<compile_context>
chip_gen: v7x
topology: tpu7x:2x2x1
jax: 0.10.0
libtpu: 0.0.40
codegen_flags: <defaults>
</compile_context>

<pallas_src>
import functools

import jax
import jax.numpy as jnp
from jax import lax
from jax.experimental import pallas as pl
from jax.experimental.pallas import tpu as pltpu

# ----------------------------- model hyper-params -----------------------------
B = 2                 # batch
C_IN = 4              # input channels (NCDHW)
HWD = 4               # latent spatial size per axis (z_dim[0])
SPATIAL = 2 * HWD     # input spatial size (encoder downsamples by 2)
ENC_CH = 512          # encoder output channels (hard-coded 512 in the module)
CB_DIM = 32           # codebook_dim
N_CODES = 128         # n_codes
CLASS_NUM = 4         # class_num
MASK_RATIO = 0.0      # -> pkeep = 1.0, masking branch disabled (as in PyTorch)
# GPT config (scaled-down from n_layer=24, n_head=16, n_embd=1024)
N_EMBD = 64
N_HEAD = 4
DH = N_EMBD // N_HEAD
N_LAYER = 2
BLOCK_SIZE = N_CODES                      # block_size = n_codes in the module
VOCAB = N_CODES + CLASS_NUM + 1           # gpt_vocab_size = 133
VOCAB_PAD = 256                           # lane-dense head output; sliced back to VOCAB
CODEBOOK_AND_MASK_DIM = N_CODES + 1
TOKENS = HWD ** 3                         # latent tokens per sample

# TODO(synk): the pkeep < 1.0 branch (mask_block / greedy_mask) uses host-side Python loops and
# torch.multinomial sampling; no clean Pallas equivalent and it is inactive here because
# mask_ratio = 0.0. score_net only feeds that branch, so it is dropped from the active path.


# ----------------------- fused encode_to_z + VQ kernel ------------------------
def _encode_vq_kernel(p_ref, ew_ref, eb_ref, pw_ref, pb_ref, cbn_ref, idx_ref):
    # encoder patchify-matmul -> pre_vq 1x1x1 conv -> NormEMA nearest code, all in VMEM.
    x = p_ref[...].astype(jnp.bfloat16)                                   # (tm, 8*C_IN)
    h = jnp.dot(x, ew_ref[...], preferred_element_type=jnp.float32) + eb_ref[...]
    z = jnp.dot(h.astype(jnp.bfloat16), pw_ref[...],
                preferred_element_type=jnp.float32) + pb_ref[...]         # (tm, CB_DIM)
    zn = z * lax.rsqrt(jnp.sum(z * z, axis=-1, keepdims=True) + 1e-12)
    en = cbn_ref[...]                                                     # (N_CODES, CB_DIM), unit-norm
    # cosine similarity: contract CB_DIM of both operands (no explicit transpose)
    sims = lax.dot_general(zn, en, (((1,), (1,)), ((), ())),
                           preferred_element_type=jnp.float32)            # (tm, N_CODES)
    m = jnp.max(sims, axis=-1, keepdims=True)
    col = lax.broadcasted_iota(jnp.int32, sims.shape, 1)
    cand = jnp.where(sims >= m, col, sims.shape[1])                       # first argmax (torch tie-break)
    idx_ref[...] = jnp.min(cand, axis=-1, keepdims=True).astype(jnp.int32)


def pallas_encode_vq(patches, params):
    """patches: (B*h^3, 8*C_IN) -> nearest normalized-code index per row, (B*h^3,) int32."""
    M, K = patches.shape
    assert M % B == 0
    tm = M // B
    idx = pl.pallas_call(
        _encode_vq_kernel,
        out_shape=jax.ShapeDtypeStruct((M, 1), jnp.int32),
        grid=(B,),
        in_specs=[
            pl.BlockSpec((tm, K), lambda i: (i, 0)),
            pl.BlockSpec((K, ENC_CH), lambda i: (0, 0)),
            pl.BlockSpec((1, ENC_CH), lambda i: (0, 0)),
            pl.BlockSpec((ENC_CH, CB_DIM), lambda i: (0, 0)),
            pl.BlockSpec((1, CB_DIM), lambda i: (0, 0)),
            pl.BlockSpec((N_CODES, CB_DIM), lambda i: (0, 0)),
        ],
        out_specs=pl.BlockSpec((tm, 1), lambda i: (i, 0)),
        compiler_params=pltpu.CompilerParams(dimension_semantics=("parallel",)),
    )(patches, params["enc_w"], params["enc_b"],
      params["prev_w"], params["prev_b"], params["codebook_norm"])
    return idx[:, 0]


# ----------------------------- fused GPT kernel -------------------------------
def _gpt_kernel(x_ref, ln1g_ref, ln1b_ref, wqkv_ref, bqkv_ref, wo_ref, bo_ref,
                ln2g_ref, ln2b_ref, wfc_ref, bfc_ref, wpr_ref, bpr_ref,
                lnfg_ref, lnfb_ref, hw_ref, hb_ref, o_ref,
                *, n_layer, n_head, dh):
    x = x_ref[0]                              # (T, C) embedded tokens (tok + pos)
    T, C = x.shape
    scale = 1.0 / (dh ** 0.5)

    # causal additive bias computed ONCE per program, reused across layers/heads
    row = lax.broadcasted_iota(jnp.int32, (T, T), 0)
    col = lax.broadcasted_iota(jnp.int32, (T, T), 1)
    causal_bias = jnp.where(col <= row, 0.0, -1e30).astype(jnp.float32)   # (T, T)

    def layer_norm(v, g, b):                  # f32 elementwise path (v5e-safe)
        mu = jnp.mean(v, axis=-1, keepdims=True)
        vc = v - mu
        var = jnp.mean(vc * vc, axis=-1, keepdims=True)
        return vc * lax.rsqrt(var + 1e-5) * g + b

    for l in range(n_layer):
        # ---- attention block ----
        h = layer_norm(x, ln1g_ref[l], ln1b_ref[l])
        qkv = jnp.dot(h.astype(jnp.bfloat16), wqkv_ref[l],
                      preferred_element_type=jnp.float32) + bqkv_ref[l]   # (T, 3C)
        q = qkv[:, 0 * C:1 * C]
        k = qkv[:, 1 * C:2 * C]
        v = qkv[:, 2 * C:3 * C]

        heads = []
        for hh in range(n_head):
            lo = hh * dh
            qh = q[:, lo:lo + dh]
            kh = k[:, lo:lo + dh]
            vh = v[:, lo:lo + dh]
            s = lax.dot_general(qh, kh, (((1,), (1,)), ((), ())),
                                preferred_element_type=jnp.float32) * scale
            s = s + causal_bias                                            # (T, T)
            m = jnp.max(s, axis=-1, keepdims=True)
            p = jnp.exp(s - m)
            p = p * pl.reciprocal(jnp.sum(p, axis=-1, keepdims=True), approx=True)
            heads.append(jnp.dot(p, vh, preferred_element_type=jnp.float32))
        attn = jnp.concatenate(heads, axis=-1)                            # (T, C) lane-dense

        x = x + jnp.dot(attn.astype(jnp.bfloat16), wo_ref[l],
                        preferred_element_type=jnp.float32) + bo_ref[l]

        # ---- MLP block ----
        h2 = layer_norm(x, ln2g_ref[l], ln2b_ref[l])
        mfc = jnp.dot(h2.astype(jnp.bfloat16), wfc_ref[l],
                      preferred_element_type=jnp.float32) + bfc_ref[l]
        # TODO(synk): PyTorch nn.GELU defaults to the exact erf form; tanh approx used here.
        mfc = jax.nn.gelu(mfc, approximate=True)
        x = x + jnp.dot(mfc.astype(jnp.bfloat16), wpr_ref[l],
                        preferred_element_type=jnp.float32) + bpr_ref[l]

    xf = layer_norm(x, lnfg_ref[...], lnfb_ref[...])
    logits = jnp.dot(xf.astype(jnp.bfloat16), hw_ref[...],
                     preferred_element_type=jnp.float32) + hb_ref[...]    # (T, VOCAB_PAD)
    o_ref[0] = logits.astype(o_ref.dtype)


def pallas_gpt(x0, p):
    """x0: (B, T, C) embedded tokens -> padded logits (B, T, VOCAB_PAD) f32."""
    Bb, T, C = x0.shape
    L = N_LAYER
    kernel = functools.partial(_gpt_kernel, n_layer=N_LAYER, n_head=N_HEAD, dh=DH)
    return pl.pallas_call(
        kernel,
        out_shape=jax.ShapeDtypeStruct((Bb, T, VOCAB_PAD), jnp.float32),
        grid=(Bb,),
        in_specs=[
            pl.BlockSpec((1, T, C), lambda i: (i, 0, 0)),            # x0
            pl.BlockSpec((L, 1, C), lambda i: (0, 0, 0)),            # ln1_g
            pl.BlockSpec((L, 1, C), lambda i: (0, 0, 0)),            # ln1_b
            pl.BlockSpec((L, C, 3 * C), lambda i: (0, 0, 0)),        # w_qkv (fused Q|K|V)
            pl.BlockSpec((L, 1, 3 * C), lambda i: (0, 0, 0)),        # b_qkv
            pl.BlockSpec((L, C, C), lambda i: (0, 0, 0)),            # w_o
            pl.BlockSpec((L, 1, C), lambda i: (0, 0, 0)),            # b_o
            pl.BlockSpec((L, 1, C), lambda i: (0, 0, 0)),            # ln2_g
            pl.BlockSpec((L, 1, C), lambda i: (0, 0, 0)),            # ln2_b
            pl.BlockSpec((L, C, 4 * C), lambda i: (0, 0, 0)),        # w_fc
            pl.BlockSpec((L, 1, 4 * C), lambda i: (0, 0, 0)),        # b_fc
            pl.BlockSpec((L, 4 * C, C), lambda i: (0, 0, 0)),        # w_pr
            pl.BlockSpec((L, 1, C), lambda i: (0, 0, 0)),            # b_pr
            pl.BlockSpec((1, C), lambda i: (0, 0)),                  # lnf_g
            pl.BlockSpec((1, C), lambda i: (0, 0)),                  # lnf_b
            pl.BlockSpec((C, VOCAB_PAD), lambda i: (0, 0)),          # head_w (lane-padded)
            pl.BlockSpec((1, VOCAB_PAD), lambda i: (0, 0)),          # head_b (lane-padded)
        ],
        out_specs=pl.BlockSpec((1, T, VOCAB_PAD), lambda i: (i, 0, 0)),
        compiler_params=pltpu.CompilerParams(dimension_semantics=("parallel",)),
    )(x0, p["ln1_g"], p["ln1_b"], p["w_qkv"], p["b_qkv"], p["w_o"], p["b_o"],
      p["ln2_g"], p["ln2_b"], p["w_fc"], p["b_fc"], p["w_pr"], p["b_pr"],
      p["lnf_g"], p["lnf_b"], p["head_w"], p["head_b"])


# ----------------------------- parameter init --------------------------------
def init_params(key):
    keys = iter(jax.random.split(key, 32))
    bf = jnp.bfloat16
    C = N_EMBD

    def nrm(shape, scale=0.02, dtype=jnp.float32):
        return (scale * jax.random.normal(next(keys), shape, jnp.float32)).astype(dtype)

    # head weights padded to a lane multiple (133 -> 256); padded tail is zero.
    head_w = nrm((C, VOCAB))
    head_w = jnp.pad(head_w, ((0, 0), (0, VOCAB_PAD - VOCAB))).astype(bf)

    # NormEMA codebook stored unit-norm (as the module keeps it); f32, accuracy-sensitive, tiny.
    cb = nrm((N_CODES, CB_DIM), scale=1.0)
    cb_norm = cb * lax.rsqrt(jnp.sum(cb * cb, axis=-1, keepdims=True) + 1e-12)

    p = {
        # synthetic Encoder: kernel-2 stride-2 3-D conv as patchify + matmul (bf16 MXU weight)
        "enc_w": nrm((8 * C_IN, ENC_CH), dtype=bf),
        "enc_b": jnp.zeros((1, ENC_CH), jnp.float32),
        # pre_vq_conv: 1x1x1 conv 512 -> codebook_dim
        "prev_w": nrm((ENC_CH, CB_DIM), dtype=bf),
        "prev_b": jnp.zeros((1, CB_DIM), jnp.float32),
        "codebook_norm": cb_norm,
        # GPT embeddings (gather done outside the kernel)
        "wte": nrm((VOCAB, C)),
        "wpe": nrm((BLOCK_SIZE, C)),
        # stacked transformer-layer weights (leading axis = layer)
        "ln1_g": jnp.ones((N_LAYER, 1, C), jnp.float32),
        "ln1_b": jnp.zeros((N_LAYER, 1, C), jnp.float32),
        "w_qkv": nrm((N_LAYER, C, 3 * C), dtype=bf),      # fused Q|K|V
        "b_qkv": jnp.zeros((N_LAYER, 1, 3 * C), jnp.float32),
        "w_o": nrm((N_LAYER, C, C), dtype=bf),
        "b_o": jnp.zeros((N_LAYER, 1, C), jnp.float32),
        "ln2_g": jnp.ones((N_LAYER, 1, C), jnp.float32),
        "ln2_b": jnp.zeros((N_LAYER, 1, C), jnp.float32),
        "w_fc": nrm((N_LAYER, C, 4 * C), dtype=bf),
        "b_fc": jnp.zeros((N_LAYER, 1, 4 * C), jnp.float32),
        "w_pr": nrm((N_LAYER, 4 * C, C), dtype=bf),
        "b_pr": jnp.zeros((N_LAYER, 1, C), jnp.float32),
        "lnf_g": jnp.ones((1, C), jnp.float32),
        "lnf_b": jnp.zeros((1, C), jnp.float32),
        "head_w": head_w,
        "head_b": jnp.zeros((1, VOCAB_PAD), jnp.float32),
    }
    return p


# ----------------------------- forward pass -----------------------------------
def forward(params, x, c):
    """VQGANTransformer.forward: returns (quant_z, logits, target)."""
    Bb = x.shape[0]
    h = HWD

    # ---- encode_to_z (fused Pallas kernel) ----
    # Encoder (synthetic): NCDHW -> channels-last, patchify(2) for the in-kernel matmul
    xc = jnp.transpose(x, (0, 2, 3, 4, 1))                            # (B, D, H, W, C)
    patches = xc.reshape(Bb, h, 2, h, 2, h, 2, C_IN)
    patches = jnp.transpose(patches, (0, 1, 3, 5, 2, 4, 6, 7))        # (B,h,h,h,2,2,2,C)
    patches = patches.reshape(Bb * h * h * h, 8 * C_IN)               # (M, 8C)

    idx = pallas_encode_vq(patches, params)                           # (M,) int32

    # NormEMA embeddings: gather normalized codes (tiny, plain-JAX gather)
    zq = jnp.take(params["codebook_norm"], idx, axis=0)               # (M, Dcb)
    quant_z = jnp.transpose(zq.reshape(Bb, h, h, h, CB_DIM), (0, 4, 1, 2, 3))  # NCDHW
    z_indices = idx.reshape(Bb, -1).astype(jnp.int32)                 # (B, tokens)

    # score_net output only feeds the mask_block branch, disabled at mask_ratio=0.0 -> removed.

    # ---- encode_to_c ----
    c_indices = c[:, None].astype(jnp.int32) + CODEBOOK_AND_MASK_DIM  # (B, 1)

    # pkeep == 1.0 -> new_indices = z_indices (masking branch skipped, as in PyTorch)
    new_indices = z_indices
    cz_indices = jnp.concatenate([c_indices, new_indices], axis=1)    # (B, 1+T)
    target = z_indices

    # ---- GPT (one fused Pallas kernel) ----
    gpt_in = cz_indices[:, :-1]                                       # (B, T)
    T = gpt_in.shape[1]
    tok = jnp.take(params["wte"], gpt_in, axis=0)                     # (B, T, C)
    pos = params["wpe"][:T][None, :, :]
    x0 = tok + pos
    logits_padded = pallas_gpt(x0, params)                            # (B, T, VOCAB_PAD)
    logits = logits_padded[:, :, :VOCAB]                              # slice off lane padding
    return quant_z, logits, target


# ----------------------------- main ------------------------------------------
if __name__ == "__main__":
    key = jax.random.PRNGKey(0)
    pkey, xkey = jax.random.split(key)
    params = init_params(pkey)

    x = jax.random.normal(xkey, (B, C_IN, SPATIAL, SPATIAL, SPATIAL), jnp.float32)
    c = jnp.array([1, 3], dtype=jnp.int32)                            # class labels

    quant_z, logits, target = jax.jit(forward)(params, x, c)
    jax.block_until_ready((quant_z, logits, target))

    assert quant_z.shape == (B, CB_DIM, HWD, HWD, HWD), quant_z.shape
    assert logits.shape == (B, TOKENS, VOCAB), logits.shape
    assert target.shape == (B, TOKENS), target.shape
    assert logits.dtype == jnp.float32 and target.dtype == jnp.int32
    assert bool(jnp.all(target >= 0)) and bool(jnp.all(target < N_CODES))
    assert bool(jnp.all(jnp.isfinite(logits)))

    print("KERNEL_OK")
</pallas_src>

<mosaic_0001>
module attributes {stable_mosaic.version = 11 : i64} {
  func.func @_encode_vq_kernel(%arg0: i32, %arg1: memref<64x32xf32, #tpu.memory_space<vmem>>, %arg2: memref<32x512xbf16, #tpu.memory_space<vmem>>, %arg3: memref<1x512xf32, #tpu.memory_space<vmem>>, %arg4: memref<512x32xbf16, #tpu.memory_space<vmem>>, %arg5: memref<1x32xf32, #tpu.memory_space<vmem>>, %arg6: memref<128x32xf32, #tpu.memory_space<vmem>>, %arg7: memref<64x1xi32, #tpu.memory_space<vmem>>) attributes {dimension_semantics = [#tpu.dimension_semantics<parallel>], iteration_bounds = array<i64: 2>, scalar_prefetch = 0 : i64, scratch_operands = 0 : i64, tpu.core_type = #tpu.core_type<tc>, window_params = [{transform_indices = @transform_0, window_bounds = array<i64: 64, 32>}, {pipeline_mode = #tpu.pipeline_mode<synchronous>, transform_indices = @transform_1, window_bounds = array<i64: 32, 512>}, {pipeline_mode = #tpu.pipeline_mode<synchronous>, transform_indices = @transform_2, window_bounds = array<i64: 1, 512>}, {pipeline_mode = #tpu.pipeline_mode<synchronous>, transform_indices = @transform_3, window_bounds = array<i64: 512, 32>}, {pipeline_mode = #tpu.pipeline_mode<synchronous>, transform_indices = @transform_4, window_bounds = array<i64: 1, 32>}, {pipeline_mode = #tpu.pipeline_mode<synchronous>, transform_indices = @transform_5, window_bounds = array<i64: 128, 32>}, {transform_indices = @transform_6, window_bounds = array<i64: 64, 1>}]} {
    %c0 = arith.constant 0 : index
    %c0_0 = arith.constant 0 : index
    %0 = vector.load %arg1[%c0, %c0_0] : memref<64x32xf32, #tpu.memory_space<vmem>>, vector<64x32xf32>
    %1 = arith.truncf %0 : vector<64x32xf32> to vector<64x32xbf16>
    %c0_1 = arith.constant 0 : index
    %c0_2 = arith.constant 0 : index
    %2 = vector.load %arg2[%c0_1, %c0_2] : memref<32x512xbf16, #tpu.memory_space<vmem>>, vector<32x512xbf16>
    %cst = arith.constant dense<0.000000e+00> : vector<64x512xf32>
    %3 = tpu.matmul %1, %2, %cst {dimension_numbers = #tpu.dot_dimension_numbers<[1], [0], [0], [1], [0, 0, 1, 1], [], []>} : vector<64x32xbf16>, vector<32x512xbf16>, vector<64x512xf32> -> vector<64x512xf32>
    %c0_3 = arith.constant 0 : index
    %c0_4 = arith.constant 0 : index
    %4 = vector.load %arg3[%c0_3, %c0_4] : memref<1x512xf32, #tpu.memory_space<vmem>>, vector<1x512xf32>
    %5 = vector.broadcast %4 : vector<1x512xf32> to vector<64x512xf32>
    %6 = arith.addf %3, %5 : vector<64x512xf32>
    %7 = arith.truncf %6 : vector<64x512xf32> to vector<64x512xbf16>
    %c0_5 = arith.constant 0 : index
    %c0_6 = arith.constant 0 : index
    %8 = vector.load %arg4[%c0_5, %c0_6] : memref<512x32xbf16, #tpu.memory_space<vmem>>, vector<512x32xbf16>
    %cst_7 = arith.constant dense<0.000000e+00> : vector<64x32xf32>
    %9 = tpu.matmul %7, %8, %cst_7 {dimension_numbers = #tpu.dot_dimension_numbers<[1], [0], [0], [1], [0, 0, 1, 1], [], []>} : vector<64x512xbf16>, vector<512x32xbf16>, vector<64x32xf32> -> vector<64x32xf32>
    %c0_8 = arith.constant 0 : index
    %c0_9 = arith.constant 0 : index
    %10 = vector.load %arg5[%c0_8, %c0_9] : memref<1x32xf32, #tpu.memory_space<vmem>>, vector<1x32xf32>
    %11 = vector.broadcast %10 : vector<1x32xf32> to vector<64x32xf32>
    %12 = arith.addf %9, %11 : vector<64x32xf32>
    %13 = arith.mulf %12, %12 : vector<64x32xf32>
    %cst_10 = arith.constant dense<0.000000e+00> : vector<64xf32>
    %14 = vector.multi_reduction <add>, %13, %cst_10 [1] : vector<64x32xf32> to vector<64xf32>
    %15 = vector.shape_cast %14 : vector<64xf32> to vector<64x1xf32>
    %cst_11 = arith.constant 9.99999996E-13 : f32
    %16 = vector.broadcast %cst_11 : f32 to vector<64x1xf32>
    %17 = arith.addf %15, %16 : vector<64x1xf32>
    %18 = math.rsqrt %17 : vector<64x1xf32>
    %19 = vector.broadcast %18 : vector<64x1xf32> to vector<64x32xf32>
    %20 = arith.mulf %12, %19 : vector<64x32xf32>
    %c0_12 = arith.constant 0 : index
    %c0_13 = arith.constant 0 : index
    %21 = vector.load %arg6[%c0_12, %c0_13] : memref<128x32xf32, #tpu.memory_space<vmem>>, vector<128x32xf32>
    %cst_14 = arith.constant dense<0.000000e+00> : vector<64x128xf32>
    %22 = tpu.matmul %20, %21, %cst_14 {dimension_numbers = #tpu.dot_dimension_numbers<[1], [1], [0], [0], [0, 0, 1, 0], [], []>} : vector<64x32xf32>, vector<128x32xf32>, vector<64x128xf32> -> vector<64x128xf32>
    %cst_15 = arith.constant dense<0xFF800000> : vector<64xf32>
    %23 = vector.multi_reduction <maximumf>, %22, %cst_15 [1] : vector<64x128xf32> to vector<64xf32>
    %24 = vector.shape_cast %23 : vector<64xf32> to vector<64x1xf32>
    %25 = tpu.iota {dimensions = array<i32: 1>} : vector<64x128xi32>
    %26 = vector.broadcast %24 : vector<64x1xf32> to vector<64x128xf32>
    %27 = arith.cmpf oge, %22, %26 : vector<64x128xf32>
    %c128_i32 = arith.constant 128 : i32
    %28 = vector.broadcast %c128_i32 : i32 to vector<64x128xi32>
    %29 = arith.select %27, %25, %28 : vector<64x128xi1>, vector<64x128xi32>
    %cst_16 = arith.constant dense<2147483647> : vector<64xi32>
    %30 = vector.multi_reduction <minsi>, %29, %cst_16 [1] : vector<64x128xi32> to vector<64xi32>
    %31 = vector.shape_cast %30 : vector<64xi32> to vector<64x1xi32>
    %c0_17 = arith.constant 0 : index
    %c0_18 = arith.constant 0 : index
    %32 = vector.load %arg7[%c0_17, %c0_18] : memref<64x1xi32, #tpu.memory_space<vmem>>, vector<64x1xi32>
    tpu.vector_store %arg7[%c0_17, %c0_18], %31 {strides = array<i32>} : memref<64x1xi32, #tpu.memory_space<vmem>>, vector<64x1xi32>,
    return
  }
  func.func @transform_0(%arg0: i32) -> (i32, i32) {
    %c0_i32 = arith.constant 0 : i32
    %c0_i32_0 = arith.constant 0 : i32
    return %arg0, %c0_i32 : i32, i32
  }
  func.func @transform_1(%arg0: i32) -> (i32, i32) {
    %c0_i32 = arith.constant 0 : i32
    %c0_i32_0 = arith.constant 0 : i32
    %c0_i32_1 = arith.constant 0 : i32
    return %c0_i32, %c0_i32_0 : i32, i32
  }
  func.func @transform_2(%arg0: i32) -> (i32, i32) {
    %c0_i32 = arith.constant 0 : i32
    %c0_i32_0 = arith.constant 0 : i32
    %c0_i32_1 = arith.constant 0 : i32
    return %c0_i32, %c0_i32_0 : i32, i32
  }
  func.func @transform_3(%arg0: i32) -> (i32, i32) {
    %c0_i32 = arith.constant 0 : i32
    %c0_i32_0 = arith.constant 0 : i32
    %c0_i32_1 = arith.constant 0 : i32
    return %c0_i32, %c0_i32_0 : i32, i32
  }
  func.func @transform_4(%arg0: i32) -> (i32, i32) {
    %c0_i32 = arith.constant 0 : i32
    %c0_i32_0 = arith.constant 0 : i32
    %c0_i32_1 = arith.constant 0 : i32
    return %c0_i32, %c0_i32_0 : i32, i32
  }
  func.func @transform_5(%arg0: i32) -> (i32, i32) {
    %c0_i32 = arith.constant 0 : i32
    %c0_i32_0 = arith.constant 0 : i32
    %c0_i32_1 = arith.constant 0 : i32
    return %c0_i32, %c0_i32_0 : i32, i32
  }
  func.func @transform_6(%arg0: i32) -> (i32, i32) {
    %c0_i32 = arith.constant 0 : i32
    %c0_i32_0 = arith.constant 0 : i32
    return %arg0, %c0_i32 : i32, i32
  }
}

module attributes {stable_mosaic.version = 11 : i64} {
  func.func @_gpt_kernel(%arg0: i32, %arg1: memref<1x64x64xf32, #tpu.memory_space<vmem>>, %arg2: memref<2x1x64xf32, #tpu.memory_space<vmem>>, %arg3: memref<2x1x64xf32, #tpu.memory_space<vmem>>, %arg4: memref<2x64x192xbf16, #tpu.memory_space<vmem>>, %arg5: memref<2x1x192xf32, #tpu.memory_space<vmem>>, %arg6: memref<2x64x64xbf16, #tpu.memory_space<vmem>>, %arg7: memref<2x1x64xf32, #tpu.memory_space<vmem>>, %arg8: memref<2x1x64xf32, #tpu.memory_space<vmem>>, %arg9: memref<2x1x64xf32, #tpu.memory_space<vmem>>, %arg10: memref<2x64x256xbf16, #tpu.memory_space<vmem>>, %arg11: memref<2x1x256xf32, #tpu.memory_space<vmem>>, %arg12: memref<2x256x64xbf16, #tpu.memory_space<vmem>>, %arg13: memref<2x1x64xf32, #tpu.memory_space<vmem>>, %arg14: memref<1x64xf32, #tpu.memory_space<vmem>>, %arg15: memref<1x64xf32, #tpu.memory_space<vmem>>, %arg16: memref<64x256xbf16, #tpu.memory_space<vmem>>, %arg17: memref<1x256xf32, #tpu.memory_space<vmem>>, %arg18: memref<1x64x256xf32, #tpu.memory_space<vmem>>) attributes {dimension_semantics = [#tpu.dimension_semantics<parallel>], iteration_bounds = array<i64: 2>, scalar_prefetch = 0 : i64, scratch_operands = 0 : i64, tpu.core_type = #tpu.core_type<tc>, window_params = [{transform_indices = @transform_0, window_bounds = array<i64: 1, 64, 64>}, {pipeline_mode = #tpu.pipeline_mode<synchronous>, transform_indices = @transform_1, window_bounds = array<i64: 2, 1, 64>}, {pipeline_mode = #tpu.pipeline_mode<synchronous>, transform_indices = @transform_2, window_bounds = array<i64: 2, 1, 64>}, {pipeline_mode = #tpu.pipeline_mode<synchronous>, transform_indices = @transform_3, window_bounds = array<i64: 2, 64, 192>}, {pipeline_mode = #tpu.pipeline_mode<synchronous>, transform_indices = @transform_4, window_bounds = array<i64: 2, 1, 192>}, {pipeline_mode = #tpu.pipeline_mode<synchronous>, transform_indices = @transform_5, window_bounds = array<i64: 2, 64, 64>}, {pipeline_mode = #tpu.pipeline_mode<synchronous>, transform_indices = @transform_6, window_bounds = array<i64: 2, 1, 64>}, {pipeline_mode = #tpu.pipeline_mode<synchronous>, transform_indices = @transform_7, window_bounds = array<i64: 2, 1, 64>}, {pipeline_mode = #tpu.pipeline_mode<synchronous>, transform_indices = @transform_8, window_bounds = array<i64: 2, 1, 64>}, {pipeline_mode = #tpu.pipeline_mode<synchronous>, transform_indices = @transform_9, window_bounds = array<i64: 2, 64, 256>}, {pipeline_mode = #tpu.pipeline_mode<synchronous>, transform_indices = @transform_10, window_bounds = array<i64: 2, 1, 256>}, {pipeline_mode = #tpu.pipeline_mode<synchronous>, transform_indices = @transform_11, window_bounds = array<i64: 2, 256, 64>}, {pipeline_mode = #tpu.pipeline_mode<synchronous>, transform_indices = @transform_12, window_bounds = array<i64: 2, 1, 64>}, {pipeline_mode = #tpu.pipeline_mode<synchronous>, transform_indices = @transform_13, window_bounds = array<i64: 1, 64>}, {pipeline_mode = #tpu.pipeline_mode<synchronous>, transform_indices = @transform_14, window_bounds = array<i64: 1, 64>}, {pipeline_mode = #tpu.pipeline_mode<synchronous>, transform_indices = @transform_15, window_bounds = array<i64: 64, 256>}, {pipeline_mode = #tpu.pipeline_mode<synchronous>, transform_indices = @transform_16, window_bounds = array<i64: 1, 256>}, {transform_indices = @transform_17, window_bounds = array<i64: 1, 64, 256>}]} {
    %c0 = arith.constant 0 : index
    %c0_0 = arith.constant 0 : index
    %c0_1 = arith.constant 0 : index
    %0 = vector.load %arg1[%c0, %c0_0, %c0_1] : memref<1x64x64xf32, #tpu.memory_space<vmem>>, vector<1x64x64xf32>
    %1 = vector.shape_cast %0 : vector<1x64x64xf32> to vector<64x64xf32>
    %2 = tpu.iota {dimensions = array<i32: 0>} : vector<64x64xi32>
    %3 = tpu.iota {dimensions = array<i32: 1>} : vector<64x64xi32>
    %4 = arith.cmpi sle, %3, %2 : vector<64x64xi32>
    %cst = arith.constant 0.000000e+00 : f32
    %cst_2 = arith.constant -1.000000e+30 : f32
    %5 = vector.broadcast %cst : f32 to vector<64x64xf32>
    %6 = vector.broadcast %cst_2 : f32 to vector<64x64xf32>
    %7 = arith.select %4, %5, %6 : vector<64x64xi1>, vector<64x64xf32>
    %c0_3 = arith.constant 0 : index
    %c0_4 = arith.constant 0 : index
    %c0_5 = arith.constant 0 : index
    %8 = vector.load %arg2[%c0_3, %c0_4, %c0_5] : memref<2x1x64xf32, #tpu.memory_space<vmem>>, vector<1x1x64xf32>
    %9 = vector.shape_cast %8 : vector<1x1x64xf32> to vector<1x64xf32>
    %c0_6 = arith.constant 0 : index
    %c0_7 = arith.constant 0 : index
    %c0_8 = arith.constant 0 : index
    %10 = vector.load %arg3[%c0_6, %c0_7, %c0_8] : memref<2x1x64xf32, #tpu.memory_space<vmem>>, vector<1x1x64xf32>
    %11 = vector.shape_cast %10 : vector<1x1x64xf32> to vector<1x64xf32>
    %cst_9 = arith.constant dense<0.000000e+00> : vector<64xf32>
    %12 = vector.multi_reduction <add>, %1, %cst_9 [1] : vector<64x64xf32> to vector<64xf32>
    %13 = vector.shape_cast %12 : vector<64xf32> to vector<64x1xf32>
    %cst_10 = arith.constant 6.400000e+01 : f32
    %14 = vector.broadcast %cst_10 : f32 to vector<64x1xf32>
    %15 = arith.divf %13, %14 : vector<64x1xf32>
    %16 = vector.broadcast %15 : vector<64x1xf32> to vector<64x64xf32>
    %17 = arith.subf %1, %16 : vector<64x64xf32>
    %18 = arith.mulf %17, %17 : vector<64x64xf32>
    %cst_11 = arith.constant dense<0.000000e+00> : vector<64xf32>
    %19 = vector.multi_reduction <add>, %18, %cst_11 [1] : vector<64x64xf32> to vector<64xf32>
    %20 = vector.shape_cast %19 : vector<64xf32> to vector<64x1xf32>
    %cst_12 = arith.constant 6.400000e+01 : f32
    %21 = vector.broadcast %cst_12 : f32 to vector<64x1xf32>
    %22 = arith.divf %20, %21 : vector<64x1xf32>
    %cst_13 = arith.constant 9.99999974E-6 : f32
    %23 = vector.broadcast %cst_13 : f32 to vector<64x1xf32>
    %24 = arith.addf %22, %23 : vector<64x1xf32>
    %25 = math.rsqrt %24 : vector<64x1xf32>
    %26 = vector.broadcast %25 : vector<64x1xf32> to vector<64x64xf32>
    %27 = arith.mulf %17, %26 : vector<64x64xf32>
    %28 = vector.broadcast %9 : vector<1x64xf32> to vector<64x64xf32>
    %29 = arith.mulf %27, %28 : vector<64x64xf32>
    %30 = vector.broadcast %11 : vector<1x64xf32> to vector<64x64xf32>
    %31 = arith.addf %29, %30 : vector<64x64xf32>
    %32 = arith.truncf %31 : vector<64x64xf32> to vector<64x64xbf16>
    %c0_14 = arith.constant 0 : index
    %c0_15 = arith.constant 0 : index
    %c0_16 = arith.constant 0 : index
    %33 = vector.load %arg4[%c0_14, %c0_15, %c0_16] : memref<2x64x192xbf16, #tpu.memory_space<vmem>>, vector<1x64x192xbf16>
    %34 = vector.shape_cast %33 : vector<1x64x192xbf16> to vector<64x192xbf16>
    %cst_17 = arith.constant dense<0.000000e+00> : vector<64x192xf32>
    %35 = tpu.matmul %32, %34, %cst_17 {dimension_numbers = #tpu.dot_dimension_numbers<[1], [0], [0], [1], [0, 0, 1, 1], [], []>} : vector<64x64xbf16>, vector<64x192xbf16>, vector<64x192xf32> -> vector<64x192xf32>
    %c0_18 = arith.constant 0 : index
    %c0_19 = arith.constant 0 : index
    %c0_20 = arith.constant 0 : index
    %36 = vector.load %arg5[%c0_18, %c0_19, %c0_20] : memref<2x1x192xf32, #tpu.memory_space<vmem>>, vector<1x1x192xf32>
    %37 = vector.shape_cast %36 : vector<1x1x192xf32> to vector<1x192xf32>
    %38 = vector.broadcast %37 : vector<1x192xf32> to vector<64x192xf32>
    %39 = arith.addf %35, %38 : vector<64x192xf32>
    %40 = vector.extract_strided_slice %39 {offsets = [0, 0], sizes = [64, 64], strides = [1, 1]} : vector<64x192xf32> to vector<64x64xf32>
    %41 = vector.extract_strided_slice %39 {offsets = [0, 64], sizes = [64, 64], strides = [1, 1]} : vector<64x192xf32> to vector<64x64xf32>
    %42 = vector.extract_strided_slice %39 {offsets = [0, 128], sizes = [64, 64], strides = [1, 1]} : vector<64x192xf32> to vector<64x64xf32>
    %43 = vector.extract_strided_slice %40 {offsets = [0, 0], sizes = [64, 16], strides = [1, 1]} : vector<64x64xf32> to vector<64x16xf32>
    %44 = vector.extract_strided_slice %41 {offsets = [0, 0], sizes = [64, 16], strides = [1, 1]} : vector<64x64xf32> to vector<64x16xf32>
    %45 = vector.extract_strided_slice %42 {offsets = [0, 0], sizes = [64, 16], strides = [1, 1]} : vector<64x64xf32> to vector<64x16xf32>
    %cst_21 = arith.constant dense<0.000000e+00> : vector<64x64xf32>
    %46 = tpu.matmul %43, %44, %cst_21 {dimension_numbers = #tpu.dot_dimension_numbers<[1], [1], [0], [0], [0, 0, 1, 0], [], []>} : vector<64x16xf32>, vector<64x16xf32>, vector<64x64xf32> -> vector<64x64xf32>
    %cst_22 = arith.constant 2.500000e-01 : f32
    %47 = vector.broadcast %cst_22 : f32 to vector<64x64xf32>
    %48 = arith.mulf %46, %47 : vector<64x64xf32>
    %49 = arith.addf %48, %7 : vector<64x64xf32>
    %cst_23 = arith.constant dense<0xFF800000> : vector<64xf32>
    %50 = vector.multi_reduction <maximumf>, %49, %cst_23 [1] : vector<64x64xf32> to vector<64xf32>
    %51 = vector.shape_cast %50 : vector<64xf32> to vector<64x1xf32>
    %52 = vector.broadcast %51 : vector<64x1xf32> to vector<64x64xf32>
    %53 = arith.subf %49, %52 : vector<64x64xf32>
    %54 = math.exp %53 : vector<64x64xf32>
    %cst_24 = arith.constant dense<0.000000e+00> : vector<64xf32>
    %55 = vector.multi_reduction <add>, %54, %cst_24 [1] : vector<64x64xf32> to vector<64xf32>
    %56 = vector.shape_cast %55 : vector<64xf32> to vector<64x1xf32>
    %57 = tpu.reciprocal %56 {approx = true} : vector<64x1xf32> -> vector<64x1xf32>
    %58 = vector.broadcast %57 : vector<64x1xf32> to vector<64x64xf32>
    %59 = arith.mulf %54, %58 : vector<64x64xf32>
    %cst_25 = arith.constant dense<0.000000e+00> : vector<64x16xf32>
    %60 = tpu.matmul %59, %45, %cst_25 {dimension_numbers = #tpu.dot_dimension_numbers<[1], [0], [0], [1], [0, 0, 1, 1], [], []>} : vector<64x64xf32>, vector<64x16xf32>, vector<64x16xf32> -> vector<64x16xf32>
    %61 = vector.extract_strided_slice %40 {offsets = [0, 16], sizes = [64, 16], strides = [1, 1]} : vector<64x64xf32> to vector<64x16xf32>
    %62 = vector.extract_strided_slice %41 {offsets = [0, 16], sizes = [64, 16], strides = [1, 1]} : vector<64x64xf32> to vector<64x16xf32>
    %63 = vector.extract_strided_slice %42 {offsets = [0, 16], sizes = [64, 16], strides = [1, 1]} : vector<64x64xf32> to vector<64x16xf32>
    %cst_26 = arith.constant dense<0.000000e+00> : vector<64x64xf32>
    %64 = tpu.matmul %61, %62, %cst_26 {dimension_numbers = #tpu.dot_dimension_numbers<[1], [1], [0], [0], [0, 0, 1, 0], [], []>} : vector<64x16xf32>, vector<64x16xf32>, vector<64x64xf32> -> vector<64x64xf32>
    %cst_27 = arith.constant 2.500000e-01 : f32
    %65 = vector.broadcast %cst_27 : f32 to vector<64x64xf32>
    %66 = arith.mulf %64, %65 : vector<64x64xf32>
    %67 = arith.addf %66, %7 : vector<64x64xf32>
    %cst_28 = arith.constant dense<0xFF800000> : vector<64xf32>
    %68 = vector.multi_reduction <maximumf>, %67, %cst_28 [1] : vector<64x64xf32> to vector<64xf32>
    %69 = vector.shape_cast %68 : vector<64xf32> to vector<64x1xf32>
    %70 = vector.broadcast %69 : vector<64x1xf32> to vector<64x64xf32>
    %71 = arith.subf %67, %70 : vector<64x64xf32>
    %72 = math.exp %71 : vector<64x64xf32>
    %cst_29 = arith.constant dense<0.000000e+00> : vector<64xf32>
    %73 = vector.multi_reduction <add>, %72, %cst_29 [1] : vector<64x64xf32> to vector<64xf32>
    %74 = vector.shape_cast %73 : vector<64xf32> to vector<64x1xf32>
    %75 = tpu.reciprocal %74 {approx = true} : vector<64x1xf32> -> vector<64x1xf32>
    %76 = vector.broadcast %75 : vector<64x1xf32> to vector<64x64xf32>
    %77 = arith.mulf %72, %76 : vector<64x64xf32>
    %cst_30 = arith.constant dense<0.000000e+00> : vector<64x16xf32>
    %78 = tpu.matmul %77, %63, %cst_30 {dimension_numbers = #tpu.dot_dimension_numbers<[1], [0], [0], [1], [0, 0, 1, 1], [], []>} : vector<64x64xf32>, vector<64x16xf32>, vector<64x16xf32> -> vector<64x16xf32>
    %79 = vector.extract_strided_slice %40 {offsets = [0, 32], sizes = [64, 16], strides = [1, 1]} : vector<64x64xf32> to vector<64x16xf32>
    %80 = vector.extract_strided_slice %41 {offsets = [0, 32], sizes = [64, 16], strides = [1, 1]} : vector<64x64xf32> to vector<64x16xf32>
    %81 = vector.extract_strided_slice %42 {offsets = [0, 32], sizes = [64, 16], strides = [1, 1]} : vector<64x64xf32> to vector<64x16xf32>
    %cst_31 = arith.constant dense<0.000000e+00> : vector<64x64xf32>
    %82 = tpu.matmul %79, %80, %cst_31 {dimension_numbers = #tpu.dot_dimension_numbers<[1], [1], [0], [0], [0, 0, 1, 0], [], []>} : vector<64x16xf32>, vector<64x16xf32>, vector<64x64xf32> -> vector<64x64xf32>
    %cst_32 = arith.constant 2.500000e-01 : f32
    %83 = vector.broadcast %cst_32 : f32 to vector<64x64xf32>
    %84 = arith.mulf %82, %83 : vector<64x64xf32>
    %85 = arith.addf %84, %7 : vector<64x64xf32>
    %cst_33 = arith.constant dense<0xFF800000> : vector<64xf32>
    %86 = vector.multi_reduction <maximumf>, %85, %cst_33 [1] : vector<64x64xf32> to vector<64xf32>
    %87 = vector.shape_cast %86 : vector<64xf32> to vector<64x1xf32>
    %88 = vector.broadcast %87 : vector<64x1xf32> to vector<64x64xf32>
    %89 = arith.subf %85, %88 : vector<64x64xf32>
    %90 = math.exp %89 : vector<64x64xf32>
    %cst_34 = arith.constant dense<0.000000e+00> : vector<64xf32>
    %91 = vector.multi_reduction <add>, %90, %cst_34 [1] : vector<64x64xf32> to vector<64xf32>
    %92 = vector.shape_cast %91 : vector<64xf32> to vector<64x1xf32>
    %93 = tpu.reciprocal %92 {approx = true} : vector<64x1xf32> -> vector<64x1xf32>
    %94 = vector.broadcast %93 : vector<64x1xf32> to vector<64x64xf32>
    %95 = arith.mulf %90, %94 : vector<64x64xf32>
    %cst_35 = arith.constant dense<0.000000e+00> : vector<64x16xf32>
    %96 = tpu.matmul %95, %81, %cst_35 {dimension_numbers = #tpu.dot_dimension_numbers<[1], [0], [0], [1], [0, 0, 1, 1], [], []>} : vector<64x64xf32>, vector<64x16xf32>, vector<64x16xf32> -> vector<64x16xf32>
    %97 = vector.extract_strided_slice %40 {offsets = [0, 48], sizes = [64, 16], strides = [1, 1]} : vector<64x64xf32> to vector<64x16xf32>
    %98 = vector.extract_strided_slice %41 {offsets = [0, 48], sizes = [64, 16], strides = [1, 1]} : vector<64x64xf32> to vector<64x16xf32>
    %99 = vector.extract_strided_slice %42 {offsets = [0, 48], sizes = [64, 16], strides = [1, 1]} : vector<64x64xf32> to vector<64x16xf32>
    %cst_36 = arith.constant dense<0.000000e+00> : vector<64x64xf32>
    %100 = tpu.matmul %97, %98, %cst_36 {dimension_numbers = #tpu.dot_dimension_numbers<[1], [1], [0], [0], [0, 0, 1, 0], [], []>} : vector<64x16xf32>, vector<64x16xf32>, vector<64x64xf32> -> vector<64x64xf32>
    %cst_37 = arith.constant 2.500000e-01 : f32
    %101 = vector.broadcast %cst_37 : f32 to vector<64x64xf32>
    %102 = arith.mulf %100, %101 : vector<64x64xf32>
    %103 = arith.addf %102, %7 : vector<64x64xf32>
    %cst_38 = arith.constant dense<0xFF800000> : vector<64xf32>
    %104 = vector.multi_reduction <maximumf>, %103, %cst_38 [1] : vector<64x64xf32> to vector<64xf32>
    %105 = vector.shape_cast %104 : vector<64xf32> to vector<64x1xf32>
    %106 = vector.broadcast %105 : vector<64x1xf32> to vector<64x64xf32>
    %107 = arith.subf %103, %106 : vector<64x64xf32>
    %108 = math.exp %107 : vector<64x64xf32>
    %cst_39 = arith.constant dense<0.000000e+00> : vector<64xf32>
    %109 = vector.multi_reduction <add>, %108, %cst_39 [1] : vector<64x64xf32> to vector<64xf32>
    %110 = vector.shape_cast %109 : vector<64xf32> to vector<64x1xf32>
    %111 = tpu.reciprocal %110 {approx = true} : vector<64x1xf32> -> vector<64x1xf32>
    %112 = vector.broadcast %111 : vector<64x1xf32> to vector<64x64xf32>
    %113 = arith.mulf %108, %112 : vector<64x64xf32>
    %cst_40 = arith.constant dense<0.000000e+00> : vector<64x16xf32>
    %114 = tpu.matmul %113, %99, %cst_40 {dimension_numbers = #tpu.dot_dimension_numbers<[1], [0], [0], [1], [0, 0, 1, 1], [], []>} : vector<64x64xf32>, vector<64x16xf32>, vector<64x16xf32> -> vector<64x16xf32>
    %115 = tpu.concatenate %60, %78, %96, %114 in 1 : vector<64x16xf32>, vector<64x16xf32>, vector<64x16xf32>, vector<64x16xf32> -> vector<64x64xf32>
    %116 = arith.truncf %115 : vector<64x64xf32> to vector<64x64xbf16>
    %c0_41 = arith.constant 0 : index
    %c0_42 = arith.constant 0 : index
    %c0_43 = arith.constant 0 : index
    %117 = vector.load %arg6[%c0_41, %c0_42, %c0_43] : memref<2x64x64xbf16, #tpu.memory_space<vmem>>, vector<1x64x64xbf16>
    %118 = vector.shape_cast %117 : vector<1x64x64xbf16> to vector<64x64xbf16>
    %cst_44 = arith.constant dense<0.000000e+00> : vector<64x64xf32>
    %119 = tpu.matmul %116, %118, %cst_44 {dimension_numbers = #tpu.dot_dimension_numbers<[1], [0], [0], [1], [0, 0, 1, 1], [], []>} : vector<64x64xbf16>, vector<64x64xbf16>, vector<64x64xf32> -> vector<64x64xf32>
    %120 = arith.addf %1, %119 : vector<64x64xf32>
    %c0_45 = arith.constant 0 : index
    %c0_46 = arith.constant 0 : index
    %c0_47 = arith.constant 0 : index
    %121 = vector.load %arg7[%c0_45, %c0_46, %c0_47] : memref<2x1x64xf32, #tpu.memory_space<vmem>>, vector<1x1x64xf32>
    %122 = vector.shape_cast %121 : vector<1x1x64xf32> to vector<1x64xf32>
    %123 = vector.broadcast %122 : vector<1x64xf32> to vector<64x64xf32>
    %124 = arith.addf %120, %123 : vector<64x64xf32>
    %c0_48 = arith.constant 0 : index
    %c0_49 = arith.constant 0 : index
    %c0_50 = arith.constant 0 : index
    %125 = vector.load %arg8[%c0_48, %c0_49, %c0_50] : memref<2x1x64xf32, #tpu.memory_space<vmem>>, vector<1x1x64xf32>
    %126 = vector.shape_cast %125 : vector<1x1x64xf32> to vector<1x64xf32>
    %c0_51 = arith.constant 0 : index
    %c0_52 = arith.constant 0 : index
    %c0_53 = arith.constant 0 : index
    %127 = vector.load %arg9[%c0_51, %c0_52, %c0_53] : memref<2x1x64xf32, #tpu.memory_space<vmem>>, vector<1x1x64xf32>
    %128 = vector.shape_cast %127 : vector<1x1x64xf32> to vector<1x64xf32>
    %cst_54 = arith.constant dense<0.000000e+00> : vector<64xf32>
    %129 = vector.multi_reduction <add>, %124, %cst_54 [1] : vector<64x64xf32> to vector<64xf32>
    %130 = vector.shape_cast %129 : vector<64xf32> to vector<64x1xf32>
    %cst_55 = arith.constant 6.400000e+01 : f32
    %131 = vector.broadcast %cst_55 : f32 to vector<64x1xf32>
    %132 = arith.divf %130, %131 : vector<64x1xf32>
    %133 = vector.broadcast %132 : vector<64x1xf32> to vector<64x64xf32>
    %134 = arith.subf %124, %133 : vector<64x64xf32>
    %135 = arith.mulf %134, %134 : vector<64x64xf32>
    %cst_56 = arith.constant dense<0.000000e+00> : vector<64xf32>
    %136 = vector.multi_reduction <add>, %135, %cst_56 [1] : vector<64x64xf32> to vector<64xf32>
    %137 = vector.shape_cast %136 : vector<64xf32> to vector<64x1xf32>
    %cst_57 = arith.constant 6.400000e+01 : f32
    %138 = vector.broadcast %cst_57 : f32 to vector<64x1xf32>
    %139 = arith.divf %137, %138 : vector<64x1xf32>
    %cst_58 = arith.constant 9.99999974E-6 : f32
    %140 = vector.broadcast %cst_58 : f32 to vector<64x1xf32>
    %141 = arith.addf %139, %140 : vector<64x1xf32>
    %142 = math.rsqrt %141 : vector<64x1xf32>
    %143 = vector.broadcast %142 : vector<64x1xf32> to vector<64x64xf32>
    %144 = arith.mulf %134, %143 : vector<64x64xf32>
    %145 = vector.broadcast %126 : vector<1x64xf32> to vector<64x64xf32>
    %146 = arith.mulf %144, %145 : vector<64x64xf32>
    %147 = vector.broadcast %128 : vector<1x64xf32> to vector<64x64xf32>
    %148 = arith.addf %146, %147 : vector<64x64xf32>
    %149 = arith.truncf %148 : vector<64x64xf32> to vector<64x64xbf16>
    %c0_59 = arith.constant 0 : index
    %c0_60 = arith.constant 0 : index
    %c0_61 = arith.constant 0 : index
    %150 = vector.load %arg10[%c0_59, %c0_60, %c0_61] : memref<2x64x256xbf16, #tpu.memory_space<vmem>>, vector<1x64x256xbf16>
    %151 = vector.shape_cast %150 : vector<1x64x256xbf16> to vector<64x256xbf16>
    %cst_62 = arith.constant dense<0.000000e+00> : vector<64x256xf32>
    %152 = tpu.matmul %149, %151, %cst_62 {dimension_numbers = #tpu.dot_dimension_numbers<[1], [0], [0], [1], [0, 0, 1, 1], [], []>} : vector<64x64xbf16>, vector<64x256xbf16>, vector<64x256xf32> -> vector<64x256xf32>
    %c0_63 = arith.constant 0 : index
    %c0_64 = arith.constant 0 : index
    %c0_65 = arith.constant 0 : index
    %153 = vector.load %arg11[%c0_63, %c0_64, %c0_65] : memref<2x1x256xf32, #tpu.memory_space<vmem>>, vector<1x1x256xf32>
    %154 = vector.shape_cast %153 : vector<1x1x256xf32> to vector<1x256xf32>
    %155 = vector.broadcast %154 : vector<1x256xf32> to vector<64x256xf32>
    %156 = arith.addf %152, %155 : vector<64x256xf32>
    %157 = arith.mulf %156, %156 : vector<64x256xf32>
    %158 = arith.mulf %156, %157 : vector<64x256xf32>
    %cst_66 = arith.constant 4.471500e-02 : f32
    %159 = vector.broadcast %cst_66 : f32 to vector<64x256xf32>
    %160 = arith.mulf %159, %158 : vector<64x256xf32>
    %161 = arith.addf %156, %160 : vector<64x256xf32>
    %cst_67 = arith.constant 0.797884583 : f32
    %162 = vector.broadcast %cst_67 : f32 to vector<64x256xf32>
    %163 = arith.mulf %162, %161 : vector<64x256xf32>
    %164 = math.tanh %163 : vector<64x256xf32>
    %cst_68 = arith.constant 1.000000e+00 : f32
    %165 = vector.broadcast %cst_68 : f32 to vector<64x256xf32>
    %166 = arith.addf %165, %164 : vector<64x256xf32>
    %cst_69 = arith.constant 5.000000e-01 : f32
    %167 = vector.broadcast %cst_69 : f32 to vector<64x256xf32>
    %168 = arith.mulf %167, %166 : vector<64x256xf32>
    %169 = arith.mulf %156, %168 : vector<64x256xf32>
    %170 = arith.truncf %169 : vector<64x256xf32> to vector<64x256xbf16>
    %c0_70 = arith.constant 0 : index
    %c0_71 = arith.constant 0 : index
    %c0_72 = arith.constant 0 : index
    %171 = vector.load %arg12[%c0_70, %c0_71, %c0_72] : memref<2x256x64xbf16, #tpu.memory_space<vmem>>, vector<1x256x64xbf16>
    %172 = vector.shape_cast %171 : vector<1x256x64xbf16> to vector<256x64xbf16>
    %cst_73 = arith.constant dense<0.000000e+00> : vector<64x64xf32>
    %173 = tpu.matmul %170, %172, %cst_73 {dimension_numbers = #tpu.dot_dimension_numbers<[1], [0], [0], [1], [0, 0, 1, 1], [], []>} : vector<64x256xbf16>, vector<256x64xbf16>, vector<64x64xf32> -> vector<64x64xf32>
    %174 = arith.addf %124, %173 : vector<64x64xf32>
    %c0_74 = arith.constant 0 : index
    %c0_75 = arith.constant 0 : index
    %c0_76 = arith.constant 0 : index
    %175 = vector.load %arg13[%c0_74, %c0_75, %c0_76] : memref<2x1x64xf32, #tpu.memory_space<vmem>>, vector<1x1x64xf32>
    %176 = vector.shape_cast %175 : vector<1x1x64xf32> to vector<1x64xf32>
    %177 = vector.broadcast %176 : vector<1x64xf32> to vector<64x64xf32>
    %178 = arith.addf %174, %177 : vector<64x64xf32>
    %c1 = arith.constant 1 : index
    %c0_77 = arith.constant 0 : index
    %c0_78 = arith.constant 0 : index
    %179 = vector.load %arg2[%c1, %c0_77, %c0_78] : memref<2x1x64xf32, #tpu.memory_space<vmem>>, vector<1x1x64xf32>
    %180 = vector.shape_cast %179 : vector<1x1x64xf32> to vector<1x64xf32>
    %c1_79 = arith.constant 1 : index
    %c0_80 = arith.constant 0 : index
    %c0_81 = arith.constant 0 : index
    %181 = vector.load %arg3[%c1_79, %c0_80, %c0_81] : memref<2x1x64xf32, #tpu.memory_space<vmem>>, vector<1x1x64xf32>
    %182 = vector.shape_cast %181 : vector<1x1x64xf32> to vector<1x64xf32>
    %cst_82 = arith.constant dense<0.000000e+00> : vector<64xf32>
    %183 = vector.multi_reduction <add>, %178, %cst_82 [1] : vector<64x64xf32> to vector<64xf32>
    %184 = vector.shape_cast %183 : vector<64xf32> to vector<64x1xf32>
    %cst_83 = arith.constant 6.400000e+01 : f32
    %185 = vector.broadcast %cst_83 : f32 to vector<64x1xf32>
    %186 = arith.divf %184, %185 : vector<64x1xf32>
    %187 = vector.broadcast %186 : vector<64x1xf32> to vector<64x64xf32>
    %188 = arith.subf %178, %187 : vector<64x64xf32>
    %189 = arith.mulf %188, %188 : vector<64x64xf32>
    %cst_84 = arith.constant dense<0.000000e+00> : vector<64xf32>
    %190 = vector.multi_reduction <add>, %189, %cst_84 [1] : vector<64x64xf32> to vector<64xf32>
    %191 = vector.shape_cast %190 : vector<64xf32> to vector<64x1xf32>
    %cst_85 = arith.constant 6.400000e+01 : f32
    %192 = vector.broadcast %cst_85 : f32 to vector<64x1xf32>
    %193 = arith.divf %191, %192 : vector<64x1xf32>
    %cst_86 = arith.constant 9.99999974E-6 : f32
    %194 = vector.broadcast %cst_86 : f32 to vector<64x1xf32>
    %195 = arith.addf %193, %194 : vector<64x1xf32>
    %196 = math.rsqrt %195 : vector<64x1xf32>
    %197 = vector.broadcast %196 : vector<64x1xf32> to vector<64x64xf32>
    %198 = arith.mulf %188, %197 : vector<64x64xf32>
    %199 = vector.broadcast %180 : vector<1x64xf32> to vector<64x64xf32>
    %200 = arith.mulf %198, %199 : vector<64x64xf32>
    %201 = vector.broadcast %182 : vector<1x64xf32> to vector<64x64xf32>
    %202 = arith.addf %200, %201 : vector<64x64xf32>
    %203 = arith.truncf %202 : vector<64x64xf32> to vector<64x64xbf16>
    %c1_87 = arith.constant 1 : index
    %c0_88 = arith.constant 0 : index
    %c0_89 = arith.constant 0 : index
    %204 = vector.load %arg4[%c1_87, %c0_88, %c0_89] : memref<2x64x192xbf16, #tpu.memory_space<vmem>>, vector<1x64x192xbf16>
    %205 = vector.shape_cast %204 : vector<1x64x192xbf16> to vector<64x192xbf16>
    %cst_90 = arith.constant dense<0.000000e+00> : vector<64x192xf32>
    %206 = tpu.matmul %203, %205, %cst_90 {dimension_numbers = #tpu.dot_dimension_numbers<[1], [0], [0], [1], [0, 0, 1, 1], [], []>} : vector<64x64xbf16>, vector<64x192xbf16>, vector<64x192xf32> -> vector<64x192xf32>
    %c1_91 = arith.constant 1 : index
    %c0_92 = arith.constant 0 : index
    %c0_93 = arith.constant 0 : index
    %207 = vector.load %arg5[%c1_91, %c0_92, %c0_93] : memref<2x1x192xf32, #tpu.memory_space<vmem>>, vector<1x1x192xf32>
    %208 = vector.shape_cast %207 : vector<1x1x192xf32> to vector<1x192xf32>
    %209 = vector.broadcast %208 : vector<1x192xf32> to vector<64x192xf32>
    %210 = arith.addf %206, %209 : vector<64x192xf32>
    %211 = vector.extract_strided_slice %210 {offsets = [0, 0], sizes = [64, 64], strides = [1, 1]} : vector<64x192xf32> to vector<64x64xf32>
    %212 = vector.extract_strided_slice %210 {offsets = [0, 64], sizes = [64, 64], strides = [1, 1]} : vector<64x192xf32> to vector<64x64xf32>
    %213 = vector.extract_strided_slice %210 {offsets = [0, 128], sizes = [64, 64], strides = [1, 1]} : vector<64x192xf32> to vector<64x64xf32>
    %214 = vector.extract_strided_slice %211 {offsets = [0, 0], sizes = [64, 16], strides = [1, 1]} : vector<64x64xf32> to vector<64x16xf32>
    %215 = vector.extract_strided_slice %212 {offsets = [0, 0], sizes = [64, 16], strides = [1, 1]} : vector<64x64xf32> to vector<64x16xf32>
    %216 = vector.extract_strided_slice %213 {offsets = [0, 0], sizes = [64, 16], strides = [1, 1]} : vector<64x64xf32> to vector<64x16xf32>
    %cst_94 = arith.constant dense<0.000000e+00> : vector<64x64xf32>
    %217 = tpu.matmul %214, %215, %cst_94 {dimension_numbers = #tpu.dot_dimension_numbers<[1], [1], [0], [0], [0, 0, 1, 0], [], []>} : vector<64x16xf32>, vector<64x16xf32>, vector<64x64xf32> -> vector<64x64xf32>
    %cst_95 = arith.constant 2.500000e-01 : f32
    %218 = vector.broadcast %cst_95 : f32 to vector<64x64xf32>
    %219 = arith.mulf %217, %218 : vector<64x64xf32>
    %220 = arith.addf %219, %7 : vector<64x64xf32>
    %cst_96 = arith.constant dense<0xFF800000> : vector<64xf32>
    %221 = vector.multi_reduction <maximumf>, %220, %cst_96 [1] : vector<64x64xf32> to vector<64xf32>
    %222 = vector.shape_cast %221 : vector<64xf32> to vector<64x1xf32>
    %223 = vector.broadcast %222 : vector<64x1xf32> to vector<64x64xf32>
    %224 = arith.subf %220, %223 : vector<64x64xf32>
    %225 = math.exp %224 : vector<64x64xf32>
    %cst_97 = arith.constant dense<0.000000e+00> : vector<64xf32>
    %226 = vector.multi_reduction <add>, %225, %cst_97 [1] : vector<64x64xf32> to vector<64xf32>
    %227 = vector.shape_cast %226 : vector<64xf32> to vector<64x1xf32>
    %228 = tpu.reciprocal %227 {approx = true} : vector<64x1xf32> -> vector<64x1xf32>
    %229 = vector.broadcast %228 : vector<64x1xf32> to vector<64x64xf32>
    %230 = arith.mulf %225, %229 : vector<64x64xf32>
    %cst_98 = arith.constant dense<0.000000e+00> : vector<64x16xf32>
    %231 = tpu.matmul %230, %216, %cst_98 {dimension_numbers = #tpu.dot_dimension_numbers<[1], [0], [0], [1], [0, 0, 1, 1], [], []>} : vector<64x64xf32>, vector<64x16xf32>, vector<64x16xf32> -> vector<64x16xf32>
    %232 = vector.extract_strided_slice %211 {offsets = [0, 16], sizes = [64, 16], strides = [1, 1]} : vector<64x64xf32> to vector<64x16xf32>
    %233 = vector.extract_strided_slice %212 {offsets = [0, 16], sizes = [64, 16], strides = [1, 1]} : vector<64x64xf32> to vector<64x16xf32>
    %234 = vector.extract_strided_slice %213 {offsets = [0, 16], sizes = [64, 16], strides = [1, 1]} : vector<64x64xf32> to vector<64x16xf32>
    %cst_99 = arith.constant dense<0.000000e+00> : vector<64x64xf32>
    %235 = tpu.matmul %232, %233, %cst_99 {dimension_numbers = #tpu.dot_dimension_numbers<[1], [1], [0], [0], [0, 0, 1, 0], [], []>} : vector<64x16xf32>, vector<64x16xf32>, vector<64x64xf32> -> vector<64x64xf32>
    %cst_100 = arith.constant 2.500000e-01 : f32
    %236 = vector.broadcast %cst_100 : f32 to vector<64x64xf32>
    %237 = arith.mulf %235, %236 : vector<64x64xf32>
    %238 = arith.addf %237, %7 : vector<64x64xf32>
    %cst_101 = arith.constant dense<0xFF800000> : vector<64xf32>
    %239 = vector.multi_reduction <maximumf>, %238, %cst_101 [1] : vector<64x64xf32> to vector<64xf32>
    %240 = vector.shape_cast %239 : vector<64xf32> to vector<64x1xf32>
    %241 = vector.broadcast %240 : vector<64x1xf32> to vector<64x64xf32>
    %242 = arith.subf %238, %241 : vector<64x64xf32>
    %243 = math.exp %242 : vector<64x64xf32>
    %cst_102 = arith.constant dense<0.000000e+00> : vector<64xf32>
    %244 = vector.multi_reduction <add>, %243, %cst_102 [1] : vector<64x64xf32> to vector<64xf32>
    %245 = vector.shape_cast %244 : vector<64xf32> to vector<64x1xf32>
    %246 = tpu.reciprocal %245 {approx = true} : vector<64x1xf32> -> vector<64x1xf32>
    %247 = vector.broadcast %246 : vector<64x1xf32> to vector<64x64xf32>
    %248 = arith.mulf %243, %247 : vector<64x64xf32>
    %cst_103 = arith.constant dense<0.000000e+00> : vector<64x16xf32>
    %249 = tpu.matmul %248, %234, %cst_103 {dimension_numbers = #tpu.dot_dimension_numbers<[1], [0], [0], [1], [0, 0, 1, 1], [], []>} : vector<64x64xf32>, vector<64x16xf32>, vector<64x16xf32> -> vector<64x16xf32>
    %250 = vector.extract_strided_slice %211 {offsets = [0, 32], sizes = [64, 16], strides = [1, 1]} : vector<64x64xf32> to vector<64x16xf32>
    %251 = vector.extract_strided_slice %212 {offsets = [0, 32], sizes = [64, 16], strides = [1, 1]} : vector<64x64xf32> to vector<64x16xf32>
    %252 = vector.extract_strided_slice %213 {offsets = [0, 32], sizes = [64, 16], strides = [1, 1]} : vector<64x64xf32> to vector<64x16xf32>
    %cst_104 = arith.constant dense<0.000000e+00> : vector<64x64xf32>
    %253 = tpu.matmul %250, %251, %cst_104 {dimension_numbers = #tpu.dot_dimension_numbers<[1], [1], [0], [0], [0, 0, 1, 0], [], []>} : vector<64x16xf32>, vector<64x16xf32>, vector<64x64xf32> -> vector<64x64xf32>
    %cst_105 = arith.constant 2.500000e-01 : f32
    %254 = vector.broadcast %cst_105 : f32 to vector<64x64xf32>
    %255 = arith.mulf %253, %254 : vector<64x64xf32>
    %256 = arith.addf %255, %7 : vector<64x64xf32>
    %cst_106 = arith.constant dense<0xFF800000> : vector<64xf32>
    %257 = vector.multi_reduction <maximumf>, %256, %cst_106 [1] : vector<64x64xf32> to vector<64xf32>
    %258 = vector.shape_cast %257 : vector<64xf32> to vector<64x1xf32>
    %259 = vector.broadcast %258 : vector<64x1xf32> to vector<64x64xf32>
    %260 = arith.subf %256, %259 : vector<64x64xf32>
    %261 = math.exp %260 : vector<64x64xf32>
    %cst_107 = arith.constant dense<0.000000e+00> : vector<64xf32>
    %262 = vector.multi_reduction <add>, %261, %cst_107 [1] : vector<64x64xf32> to vector<64xf32>
    %263 = vector.shape_cast %262 : vector<64xf32> to vector<64x1xf32>
    %264 = tpu.reciprocal %263 {approx = true} : vector<64x1xf32> -> vector<64x1xf32>
    %265 = vector.broadcast %264 : vector<64x1xf32> to vector<64x64xf32>
    %266 = arith.mulf %261, %265 : vector<64x64xf32>
    %cst_108 = arith.constant dense<0.000000e+00> : vector<64x16xf32>
    %267 = tpu.matmul %266, %252, %cst_108 {dimension_numbers = #tpu.dot_dimension_numbers<[1], [0], [0], [1], [0, 0, 1, 1], [], []>} : vector<64x64xf32>, vector<64x16xf32>, vector<64x16xf32> -> vector<64x16xf32>
    %268 = vector.extract_strided_slice %211 {offsets = [0, 48], sizes = [64, 16], strides = [1, 1]} : vector<64x64xf32> to vector<64x16xf32>
    %269 = vector.extract_strided_slice %212 {offsets = [0, 48], sizes = [64, 16], strides = [1, 1]} : vector<64x64xf32> to vector<64x16xf32>
    %270 = vector.extract_strided_slice %213 {offsets = [0, 48], sizes = [64, 16], strides = [1, 1]} : vector<64x64xf32> to vector<64x16xf32>
    %cst_109 = arith.constant dense<0.000000e+00> : vector<64x64xf32>
    %271 = tpu.matmul %268, %269, %cst_109 {dimension_numbers = #tpu.dot_dimension_numbers<[1], [1], [0], [0], [0, 0, 1, 0], [], []>} : vector<64x16xf32>, vector<64x16xf32>, vector<64x64xf32> -> vector<64x64xf32>
    %cst_110 = arith.constant 2.500000e-01 : f32
    %272 = vector.broadcast %cst_110 : f32 to vector<64x64xf32>
    %273 = arith.mulf %271, %272 : vector<64x64xf32>
    %274 = arith.addf %273, %7 : vector<64x64xf32>
    %cst_111 = arith.constant dense<0xFF800000> : vector<64xf32>
    %275 = vector.multi_reduction <maximumf>, %274, %cst_111 [1] : vector<64x64xf32> to vector<64xf32>
    %276 = vector.shape_cast %275 : vector<64xf32> to vector<64x1xf32>
    %277 = vector.broadcast %276 : vector<64x1xf32> to vector<64x64xf32>
    %278 = arith.subf %274, %277 : vector<64x64xf32>
    %279 = math.exp %278 : vector<64x64xf32>
    %cst_112 = arith.constant dense<0.000000e+00> : vector<64xf32>
    %280 = vector.multi_reduction <add>, %279, %cst_112 [1] : vector<64x64xf32> to vector<64xf32>
    %281 = vector.shape_cast %280 : vector<64xf32> to vector<64x1xf32>
    %282 = tpu.reciprocal %281 {approx = true} : vector<64x1xf32> -> vector<64x1xf32>
    %283 = vector.broadcast %282 : vector<64x1xf32> to vector<64x64xf32>
    %284 = arith.mulf %279, %283 : vector<64x64xf32>
    %cst_113 = arith.constant dense<0.000000e+00> : vector<64x16xf32>
    %285 = tpu.matmul %284, %270, %cst_113 {dimension_numbers = #tpu.dot_dimension_numbers<[1], [0], [0], [1], [0, 0, 1, 1], [], []>} : vector<64x64xf32>, vector<64x16xf32>, vector<64x16xf32> -> vector<64x16xf32>
    %286 = tpu.concatenate %231, %249, %267, %285 in 1 : vector<64x16xf32>, vector<64x16xf32>, vector<64x16xf32>, vector<64x16xf32> -> vector<64x64xf32>
    %287 = arith.truncf %286 : vector<64x64xf32> to vector<64x64xbf16>
    %c1_114 = arith.constant 1 : index
    %c0_115 = arith.constant 0 : index
    %c0_116 = arith.constant 0 : index
    %288 = vector.load %arg6[%c1_114, %c0_115, %c0_116] : memref<2x64x64xbf16, #tpu.memory_space<vmem>>, vector<1x64x64xbf16>
    %289 = vector.shape_cast %288 : vector<1x64x64xbf16> to vector<64x64xbf16>
    %cst_117 = arith.constant dense<0.000000e+00> : vector<64x64xf32>
    %290 = tpu.matmul %287, %289, %cst_117 {dimension_numbers = #tpu.dot_dimension_numbers<[1], [0], [0], [1], [0, 0, 1, 1], [], []>} : vector<64x64xbf16>, vector<64x64xbf16>, vector<64x64xf32> -> vector<64x64xf32>
    %291 = arith.addf %178, %290 : vector<64x64xf32>
    %c1_118 = arith.constant 1 : index
    %c0_119 = arith.constant 0 : index
    %c0_120 = arith.constant 0 : index
    %292 = vector.load %arg7[%c1_118, %c0_119, %c0_120] : memref<2x1x64xf32, #tpu.memory_space<vmem>>, vector<1x1x64xf32>
    %293 = vector.shape_cast %292 : vector<1x1x64xf32> to vector<1x64xf32>
    %294 = vector.broadcast %293 : vector<1x64xf32> to vector<64x64xf32>
    %295 = arith.addf %291, %294 : vector<64x64xf32>
    %c1_121 = arith.constant 1 : index
    %c0_122 = arith.constant 0 : index
    %c0_123 = arith.constant 0 : index
    %296 = vector.load %arg8[%c1_121, %c0_122, %c0_123] : memref<2x1x64xf32, #tpu.memory_space<vmem>>, vector<1x1x64xf32>
    %297 = vector.shape_cast %296 : vector<1x1x64xf32> to vector<1x64xf32>
    %c1_124 = arith.constant 1 : index
    %c0_125 = arith.constant 0 : index
    %c0_126 = arith.constant 0 : index
    %298 = vector.load %arg9[%c1_124, %c0_125, %c0_126] : memref<2x1x64xf32, #tpu.memory_space<vmem>>, vector<1x1x64xf32>
    %299 = vector.shape_cast %298 : vector<1x1x64xf32> to vector<1x64xf32>
    %cst_127 = arith.constant dense<0.000000e+00> : vector<64xf32>
    %300 = vector.multi_reduction <add>, %295, %cst_127 [1] : vector<64x64xf32> to vector<64xf32>
    %301 = vector.shape_cast %300 : vector<64xf32> to vector<64x1xf32>
    %cst_128 = arith.constant 6.400000e+01 : f32
    %302 = vector.broadcast %cst_128 : f32 to vector<64x1xf32>
    %303 = arith.divf %301, %302 : vector<64x1xf32>
    %304 = vector.broadcast %303 : vector<64x1xf32> to vector<64x64xf32>
    %305 = arith.subf %295, %304 : vector<64x64xf32>
    %306 = arith.mulf %305, %305 : vector<64x64xf32>
    %cst_129 = arith.constant dense<0.000000e+00> : vector<64xf32>
    %307 = vector.multi_reduction <add>, %306, %cst_129 [1] : vector<64x64xf32> to vector<64xf32>
    %308 = vector.shape_cast %307 : vector<64xf32> to vector<64x1xf32>
    %cst_130 = arith.constant 6.400000e+01 : f32
    %309 = vector.broadcast %cst_130 : f32 to vector<64x1xf32>
    %310 = arith.divf %308, %309 : vector<64x1xf32>
    %cst_131 = arith.constant 9.99999974E-6 : f32
    %311 = vector.broadcast %cst_131 : f32 to vector<64x1xf32>
    %312 = arith.addf %310, %311 : vector<64x1xf32>
    %313 = math.rsqrt %312 : vector<64x1xf32>
    %314 = vector.broadcast %313 : vector<64x1xf32> to vector<64x64xf32>
    %315 = arith.mulf %305, %314 : vector<64x64xf32>
    %316 = vector.broadcast %297 : vector<1x64xf32> to vector<64x64xf32>
    %317 = arith.mulf %315, %316 : vector<64x64xf32>
    %318 = vector.broadcast %299 : vector<1x64xf32> to vector<64x64xf32>
    %319 = arith.addf %317, %318 : vector<64x64xf32>
    %320 = arith.truncf %319 : vector<64x64xf32> to vector<64x64xbf16>
    %c1_132 = arith.constant 1 : index
    %c0_133 = arith.constant 0 : index
    %c0_134 = arith.constant 0 : index
    %321 = vector.load %arg10[%c1_132, %c0_133, %c0_134] : memref<2x64x256xbf16, #tpu.memory_space<vmem>>, vector<1x64x256xbf16>
    %322 = vector.shape_cast %321 : vector<1x64x256xbf16> to vector<64x256xbf16>
    %cst_135 = arith.constant dense<0.000000e+00> : vector<64x256xf32>
    %323 = tpu.matmul %320, %322, %cst_135 {dimension_numbers = #tpu.dot_dimension_numbers<[1], [0], [0], [1], [0, 0, 1, 1], [], []>} : vector<64x64xbf16>, vector<64x256xbf16>, vector<64x256xf32> -> vector<64x256xf32>
    %c1_136 = arith.constant 1 : index
    %c0_137 = arith.constant 0 : index
    %c0_138 = arith.constant 0 : index
    %324 = vector.load %arg11[%c1_136, %c0_137, %c0_138] : memref<2x1x256xf32, #tpu.memory_space<vmem>>, vector<1x1x256xf32>
    %325 = vector.shape_cast %324 : vector<1x1x256xf32> to vector<1x256xf32>
    %326 = vector.broadcast %325 : vector<1x256xf32> to vector<64x256xf32>
    %327 = arith.addf %323, %326 : vector<64x256xf32>
    %328 = arith.mulf %327, %327 : vector<64x256xf32>
    %329 = arith.mulf %327, %328 : vector<64x256xf32>
    %cst_139 = arith.constant 4.471500e-02 : f32
    %330 = vector.broadcast %cst_139 : f32 to vector<64x256xf32>
    %331 = arith.mulf %330, %329 : vector<64x256xf32>
    %332 = arith.addf %327, %331 : vector<64x256xf32>
    %cst_140 = arith.constant 0.797884583 : f32
    %333 = vector.broadcast %cst_140 : f32 to vector<64x256xf32>
    %334 = arith.mulf %333, %332 : vector<64x256xf32>
    %335 = math.tanh %334 : vector<64x256xf32>
    %cst_141 = arith.constant 1.000000e+00 : f32
    %336 = vector.broadcast %cst_141 : f32 to vector<64x256xf32>
    %337 = arith.addf %336, %335 : vector<64x256xf32>
    %cst_142 = arith.constant 5.000000e-01 : f32
    %338 = vector.broadcast %cst_142 : f32 to vector<64x256xf32>
    %339 = arith.mulf %338, %337 : vector<64x256xf32>
    %340 = arith.mulf %327, %339 : vector<64x256xf32>
    %341 = arith.truncf %340 : vector<64x256xf32> to vector<64x256xbf16>
    %c1_143 = arith.constant 1 : index
    %c0_144 = arith.constant 0 : index
    %c0_145 = arith.constant 0 : index
    %342 = vector.load %arg12[%c1_143, %c0_144, %c0_145] : memref<2x256x64xbf16, #tpu.memory_space<vmem>>, vector<1x256x64xbf16>
    %343 = vector.shape_cast %342 : vector<1x256x64xbf16> to vector<256x64xbf16>
    %cst_146 = arith.constant dense<0.000000e+00> : vector<64x64xf32>
    %344 = tpu.matmul %341, %343, %cst_146 {dimension_numbers = #tpu.dot_dimension_numbers<[1], [0], [0], [1], [0, 0, 1, 1], [], []>} : vector<64x256xbf16>, vector<256x64xbf16>, vector<64x64xf32> -> vector<64x64xf32>
    %345 = arith.addf %295, %344 : vector<64x64xf32>
    %c1_147 = arith.constant 1 : index
    %c0_148 = arith.constant 0 : index
    %c0_149 = arith.constant 0 : index
    %346 = vector.load %arg13[%c1_147, %c0_148, %c0_149] : memref<2x1x64xf32, #tpu.memory_space<vmem>>, vector<1x1x64xf32>
    %347 = vector.shape_cast %346 : vector<1x1x64xf32> to vector<1x64xf32>
    %348 = vector.broadcast %347 : vector<1x64xf32> to vector<64x64xf32>
    %349 = arith.addf %345, %348 : vector<64x64xf32>
    %c0_150 = arith.constant 0 : index
    %c0_151 = arith.constant 0 : index
    %350 = vector.load %arg14[%c0_150, %c0_151] : memref<1x64xf32, #tpu.memory_space<vmem>>, vector<1x64xf32>
    %c0_152 = arith.constant 0 : index
    %c0_153 = arith.constant 0 : index
    %351 = vector.load %arg15[%c0_152, %c0_153] : memref<1x64xf32, #tpu.memory_space<vmem>>, vector<1x64xf32>
    %cst_154 = arith.constant dense<0.000000e+00> : vector<64xf32>
    %352 = vector.multi_reduction <add>, %349, %cst_154 [1] : vector<64x64xf32> to vector<64xf32>
    %353 = vector.shape_cast %352 : vector<64xf32> to vector<64x1xf32>
    %cst_155 = arith.constant 6.400000e+01 : f32
    %354 = vector.broadcast %cst_155 : f32 to vector<64x1xf32>
    %355 = arith.divf %353, %354 : vector<64x1xf32>
    %356 = vector.broadcast %355 : vector<64x1xf32> to vector<64x64xf32>
    %357 = arith.subf %349, %356 : vector<64x64xf32>
    %358 = arith.mulf %357, %357 : vector<64x64xf32>
    %cst_156 = arith.constant dense<0.000000e+00> : vector<64xf32>
    %359 = vector.multi_reduction <add>, %358, %cst_156 [1] : vector<64x64xf32> to vector<64xf32>
    %360 = vector.shape_cast %359 : vector<64xf32> to vector<64x1xf32>
    %cst_157 = arith.constant 6.400000e+01 : f32
    %361 = vector.broadcast %cst_157 : f32 to vector<64x1xf32>
    %362 = arith.divf %360, %361 : vector<64x1xf32>
    %cst_158 = arith.constant 9.99999974E-6 : f32
    %363 = vector.broadcast %cst_158 : f32 to vector<64x1xf32>
    %364 = arith.addf %362, %363 : vector<64x1xf32>
    %365 = math.rsqrt %364 : vector<64x1xf32>
    %366 = vector.broadcast %365 : vector<64x1xf32> to vector<64x64xf32>
    %367 = arith.mulf %357, %366 : vector<64x64xf32>
    %368 = vector.broadcast %350 : vector<1x64xf32> to vector<64x64xf32>
    %369 = arith.mulf %367, %368 : vector<64x64xf32>
    %370 = vector.broadcast %351 : vector<1x64xf32> to vector<64x64xf32>
    %371 = arith.addf %369, %370 : vector<64x64xf32>
    %372 = arith.truncf %371 : vector<64x64xf32> to vector<64x64xbf16>
    %c0_159 = arith.constant 0 : index
    %c0_160 = arith.constant 0 : index
    %373 = vector.load %arg16[%c0_159, %c0_160] : memref<64x256xbf16, #tpu.memory_space<vmem>>, vector<64x256xbf16>
    %cst_161 = arith.constant dense<0.000000e+00> : vector<64x256xf32>
    %374 = tpu.matmul %372, %373, %cst_161 {dimension_numbers = #tpu.dot_dimension_numbers<[1], [0], [0], [1], [0, 0, 1, 1], [], []>} : vector<64x64xbf16>, vector<64x256xbf16>, vector<64x256xf32> -> vector<64x256xf32>
    %c0_162 = arith.constant 0 : index
    %c0_163 = arith.constant 0 : index
    %375 = vector.load %arg17[%c0_162, %c0_163] : memref<1x256xf32, #tpu.memory_space<vmem>>, vector<1x256xf32>
    %376 = vector.broadcast %375 : vector<1x256xf32> to vector<64x256xf32>
    %377 = arith.addf %374, %376 : vector<64x256xf32>
    %c0_164 = arith.constant 0 : index
    %c0_165 = arith.constant 0 : index
    %c0_166 = arith.constant 0 : index
    %378 = vector.load %arg18[%c0_164, %c0_165, %c0_166] : memref<1x64x256xf32, #tpu.memory_space<vmem>>, vector<1x64x256xf32>
    %379 = vector.shape_cast %378 : vector<1x64x256xf32> to vector<64x256xf32>
    %380 = vector.shape_cast %377 : vector<64x256xf32> to vector<1x64x256xf32>
    tpu.vector_store %arg18[%c0_164, %c0_165, %c0_166], %380 {strides = array<i32>} : memref<1x64x256xf32, #tpu.memory_space<vmem>>, vector<1x64x256xf32>,
    return
  }
  func.func @transform_0(%arg0: i32) -> (i32, i32, i32) {
    %c0_i32 = arith.constant 0 : i32
    %c0_i32_0 = arith.constant 0 : i32
    %c0_i32_1 = arith.constant 0 : i32
    return %arg0, %c0_i32, %c0_i32_0 : i32, i32, i32
  }
  func.func @transform_1(%arg0: i32) -> (i32, i32, i32) {
    %c0_i32 = arith.constant 0 : i32
    %c0_i32_0 = arith.constant 0 : i32
    %c0_i32_1 = arith.constant 0 : i32
    %c0_i32_2 = arith.constant 0 : i32
    return %c0_i32, %c0_i32_0, %c0_i32_1 : i32, i32, i32
  }
  func.func @transform_2(%arg0: i32) -> (i32, i32, i32) {
    %c0_i32 = arith.constant 0 : i32
    %c0_i32_0 = arith.constant 0 : i32
    %c0_i32_1 = arith.constant 0 : i32
    %c0_i32_2 = arith.constant 0 : i32
    return %c0_i32, %c0_i32_0, %c0_i32_1 : i32, i32, i32
  }
  func.func @transform_3(%arg0: i32) -> (i32, i32, i32) {
    %c0_i32 = arith.constant 0 : i32
    %c0_i32_0 = arith.constant 0 : i32
    %c0_i32_1 = arith.constant 0 : i32
    %c0_i32_2 = arith.constant 0 : i32
    return %c0_i32, %c0_i32_0, %c0_i32_1 : i32, i32, i32
  }
  func.func @transform_4(%arg0: i32) -> (i32, i32, i32) {
    %c0_i32 = arith.constant 0 : i32
    %c0_i32_0 = arith.constant 0 : i32
    %c0_i32_1 = arith.constant 0 : i32
    %c0_i32_2 = arith.constant 0 : i32
    return %c0_i32, %c0_i32_0, %c0_i32_1 : i32, i32, i32
  }
  func.func @transform_5(%arg0: i32) -> (i32, i32, i32) {
    %c0_i32 = arith.constant 0 : i32
    %c0_i32_0 = arith.constant 0 : i32
    %c0_i32_1 = arith.constant 0 : i32
    %c0_i32_2 = arith.constant 0 : i32
    return %c0_i32, %c0_i32_0, %c0_i32_1 : i32, i32, i32
  }
  func.func @transform_6(%arg0: i32) -> (i32, i32, i32) {
    %c0_i32 = arith.constant 0 : i32
    %c0_i32_0 = arith.constant 0 : i32
    %c0_i32_1 = arith.constant 0 : i32
    %c0_i32_2 = arith.constant 0 : i32
    return %c0_i32, %c0_i32_0, %c0_i32_1 : i32, i32, i32
  }
  func.func @transform_7(%arg0: i32) -> (i32, i32, i32) {
    %c0_i32 = arith.constant 0 : i32
    %c0_i32_0 = arith.constant 0 : i32
    %c0_i32_1 = arith.constant 0 : i32
    %c0_i32_2 = arith.constant 0 : i32
    return %c0_i32, %c0_i32_0, %c0_i32_1 : i32, i32, i32
  }
  func.func @transform_8(%arg0: i32) -> (i32, i32, i32) {
    %c0_i32 = arith.constant 0 : i32
    %c0_i32_0 = arith.constant 0 : i32
    %c0_i32_1 = arith.constant 0 : i32
    %c0_i32_2 = arith.constant 0 : i32
    return %c0_i32, %c0_i32_0, %c0_i32_1 : i32, i32, i32
  }
  func.func @transform_9(%arg0: i32) -> (i32, i32, i32) {
    %c0_i32 = arith.constant 0 : i32
    %c0_i32_0 = arith.constant 0 : i32
    %c0_i32_1 = arith.constant 0 : i32
    %c0_i32_2 = arith.constant 0 : i32
    return %c0_i32, %c0_i32_0, %c0_i32_1 : i32, i32, i32
  }
  func.func @transform_10(%arg0: i32) -> (i32, i32, i32) {
    %c0_i32 = arith.constant 0 : i32
    %c0_i32_0 = arith.constant 0 : i32
    %c0_i32_1 = arith.constant 0 : i32
    %c0_i32_2 = arith.constant 0 : i32
    return %c0_i32, %c0_i32_0, %c0_i32_1 : i32, i32, i32
  }
  func.func @transform_11(%arg0: i32) -> (i32, i32, i32) {
    %c0_i32 = arith.constant 0 : i32
    %c0_i32_0 = arith.constant 0 : i32
    %c0_i32_1 = arith.constant 0 : i32
    %c0_i32_2 = arith.constant 0 : i32
    return %c0_i32, %c0_i32_0, %c0_i32_1 : i32, i32, i32
  }
  func.func @transform_12(%arg0: i32) -> (i32, i32, i32) {
    %c0_i32 = arith.constant 0 : i32
    %c0_i32_0 = arith.constant 0 : i32
    %c0_i32_1 = arith.constant 0 : i32
    %c0_i32_2 = arith.constant 0 : i32
    return %c0_i32, %c0_i32_0, %c0_i32_1 : i32, i32, i32
  }
  func.func @transform_13(%arg0: i32) -> (i32, i32) {
    %c0_i32 = arith.constant 0 : i32
    %c0_i32_0 = arith.constant 0 : i32
    %c0_i32_1 = arith.constant 0 : i32
    return %c0_i32, %c0_i32_0 : i32, i32
  }
  func.func @transform_14(%arg0: i32) -> (i32, i32) {
    %c0_i32 = arith.constant 0 : i32
    %c0_i32_0 = arith.constant 0 : i32
    %c0_i32_1 = arith.constant 0 : i32
    return %c0_i32, %c0_i32_0 : i32, i32
  }
  func.func @transform_15(%arg0: i32) -> (i32, i32) {
    %c0_i32 = arith.constant 0 : i32
    %c0_i32_0 = arith.constant 0 : i32
    %c0_i32_1 = arith.constant 0 : i32
    return %c0_i32, %c0_i32_0 : i32, i32
  }
  func.func @transform_16(%arg0: i32) -> (i32, i32) {
    %c0_i32 = arith.constant 0 : i32
    %c0_i32_0 = arith.constant 0 : i32
    %c0_i32_1 = arith.constant 0 : i32
    return %c0_i32, %c0_i32_0 : i32, i32
  }
  func.func @transform_17(%arg0: i32) -> (i32, i32, i32) {
    %c0_i32 = arith.constant 0 : i32
    %c0_i32_0 = arith.constant 0 : i32
    %c0_i32_1 = arith.constant 0 : i32
    return %arg0, %c0_i32, %c0_i32_0 : i32, i32, i32
  }
}

</mosaic_0001>

<llo_original>
// kernel: squeeze.3
$region0: #{squeeze.3}
  %s0 = inlined_call_operand.vmem [shape: s32[128], index: 0, kind: input, shape index: {}]
  %s1 = inlined_call_operand.vmem [shape: s32[2,64], index: 1, kind: output, shape index: {}]
  $region1: #{squeeze.3} parent=0
    #allocation0 [shape = 'u8[4096]{0}', space=vmem, size = 0x1000, scoped, tag = 'scoped mem for output reshape']
    #allocation1 [shape = 'u8[4096]{0}', space=vmem, size = 0x1000, scoped, tag = 'scoped mem for input reshape']
    %s3 = sshllo.u32 0, 1
    %v4 = vld [vmem:[%s0] sm:%s3]
    %5 = vst [vmem:[#allocation1] sm:%s3] %v4
    %v6 = vld [vmem:[#allocation1] sm:$0x1]
    %vm7 = vcmask 523264
    %8 = vst.msk [vmem:[#allocation0] sm:$0x1] %vm7, %v6
    %v9 = vld [vmem:[#allocation1] sm:$0x1]
    %10 = vrot.lane.b32.xlu0 %v9, 64
    %v11 = vpop.permute.xlu0 %10
    %vm12 = vcmask 523264
    %s13 = scalar_lea.vmem [#allocation0], 1
    %14 = vst.msk [vmem:[%s13] sm:$0x1] %vm12, %v11
    %s16 = sshllo.u32 0, 2
    %v18 = vld [vmem:[#allocation0] sm:%s16]
    %s19 = sshllo.u32 0, 2
    %20 = vst [vmem:[%s1] sm:%s19] %v18

// kernel: forward.2
$region0: #{forward.2}
  #allocation0 [shape = 'u32[]', space=smem, size = 0x4, offset = 0x4, fixed_abs, tag = 'smem constant byte address 0x4 - core index']
  #allocation1 [shape = 'u32[144,128]{1,0:T(1,128)}', space=vmem, size = 0x12000, scoped, tag = 'internal scratch']
  %s0 = inlined_call_operand.vmem [shape: f32[128,32], index: 0, kind: input, shape index: {}]
  %s1 = inlined_call_operand.vmem [shape: bf16[32,512], index: 1, kind: input, shape index: {}]
  %s2 = inlined_call_operand.vmem [shape: f32[1,512], index: 2, kind: input, shape index: {}]
  %s3 = inlined_call_operand.vmem [shape: bf16[512,32], index: 3, kind: input, shape index: {}]
  %s4 = inlined_call_operand.vmem [shape: f32[1,32], index: 4, kind: input, shape index: {}]
  %s5 = inlined_call_operand.vmem [shape: f32[128,32], index: 5, kind: input, shape index: {}]
  %s6 = inlined_call_operand.vmem [shape: s32[128,1], index: 6, kind: output, shape index: {}]
  %s7 = sld [smem:[#allocation0]]
  $region57: #{forward.2} parent=0
    _
  %s9 = ssub.s32 1, %s7
  %s10 = scalar_select 0, %s9, %s7
  loop: start=0, step=1, limit=4
  $region2: #{forward.2} parent=0 // loop_pre_header
    _
  $region3: #{forward.2} parent=0 // loop_header
    %s12 = sphi 0, %s16
    %p13 = scmp.ge.s32.totalorder %s12, 4
    %s22 = sphi 0, %s24
    %s25 = sphi 0, %s22
    %s26 = sphi 0, %s25
    %s42 = sphi 0, %s26
    %s46 = sphi 0, %s46
    %s48 = sphi 0, %s46
    %s49 = sphi 0, %s48
    %s63 = sphi 0, %s49
    %s67 = sphi 0, %s67
    %s69 = sphi 0, %s67
    %s70 = sphi 0, %s69
    %s84 = sphi 0, %s70
    %s88 = sphi 0, %s88
    %s90 = sphi 0, %s88
    %s91 = sphi 0, %s90
    %s105 = sphi 0, %s91
    %s109 = sphi 0, %s109
    %s111 = sphi 0, %s109
    %s112 = sphi 0, %s111
    %s126 = sphi 0, %s112
    %s130 = sphi 0, %s130
    %s132 = sphi 0, %s130
    %s133 = sphi 0, %s132
    %s147 = sphi 0, %s133
    %s153 = sphi 0, %s155
    %s156 = sphi 0, %s153
    %s157 = sphi 0, %s156
    %s173 = sphi 0, %s157
  $region4: #{forward.2} parent=0 // loop_header_branch
    %15 = sbr.rel (%p13) target = $region8
  $region5: #{forward.2} parent=0 // loop_body
    %s17 = ssub.s32 %s12, 1
    %s18 = ssub.s32 %s12, 2
    %s19 = sadd.s32 %s12, 1
    %s20 = ssub.s32 %s12, %s19
    %p21 = scmp.eq.s32.totalorder %s20, 0
    %s23 = sadd.s32 %s22, 1
    %s24 = scalar_select %p21, %s22, %s23
    %p27 = pneg %p21
    %p28 = scmp.eq.s32.totalorder %s12, 1
    %p29 = por %p27, %p28
    %p30 = scmp.ne.s32.totalorder %s22, %s25
    %p31 = scmp.eq.s32.totalorder %s12, 0
    %p32 = por %p30, %p31
    %p33 = scmp.ne.s32.totalorder %s22, %s25
    %p34 = scmp.eq.s32.totalorder %s17, 1
    %p35 = por %p33, %p34
    %p36 = scmp.ne.s32.totalorder %s25, %s26
    %p37 = scmp.eq.s32.totalorder %s17, 0
    %p38 = por %p36, %p37
    %p39 = scmp.ne.s32.totalorder %s25, %s26
    %p40 = scmp.eq.s32.totalorder %s18, 1
    %p41 = por %p39, %p40
    %p43 = scmp.ne.s32.totalorder %s26, %s42
    %p44 = scmp.eq.s32.totalorder %s18, 0
    %p45 = por %p43, %p44
    %s47 = sadd.s32 %s46, 1
    %p50 = scmp.eq.s32.totalorder %s12, 1
    %p51 = scmp.ne.s32.totalorder %s46, %s48
    %p52 = scmp.eq.s32.totalorder %s12, 0
    %p53 = por %p51, %p52
    %p54 = scmp.ne.s32.totalorder %s46, %s48
    %p55 = scmp.eq.s32.totalorder %s17, 1
    %p56 = por %p54, %p55
    %p57 = scmp.ne.s32.totalorder %s48, %s49
    %p58 = scmp.eq.s32.totalorder %s17, 0
    %p59 = por %p57, %p58
    %p60 = scmp.ne.s32.totalorder %s48, %s49
    %p61 = scmp.eq.s32.totalorder %s18, 1
    %p62 = por %p60, %p61
    %p64 = scmp.ne.s32.totalorder %s49, %s63
    %p65 = scmp.eq.s32.totalorder %s18, 0
    %p66 = por %p64, %p65
    %s68 = sadd.s32 %s67, 1
    %p71 = scmp.eq.s32.totalorder %s12, 1
    %p72 = scmp.ne.s32.totalorder %s67, %s69
    %p73 = scmp.eq.s32.totalorder %s12, 0
    %p74 = por %p72, %p73
    %p75 = scmp.ne.s32.totalorder %s67, %s69
    %p76 = scmp.eq.s32.totalorder %s17, 1
    %p77 = por %p75, %p76
    %p78 = scmp.ne.s32.totalorder %s69, %s70
    %p79 = scmp.eq.s32.totalorder %s17, 0
    %p80 = por %p78, %p79
    %p81 = scmp.ne.s32.totalorder %s69, %s70
    %p82 = scmp.eq.s32.totalorder %s18, 1
    %p83 = por %p81, %p82
    %p85 = scmp.ne.s32.totalorder %s70, %s84
    %p86 = scmp.eq.s32.totalorder %s18, 0
    %p87 = por %p85, %p86
    %s89 = sadd.s32 %s88, 1
    %p92 = scmp.eq.s32.totalorder %s12, 1
    %p93 = scmp.ne.s32.totalorder %s88, %s90
    %p94 = scmp.eq.s32.totalorder %s12, 0
    %p95 = por %p93, %p94
    %p96 = scmp.ne.s32.totalorder %s88, %s90
    %p97 = scmp.eq.s32.totalorder %s17, 1
    %p98 = por %p96, %p97
    %p99 = scmp.ne.s32.totalorder %s90, %s91
    %p100 = scmp.eq.s32.totalorder %s17, 0
    %p101 = por %p99, %p100
    %p102 = scmp.ne.s32.totalorder %s90, %s91
    %p103 = scmp.eq.s32.totalorder %s18, 1
    %p104 = por %p102, %p103
    %p106 = scmp.ne.s32.totalorder %s91, %s105
    %p107 = scmp.eq.s32.totalorder %s18, 0
    %p108 = por %p106, %p107
    %s110 = sadd.s32 %s109, 1
    %p113 = scmp.eq.s32.totalorder %s12, 1
    %p114 = scmp.ne.s32.totalorder %s109, %s111
    %p115 = scmp.eq.s32.totalorder %s12, 0
    %p116 = por %p114, %p115
    %p117 = scmp.ne.s32.totalorder %s109, %s111
    %p118 = scmp.eq.s32.totalorder %s17, 1
    %p119 = por %p117, %p118
    %p120 = scmp.ne.s32.totalorder %s111, %s112
    %p121 = scmp.eq.s32.totalorder %s17, 0
    %p122 = por %p120, %p121
    %p123 = scmp.ne.s32.totalorder %s111, %s112
    %p124 = scmp.eq.s32.totalorder %s18, 1
    %p125 = por %p123, %p124
    %p127 = scmp.ne.s32.totalorder %s112, %s126
    %p128 = scmp.eq.s32.totalorder %s18, 0
    %p129 = por %p127, %p128
    %s131 = sadd.s32 %s130, 1
    %p134 = scmp.eq.s32.totalorder %s12, 1
    %p135 = scmp.ne.s32.totalorder %s130, %s132
    %p136 = scmp.eq.s32.totalorder %s12, 0
    %p137 = por %p135, %p136
    %p138 = scmp.ne.s32.totalorder %s130, %s132
    %p139 = scmp.eq.s32.totalorder %s17, 1
    %p140 = por %p138, %p139
    %p141 = scmp.ne.s32.totalorder %s132, %s133
    %p142 = scmp.eq.s32.totalorder %s17, 0
    %p143 = por %p141, %p142
    %p144 = scmp.ne.s32.totalorder %s132, %s133
    %p145 = scmp.eq.s32.totalorder %s18, 1
    %p146 = por %p144, %p145
    %p148 = scmp.ne.s32.totalorder %s133, %s147
    %p149 = scmp.eq.s32.totalorder %s18, 0
    %p150 = por %p148, %p149
    %s151 = ssub.s32 %s12, %s19
    %p152 = scmp.eq.s32.totalorder %s151, 0
    %s154 = sadd.s32 %s153, 1
    %s155 = scalar_select %p152, %s153, %s154
    %p158 = pneg %p152
    %p159 = scmp.eq.s32.totalorder %s12, 1
    %p160 = por %p158, %p159
    %p161 = scmp.ne.s32.totalorder %s153, %s156
    %p162 = scmp.eq.s32.totalorder %s12, 0
    %p163 = por %p161, %p162
    %p164 = scmp.ne.s32.totalorder %s153, %s156
    %p165 = scmp.eq.s32.totalorder %s17, 1
    %p166 = por %p164, %p165
    %p167 = scmp.ne.s32.totalorder %s156, %s157
    %p168 = scmp.eq.s32.totalorder %s17, 0
    %p169 = por %p167, %p168
    %p170 = scmp.ne.s32.totalorder %s156, %s157
    %p171 = scmp.eq.s32.totalorder %s18, 1
    %p172 = por %p170, %p171
    %p174 = scmp.ne.s32.totalorder %s157, %s173
    %p175 = scmp.eq.s32.totalorder %s18, 0
    %p176 = por %p174, %p175
    %p177 = scmp.le.s32.totalorder 1, %s12
    %p178 = scmp.lt.s32.totalorder %s12, 3
    %p179 = pnand %p177, %p178
    %p180 = pneg %p179
    // Predicated region
    $region9: #{forward.2} parent=5 // pred_check
      _
    $region10: #{forward.2} parent=5 // pred_check_branch
      %182 = sbr.rel (%p179) target = $region12
    $region11: #{forward.2} parent=5 // pred_region
      %s183 = ssub.s32 %s12, 1
      // Predicated region
      $region13: #{forward.2} parent=11 // pred_check
        %p184 = pneg %p59
      $region14: #{forward.2} parent=11 // pred_check_branch
        %186 = sbr.rel (%p184) target = $region16
      $region15: #{forward.2} parent=11 // pred_region
        _
      $region16: #{forward.2} parent=11 // pred_fallthru
        _
      // Predicated region
      $region17: #{forward.2} parent=11 // pred_check
        %p187 = pneg %p80
      $region18: #{forward.2} parent=11 // pred_check_branch
        %189 = sbr.rel (%p187) target = $region20
      $region19: #{forward.2} parent=11 // pred_region
        _
      $region20: #{forward.2} parent=11 // pred_fallthru
        _
      // Predicated region
      $region21: #{forward.2} parent=11 // pred_check
        %p190 = pneg %p101
      $region22: #{forward.2} parent=11 // pred_check_branch
        %192 = sbr.rel (%p190) target = $region24
      $region23: #{forward.2} parent=11 // pred_region
        _
      $region24: #{forward.2} parent=11 // pred_fallthru
        _
      // Predicated region
      $region25: #{forward.2} parent=11 // pred_check
        %p193 = pneg %p122
      $region26: #{forward.2} parent=11 // pred_check_branch
        %195 = sbr.rel (%p193) target = $region28
      $region27: #{forward.2} parent=11 // pred_region
        _
      $region28: #{forward.2} parent=11 // pred_fallthru
        _
      // Predicated region
      $region29: #{forward.2} parent=11 // pred_check
        %p196 = pneg %p143
      $region30: #{forward.2} parent=11 // pred_check_branch
        %198 = sbr.rel (%p196) target = $region32
      $region31: #{forward.2} parent=11 // pred_region
        _
      $region32: #{forward.2} parent=11 // pred_fallthru
        _
    $region12: #{forward.2} parent=5 // pred_fallthru
      _
    %p199 = scmp.lt.s32.totalorder %s12, 2
    // Predicated region
    $region33: #{forward.2} parent=5 // pred_check
      %p200 = pneg %p199
    $region34: #{forward.2} parent=5 // pred_check_branch
      %202 = sbr.rel (%p200) target = $region36
    $region35: #{forward.2} parent=5 // pred_region
      // Predicated region
      $region37: #{forward.2} parent=35 // pred_check
        %p203 = pneg %p32
      $region38: #{forward.2} parent=35 // pred_check_branch
        %205 = sbr.rel (%p203) target = $region40
      $region39: #{forward.2} parent=35 // pred_region
        %s206 = smul.u32 8, %s12
        %p207 = scmp.lt.s32.totalorder %s206, 15
        %s208 = scalar_select %p207, %s206, 15
        %s209 = smul.addr %s208, 8
        %s210 = scalar_lea.vmem %s0, %s209
        %s211 = smul.u32 8, %s12
      $region40: #{forward.2} parent=35 // pred_fallthru
        _
    $region36: #{forward.2} parent=5 // pred_fallthru
      _
    %p212 = scmp.le.s32.totalorder 1, %s12
    %p213 = scmp.lt.s32.totalorder %s12, 3
    %p214 = pnand %p212, %p213
    %p215 = pneg %p214
    // Predicated region
    $region41: #{forward.2} parent=5 // pred_check
      _
    $region42: #{forward.2} parent=5 // pred_check_branch
      %217 = sbr.rel (%p214) target = $region44
    $region43: #{forward.2} parent=5 // pred_region
      %s218 = ssub.s32 %s12, 1
      %s219 = smul.u32 8, %s17
      %p220 = scmp.lt.s32.totalorder %s219, 15
      %s221 = scalar_select %p220, %s219, 15
      %s222 = smul.addr %s221, 8
      %s223 = scalar_lea.vmem %s0, %s222
      %p224 = pneg %p38
      %p225 = pneg %p35
      %p226 = pneg %p59
      %p227 = pneg %p56
      %p228 = pneg %p80
      %p229 = pneg %p77
      %p230 = pneg %p101
      %p231 = pneg %p98
      %p232 = pneg %p122
      %p233 = pneg %p119
      %p234 = pneg %p143
      %p235 = pneg %p140
      %p236 = pneg %p169
      %p237 = pneg %p166
      %s238 = smul.u32 8, %s17
      %p239 = scmp.lt.s32.totalorder %s238, 15
      %s240 = scalar_select %p239, %s238, 15
      %s241 = smul.addr %s240, 8
      %s242 = scalar_lea.vmem %s6, %s241
      %s243 = smul.u32 8, %s17
      %p244 = scmp.lt.s32.totalorder %s243, 15
      %s245 = scalar_select %p244, %s243, 15
      %s246 = smul.addr %s245, 8
      %s247 = scalar_lea.vmem %s0, %s246
      %s248 = smul.u32 8, %s17
      %s249 = smul.u32 8, %s17
      %p250 = scmp.lt.s32.totalorder %s249, 15
      %s251 = scalar_select %p250, %s249, 15
      %s252 = smul.addr %s251, 8
      %s253 = scalar_lea.vmem %s6, %s252
      %s254 = smul.u32 8, %s17
      %v256 = vld [vmem:[%s247] sm:$0xff]
      %v257 = vld [vmem:[%s247 + $0x8] sm:$0xff]
      %v258 = vld [vmem:[%s247 + $0x10] sm:$0xff]
      %v259 = vld [vmem:[%s247 + $0x18] sm:$0xff]
      %v260 = vld [vmem:[%s247 + $0x20] sm:$0xff]
      %v261 = vld [vmem:[%s247 + $0x28] sm:$0xff]
      %v262 = vld [vmem:[%s247 + $0x30] sm:$0xff]
      %v263 = vld [vmem:[%s247 + $0x38] sm:$0xff]
      %v264 = vpack.c.bf16 %v257, %v256
      %v265 = vpack.c.bf16 %v259, %v258
      %v266 = vpack.c.bf16 %v261, %v260
      %v267 = vpack.c.bf16 %v263, %v262
      %v268 = vld [vmem:[%s1] sm:$0xff]
      %v269 = vld [vmem:[%s1 + $0x8] sm:$0xff]
      %v270 = vld [vmem:[%s1 + $0x10] sm:$0xff]
      %v271 = vld [vmem:[%s1 + $0x18] sm:$0xff]
      %v272 = vld [vmem:[%s1 + $0x20] sm:$0xff]
      %v273 = vld [vmem:[%s1 + $0x28] sm:$0xff]
      %v274 = vld [vmem:[%s1 + $0x30] sm:$0xff]
      %v275 = vld [vmem:[%s1 + $0x38] sm:$0xff]
      %v276 = vld [vmem:[%s2] sm:$0xf]
      %v278 = vlaneseq
      %v279 = vshrl.u32 %v278, 7
      %v280 = vsub.s32 0, %v279
      %v281 = vrot.slane %v276, %v280
      %v282 = vlaneseq
      %v283 = vshrl.u32 %v282, 7
      %v284 = vsub.s32 1, %v283
      %v285 = vrot.slane %v276, %v284
      %v286 = vlaneseq
      %v287 = vshrl.u32 %v286, 7
      %v288 = vsub.s32 2, %v287
      %v289 = vrot.slane %v276, %v288
      %v290 = vlaneseq
      %v291 = vshrl.u32 %v290, 7
      %v292 = vsub.s32 3, %v291
      %v293 = vrot.slane %v276, %v292
      %v306 = vunpack.c.l.b16 %v268
      %v307 = vunpack.c.h.b16 %v268
      %v308 = vunpack.c.l.b16 %v269
      %v309 = vunpack.c.h.b16 %v269
      %v310 = vunpack.c.l.b16 %v270
      %v311 = vunpack.c.h.b16 %v270
      %v312 = vunpack.c.l.b16 %v271
      %v313 = vunpack.c.h.b16 %v271
      %v314 = vunpack.c.l.b16 %v272
      %v315 = vunpack.c.h.b16 %v272
      %v316 = vunpack.c.l.b16 %v273
      %v317 = vunpack.c.h.b16 %v273
      %v318 = vunpack.c.l.b16 %v274
      %v319 = vunpack.c.h.b16 %v274
      %v320 = vunpack.c.l.b16 %v275
      %v321 = vunpack.c.h.b16 %v275
      %v322 = vpack.c.b16 %v310, %v306
      %v323 = vpack.c.b16 %v311, %v307
      %v324 = vpack.c.b16 %v312, %v308
      %v325 = vpack.c.b16 %v313, %v309
      %v326 = vpack.c.b16 %v318, %v314
      %v327 = vpack.c.b16 %v319, %v315
      %v328 = vpack.c.b16 %v320, %v316
      %v329 = vpack.c.b16 %v321, %v317
      %vm338 = vcmask 261120
      %v340 = vsel %vm338, %v264, 0
      %v343 = vsel %vm338, %v265, 0
      %v346 = vsel %vm338, %v266, 0
      %v349 = vsel %vm338, %v267, 0
      %351 = vmatprep.subr.bf16.mxu0 %v323
      %352 = vmatpush1.bf16.msra.mxu0 %v322
      %353 = vmatprep.subr.bf16.mxu0 %v327
      %354 = vmatpush1.bf16.msra.mxu0 %v326
      %355 = vmatprep.subr.bf16.mxu0 0
      %356 = vmatpush1.bf16.msra.mxu0 0
      %357 = vmatprep.subr.bf16.mxu0 0
      %358 = vmatpush1.bf16.msra.mxu0 0
      %359 = vmatprep.subr.bf16.mxu0 0
      %360 = vmatpush1.bf16.msra.mxu0 0
      %361 = vmatprep.subr.bf16.mxu0 0
      %362 = vmatpush1.bf16.msra.mxu0 0
      %363 = vmatprep.subr.bf16.mxu0 0
      %364 = vmatpush1.bf16.msra.mxu0 0
      %365 = vmatprep.subr.bf16.mxu0 0
      %366 = vmatpush1.bf16.msra.mxu0 0
      %367 = vmatprep.subr.bf16.mxu0 0
      %368 = vmatpush1.bf16.msra.mxu0 0
      %369 = vmatprep.subr.bf16.mxu0 0
      %370 = vmatpush1.bf16.msra.mxu0 0
      %371 = vmatprep.subr.bf16.mxu0 0
      %372 = vmatpush1.bf16.msra.mxu0 0
      %373 = vmatprep.subr.bf16.mxu0 0
      %374 = vmatpush1.bf16.msra.mxu0 0
      %375 = vmatprep.subr.bf16.mxu0 0
      %376 = vmatpush1.bf16.msra.mxu0 0
      %377 = vmatprep.subr.bf16.mxu0 0
      %378 = vmatpush1.bf16.msra.mxu0 0
      %379 = vmatprep.subr.bf16.mxu0 0
      %380 = vmatpush1.bf16.msra.mxu0 0
      %381 = vmatprep.subr.bf16.mxu0 0
      %382 = vmatpush1.bf16.msra.mxu0 0
      %383 = vmatprep.mubr.bf16.mxu0 0
      %384 = vmatmul.mubr.bf16.gmra.mrb[0].mxu0 %v340
      %v385 = vpop.f32.mrb[0].mxu0
      %v386 = vadd.f32 %v281, %v385
      %v387 = vpop.f32.mrb[0].mxu0
      %v388 = vadd.f32 %v285, %v387
      %v389 = vpop.f32.mrb[0].mxu0
      %v390 = vadd.f32 %v281, %v389
      %v391 = vpop.f32.mrb[0].mxu0
      %v392 = vadd.f32 %v285, %v391
      %393 = vmatprep.mubr.bf16.mxu0 0
      %394 = vmatmul.mubr.bf16.gmra.mrb[0].mxu0 %v343
      %v395 = vpop.f32.mrb[0].mxu0
      %v396 = vadd.f32 %v281, %v395
      %v397 = vpop.f32.mrb[0].mxu0
      %v398 = vadd.f32 %v285, %v397
      %v399 = vpop.f32.mrb[0].mxu0
      %v400 = vadd.f32 %v281, %v399
      %v401 = vpop.f32.mrb[0].mxu0
      %v402 = vadd.f32 %v285, %v401
      %403 = vmatprep.mubr.bf16.mxu0 0
      %404 = vmatmul.mubr.bf16.gmra.mrb[0].mxu0 %v346
      %v405 = vpop.f32.mrb[0].mxu0
      %v406 = vadd.f32 %v281, %v405
      %v407 = vpop.f32.mrb[0].mxu0
      %v408 = vadd.f32 %v285, %v407
      %v409 = vpop.f32.mrb[0].mxu0
      %v410 = vadd.f32 %v281, %v409
      %v411 = vpop.f32.mrb[0].mxu0
      %v412 = vadd.f32 %v285, %v411
      %413 = vmatprep.mubr.bf16.mxu0 0
      %414 = vmatmul.mubr.bf16.gmra.mrb[0].mxu0 %v349
      %v415 = vpop.f32.mrb[0].mxu0
      %v416 = vadd.f32 %v281, %v415
      %v417 = vpop.f32.mrb[0].mxu0
      %v418 = vadd.f32 %v285, %v417
      %v419 = vpop.f32.mrb[0].mxu0
      %v420 = vadd.f32 %v281, %v419
      %v421 = vpop.f32.mrb[0].mxu0
      %v422 = vadd.f32 %v285, %v421
      %423 = vdwg.mxu0
      %424 = vmatprep.subr.bf16.mxu0 %v325
      %425 = vmatpush1.bf16.msra.mxu0 %v324
      %426 = vmatprep.subr.bf16.mxu0 %v329
      %427 = vmatpush1.bf16.msra.mxu0 %v328
      %428 = vmatprep.subr.bf16.mxu0 0
      %429 = vmatpush1.bf16.msra.mxu0 0
      %430 = vmatprep.subr.bf16.mxu0 0
      %431 = vmatpush1.bf16.msra.mxu0 0
      %432 = vmatprep.subr.bf16.mxu0 0
      %433 = vmatpush1.bf16.msra.mxu0 0
      %434 = vmatprep.subr.bf16.mxu0 0
      %435 = vmatpush1.bf16.msra.mxu0 0
      %436 = vmatprep.subr.bf16.mxu0 0
      %437 = vmatpush1.bf16.msra.mxu0 0
      %438 = vmatprep.subr.bf16.mxu0 0
      %439 = vmatpush1.bf16.msra.mxu0 0
      %440 = vmatprep.subr.bf16.mxu0 0
      %441 = vmatpush1.bf16.msra.mxu0 0
      %442 = vmatprep.subr.bf16.mxu0 0
      %443 = vmatpush1.bf16.msra.mxu0 0
      %444 = vmatprep.subr.bf16.mxu0 0
      %445 = vmatpush1.bf16.msra.mxu0 0
      %446 = vmatprep.subr.bf16.mxu0 0
      %447 = vmatpush1.bf16.msra.mxu0 0
      %448 = vmatprep.subr.bf16.mxu0 0
      %449 = vmatpush1.bf16.msra.mxu0 0
      %450 = vmatprep.subr.bf16.mxu0 0
      %451 = vmatpush1.bf16.msra.mxu0 0
      %452 = vmatprep.subr.bf16.mxu0 0
      %453 = vmatpush1.bf16.msra.mxu0 0
      %454 = vmatprep.subr.bf16.mxu0 0
      %455 = vmatpush1.bf16.msra.mxu0 0
      %456 = vmatprep.mubr.bf16.mxu0 0
      %457 = vmatmul.mubr.bf16.gmra.mrb[0].mxu0 %v340
      %v458 = vpop.f32.mrb[0].mxu0
      %v459 = vadd.f32 %v289, %v458
      %v460 = vpop.f32.mrb[0].mxu0
      %v461 = vadd.f32 %v293, %v460
      %v462 = vpop.f32.mrb[0].mxu0
      %v463 = vadd.f32 %v289, %v462
      %v464 = vpop.f32.mrb[0].mxu0
      %v465 = vadd.f32 %v293, %v464
      %466 = vmatprep.mubr.bf16.mxu0 0
      %467 = vmatmul.mubr.bf16.gmra.mrb[0].mxu0 %v343
      %v468 = vpop.f32.mrb[0].mxu0
      %v469 = vadd.f32 %v289, %v468
      %v470 = vpop.f32.mrb[0].mxu0
      %v471 = vadd.f32 %v293, %v470
      %v472 = vpop.f32.mrb[0].mxu0
      %v473 = vadd.f32 %v289, %v472
      %v474 = vpop.f32.mrb[0].mxu0
      %v475 = vadd.f32 %v293, %v474
      %476 = vmatprep.mubr.bf16.mxu0 0
      %477 = vmatmul.mubr.bf16.gmra.mrb[0].mxu0 %v346
      %v478 = vpop.f32.mrb[0].mxu0
      %v479 = vadd.f32 %v289, %v478
      %v480 = vpop.f32.mrb[0].mxu0
      %v481 = vadd.f32 %v293, %v480
      %v482 = vpop.f32.mrb[0].mxu0
      %v483 = vadd.f32 %v289, %v482
      %v484 = vpop.f32.mrb[0].mxu0
      %v485 = vadd.f32 %v293, %v484
      %486 = vmatprep.mubr.bf16.mxu0 0
      %487 = vmatmul.mubr.bf16.gmra.mrb[0].mxu0 %v349
      %v488 = vpop.f32.mrb[0].mxu0
      %v489 = vadd.f32 %v289, %v488
      %v490 = vpop.f32.mrb[0].mxu0
      %v491 = vadd.f32 %v293, %v490
      %v492 = vpop.f32.mrb[0].mxu0
      %v493 = vadd.f32 %v289, %v492
      %v494 = vpop.f32.mrb[0].mxu0
      %v495 = vadd.f32 %v293, %v494
      %496 = vdwg.mxu0
      %v497 = vpack.c.bf16 %v390, %v386
      %v498 = vpack.c.bf16 %v392, %v388
      %v499 = vpack.c.bf16 %v463, %v459
      %v500 = vpack.c.bf16 %v465, %v461
      %v501 = vpack.c.bf16 %v400, %v396
      %v502 = vpack.c.bf16 %v402, %v398
      %v503 = vpack.c.bf16 %v473, %v469
      %v504 = vpack.c.bf16 %v475, %v471
      %v505 = vpack.c.bf16 %v410, %v406
      %v506 = vpack.c.bf16 %v412, %v408
      %v507 = vpack.c.bf16 %v483, %v479
      %v508 = vpack.c.bf16 %v485, %v481
      %v509 = vpack.c.bf16 %v420, %v416
      %v510 = vpack.c.bf16 %v422, %v418
      %v511 = vpack.c.bf16 %v493, %v489
      %v512 = vpack.c.bf16 %v495, %v491
      %v513 = vld [vmem:[%s3] sm:$0xf]
      %v514 = vld [vmem:[%s3 + $0x4] sm:$0xf]
      %v515 = vld [vmem:[%s3 + $0x8] sm:$0xf]
      %v516 = vld [vmem:[%s3 + $0xc] sm:$0xf]
      %v517 = vld [vmem:[%s3 + $0x10] sm:$0xf]
      %v518 = vld [vmem:[%s3 + $0x14] sm:$0xf]
      %v519 = vld [vmem:[%s3 + $0x18] sm:$0xf]
      %v520 = vld [vmem:[%s3 + $0x1c] sm:$0xf]
      %v521 = vld [vmem:[%s3 + $0x20] sm:$0xf]
      %v522 = vld [vmem:[%s3 + $0x24] sm:$0xf]
      %v523 = vld [vmem:[%s3 + $0x28] sm:$0xf]
      %v524 = vld [vmem:[%s3 + $0x2c] sm:$0xf]
      %v525 = vld [vmem:[%s3 + $0x30] sm:$0xf]
      %v526 = vld [vmem:[%s3 + $0x34] sm:$0xf]
      %v527 = vld [vmem:[%s3 + $0x38] sm:$0xf]
      %v528 = vld [vmem:[%s3 + $0x3c] sm:$0xf]
      %v529 = vld [vmem:[%s3 + $0x40] sm:$0xf]
      %v530 = vld [vmem:[%s3 + $0x44] sm:$0xf]
      %v531 = vld [vmem:[%s3 + $0x48] sm:$0xf]
      %v532 = vld [vmem:[%s3 + $0x4c] sm:$0xf]
      %v533 = vld [vmem:[%s3 + $0x50] sm:$0xf]
      %v534 = vld [vmem:[%s3 + $0x54] sm:$0xf]
      %v535 = vld [vmem:[%s3 + $0x58] sm:$0xf]
      %v536 = vld [vmem:[%s3 + $0x5c] sm:$0xf]
      %v537 = vld [vmem:[%s3 + $0x60] sm:$0xf]
      %v538 = vld [vmem:[%s3 + $0x64] sm:$0xf]
      %v539 = vld [vmem:[%s3 + $0x68] sm:$0xf]
      %v540 = vld [vmem:[%s3 + $0x6c] sm:$0xf]
      %v541 = vld [vmem:[%s3 + $0x70] sm:$0xf]
      %v542 = vld [vmem:[%s3 + $0x74] sm:$0xf]
      %v543 = vld [vmem:[%s3 + $0x78] sm:$0xf]
      %v544 = vld [vmem:[%s3 + $0x7c] sm:$0xf]
      %v545 = vld [vmem:[%s3 + $0x80] sm:$0xf]
      %v546 = vld [vmem:[%s3 + $0x84] sm:$0xf]
      %v547 = vld [vmem:[%s3 + $0x88] sm:$0xf]
      %v548 = vld [vmem:[%s3 + $0x8c] sm:$0xf]
      %v549 = vld [vmem:[%s3 + $0x90] sm:$0xf]
      %v550 = vld [vmem:[%s3 + $0x94] sm:$0xf]
      %v551 = vld [vmem:[%s3 + $0x98] sm:$0xf]
      %v552 = vld [vmem:[%s3 + $0x9c] sm:$0xf]
      %v553 = vld [vmem:[%s3 + $0xa0] sm:$0xf]
      %v554 = vld [vmem:[%s3 + $0xa4] sm:$0xf]
      %v555 = vld [vmem:[%s3 + $0xa8] sm:$0xf]
      %v556 = vld [vmem:[%s3 + $0xac] sm:$0xf]
      %v557 = vld [vmem:[%s3 + $0xb0] sm:$0xf]
      %v558 = vld [vmem:[%s3 + $0xb4] sm:$0xf]
      %v559 = vld [vmem:[%s3 + $0xb8] sm:$0xf]
      %v560 = vld [vmem:[%s3 + $0xbc] sm:$0xf]
      %v561 = vld [vmem:[%s3 + $0xc0] sm:$0xf]
      %v562 = vld [vmem:[%s3 + $0xc4] sm:$0xf]
      %v563 = vld [vmem:[%s3 + $0xc8] sm:$0xf]
      %v564 = vld [vmem:[%s3 + $0xcc] sm:$0xf]
      %v565 = vld [vmem:[%s3 + $0xd0] sm:$0xf]
      %v566 = vld [vmem:[%s3 + $0xd4] sm:$0xf]
      %v567 = vld [vmem:[%s3 + $0xd8] sm:$0xf]
      %v568 = vld [vmem:[%s3 + $0xdc] sm:$0xf]
      %v569 = vld [vmem:[%s3 + $0xe0] sm:$0xf]
      %v570 = vld [vmem:[%s3 + $0xe4] sm:$0xf]
      %v571 = vld [vmem:[%s3 + $0xe8] sm:$0xf]
      %v572 = vld [vmem:[%s3 + $0xec] sm:$0xf]
      %v573 = vld [vmem:[%s3 + $0xf0] sm:$0xf]
      %v574 = vld [vmem:[%s3 + $0xf4] sm:$0xf]
      %v575 = vld [vmem:[%s3 + $0xf8] sm:$0xf]
      %v576 = vld [vmem:[%s3 + $0xfc] sm:$0xf]
      %v577 = vld [vmem:[%s4] sm:$0x1]
      %v579 = vlaneseq
      %v580 = vshrl.u32 %v579, 7
      %v581 = vsub.s32 0, %v580
      %v582 = vrot.slane %v577, %v581
      %v648 = vunpack.c.l.b16 %v513
      %v649 = vunpack.c.l.b16 %v514
      %v650 = vunpack.c.l.b16 %v515
      %v651 = vunpack.c.l.b16 %v516
      %v652 = vunpack.c.l.b16 %v517
      %v653 = vunpack.c.l.b16 %v518
      %v654 = vunpack.c.l.b16 %v519
      %v655 = vunpack.c.l.b16 %v520
      %v656 = vunpack.c.l.b16 %v521
      %v657 = vunpack.c.l.b16 %v522
      %v658 = vunpack.c.l.b16 %v523
      %v659 = vunpack.c.l.b16 %v524
      %v660 = vunpack.c.l.b16 %v525
      %v661 = vunpack.c.l.b16 %v526
      %v662 = vunpack.c.l.b16 %v527
      %v663 = vunpack.c.l.b16 %v528
      %v664 = vunpack.c.l.b16 %v529
      %v665 = vunpack.c.l.b16 %v530
      %v666 = vunpack.c.l.b16 %v531
      %v667 = vunpack.c.l.b16 %v532
      %v668 = vunpack.c.l.b16 %v533
      %v669 = vunpack.c.l.b16 %v534
      %v670 = vunpack.c.l.b16 %v535
      %v671 = vunpack.c.l.b16 %v536
      %v672 = vunpack.c.l.b16 %v537
      %v673 = vunpack.c.l.b16 %v538
      %v674 = vunpack.c.l.b16 %v539
      %v675 = vunpack.c.l.b16 %v540
      %v676 = vunpack.c.l.b16 %v541
      %v677 = vunpack.c.l.b16 %v542
      %v678 = vunpack.c.l.b16 %v543
      %v679 = vunpack.c.l.b16 %v544
      %v680 = vunpack.c.l.b16 %v545
      %v681 = vunpack.c.l.b16 %v546
      %v682 = vunpack.c.l.b16 %v547
      %v683 = vunpack.c.l.b16 %v548
      %v684 = vunpack.c.l.b16 %v549
      %v685 = vunpack.c.l.b16 %v550
      %v686 = vunpack.c.l.b16 %v551
      %v687 = vunpack.c.l.b16 %v552
      %v688 = vunpack.c.l.b16 %v553
      %v689 = vunpack.c.l.b16 %v554
      %v690 = vunpack.c.l.b16 %v555
      %v691 = vunpack.c.l.b16 %v556
      %v692 = vunpack.c.l.b16 %v557
      %v693 = vunpack.c.l.b16 %v558
      %v694 = vunpack.c.l.b16 %v559
      %v695 = vunpack.c.l.b16 %v560
      %v696 = vunpack.c.l.b16 %v561
      %v697 = vunpack.c.l.b16 %v562
      %v698 = vunpack.c.l.b16 %v563
      %v699 = vunpack.c.l.b16 %v564
      %v700 = vunpack.c.l.b16 %v565
      %v701 = vunpack.c.l.b16 %v566
      %v702 = vunpack.c.l.b16 %v567
      %v703 = vunpack.c.l.b16 %v568
      %v704 = vunpack.c.l.b16 %v569
      %v705 = vunpack.c.l.b16 %v570
      %v706 = vunpack.c.l.b16 %v571
      %v707 = vunpack.c.l.b16 %v572
      %v708 = vunpack.c.l.b16 %v573
      %v709 = vunpack.c.l.b16 %v574
      %v710 = vunpack.c.l.b16 %v575
      %v711 = vunpack.c.l.b16 %v576
      %v712 = vpack.c.b16 %v649, %v648
      %v713 = vpack.c.b16 %v651, %v650
      %v714 = vpack.c.b16 %v653, %v652
      %v715 = vpack.c.b16 %v655, %v654
      %v716 = vpack.c.b16 %v657, %v656
      %v717 = vpack.c.b16 %v659, %v658
      %v718 = vpack.c.b16 %v661, %v660
      %v719 = vpack.c.b16 %v663, %v662
      %v720 = vpack.c.b16 %v665, %v664
      %v721 = vpack.c.b16 %v667, %v666
      %v722 = vpack.c.b16 %v669, %v668
      %v723 = vpack.c.b16 %v671, %v670
      %v724 = vpack.c.b16 %v673, %v672
      %v725 = vpack.c.b16 %v675, %v674
      %v726 = vpack.c.b16 %v677, %v676
      %v727 = vpack.c.b16 %v679, %v678
      %v728 = vpack.c.b16 %v681, %v680
      %v729 = vpack.c.b16 %v683, %v682
      %v730 = vpack.c.b16 %v685, %v684
      %v731 = vpack.c.b16 %v687, %v686
      %v732 = vpack.c.b16 %v689, %v688
      %v733 = vpack.c.b16 %v691, %v690
      %v734 = vpack.c.b16 %v693, %v692
      %v735 = vpack.c.b16 %v695, %v694
      %v736 = vpack.c.b16 %v697, %v696
      %v737 = vpack.c.b16 %v699, %v698
      %v738 = vpack.c.b16 %v701, %v700
      %v739 = vpack.c.b16 %v703, %v702
      %v740 = vpack.c.b16 %v705, %v704
      %v741 = vpack.c.b16 %v707, %v706
      %v742 = vpack.c.b16 %v709, %v708
      %v743 = vpack.c.b16 %v711, %v710
      %776 = vmatprep.subr.bf16.mxu0 0
      %777 = vmatpush1.bf16.msra.mxu0 %v712
      %778 = vmatprep.subr.bf16.mxu0 0
      %779 = vmatpush1.bf16.msra.mxu0 %v713
      %780 = vmatprep.subr.bf16.mxu0 0
      %781 = vmatpush1.bf16.msra.mxu0 %v714
      %782 = vmatprep.subr.bf16.mxu0 0
      %783 = vmatpush1.bf16.msra.mxu0 %v715
      %784 = vmatprep.subr.bf16.mxu0 0
      %785 = vmatpush1.bf16.msra.mxu0 %v716
      %786 = vmatprep.subr.bf16.mxu0 0
      %787 = vmatpush1.bf16.msra.mxu0 %v717
      %788 = vmatprep.subr.bf16.mxu0 0
      %789 = vmatpush1.bf16.msra.mxu0 %v718
      %790 = vmatprep.subr.bf16.mxu0 0
      %791 = vmatpush1.bf16.msra.mxu0 %v719
      %792 = vmatprep.subr.bf16.mxu0 0
      %793 = vmatpush1.bf16.msra.mxu0 %v720
      %794 = vmatprep.subr.bf16.mxu0 0
      %795 = vmatpush1.bf16.msra.mxu0 %v721
      %796 = vmatprep.subr.bf16.mxu0 0
      %797 = vmatpush1.bf16.msra.mxu0 %v722
      %798 = vmatprep.subr.bf16.mxu0 0
      %799 = vmatpush1.bf16.msra.mxu0 %v723
      %800 = vmatprep.subr.bf16.mxu0 0
      %801 = vmatpush1.bf16.msra.mxu0 %v724
      %802 = vmatprep.subr.bf16.mxu0 0
      %803 = vmatpush1.bf16.msra.mxu0 %v725
      %804 = vmatprep.subr.bf16.mxu0 0
      %805 = vmatpush1.bf16.msra.mxu0 %v726
      %806 = vmatprep.subr.bf16.mxu0 0
      %807 = vmatpush1.bf16.msra.mxu0 %v727
      %808 = vmatprep.mubr.bf16.mxu0 %v498
      %809 = vmatmul.mubr.bf16.gmra.mrb[0].mxu0 %v497
      %v810 = vpop.f32.mrb[0].mxu0
      %v811 = vadd.f32 %v582, %v810
      %v812 = vpop.f32.mrb[0].mxu0
      %v813 = vpop.f32.mrb[0].mxu0
      %v814 = vadd.f32 %v582, %v813
      %v815 = vpop.f32.mrb[0].mxu0
      %816 = vmatprep.mubr.bf16.mxu0 %v502
      %817 = vmatmul.mubr.bf16.gmra.mrb[0].mxu0 %v501
      %v818 = vpop.f32.mrb[0].mxu0
      %v819 = vadd.f32 %v582, %v818
      %v820 = vpop.f32.mrb[0].mxu0
      %v821 = vpop.f32.mrb[0].mxu0
      %v822 = vadd.f32 %v582, %v821
      %v823 = vpop.f32.mrb[0].mxu0
      %824 = vmatprep.mubr.bf16.mxu0 %v506
      %825 = vmatmul.mubr.bf16.gmra.mrb[0].mxu0 %v505
      %v826 = vpop.f32.mrb[0].mxu0
      %v827 = vadd.f32 %v582, %v826
      %v828 = vpop.f32.mrb[0].mxu0
      %v829 = vpop.f32.mrb[0].mxu0
      %v830 = vadd.f32 %v582, %v829
      %v831 = vpop.f32.mrb[0].mxu0
      %832 = vmatprep.mubr.bf16.mxu0 %v510
      %833 = vmatmul.mubr.bf16.gmra.mrb[0].mxu0 %v509
      %v834 = vpop.f32.mrb[0].mxu0
      %v835 = vadd.f32 %v582, %v834
      %v836 = vpop.f32.mrb[0].mxu0
      %v837 = vpop.f32.mrb[0].mxu0
      %v838 = vadd.f32 %v582, %v837
      %v839 = vpop.f32.mrb[0].mxu0
      %840 = vdwg.mxu0
      %841 = vmatprep.subr.bf16.mxu0 0
      %842 = vmatpush1.bf16.msra.mxu0 %v728
      %843 = vmatprep.subr.bf16.mxu0 0
      %844 = vmatpush1.bf16.msra.mxu0 %v729
      %845 = vmatprep.subr.bf16.mxu0 0
      %846 = vmatpush1.bf16.msra.mxu0 %v730
      %847 = vmatprep.subr.bf16.mxu0 0
      %848 = vmatpush1.bf16.msra.mxu0 %v731
      %849 = vmatprep.subr.bf16.mxu0 0
      %850 = vmatpush1.bf16.msra.mxu0 %v732
      %851 = vmatprep.subr.bf16.mxu0 0
      %852 = vmatpush1.bf16.msra.mxu0 %v733
      %853 = vmatprep.subr.bf16.mxu0 0
      %854 = vmatpush1.bf16.msra.mxu0 %v734
      %855 = vmatprep.subr.bf16.mxu0 0
      %856 = vmatpush1.bf16.msra.mxu0 %v735
      %857 = vmatprep.subr.bf16.mxu0 0
      %858 = vmatpush1.bf16.msra.mxu0 %v736
      %859 = vmatprep.subr.bf16.mxu0 0
      %860 = vmatpush1.bf16.msra.mxu0 %v737
      %861 = vmatprep.subr.bf16.mxu0 0
      %862 = vmatpush1.bf16.msra.mxu0 %v738
      %863 = vmatprep.subr.bf16.mxu0 0
      %864 = vmatpush1.bf16.msra.mxu0 %v739
      %865 = vmatprep.subr.bf16.mxu0 0
      %866 = vmatpush1.bf16.msra.mxu0 %v740
      %867 = vmatprep.subr.bf16.mxu0 0
      %868 = vmatpush1.bf16.msra.mxu0 %v741
      %869 = vmatprep.subr.bf16.mxu0 0
      %870 = vmatpush1.bf16.msra.mxu0 %v742
      %871 = vmatprep.subr.bf16.mxu0 0
      %872 = vmatpush1.bf16.msra.mxu0 %v743
      %873 = vmatprep.mubr.bf16.mxu0 %v500
      %874 = vmatmul.mubr.bf16.gmra.mrb[0].mxu0 %v499
      %v875 = vpop.f32.mrb[0].mxu0
      %v876 = vadd.f32 %v811, %v875
      %v877 = vpop.f32.mrb[0].mxu0
      %v878 = vpop.f32.mrb[0].mxu0
      %v879 = vadd.f32 %v814, %v878
      %v880 = vpop.f32.mrb[0].mxu0
      %881 = vmatprep.mubr.bf16.mxu0 %v504
      %882 = vmatmul.mubr.bf16.gmra.mrb[0].mxu0 %v503
      %v883 = vpop.f32.mrb[0].mxu0
      %v884 = vadd.f32 %v819, %v883
      %v885 = vpop.f32.mrb[0].mxu0
      %v886 = vpop.f32.mrb[0].mxu0
      %v887 = vadd.f32 %v822, %v886
      %v888 = vpop.f32.mrb[0].mxu0
      %889 = vmatprep.mubr.bf16.mxu0 %v508
      %890 = vmatmul.mubr.bf16.gmra.mrb[0].mxu0 %v507
      %v891 = vpop.f32.mrb[0].mxu0
      %v892 = vadd.f32 %v827, %v891
      %v893 = vpop.f32.mrb[0].mxu0
      %v894 = vpop.f32.mrb[0].mxu0
      %v895 = vadd.f32 %v830, %v894
      %v896 = vpop.f32.mrb[0].mxu0
      %897 = vmatprep.mubr.bf16.mxu0 %v512
      %898 = vmatmul.mubr.bf16.gmra.mrb[0].mxu0 %v511
      %v899 = vpop.f32.mrb[0].mxu0
      %v900 = vadd.f32 %v835, %v899
      %v901 = vpop.f32.mrb[0].mxu0
      %v902 = vpop.f32.mrb[0].mxu0
      %v903 = vadd.f32 %v838, %v902
      %v904 = vpop.f32.mrb[0].mxu0
      %905 = vdwg.mxu0
      %v906 = vmul.f32 %v876, %v876
      %v907 = vmul.f32 %v879, %v879
      %v908 = vmul.f32 %v884, %v884
      %v909 = vmul.f32 %v887, %v887
      %v910 = vmul.f32 %v892, %v892
      %v911 = vmul.f32 %v895, %v895
      %v912 = vmul.f32 %v900, %v900
      %v913 = vmul.f32 %v903, %v903
      %v914 = vsel %vm338, %v906, 0.0
      %915 = vadd.xlane.f32.xlu0 %v914
      %v916 = vpop.xlane.xlu0 %915
      %v917 = vsel %vm338, %v907, 0.0
      %918 = vadd.xlane.f32.xlu0 %v917
      %v919 = vpop.xlane.xlu0 %918
      %v920 = vsel %vm338, %v908, 0.0
      %921 = vadd.xlane.f32.xlu0 %v920
      %v922 = vpop.xlane.xlu0 %921
      %v923 = vsel %vm338, %v909, 0.0
      %924 = vadd.xlane.f32.xlu0 %v923
      %v925 = vpop.xlane.xlu0 %924
      %v926 = vsel %vm338, %v910, 0.0
      %927 = vadd.xlane.f32.xlu0 %v926
      %v928 = vpop.xlane.xlu0 %927
      %v929 = vsel %vm338, %v911, 0.0
      %930 = vadd.xlane.f32.xlu0 %v929
      %v931 = vpop.xlane.xlu0 %930
      %v932 = vsel %vm338, %v912, 0.0
      %933 = vadd.xlane.f32.xlu0 %v932
      %v934 = vpop.xlane.xlu0 %933
      %v935 = vsel %vm338, %v913, 0.0
      %936 = vadd.xlane.f32.xlu0 %v935
      %v937 = vpop.xlane.xlu0 %936
      %v938 = vadd.f32 %v916, 1e-12
      %v939 = vadd.f32 %v919, 1e-12
      %v940 = vadd.f32 %v922, 1e-12
      %v941 = vadd.f32 %v925, 1e-12
      %v942 = vadd.f32 %v928, 1e-12
      %v943 = vadd.f32 %v931, 1e-12
      %v944 = vadd.f32 %v934, 1e-12
      %v945 = vadd.f32 %v937, 1e-12
      %v946 = vrsqrt.pop %v938
      %v947 = vrsqrt.pop %v939
      %v948 = vrsqrt.pop %v940
      %v949 = vrsqrt.pop %v941
      %v950 = vrsqrt.pop %v942
      %v951 = vrsqrt.pop %v943
      %v952 = vrsqrt.pop %v944
      %v953 = vrsqrt.pop %v945
      %v954 = vmul.f32 %v876, %v946
      %v955 = vmul.f32 %v879, %v947
      %v956 = vmul.f32 %v884, %v948
      %v957 = vmul.f32 %v887, %v949
      %v958 = vmul.f32 %v892, %v950
      %v959 = vmul.f32 %v895, %v951
      %v960 = vmul.f32 %v900, %v952
      %v961 = vmul.f32 %v903, %v953
      %v962 = vld [vmem:[%s5] sm:$0xff]
      %v963 = vld [vmem:[%s5 + $0x8] sm:$0xff]
      %v964 = vld [vmem:[%s5 + $0x10] sm:$0xff]
      %v965 = vld [vmem:[%s5 + $0x18] sm:$0xff]
      %v966 = vld [vmem:[%s5 + $0x20] sm:$0xff]
      %v967 = vld [vmem:[%s5 + $0x28] sm:$0xff]
      %v968 = vld [vmem:[%s5 + $0x30] sm:$0xff]
      %v969 = vld [vmem:[%s5 + $0x38] sm:$0xff]
      %v970 = vld [vmem:[%s5 + $0x40] sm:$0xff]
      %v971 = vld [vmem:[%s5 + $0x48] sm:$0xff]
      %v972 = vld [vmem:[%s5 + $0x50] sm:$0xff]
      %v973 = vld [vmem:[%s5 + $0x58] sm:$0xff]
      %v974 = vld [vmem:[%s5 + $0x60] sm:$0xff]
      %v975 = vld [vmem:[%s5 + $0x68] sm:$0xff]
      %v976 = vld [vmem:[%s5 + $0x70] sm:$0xff]
      %v977 = vld [vmem:[%s5 + $0x78] sm:$0xff]
      %v979 = vsel %vm338, %v954, 0
      %v982 = vsel %vm338, %v955, 0
      %v985 = vsel %vm338, %v956, 0
      %v988 = vsel %vm338, %v957, 0
      %v991 = vsel %vm338, %v958, 0
      %v994 = vsel %vm338, %v959, 0
      %v997 = vsel %vm338, %v960, 0
      %v1000 = vsel %vm338, %v961, 0
      %v1003 = vsel %vm338, %v962, 0
      %v1006 = vsel %vm338, %v963, 0
      %v1009 = vsel %vm338, %v964, 0
      %v1012 = vsel %vm338, %v965, 0
      %v1015 = vsel %vm338, %v966, 0
      %v1018 = vsel %vm338, %v967, 0
      %v1021 = vsel %vm338, %v968, 0
      %v1024 = vsel %vm338, %v969, 0
      %v1027 = vsel %vm338, %v970, 0
      %v1030 = vsel %vm338, %v971, 0
      %v1033 = vsel %vm338, %v972, 0
      %v1036 = vsel %vm338, %v973, 0
      %v1039 = vsel %vm338, %v974, 0
      %v1042 = vsel %vm338, %v975, 0
      %v1045 = vsel %vm338, %v976, 0
      %v1048 = vsel %vm338, %v977, 0
      %1050 = vmatprep.subr.mxu0 0.0
      %1051 = vmatpush1.xpose.msra.mxu0 %v1003
      %1052 = vmatprep.subr.mxu0 0.0
      %1053 = vmatpush1.xpose.msra.mxu0 %v1006
      %1054 = vmatprep.subr.mxu0 0.0
      %1055 = vmatpush1.xpose.msra.mxu0 %v1009
      %1056 = vmatprep.subr.mxu0 0.0
      %1057 = vmatpush1.xpose.msra.mxu0 %v1012
      %1058 = vmatprep.subr.mxu0 0.0
      %1059 = vmatpush1.xpose.msra.mxu0 %v1015
      %1060 = vmatprep.subr.mxu0 0.0
      %1061 = vmatpush1.xpose.msra.mxu0 %v1018
      %1062 = vmatprep.subr.mxu0 0.0
      %1063 = vmatpush1.xpose.msra.mxu0 %v1021
      %1064 = vmatprep.subr.mxu0 0.0
      %1065 = vmatpush1.xpose.msra.mxu0 %v1024
      %1066 = vmatprep.subr.mxu0 0.0
      %1067 = vmatpush1.xpose.msra.mxu0 %v1027
      %1068 = vmatprep.subr.mxu0 0.0
      %1069 = vmatpush1.xpose.msra.mxu0 %v1030
      %1070 = vmatprep.subr.mxu0 0.0
      %1071 = vmatpush1.xpose.msra.mxu0 %v1033
      %1072 = vmatprep.subr.mxu0 0.0
      %1073 = vmatpush1.xpose.msra.mxu0 %v1036
      %1074 = vmatprep.subr.mxu0 0.0
      %1075 = vmatpush1.xpose.msra.mxu0 %v1039
      %1076 = vmatprep.subr.mxu0 0.0
      %1077 = vmatpush1.xpose.msra.mxu0 %v1042
      %1078 = vmatprep.subr.mxu0 0.0
      %1079 = vmatpush1.xpose.msra.mxu0 %v1045
      %1080 = vmatprep.subr.mxu0 0.0
      %1081 = vmatpush1.xpose.msra.mxu0 %v1048
      %1082 = vmatprep.subr.mxu0 0.0
      %1083 = vmatpush1.xpose.msra.mxu0 0.0
      %1084 = vmatprep.subr.mxu0 0.0
      %1085 = vmatpush1.xpose.msra.mxu0 0.0
      %1086 = vmatprep.subr.mxu0 0.0
      %1087 = vmatpush1.xpose.msra.mxu0 0.0
      %1088 = vmatprep.subr.mxu0 0.0
      %1089 = vmatpush1.xpose.msra.mxu0 0.0
      %1090 = vmatprep.subr.mxu0 0.0
      %1091 = vmatpush1.xpose.msra.mxu0 0.0
      %1092 = vmatprep.subr.mxu0 0.0
      %1093 = vmatpush1.xpose.msra.mxu0 0.0
      %1094 = vmatprep.subr.mxu0 0.0
      %1095 = vmatpush1.xpose.msra.mxu0 0.0
      %1096 = vmatprep.subr.mxu0 0.0
      %1097 = vmatpush1.xpose.msra.mxu0 0.0
      %1098 = vmatprep.subr.mxu0 0.0
      %1099 = vmatpush1.xpose.msra.mxu0 0.0
      %1100 = vmatprep.subr.mxu0 0.0
      %1101 = vmatpush1.xpose.msra.mxu0 0.0
      %1102 = vmatprep.subr.mxu0 0.0
      %1103 = vmatpush1.xpose.msra.mxu0 0.0
      %1104 = vmatprep.subr.mxu0 0.0
      %1105 = vmatpush1.xpose.msra.mxu0 0.0
      %1106 = vmatprep.subr.mxu0 0.0
      %1107 = vmatpush1.xpose.msra.mxu0 0.0
      %1108 = vmatprep.subr.mxu0 0.0
      %1109 = vmatpush1.xpose.msra.mxu0 0.0
      %1110 = vmatprep.subr.mxu0 0.0
      %1111 = vmatpush1.xpose.msra.mxu0 0.0
      %1112 = vmatprep.subr.mxu0 0.0
      %1113 = vmatpush1.xpose.msra.mxu0 0.0
      %1114 = vmatprep.mubr.f32.mxu0 0.0
      %1115 = vmatmul.mubr.f32.gmra.mrb[0].mxu0 %v979
      %v1116 = vpop.f32.mrb[0].mxu0
      %v1117 = vadd.f32 0.0, %v1116
      %v1118 = vpop.f32.mrb[0].mxu0
      %1119 = vmatprep.mubr.f32.mxu0 0.0
      %1120 = vmatmul.mubr.f32.gmra.mrb[0].mxu0 %v982
      %v1121 = vpop.f32.mrb[0].mxu0
      %v1122 = vadd.f32 0.0, %v1121
      %v1123 = vpop.f32.mrb[0].mxu0
      %1124 = vmatprep.mubr.f32.mxu0 0.0
      %1125 = vmatmul.mubr.f32.gmra.mrb[0].mxu0 %v985
      %v1126 = vpop.f32.mrb[0].mxu0
      %v1127 = vadd.f32 0.0, %v1126
      %v1128 = vpop.f32.mrb[0].mxu0
      %1129 = vmatprep.mubr.f32.mxu0 0.0
      %1130 = vmatmul.mubr.f32.gmra.mrb[0].mxu0 %v988
      %v1131 = vpop.f32.mrb[0].mxu0
      %v1132 = vadd.f32 0.0, %v1131
      %v1133 = vpop.f32.mrb[0].mxu0
      %1134 = vmatprep.mubr.f32.mxu0 0.0
      %1135 = vmatmul.mubr.f32.gmra.mrb[0].mxu0 %v991
      %v1136 = vpop.f32.mrb[0].mxu0
      %v1137 = vadd.f32 0.0, %v1136
      %v1138 = vpop.f32.mrb[0].mxu0
      %1139 = vmatprep.mubr.f32.mxu0 0.0
      %1140 = vmatmul.mubr.f32.gmra.mrb[0].mxu0 %v994
      %v1141 = vpop.f32.mrb[0].mxu0
      %v1142 = vadd.f32 0.0, %v1141
      %v1143 = vpop.f32.mrb[0].mxu0
      %1144 = vmatprep.mubr.f32.mxu0 0.0
      %1145 = vmatmul.mubr.f32.gmra.mrb[0].mxu0 %v997
      %v1146 = vpop.f32.mrb[0].mxu0
      %v1147 = vadd.f32 0.0, %v1146
      %v1148 = vpop.f32.mrb[0].mxu0
      %1149 = vmatprep.mubr.f32.mxu0 0.0
      %1150 = vmatmul.mubr.f32.gmra.mrb[0].mxu0 %v1000
      %v1151 = vpop.f32.mrb[0].mxu0
      %v1152 = vadd.f32 0.0, %v1151
      %v1153 = vpop.f32.mrb[0].mxu0
      %1154 = vdwg.mxu0
      %1155 = vmax.xlane.f32.xlu0 %v1117
      %v1156 = vpop.xlane.xlu0 %1155
      %1157 = vmax.xlane.f32.xlu0 %v1122
      %v1158 = vpop.xlane.xlu0 %1157
      %1159 = vmax.xlane.f32.xlu0 %v1127
      %v1160 = vpop.xlane.xlu0 %1159
      %1161 = vmax.xlane.f32.xlu0 %v1132
      %v1162 = vpop.xlane.xlu0 %1161
      %1163 = vmax.xlane.f32.xlu0 %v1137
      %v1164 = vpop.xlane.xlu0 %1163
      %1165 = vmax.xlane.f32.xlu0 %v1142
      %v1166 = vpop.xlane.xlu0 %1165
      %1167 = vmax.xlane.f32.xlu0 %v1147
      %v1168 = vpop.xlane.xlu0 %1167
      %1169 = vmax.xlane.f32.xlu0 %v1152
      %v1170 = vpop.xlane.xlu0 %1169
      %v1171 = vlaneseq
      %v1172 = vand.u32 %v1171, 127
      %vm1173 = vcmp.ge.f32.partialorder %v1117, %v1156
      %vm1174 = vcmp.ge.f32.partialorder %v1122, %v1158
      %vm1175 = vcmp.ge.f32.partialorder %v1127, %v1160
      %vm1176 = vcmp.ge.f32.partialorder %v1132, %v1162
      %vm1177 = vcmp.ge.f32.partialorder %v1137, %v1164
      %vm1178 = vcmp.ge.f32.partialorder %v1142, %v1166
      %vm1179 = vcmp.ge.f32.partialorder %v1147, %v1168
      %vm1180 = vcmp.ge.f32.partialorder %v1152, %v1170
      %v1181 = vsel %vm1173, %v1172, 128
      %v1182 = vsel %vm1174, %v1172, 128
      %v1183 = vsel %vm1175, %v1172, 128
      %v1184 = vsel %vm1176, %v1172, 128
      %v1185 = vsel %vm1177, %v1172, 128
      %v1186 = vsel %vm1178, %v1172, 128
      %v1187 = vsel %vm1179, %v1172, 128
      %v1188 = vsel %vm1180, %v1172, 128
      %v1189 = vand.u32 %v1181, 65535
      %v1190 = vshra.s32 %v1181, 16
      %v1191 = vcvt.s32.f32 %v1189
      %v1192 = vcvt.s32.f32 %v1190
      %1193 = vmin.xlane.f32.xlu0 %v1192
      %v1194 = vpop.xlane.xlu0 %1193
      %vm1195 = vcmp.eq.f32.partialorder %v1192, %v1194
      %v1196 = vsel %vm1195, %v1191, inf
      %1197 = vmin.xlane.f32.xlu0 %v1196
      %v1198 = vpop.xlane.xlu0 %1197
      %v1199 = vcvt.f32.s32 %v1198
      %v1200 = vcvt.f32.s32 %v1194
      %v1201 = vshll.u32 %v1200, 16
      %v1202 = vadd.s32 %v1201, %v1199
      %v1203 = vand.u32 %v1182, 65535
      %v1204 = vshra.s32 %v1182, 16
      %v1205 = vcvt.s32.f32 %v1203
      %v1206 = vcvt.s32.f32 %v1204
      %1207 = vmin.xlane.f32.xlu0 %v1206
      %v1208 = vpop.xlane.xlu0 %1207
      %vm1209 = vcmp.eq.f32.partialorder %v1206, %v1208
      %v1210 = vsel %vm1209, %v1205, inf
      %1211 = vmin.xlane.f32.xlu0 %v1210
      %v1212 = vpop.xlane.xlu0 %1211
      %v1213 = vcvt.f32.s32 %v1212
      %v1214 = vcvt.f32.s32 %v1208
      %v1215 = vshll.u32 %v1214, 16
      %v1216 = vadd.s32 %v1215, %v1213
      %v1217 = vand.u32 %v1183, 65535
      %v1218 = vshra.s32 %v1183, 16
      %v1219 = vcvt.s32.f32 %v1217
      %v1220 = vcvt.s32.f32 %v1218
      %1221 = vmin.xlane.f32.xlu0 %v1220
      %v1222 = vpop.xlane.xlu0 %1221
      %vm1223 = vcmp.eq.f32.partialorder %v1220, %v1222
      %v1224 = vsel %vm1223, %v1219, inf
      %1225 = vmin.xlane.f32.xlu0 %v1224
      %v1226 = vpop.xlane.xlu0 %1225
      %v1227 = vcvt.f32.s32 %v1226
      %v1228 = vcvt.f32.s32 %v1222
      %v1229 = vshll.u32 %v1228, 16
      %v1230 = vadd.s32 %v1229, %v1227
      %v1231 = vand.u32 %v1184, 65535
      %v1232 = vshra.s32 %v1184, 16
      %v1233 = vcvt.s32.f32 %v1231
      %v1234 = vcvt.s32.f32 %v1232
      %1235 = vmin.xlane.f32.xlu0 %v1234
      %v1236 = vpop.xlane.xlu0 %1235
      %vm1237 = vcmp.eq.f32.partialorder %v1234, %v1236
      %v1238 = vsel %vm1237, %v1233, inf
      %1239 = vmin.xlane.f32.xlu0 %v1238
      %v1240 = vpop.xlane.xlu0 %1239
      %v1241 = vcvt.f32.s32 %v1240
      %v1242 = vcvt.f32.s32 %v1236
      %v1243 = vshll.u32 %v1242, 16
      %v1244 = vadd.s32 %v1243, %v1241
      %v1245 = vand.u32 %v1185, 65535
      %v1246 = vshra.s32 %v1185, 16
      %v1247 = vcvt.s32.f32 %v1245
      %v1248 = vcvt.s32.f32 %v1246
      %1249 = vmin.xlane.f32.xlu0 %v1248
      %v1250 = vpop.xlane.xlu0 %1249
      %vm1251 = vcmp.eq.f32.partialorder %v1248, %v1250
      %v1252 = vsel %vm1251, %v1247, inf
      %1253 = vmin.xlane.f32.xlu0 %v1252
      %v1254 = vpop.xlane.xlu0 %1253
      %v1255 = vcvt.f32.s32 %v1254
      %v1256 = vcvt.f32.s32 %v1250
      %v1257 = vshll.u32 %v1256, 16
      %v1258 = vadd.s32 %v1257, %v1255
      %v1259 = vand.u32 %v1186, 65535
      %v1260 = vshra.s32 %v1186, 16
      %v1261 = vcvt.s32.f32 %v1259
      %v1262 = vcvt.s32.f32 %v1260
      %1263 = vmin.xlane.f32.xlu0 %v1262
      %v1264 = vpop.xlane.xlu0 %1263
      %vm1265 = vcmp.eq.f32.partialorder %v1262, %v1264
      %v1266 = vsel %vm1265, %v1261, inf
      %1267 = vmin.xlane.f32.xlu0 %v1266
      %v1268 = vpop.xlane.xlu0 %1267
      %v1269 = vcvt.f32.s32 %v1268
      %v1270 = vcvt.f32.s32 %v1264
      %v1271 = vshll.u32 %v1270, 16
      %v1272 = vadd.s32 %v1271, %v1269
      %v1273 = vand.u32 %v1187, 65535
      %v1274 = vshra.s32 %v1187, 16
      %v1275 = vcvt.s32.f32 %v1273
      %v1276 = vcvt.s32.f32 %v1274
      %1277 = vmin.xlane.f32.xlu0 %v1276
      %v1278 = vpop.xlane.xlu0 %1277
      %vm1279 = vcmp.eq.f32.partialorder %v1276, %v1278
      %v1280 = vsel %vm1279, %v1275, inf
      %1281 = vmin.xlane.f32.xlu0 %v1280
      %v1282 = vpop.xlane.xlu0 %1281
      %v1283 = vcvt.f32.s32 %v1282
      %v1284 = vcvt.f32.s32 %v1278
      %v1285 = vshll.u32 %v1284, 16
      %v1286 = vadd.s32 %v1285, %v1283
      %v1287 = vand.u32 %v1188, 65535
      %v1288 = vshra.s32 %v1188, 16
      %v1289 = vcvt.s32.f32 %v1287
      %v1290 = vcvt.s32.f32 %v1288
      %1291 = vmin.xlane.f32.xlu0 %v1290
      %v1292 = vpop.xlane.xlu0 %1291
      %vm1293 = vcmp.eq.f32.partialorder %v1290, %v1292
      %v1294 = vsel %vm1293, %v1289, inf
      %1295 = vmin.xlane.f32.xlu0 %v1294
      %v1296 = vpop.xlane.xlu0 %1295
      %v1297 = vcvt.f32.s32 %v1296
      %v1298 = vcvt.f32.s32 %v1292
      %v1299 = vshll.u32 %v1298, 16
      %v1300 = vadd.s32 %v1299, %v1297
      %vm1301 = vcmask 7168
      %1302 = vst.msk [vmem:[%s253] sm:$0xff] %vm1301, %v1202
      %1303 = vst.msk [vmem:[%s253 + $0x8] sm:$0xff] %vm1301, %v1216
      %1304 = vst.msk [vmem:[%s253 + $0x10] sm:$0xff] %vm1301, %v1230
      %1305 = vst.msk [vmem:[%s253 + $0x18] sm:$0xff] %vm1301, %v1244
      %1306 = vst.msk [vmem:[%s253 + $0x20] sm:$0xff] %vm1301, %v1258
      %1307 = vst.msk [vmem:[%s253 + $0x28] sm:$0xff] %vm1301, %v1272
      %1308 = vst.msk [vmem:[%s253 + $0x30] sm:$0xff] %vm1301, %v1286
      %1309 = vst.msk [vmem:[%s253 + $0x38] sm:$0xff] %vm1301, %v1300
      %s1310 = smul.u32 8, %s17
      %p1311 = scmp.lt.s32.totalorder %s1310, 15
      %s1312 = scalar_select %p1311, %s1310, 15
      %s1313 = smul.addr %s1312, 8
      %s1314 = scalar_lea.vmem %s6, %s1313
      // Predicated region
      $region45: #{forward.2} parent=43 // pred_check
        %p1315 = pneg %p166
      $region46: #{forward.2} parent=43 // pred_check_branch
        %1317 = sbr.rel (%p1315) target = $region48
      $region47: #{forward.2} parent=43 // pred_region
        %s1318 = smul.u32 8, %s17
      $region48: #{forward.2} parent=43 // pred_fallthru
        _
    $region44: #{forward.2} parent=5 // pred_fallthru
      _
    %p1319 = scmp.le.s32.totalorder 2, %s12
    // Predicated region
    $region49: #{forward.2} parent=5 // pred_check
      %p1320 = pneg %p1319
    $region50: #{forward.2} parent=5 // pred_check_branch
      %1322 = sbr.rel (%p1320) target = $region52
    $region51: #{forward.2} parent=5 // pred_region
      %s1323 = ssub.s32 %s12, 2
      // Predicated region
      $region53: #{forward.2} parent=51 // pred_check
        %p1324 = pneg %p172
      $region54: #{forward.2} parent=51 // pred_check_branch
        %1326 = sbr.rel (%p1324) target = $region56
      $region55: #{forward.2} parent=51 // pred_region
        %s1327 = smul.u32 8, %s18
        %p1328 = scmp.lt.s32.totalorder %s1327, 15
        %s1329 = scalar_select %p1328, %s1327, 15
        %s1330 = smul.addr %s1329, 8
        %s1331 = scalar_lea.vmem %s6, %s1330
      $region56: #{forward.2} parent=51 // pred_fallthru
        _
    $region52: #{forward.2} parent=5 // pred_fallthru
      _
  $region6: #{forward.2} parent=0 // loop_footer
    %s16 = sadd.s32 1, %s12
  $region7: #{forward.2} parent=0 // loop_footer_branch
    %11 = sbr.rel target = $region3
  $region8: #{forward.2} parent=0 // loop_exit
    _

// kernel: forward.3
$region0: #{forward.3}
  #allocation0 [shape = 'u32[]', space=smem, size = 0x4, offset = 0x4, fixed_abs, tag = 'smem constant byte address 0x4 - core index']
  #allocation1 [shape = 'u32[144,128]{1,0:T(1,128)}', space=vmem, size = 0x12000, scoped, tag = 'internal scratch']
  %s0 = inlined_call_operand.vmem [shape: f32[2,64,64], index: 0, kind: input, shape index: {}]
  %s1 = inlined_call_operand.vmem [shape: f32[2,1,64], index: 1, kind: input, shape index: {}]
  %s2 = inlined_call_operand.vmem [shape: f32[2,1,64], index: 2, kind: input, shape index: {}]
  %s3 = inlined_call_operand.vmem [shape: bf16[2,64,192], index: 3, kind: input, shape index: {}]
  %s4 = inlined_call_operand.vmem [shape: f32[2,1,192], index: 4, kind: input, shape index: {}]
  %s5 = inlined_call_operand.vmem [shape: bf16[2,64,64], index: 5, kind: input, shape index: {}]
  %s6 = inlined_call_operand.vmem [shape: f32[2,1,64], index: 6, kind: input, shape index: {}]
  %s7 = inlined_call_operand.vmem [shape: f32[2,1,64], index: 7, kind: input, shape index: {}]
  %s8 = inlined_call_operand.vmem [shape: f32[2,1,64], index: 8, kind: input, shape index: {}]
  %s9 = inlined_call_operand.vmem [shape: bf16[2,64,256], index: 9, kind: input, shape index: {}]
  %s10 = inlined_call_operand.vmem [shape: f32[2,1,256], index: 10, kind: input, shape index: {}]
  %s11 = inlined_call_operand.vmem [shape: bf16[2,256,64], index: 11, kind: input, shape index: {}]
  %s12 = inlined_call_operand.vmem [shape: f32[2,1,64], index: 12, kind: input, shape index: {}]
  %s13 = inlined_call_operand.vmem [shape: f32[1,64], index: 13, kind: input, shape index: {}]
  %s14 = inlined_call_operand.vmem [shape: f32[1,64], index: 14, kind: input, shape index: {}]
  %s15 = inlined_call_operand.vmem [shape: bf16[64,256], index: 15, kind: input, shape index: {}]
  %s16 = inlined_call_operand.vmem [shape: f32[1,256], index: 16, kind: input, shape index: {}]
  %s17 = inlined_call_operand.hbm [shape: f32[2,64,256], index: 17, kind: output, shape index: {}]
  %s18 = sld [smem:[#allocation0]]
  $region101: #{forward.3} parent=0
    _
  %s20 = ssub.s32 1, %s18
  %s21 = scalar_select 0, %s20, %s18
  $region1: #{forward.3} parent=0
    #allocation2 [shape = 'u8[131072]{0}', space=vmem, size = 0x20000, scoped, tag = 'output window, operand 0']
    #allocation3 [shape = 's32[2]{0}', space=sflag, size = 0x8, scoped, tag = 'scoped memory for forward.3']
    %22 = vsyncpa [#allocation3], 0
    %s23 = scalar_lea.sflag [#allocation3], 1
    %24 = vsyncpa %s23, 0
    loop: start=0, step=1, limit=4
    $region2: #{forward.3} parent=1 // loop_pre_header
      _
    $region3: #{forward.3} parent=1 // loop_header
      %s26 = sphi 0, %s30
      %p27 = scmp.ge.s32.totalorder %s26, 4
      %s36 = sphi 0, %s38
      %s39 = sphi 0, %s36
      %s40 = sphi 0, %s39
      %s56 = sphi 0, %s40
      %s60 = sphi 0, %s60
      %s62 = sphi 0, %s60
      %s63 = sphi 0, %s62
      %s77 = sphi 0, %s63
      %s81 = sphi 0, %s81
      %s83 = sphi 0, %s81
      %s84 = sphi 0, %s83
      %s98 = sphi 0, %s84
      %s102 = sphi 0, %s102
      %s104 = sphi 0, %s102
      %s105 = sphi 0, %s104
      %s119 = sphi 0, %s105
      %s123 = sphi 0, %s123
      %s125 = sphi 0, %s123
      %s126 = sphi 0, %s125
      %s140 = sphi 0, %s126
      %s144 = sphi 0, %s144
      %s146 = sphi 0, %s144
      %s147 = sphi 0, %s146
      %s161 = sphi 0, %s147
      %s165 = sphi 0, %s165
      %s167 = sphi 0, %s165
      %s168 = sphi 0, %s167
      %s182 = sphi 0, %s168
      %s186 = sphi 0, %s186
      %s188 = sphi 0, %s186
      %s189 = sphi 0, %s188
      %s203 = sphi 0, %s189
      %s207 = sphi 0, %s207
      %s209 = sphi 0, %s207
      %s210 = sphi 0, %s209
      %s224 = sphi 0, %s210
      %s228 = sphi 0, %s228
      %s230 = sphi 0, %s228
      %s231 = sphi 0, %s230
      %s245 = sphi 0, %s231
      %s249 = sphi 0, %s249
      %s251 = sphi 0, %s249
      %s252 = sphi 0, %s251
      %s266 = sphi 0, %s252
      %s270 = sphi 0, %s270
      %s272 = sphi 0, %s270
      %s273 = sphi 0, %s272
      %s287 = sphi 0, %s273
      %s291 = sphi 0, %s291
      %s293 = sphi 0, %s291
      %s294 = sphi 0, %s293
      %s308 = sphi 0, %s294
      %s312 = sphi 0, %s312
      %s314 = sphi 0, %s312
      %s315 = sphi 0, %s314
      %s329 = sphi 0, %s315
      %s333 = sphi 0, %s333
      %s335 = sphi 0, %s333
      %s336 = sphi 0, %s335
      %s350 = sphi 0, %s336
      %s354 = sphi 0, %s354
      %s356 = sphi 0, %s354
      %s357 = sphi 0, %s356
      %s371 = sphi 0, %s357
      %s375 = sphi 0, %s375
      %s377 = sphi 0, %s375
      %s378 = sphi 0, %s377
      %s392 = sphi 0, %s378
      %s398 = sphi 0, %s400
      %s401 = sphi 0, %s398
      %s402 = sphi 0, %s401
      %s418 = sphi 0, %s402
    $region4: #{forward.3} parent=1 // loop_header_branch
      %29 = sbr.rel (%p27) target = $region8
    $region5: #{forward.3} parent=1 // loop_body
      %s31 = ssub.s32 %s26, 1
      %s32 = ssub.s32 %s26, 2
      %s33 = sadd.s32 %s26, 1
      %s34 = ssub.s32 %s26, %s33
      %p35 = scmp.eq.s32.totalorder %s34, 0
      %s37 = sadd.s32 %s36, 1
      %s38 = scalar_select %p35, %s36, %s37
      %p41 = pneg %p35
      %p42 = scmp.eq.s32.totalorder %s26, 1
      %p43 = por %p41, %p42
      %p44 = scmp.ne.s32.totalorder %s36, %s39
      %p45 = scmp.eq.s32.totalorder %s26, 0
      %p46 = por %p44, %p45
      %p47 = scmp.ne.s32.totalorder %s36, %s39
      %p48 = scmp.eq.s32.totalorder %s31, 1
      %p49 = por %p47, %p48
      %p50 = scmp.ne.s32.totalorder %s39, %s40
      %p51 = scmp.eq.s32.totalorder %s31, 0
      %p52 = por %p50, %p51
      %p53 = scmp.ne.s32.totalorder %s39, %s40
      %p54 = scmp.eq.s32.totalorder %s32, 1
      %p55 = por %p53, %p54
      %p57 = scmp.ne.s32.totalorder %s40, %s56
      %p58 = scmp.eq.s32.totalorder %s32, 0
      %p59 = por %p57, %p58
      %s61 = sadd.s32 %s60, 1
      %p64 = scmp.eq.s32.totalorder %s26, 1
      %p65 = scmp.ne.s32.totalorder %s60, %s62
      %p66 = scmp.eq.s32.totalorder %s26, 0
      %p67 = por %p65, %p66
      %p68 = scmp.ne.s32.totalorder %s60, %s62
      %p69 = scmp.eq.s32.totalorder %s31, 1
      %p70 = por %p68, %p69
      %p71 = scmp.ne.s32.totalorder %s62, %s63
      %p72 = scmp.eq.s32.totalorder %s31, 0
      %p73 = por %p71, %p72
      %p74 = scmp.ne.s32.totalorder %s62, %s63
      %p75 = scmp.eq.s32.totalorder %s32, 1
      %p76 = por %p74, %p75
      %p78 = scmp.ne.s32.totalorder %s63, %s77
      %p79 = scmp.eq.s32.totalorder %s32, 0
      %p80 = por %p78, %p79
      %s82 = sadd.s32 %s81, 1
      %p85 = scmp.eq.s32.totalorder %s26, 1
      %p86 = scmp.ne.s32.totalorder %s81, %s83
      %p87 = scmp.eq.s32.totalorder %s26, 0
      %p88 = por %p86, %p87
      %p89 = scmp.ne.s32.totalorder %s81, %s83
      %p90 = scmp.eq.s32.totalorder %s31, 1
      %p91 = por %p89, %p90
      %p92 = scmp.ne.s32.totalorder %s83, %s84
      %p93 = scmp.eq.s32.totalorder %s31, 0
      %p94 = por %p92, %p93
      %p95 = scmp.ne.s32.totalorder %s83, %s84
      %p96 = scmp.eq.s32.totalorder %s32, 1
      %p97 = por %p95, %p96
      %p99 = scmp.ne.s32.totalorder %s84, %s98
      %p100 = scmp.eq.s32.totalorder %s32, 0
      %p101 = por %p99, %p100
      %s103 = sadd.s32 %s102, 1
      %p106 = scmp.eq.s32.totalorder %s26, 1
      %p107 = scmp.ne.s32.totalorder %s102, %s104
      %p108 = scmp.eq.s32.totalorder %s26, 0
      %p109 = por %p107, %p108
      %p110 = scmp.ne.s32.totalorder %s102, %s104
      %p111 = scmp.eq.s32.totalorder %s31, 1
      %p112 = por %p110, %p111
      %p113 = scmp.ne.s32.totalorder %s104, %s105
      %p114 = scmp.eq.s32.totalorder %s31, 0
      %p115 = por %p113, %p114
      %p116 = scmp.ne.s32.totalorder %s104, %s105
      %p117 = scmp.eq.s32.totalorder %s32, 1
      %p118 = por %p116, %p117
      %p120 = scmp.ne.s32.totalorder %s105, %s119
      %p121 = scmp.eq.s32.totalorder %s32, 0
      %p122 = por %p120, %p121
      %s124 = sadd.s32 %s123, 1
      %p127 = scmp.eq.s32.totalorder %s26, 1
      %p128 = scmp.ne.s32.totalorder %s123, %s125
      %p129 = scmp.eq.s32.totalorder %s26, 0
      %p130 = por %p128, %p129
      %p131 = scmp.ne.s32.totalorder %s123, %s125
      %p132 = scmp.eq.s32.totalorder %s31, 1
      %p133 = por %p131, %p132
      %p134 = scmp.ne.s32.totalorder %s125, %s126
      %p135 = scmp.eq.s32.totalorder %s31, 0
      %p136 = por %p134, %p135
      %p137 = scmp.ne.s32.totalorder %s125, %s126
      %p138 = scmp.eq.s32.totalorder %s32, 1
      %p139 = por %p137, %p138
      %p141 = scmp.ne.s32.totalorder %s126, %s140
      %p142 = scmp.eq.s32.totalorder %s32, 0
      %p143 = por %p141, %p142
      %s145 = sadd.s32 %s144, 1
      %p148 = scmp.eq.s32.totalorder %s26, 1
      %p149 = scmp.ne.s32.totalorder %s144, %s146
      %p150 = scmp.eq.s32.totalorder %s26, 0
      %p151 = por %p149, %p150
      %p152 = scmp.ne.s32.totalorder %s144, %s146
      %p153 = scmp.eq.s32.totalorder %s31, 1
      %p154 = por %p152, %p153
      %p155 = scmp.ne.s32.totalorder %s146, %s147
      %p156 = scmp.eq.s32.totalorder %s31, 0
      %p157 = por %p155, %p156
      %p158 = scmp.ne.s32.totalorder %s146, %s147
      %p159 = scmp.eq.s32.totalorder %s32, 1
      %p160 = por %p158, %p159
      %p162 = scmp.ne.s32.totalorder %s147, %s161
      %p163 = scmp.eq.s32.totalorder %s32, 0
      %p164 = por %p162, %p163
      %s166 = sadd.s32 %s165, 1
      %p169 = scmp.eq.s32.totalorder %s26, 1
      %p170 = scmp.ne.s32.totalorder %s165, %s167
      %p171 = scmp.eq.s32.totalorder %s26, 0
      %p172 = por %p170, %p171
      %p173 = scmp.ne.s32.totalorder %s165, %s167
      %p174 = scmp.eq.s32.totalorder %s31, 1
      %p175 = por %p173, %p174
      %p176 = scmp.ne.s32.totalorder %s167, %s168
      %p177 = scmp.eq.s32.totalorder %s31, 0
      %p178 = por %p176, %p177
      %p179 = scmp.ne.s32.totalorder %s167, %s168
      %p180 = scmp.eq.s32.totalorder %s32, 1
      %p181 = por %p179, %p180
      %p183 = scmp.ne.s32.totalorder %s168, %s182
      %p184 = scmp.eq.s32.totalorder %s32, 0
      %p185 = por %p183, %p184
      %s187 = sadd.s32 %s186, 1
      %p190 = scmp.eq.s32.totalorder %s26, 1
      %p191 = scmp.ne.s32.totalorder %s186, %s188
      %p192 = scmp.eq.s32.totalorder %s26, 0
      %p193 = por %p191, %p192
      %p194 = scmp.ne.s32.totalorder %s186, %s188
      %p195 = scmp.eq.s32.totalorder %s31, 1
      %p196 = por %p194, %p195
      %p197 = scmp.ne.s32.totalorder %s188, %s189
      %p198 = scmp.eq.s32.totalorder %s31, 0
      %p199 = por %p197, %p198
      %p200 = scmp.ne.s32.totalorder %s188, %s189
      %p201 = scmp.eq.s32.totalorder %s32, 1
      %p202 = por %p200, %p201
      %p204 = scmp.ne.s32.totalorder %s189, %s203
      %p205 = scmp.eq.s32.totalorder %s32, 0
      %p206 = por %p204, %p205
      %s208 = sadd.s32 %s207, 1
      %p211 = scmp.eq.s32.totalorder %s26, 1
      %p212 = scmp.ne.s32.totalorder %s207, %s209
      %p213 = scmp.eq.s32.totalorder %s26, 0
      %p214 = por %p212, %p213
      %p215 = scmp.ne.s32.totalorder %s207, %s209
      %p216 = scmp.eq.s32.totalorder %s31, 1
      %p217 = por %p215, %p216
      %p218 = scmp.ne.s32.totalorder %s209, %s210
      %p219 = scmp.eq.s32.totalorder %s31, 0
      %p220 = por %p218, %p219
      %p221 = scmp.ne.s32.totalorder %s209, %s210
      %p222 = scmp.eq.s32.totalorder %s32, 1
      %p223 = por %p221, %p222
      %p225 = scmp.ne.s32.totalorder %s210, %s224
      %p226 = scmp.eq.s32.totalorder %s32, 0
      %p227 = por %p225, %p226
      %s229 = sadd.s32 %s228, 1
      %p232 = scmp.eq.s32.totalorder %s26, 1
      %p233 = scmp.ne.s32.totalorder %s228, %s230
      %p234 = scmp.eq.s32.totalorder %s26, 0
      %p235 = por %p233, %p234
      %p236 = scmp.ne.s32.totalorder %s228, %s230
      %p237 = scmp.eq.s32.totalorder %s31, 1
      %p238 = por %p236, %p237
      %p239 = scmp.ne.s32.totalorder %s230, %s231
      %p240 = scmp.eq.s32.totalorder %s31, 0
      %p241 = por %p239, %p240
      %p242 = scmp.ne.s32.totalorder %s230, %s231
      %p243 = scmp.eq.s32.totalorder %s32, 1
      %p244 = por %p242, %p243
      %p246 = scmp.ne.s32.totalorder %s231, %s245
      %p247 = scmp.eq.s32.totalorder %s32, 0
      %p248 = por %p246, %p247
      %s250 = sadd.s32 %s249, 1
      %p253 = scmp.eq.s32.totalorder %s26, 1
      %p254 = scmp.ne.s32.totalorder %s249, %s251
      %p255 = scmp.eq.s32.totalorder %s26, 0
      %p256 = por %p254, %p255
      %p257 = scmp.ne.s32.totalorder %s249, %s251
      %p258 = scmp.eq.s32.totalorder %s31, 1
      %p259 = por %p257, %p258
      %p260 = scmp.ne.s32.totalorder %s251, %s252
      %p261 = scmp.eq.s32.totalorder %s31, 0
      %p262 = por %p260, %p261
      %p263 = scmp.ne.s32.totalorder %s251, %s252
      %p264 = scmp.eq.s32.totalorder %s32, 1
      %p265 = por %p263, %p264
      %p267 = scmp.ne.s32.totalorder %s252, %s266
      %p268 = scmp.eq.s32.totalorder %s32, 0
      %p269 = por %p267, %p268
      %s271 = sadd.s32 %s270, 1
      %p274 = scmp.eq.s32.totalorder %s26, 1
      %p275 = scmp.ne.s32.totalorder %s270, %s272
      %p276 = scmp.eq.s32.totalorder %s26, 0
      %p277 = por %p275, %p276
      %p278 = scmp.ne.s32.totalorder %s270, %s272
      %p279 = scmp.eq.s32.totalorder %s31, 1
      %p280 = por %p278, %p279
      %p281 = scmp.ne.s32.totalorder %s272, %s273
      %p282 = scmp.eq.s32.totalorder %s31, 0
      %p283 = por %p281, %p282
      %p284 = scmp.ne.s32.totalorder %s272, %s273
      %p285 = scmp.eq.s32.totalorder %s32, 1
      %p286 = por %p284, %p285
      %p288 = scmp.ne.s32.totalorder %s273, %s287
      %p289 = scmp.eq.s32.totalorder %s32, 0
      %p290 = por %p288, %p289
      %s292 = sadd.s32 %s291, 1
      %p295 = scmp.eq.s32.totalorder %s26, 1
      %p296 = scmp.ne.s32.totalorder %s291, %s293
      %p297 = scmp.eq.s32.totalorder %s26, 0
      %p298 = por %p296, %p297
      %p299 = scmp.ne.s32.totalorder %s291, %s293
      %p300 = scmp.eq.s32.totalorder %s31, 1
      %p301 = por %p299, %p300
      %p302 = scmp.ne.s32.totalorder %s293, %s294
      %p303 = scmp.eq.s32.totalorder %s31, 0
      %p304 = por %p302, %p303
      %p305 = scmp.ne.s32.totalorder %s293, %s294
      %p306 = scmp.eq.s32.totalorder %s32, 1
      %p307 = por %p305, %p306
      %p309 = scmp.ne.s32.totalorder %s294, %s308
      %p310 = scmp.eq.s32.totalorder %s32, 0
      %p311 = por %p309, %p310
      %s313 = sadd.s32 %s312, 1
      %p316 = scmp.eq.s32.totalorder %s26, 1
      %p317 = scmp.ne.s32.totalorder %s312, %s314
      %p318 = scmp.eq.s32.totalorder %s26, 0
      %p319 = por %p317, %p318
      %p320 = scmp.ne.s32.totalorder %s312, %s314
      %p321 = scmp.eq.s32.totalorder %s31, 1
      %p322 = por %p320, %p321
      %p323 = scmp.ne.s32.totalorder %s314, %s315
      %p324 = scmp.eq.s32.totalorder %s31, 0
      %p325 = por %p323, %p324
      %p326 = scmp.ne.s32.totalorder %s314, %s315
      %p327 = scmp.eq.s32.totalorder %s32, 1
      %p328 = por %p326, %p327
      %p330 = scmp.ne.s32.totalorder %s315, %s329
      %p331 = scmp.eq.s32.totalorder %s32, 0
      %p332 = por %p330, %p331
      %s334 = sadd.s32 %s333, 1
      %p337 = scmp.eq.s32.totalorder %s26, 1
      %p338 = scmp.ne.s32.totalorder %s333, %s335
      %p339 = scmp.eq.s32.totalorder %s26, 0
      %p340 = por %p338, %p339
      %p341 = scmp.ne.s32.totalorder %s333, %s335
      %p342 = scmp.eq.s32.totalorder %s31, 1
      %p343 = por %p341, %p342
      %p344 = scmp.ne.s32.totalorder %s335, %s336
      %p345 = scmp.eq.s32.totalorder %s31, 0
      %p346 = por %p344, %p345
      %p347 = scmp.ne.s32.totalorder %s335, %s336
      %p348 = scmp.eq.s32.totalorder %s32, 1
      %p349 = por %p347, %p348
      %p351 = scmp.ne.s32.totalorder %s336, %s350
      %p352 = scmp.eq.s32.totalorder %s32, 0
      %p353 = por %p351, %p352
      %s355 = sadd.s32 %s354, 1
      %p358 = scmp.eq.s32.totalorder %s26, 1
      %p359 = scmp.ne.s32.totalorder %s354, %s356
      %p360 = scmp.eq.s32.totalorder %s26, 0
      %p361 = por %p359, %p360
      %p362 = scmp.ne.s32.totalorder %s354, %s356
      %p363 = scmp.eq.s32.totalorder %s31, 1
      %p364 = por %p362, %p363
      %p365 = scmp.ne.s32.totalorder %s356, %s357
      %p366 = scmp.eq.s32.totalorder %s31, 0
      %p367 = por %p365, %p366
      %p368 = scmp.ne.s32.totalorder %s356, %s357
      %p369 = scmp.eq.s32.totalorder %s32, 1
      %p370 = por %p368, %p369
      %p372 = scmp.ne.s32.totalorder %s357, %s371
      %p373 = scmp.eq.s32.totalorder %s32, 0
      %p374 = por %p372, %p373
      %s376 = sadd.s32 %s375, 1
      %p379 = scmp.eq.s32.totalorder %s26, 1
      %p380 = scmp.ne.s32.totalorder %s375, %s377
      %p381 = scmp.eq.s32.totalorder %s26, 0
      %p382 = por %p380, %p381
      %p383 = scmp.ne.s32.totalorder %s375, %s377
      %p384 = scmp.eq.s32.totalorder %s31, 1
      %p385 = por %p383, %p384
      %p386 = scmp.ne.s32.totalorder %s377, %s378
      %p387 = scmp.eq.s32.totalorder %s31, 0
      %p388 = por %p386, %p387
      %p389 = scmp.ne.s32.totalorder %s377, %s378
      %p390 = scmp.eq.s32.totalorder %s32, 1
      %p391 = por %p389, %p390
      %p393 = scmp.ne.s32.totalorder %s378, %s392
      %p394 = scmp.eq.s32.totalorder %s32, 0
      %p395 = por %p393, %p394
      %s396 = ssub.s32 %s26, %s33
      %p397 = scmp.eq.s32.totalorder %s396, 0
      %s399 = sadd.s32 %s398, 1
      %s400 = scalar_select %p397, %s398, %s399
      %p403 = pneg %p397
      %p404 = scmp.eq.s32.totalorder %s26, 1
      %p405 = por %p403, %p404
      %p406 = scmp.ne.s32.totalorder %s398, %s401
      %p407 = scmp.eq.s32.totalorder %s26, 0
      %p408 = por %p406, %p407
      %p409 = scmp.ne.s32.totalorder %s398, %s401
      %p410 = scmp.eq.s32.totalorder %s31, 1
      %p411 = por %p409, %p410
      %p412 = scmp.ne.s32.totalorder %s401, %s402
      %p413 = scmp.eq.s32.totalorder %s31, 0
      %p414 = por %p412, %p413
      %p415 = scmp.ne.s32.totalorder %s401, %s402
      %p416 = scmp.eq.s32.totalorder %s32, 1
      %p417 = por %p415, %p416
      %p419 = scmp.ne.s32.totalorder %s402, %s418
      %p420 = scmp.eq.s32.totalorder %s32, 0
      %p421 = por %p419, %p420
      %p422 = scmp.le.s32.totalorder 1, %s26
      %p423 = scmp.lt.s32.totalorder %s26, 3
      %p424 = pnand %p422, %p423
      %p425 = pneg %p424
      // Predicated region
      $region9: #{forward.3} parent=5 // pred_check
        _
      $region10: #{forward.3} parent=5 // pred_check_branch
        %427 = sbr.rel (%p424) target = $region12
      $region11: #{forward.3} parent=5 // pred_region
        %s428 = ssub.s32 %s26, 1
        // Predicated region
        $region13: #{forward.3} parent=11 // pred_check
          %p429 = pneg %p73
        $region14: #{forward.3} parent=11 // pred_check_branch
          %431 = sbr.rel (%p429) target = $region16
        $region15: #{forward.3} parent=11 // pred_region
          _
        $region16: #{forward.3} parent=11 // pred_fallthru
          _
        // Predicated region
        $region17: #{forward.3} parent=11 // pred_check
          %p432 = pneg %p94
        $region18: #{forward.3} parent=11 // pred_check_branch
          %434 = sbr.rel (%p432) target = $region20
        $region19: #{forward.3} parent=11 // pred_region
          _
        $region20: #{forward.3} parent=11 // pred_fallthru
          _
        // Predicated region
        $region21: #{forward.3} parent=11 // pred_check
          %p435 = pneg %p115
        $region22: #{forward.3} parent=11 // pred_check_branch
          %437 = sbr.rel (%p435) target = $region24
        $region23: #{forward.3} parent=11 // pred_region
          _
        $region24: #{forward.3} parent=11 // pred_fallthru
          _
        // Predicated region
        $region25: #{forward.3} parent=11 // pred_check
          %p438 = pneg %p136
        $region26: #{forward.3} parent=11 // pred_check_branch
          %440 = sbr.rel (%p438) target = $region28
        $region27: #{forward.3} parent=11 // pred_region
          _
        $region28: #{forward.3} parent=11 // pred_fallthru
          _
        // Predicated region
        $region29: #{forward.3} parent=11 // pred_check
          %p441 = pneg %p157
        $region30: #{forward.3} parent=11 // pred_check_branch
          %443 = sbr.rel (%p441) target = $region32
        $region31: #{forward.3} parent=11 // pred_region
          _
        $region32: #{forward.3} parent=11 // pred_fallthru
          _
        // Predicated region
        $region33: #{forward.3} parent=11 // pred_check
          %p444 = pneg %p178
        $region34: #{forward.3} parent=11 // pred_check_branch
          %446 = sbr.rel (%p444) target = $region36
        $region35: #{forward.3} parent=11 // pred_region
          _
        $region36: #{forward.3} parent=11 // pred_fallthru
          _
        // Predicated region
        $region37: #{forward.3} parent=11 // pred_check
          %p447 = pneg %p199
        $region38: #{forward.3} parent=11 // pred_check_branch
          %449 = sbr.rel (%p447) target = $region40
        $region39: #{forward.3} parent=11 // pred_region
          _
        $region40: #{forward.3} parent=11 // pred_fallthru
          _
        // Predicated region
        $region41: #{forward.3} parent=11 // pred_check
          %p450 = pneg %p220
        $region42: #{forward.3} parent=11 // pred_check_branch
          %452 = sbr.rel (%p450) target = $region44
        $region43: #{forward.3} parent=11 // pred_region
          _
        $region44: #{forward.3} parent=11 // pred_fallthru
          _
        // Predicated region
        $region45: #{forward.3} parent=11 // pred_check
          %p453 = pneg %p241
        $region46: #{forward.3} parent=11 // pred_check_branch
          %455 = sbr.rel (%p453) target = $region48
        $region47: #{forward.3} parent=11 // pred_region
          _
        $region48: #{forward.3} parent=11 // pred_fallthru
          _
        // Predicated region
        $region49: #{forward.3} parent=11 // pred_check
          %p456 = pneg %p262
        $region50: #{forward.3} parent=11 // pred_check_branch
          %458 = sbr.rel (%p456) target = $region52
        $region51: #{forward.3} parent=11 // pred_region
          _
        $region52: #{forward.3} parent=11 // pred_fallthru
          _
        // Predicated region
        $region53: #{forward.3} parent=11 // pred_check
          %p459 = pneg %p283
        $region54: #{forward.3} parent=11 // pred_check_branch
          %461 = sbr.rel (%p459) target = $region56
        $region55: #{forward.3} parent=11 // pred_region
          _
        $region56: #{forward.3} parent=11 // pred_fallthru
          _
        // Predicated region
        $region57: #{forward.3} parent=11 // pred_check
          %p462 = pneg %p304
        $region58: #{forward.3} parent=11 // pred_check_branch
          %464 = sbr.rel (%p462) target = $region60
        $region59: #{forward.3} parent=11 // pred_region
          _
        $region60: #{forward.3} parent=11 // pred_fallthru
          _
        // Predicated region
        $region61: #{forward.3} parent=11 // pred_check
          %p465 = pneg %p325
        $region62: #{forward.3} parent=11 // pred_check_branch
          %467 = sbr.rel (%p465) target = $region64
        $region63: #{forward.3} parent=11 // pred_region
          _
        $region64: #{forward.3} parent=11 // pred_fallthru
          _
        // Predicated region
        $region65: #{forward.3} parent=11 // pred_check
          %p468 = pneg %p346
        $region66: #{forward.3} parent=11 // pred_check_branch
          %470 = sbr.rel (%p468) target = $region68
        $region67: #{forward.3} parent=11 // pred_region
          _
        $region68: #{forward.3} parent=11 // pred_fallthru
          _
        // Predicated region
        $region69: #{forward.3} parent=11 // pred_check
          %p471 = pneg %p367
        $region70: #{forward.3} parent=11 // pred_check_branch
          %473 = sbr.rel (%p471) target = $region72
        $region71: #{forward.3} parent=11 // pred_region
          _
        $region72: #{forward.3} parent=11 // pred_fallthru
          _
        // Predicated region
        $region73: #{forward.3} parent=11 // pred_check
          %p474 = pneg %p388
        $region74: #{forward.3} parent=11 // pred_check_branch
          %476 = sbr.rel (%p474) target = $region76
        $region75: #{forward.3} parent=11 // pred_region
          _
        $region76: #{forward.3} parent=11 // pred_fallthru
          _
      $region12: #{forward.3} parent=5 // pred_fallthru
        _
      %p477 = scmp.lt.s32.totalorder %s26, 2
      // Predicated region
      $region77: #{forward.3} parent=5 // pred_check
        %p478 = pneg %p477
      $region78: #{forward.3} parent=5 // pred_check_branch
        %480 = sbr.rel (%p478) target = $region80
      $region79: #{forward.3} parent=5 // pred_region
        // Predicated region
        $region81: #{forward.3} parent=79 // pred_check
          %p481 = pneg %p46
        $region82: #{forward.3} parent=79 // pred_check_branch
          %483 = sbr.rel (%p481) target = $region84
        $region83: #{forward.3} parent=79 // pred_region
          %p484 = scmp.lt.s32.totalorder %s26, 1
          %s485 = scalar_select %p484, %s26, 1
          %s486 = smul.addr %s485, 8
          %s487 = smul.addr %s486, 8
          %s488 = scalar_lea.vmem %s0, %s487
        $region84: #{forward.3} parent=79 // pred_fallthru
          _
      $region80: #{forward.3} parent=5 // pred_fallthru
        _
      %p489 = scmp.le.s32.totalorder 1, %s26
      %p490 = scmp.lt.s32.totalorder %s26, 3
      %p491 = pnand %p489, %p490
      %p492 = pneg %p491
      // Predicated region
      $region85: #{forward.3} parent=5 // pred_check
        _
      $region86: #{forward.3} parent=5 // pred_check_branch
        %494 = sbr.rel (%p491) target = $region88
      $region87: #{forward.3} parent=5 // pred_region
        %s495 = ssub.s32 %s26, 1
        %p496 = scmp.lt.s32.totalorder %s31, 1
        %s497 = scalar_select %p496, %s31, 1
        %s498 = smul.addr %s497, 8
        %s499 = smul.addr %s498, 8
        %s500 = scalar_lea.vmem %s0, %s499
        %p501 = pneg %p52
        %p502 = pneg %p49
        %p503 = pneg %p73
        %p504 = pneg %p70
        %p505 = pneg %p94
        %p506 = pneg %p91
        %p507 = pneg %p115
        %p508 = pneg %p112
        %p509 = pneg %p136
        %p510 = pneg %p133
        %p511 = pneg %p157
        %p512 = pneg %p154
        %p513 = pneg %p178
        %p514 = pneg %p175
        %p515 = pneg %p199
        %p516 = pneg %p196
        %p517 = pneg %p220
        %p518 = pneg %p217
        %p519 = pneg %p241
        %p520 = pneg %p238
        %p521 = pneg %p262
        %p522 = pneg %p259
        %p523 = pneg %p283
        %p524 = pneg %p280
        %p525 = pneg %p304
        %p526 = pneg %p301
        %p527 = pneg %p325
        %p528 = pneg %p322
        %p529 = pneg %p346
        %p530 = pneg %p343
        %p531 = pneg %p367
        %p532 = pneg %p364
        %p533 = pneg %p388
        %p534 = pneg %p385
        %p535 = pneg %p414
        %p536 = pneg %p411
        %s537 = sand.u32 %s401, 1
        %s538 = scalar_lea.sflag [#allocation3], %s537
        %s539 = sand.u32 %s401, 1
        %s540 = smul.addr %s539, 128
        %s541 = scalar_lea.vmem [#allocation2], %s540
        %p542 = scmp.lt.s32.totalorder %s31, 1
        %s543 = scalar_select %p542, %s31, 1
        %s544 = smul.addr %s543, 8
        %s545 = smul.addr %s544, 8
        %s546 = scalar_lea.vmem %s0, %s545
        %v548 = vld [vmem:[%s546] sm:$0xff]
        %v549 = vld [vmem:[%s546 + $0x8] sm:$0xff]
        %v550 = vld [vmem:[%s546 + $0x10] sm:$0xff]
        %v551 = vld [vmem:[%s546 + $0x18] sm:$0xff]
        %v552 = vld [vmem:[%s546 + $0x20] sm:$0xff]
        %v553 = vld [vmem:[%s546 + $0x28] sm:$0xff]
        %v554 = vld [vmem:[%s546 + $0x30] sm:$0xff]
        %v555 = vld [vmem:[%s546 + $0x38] sm:$0xff]
        %v556 = vlaneseq
        %v557 = vshrl.u32 %v556, 7
        %v558 = vadd.s32 %v557, 8
        %v559 = vadd.s32 %v557, 16
        %v560 = vadd.s32 %v557, 24
        %v561 = vadd.s32 %v557, 32
        %v562 = vadd.s32 %v557, 40
        %v563 = vadd.s32 %v557, 48
        %v564 = vadd.s32 %v557, 56
        %v565 = vlaneseq
        %v566 = vand.u32 %v565, 127
        %vm567 = vcmp.le.s32.totalorder %v566, %v557
        %vm568 = vcmp.le.s32.totalorder %v566, %v558
        %vm569 = vcmp.le.s32.totalorder %v566, %v559
        %vm570 = vcmp.le.s32.totalorder %v566, %v560
        %vm571 = vcmp.le.s32.totalorder %v566, %v561
        %vm572 = vcmp.le.s32.totalorder %v566, %v562
        %vm573 = vcmp.le.s32.totalorder %v566, %v563
        %vm574 = vcmp.le.s32.totalorder %v566, %v564
        %v575 = vsel %vm567, 0.0, -1e+30
        %v576 = vsel %vm568, 0.0, -1e+30
        %v577 = vsel %vm569, 0.0, -1e+30
        %v578 = vsel %vm570, 0.0, -1e+30
        %v579 = vsel %vm571, 0.0, -1e+30
        %v580 = vsel %vm572, 0.0, -1e+30
        %v581 = vsel %vm573, 0.0, -1e+30
        %v582 = vsel %vm574, 0.0, -1e+30
        %v583 = vld [vmem:[%s1] sm:$0x1]
        %v584 = vld [vmem:[%s2] sm:$0x1]
        %vm585 = vcmask 523264
        %v586 = vsel %vm585, %v548, 0.0
        %587 = vadd.xlane.f32.xlu0 %v586
        %v588 = vpop.xlane.xlu0 %587
        %v589 = vsel %vm585, %v549, 0.0
        %590 = vadd.xlane.f32.xlu0 %v589
        %v591 = vpop.xlane.xlu0 %590
        %v592 = vsel %vm585, %v550, 0.0
        %593 = vadd.xlane.f32.xlu0 %v592
        %v594 = vpop.xlane.xlu0 %593
        %v595 = vsel %vm585, %v551, 0.0
        %596 = vadd.xlane.f32.xlu0 %v595
        %v597 = vpop.xlane.xlu0 %596
        %v598 = vsel %vm585, %v552, 0.0
        %599 = vadd.xlane.f32.xlu0 %v598
        %v600 = vpop.xlane.xlu0 %599
        %v601 = vsel %vm585, %v553, 0.0
        %602 = vadd.xlane.f32.xlu0 %v601
        %v603 = vpop.xlane.xlu0 %602
        %v604 = vsel %vm585, %v554, 0.0
        %605 = vadd.xlane.f32.xlu0 %v604
        %v606 = vpop.xlane.xlu0 %605
        %v607 = vsel %vm585, %v555, 0.0
        %608 = vadd.xlane.f32.xlu0 %v607
        %v609 = vpop.xlane.xlu0 %608
        %v610 = vrcp.pop 64.0
        %v611 = vmul.f32 %v588, %v610
        %v612 = vmul.f32 %v591, %v610
        %v613 = vmul.f32 %v594, %v610
        %v614 = vmul.f32 %v597, %v610
        %v615 = vmul.f32 %v600, %v610
        %v616 = vmul.f32 %v603, %v610
        %v617 = vmul.f32 %v606, %v610
        %v618 = vmul.f32 %v609, %v610
        %v619 = vsub.f32 %v548, %v611
        %v620 = vsub.f32 %v549, %v612
        %v621 = vsub.f32 %v550, %v613
        %v622 = vsub.f32 %v551, %v614
        %v623 = vsub.f32 %v552, %v615
        %v624 = vsub.f32 %v553, %v616
        %v625 = vsub.f32 %v554, %v617
        %v626 = vsub.f32 %v555, %v618
        %v627 = vmul.f32 %v619, %v619
        %v628 = vmul.f32 %v620, %v620
        %v629 = vmul.f32 %v621, %v621
        %v630 = vmul.f32 %v622, %v622
        %v631 = vmul.f32 %v623, %v623
        %v632 = vmul.f32 %v624, %v624
        %v633 = vmul.f32 %v625, %v625
        %v634 = vmul.f32 %v626, %v626
        %v635 = vsel %vm585, %v627, 0.0
        %636 = vadd.xlane.f32.xlu0 %v635
        %v637 = vpop.xlane.xlu0 %636
        %v638 = vsel %vm585, %v628, 0.0
        %639 = vadd.xlane.f32.xlu0 %v638
        %v640 = vpop.xlane.xlu0 %639
        %v641 = vsel %vm585, %v629, 0.0
        %642 = vadd.xlane.f32.xlu0 %v641
        %v643 = vpop.xlane.xlu0 %642
        %v644 = vsel %vm585, %v630, 0.0
        %645 = vadd.xlane.f32.xlu0 %v644
        %v646 = vpop.xlane.xlu0 %645
        %v647 = vsel %vm585, %v631, 0.0
        %648 = vadd.xlane.f32.xlu0 %v647
        %v649 = vpop.xlane.xlu0 %648
        %v650 = vsel %vm585, %v632, 0.0
        %651 = vadd.xlane.f32.xlu0 %v650
        %v652 = vpop.xlane.xlu0 %651
        %v653 = vsel %vm585, %v633, 0.0
        %654 = vadd.xlane.f32.xlu0 %v653
        %v655 = vpop.xlane.xlu0 %654
        %v656 = vsel %vm585, %v634, 0.0
        %657 = vadd.xlane.f32.xlu0 %v656
        %v658 = vpop.xlane.xlu0 %657
        %v659 = vmul.f32 %v637, %v610
        %v660 = vmul.f32 %v640, %v610
        %v661 = vmul.f32 %v643, %v610
        %v662 = vmul.f32 %v646, %v610
        %v663 = vmul.f32 %v649, %v610
        %v664 = vmul.f32 %v652, %v610
        %v665 = vmul.f32 %v655, %v610
        %v666 = vmul.f32 %v658, %v610
        %v667 = vadd.f32 %v659, 1e-05
        %v668 = vadd.f32 %v660, 1e-05
        %v669 = vadd.f32 %v661, 1e-05
        %v670 = vadd.f32 %v662, 1e-05
        %v671 = vadd.f32 %v663, 1e-05
        %v672 = vadd.f32 %v664, 1e-05
        %v673 = vadd.f32 %v665, 1e-05
        %v674 = vadd.f32 %v666, 1e-05
        %v675 = vrsqrt.pop %v667
        %v676 = vrsqrt.pop %v668
        %v677 = vrsqrt.pop %v669
        %v678 = vrsqrt.pop %v670
        %v679 = vrsqrt.pop %v671
        %v680 = vrsqrt.pop %v672
        %v681 = vrsqrt.pop %v673
        %v682 = vrsqrt.pop %v674
        %v683 = vmul.f32 %v619, %v675
        %v684 = vmul.f32 %v620, %v676
        %v685 = vmul.f32 %v621, %v677
        %v686 = vmul.f32 %v622, %v678
        %v687 = vmul.f32 %v623, %v679
        %v688 = vmul.f32 %v624, %v680
        %v689 = vmul.f32 %v625, %v681
        %v690 = vmul.f32 %v626, %v682
        %v692 = vlaneseq
        %v693 = vshrl.u32 %v692, 7
        %v694 = vsub.s32 0, %v693
        %v695 = vrot.slane %v583, %v694
        %v697 = vmul.f32 %v683, %v695
        %v698 = vmul.f32 %v684, %v695
        %v699 = vmul.f32 %v685, %v695
        %v700 = vmul.f32 %v686, %v695
        %v701 = vmul.f32 %v687, %v695
        %v702 = vmul.f32 %v688, %v695
        %v703 = vmul.f32 %v689, %v695
        %v704 = vmul.f32 %v690, %v695
        %v706 = vlaneseq
        %v707 = vshrl.u32 %v706, 7
        %v708 = vsub.s32 0, %v707
        %v709 = vrot.slane %v584, %v708
        %v711 = vadd.f32 %v697, %v709
        %v712 = vadd.f32 %v698, %v709
        %v713 = vadd.f32 %v699, %v709
        %v714 = vadd.f32 %v700, %v709
        %v715 = vadd.f32 %v701, %v709
        %v716 = vadd.f32 %v702, %v709
        %v717 = vadd.f32 %v703, %v709
        %v718 = vadd.f32 %v704, %v709
        %v719 = vpack.c.bf16 %v712, %v711
        %v720 = vpack.c.bf16 %v714, %v713
        %v721 = vpack.c.bf16 %v716, %v715
        %v722 = vpack.c.bf16 %v718, %v717
        %v723 = vld [vmem:[%s3] sm:$0xff]
        %v724 = vld [vmem:[%s3 + $0x8] sm:$0xff]
        %v725 = vld [vmem:[%s3 + $0x10] sm:$0xff]
        %v726 = vld [vmem:[%s3 + $0x18] sm:$0xff]
        %v727 = vld [vmem:[%s3 + $0x20] sm:$0xff]
        %v728 = vld [vmem:[%s3 + $0x28] sm:$0xff]
        %v729 = vld [vmem:[%s3 + $0x30] sm:$0xff]
        %v730 = vld [vmem:[%s3 + $0x38] sm:$0xff]
        %v731 = vld [vmem:[%s4] sm:$0x3]
        %v733 = vlaneseq
        %v734 = vshrl.u32 %v733, 7
        %v735 = vsub.s32 0, %v734
        %v736 = vrot.slane %v731, %v735
        %v737 = vlaneseq
        %v738 = vshrl.u32 %v737, 7
        %v739 = vsub.s32 1, %v738
        %v740 = vrot.slane %v731, %v739
        %v751 = vunpack.c.l.b16 %v723
        %v752 = vunpack.c.h.b16 %v723
        %v753 = vunpack.c.l.b16 %v724
        %v754 = vunpack.c.h.b16 %v724
        %v755 = vunpack.c.l.b16 %v725
        %v756 = vunpack.c.h.b16 %v725
        %v757 = vunpack.c.l.b16 %v726
        %v758 = vunpack.c.h.b16 %v726
        %v759 = vunpack.c.l.b16 %v727
        %v760 = vunpack.c.h.b16 %v727
        %v761 = vunpack.c.l.b16 %v728
        %v762 = vunpack.c.h.b16 %v728
        %v763 = vunpack.c.l.b16 %v729
        %v764 = vunpack.c.h.b16 %v729
        %v765 = vunpack.c.l.b16 %v730
        %v766 = vunpack.c.h.b16 %v730
        %v767 = vpack.c.b16 %v753, %v751
        %v768 = vpack.c.b16 %v754, %v752
        %v769 = vpack.c.b16 %v757, %v755
        %v770 = vpack.c.b16 %v758, %v756
        %v771 = vpack.c.b16 %v761, %v759
        %v772 = vpack.c.b16 %v762, %v760
        %v773 = vpack.c.b16 %v765, %v763
        %v774 = vpack.c.b16 %v766, %v764
        %v784 = vsel %vm585, %v719, 0
        %v787 = vsel %vm585, %v720, 0
        %v790 = vsel %vm585, %v721, 0
        %v793 = vsel %vm585, %v722, 0
        %795 = vmatprep.subr.bf16.mxu0 %v768
        %796 = vmatpush1.bf16.msra.mxu0 %v767
        %797 = vmatprep.subr.bf16.mxu0 %v770
        %798 = vmatpush1.bf16.msra.mxu0 %v769
        %799 = vmatprep.subr.bf16.mxu0 %v772
        %800 = vmatpush1.bf16.msra.mxu0 %v771
        %801 = vmatprep.subr.bf16.mxu0 %v774
        %802 = vmatpush1.bf16.msra.mxu0 %v773
        %803 = vmatprep.subr.bf16.mxu0 0
        %804 = vmatpush1.bf16.msra.mxu0 0
        %805 = vmatprep.subr.bf16.mxu0 0
        %806 = vmatpush1.bf16.msra.mxu0 0
        %807 = vmatprep.subr.bf16.mxu0 0
        %808 = vmatpush1.bf16.msra.mxu0 0
        %809 = vmatprep.subr.bf16.mxu0 0
        %810 = vmatpush1.bf16.msra.mxu0 0
        %811 = vmatprep.subr.bf16.mxu0 0
        %812 = vmatpush1.bf16.msra.mxu0 0
        %813 = vmatprep.subr.bf16.mxu0 0
        %814 = vmatpush1.bf16.msra.mxu0 0
        %815 = vmatprep.subr.bf16.mxu0 0
        %816 = vmatpush1.bf16.msra.mxu0 0
        %817 = vmatprep.subr.bf16.mxu0 0
        %818 = vmatpush1.bf16.msra.mxu0 0
        %819 = vmatprep.subr.bf16.mxu0 0
        %820 = vmatpush1.bf16.msra.mxu0 0
        %821 = vmatprep.subr.bf16.mxu0 0
        %822 = vmatpush1.bf16.msra.mxu0 0
        %823 = vmatprep.subr.bf16.mxu0 0
        %824 = vmatpush1.bf16.msra.mxu0 0
        %825 = vmatprep.subr.bf16.mxu0 0
        %826 = vmatpush1.bf16.msra.mxu0 0
        %827 = vmatprep.mubr.bf16.mxu0 0
        %828 = vmatmul.mubr.bf16.gmra.mrb[0].mxu0 %v784
        %v829 = vpop.f32.mrb[0].mxu0
        %v830 = vadd.f32 %v736, %v829
        %v831 = vpop.f32.mrb[0].mxu0
        %v832 = vadd.f32 %v740, %v831
        %v833 = vpop.f32.mrb[0].mxu0
        %v834 = vadd.f32 %v736, %v833
        %v835 = vpop.f32.mrb[0].mxu0
        %v836 = vadd.f32 %v740, %v835
        %837 = vmatprep.mubr.bf16.mxu0 0
        %838 = vmatmul.mubr.bf16.gmra.mrb[0].mxu0 %v787
        %v839 = vpop.f32.mrb[0].mxu0
        %v840 = vadd.f32 %v736, %v839
        %v841 = vpop.f32.mrb[0].mxu0
        %v842 = vadd.f32 %v740, %v841
        %v843 = vpop.f32.mrb[0].mxu0
        %v844 = vadd.f32 %v736, %v843
        %v845 = vpop.f32.mrb[0].mxu0
        %v846 = vadd.f32 %v740, %v845
        %847 = vmatprep.mubr.bf16.mxu0 0
        %848 = vmatmul.mubr.bf16.gmra.mrb[0].mxu0 %v790
        %v849 = vpop.f32.mrb[0].mxu0
        %v850 = vadd.f32 %v736, %v849
        %v851 = vpop.f32.mrb[0].mxu0
        %v852 = vadd.f32 %v740, %v851
        %v853 = vpop.f32.mrb[0].mxu0
        %v854 = vadd.f32 %v736, %v853
        %v855 = vpop.f32.mrb[0].mxu0
        %v856 = vadd.f32 %v740, %v855
        %857 = vmatprep.mubr.bf16.mxu0 0
        %858 = vmatmul.mubr.bf16.gmra.mrb[0].mxu0 %v793
        %v859 = vpop.f32.mrb[0].mxu0
        %v860 = vadd.f32 %v736, %v859
        %v861 = vpop.f32.mrb[0].mxu0
        %v862 = vadd.f32 %v740, %v861
        %v863 = vpop.f32.mrb[0].mxu0
        %v864 = vadd.f32 %v736, %v863
        %v865 = vpop.f32.mrb[0].mxu0
        %v866 = vadd.f32 %v740, %v865
        %867 = vdwg.mxu0
        %876 = vrot.lane.b32.xlu0 %v830, 64
        %v877 = vpop.permute.xlu0 %876
        %878 = vrot.lane.b32.xlu0 %v834, 64
        %v879 = vpop.permute.xlu0 %878
        %880 = vrot.lane.b32.xlu0 %v840, 64
        %v881 = vpop.permute.xlu0 %880
        %882 = vrot.lane.b32.xlu0 %v844, 64
        %v883 = vpop.permute.xlu0 %882
        %884 = vrot.lane.b32.xlu0 %v850, 64
        %v885 = vpop.permute.xlu0 %884
        %886 = vrot.lane.b32.xlu0 %v854, 64
        %v887 = vpop.permute.xlu0 %886
        %888 = vrot.lane.b32.xlu0 %v860, 64
        %v889 = vpop.permute.xlu0 %888
        %890 = vrot.lane.b32.xlu0 %v864, 64
        %v891 = vpop.permute.xlu0 %890
        %vm892 = vcmask 130048
        %v893 = vsel %vm892, %v830, 0
        %v895 = vsel %vm892, %v834, 0
        %v897 = vsel %vm892, %v840, 0
        %v899 = vsel %vm892, %v844, 0
        %v901 = vsel %vm892, %v850, 0
        %v903 = vsel %vm892, %v854, 0
        %v905 = vsel %vm892, %v860, 0
        %v907 = vsel %vm892, %v864, 0
        %v909 = vsel %vm892, %v877, 0
        %v911 = vsel %vm892, %v879, 0
        %v913 = vsel %vm892, %v881, 0
        %v915 = vsel %vm892, %v883, 0
        %v917 = vsel %vm892, %v885, 0
        %v919 = vsel %vm892, %v887, 0
        %v921 = vsel %vm892, %v889, 0
        %v923 = vsel %vm892, %v891, 0
        %925 = vmatprep.subr.mxu0 0.0
        %926 = vmatpush1.xpose.msra.mxu0 %v909
        %927 = vmatprep.subr.mxu0 0.0
        %928 = vmatpush1.xpose.msra.mxu0 %v911
        %929 = vmatprep.subr.mxu0 0.0
        %930 = vmatpush1.xpose.msra.mxu0 %v913
        %931 = vmatprep.subr.mxu0 0.0
        %932 = vmatpush1.xpose.msra.mxu0 %v915
        %933 = vmatprep.subr.mxu0 0.0
        %934 = vmatpush1.xpose.msra.mxu0 %v917
        %935 = vmatprep.subr.mxu0 0.0
        %936 = vmatpush1.xpose.msra.mxu0 %v919
        %937 = vmatprep.subr.mxu0 0.0
        %938 = vmatpush1.xpose.msra.mxu0 %v921
        %939 = vmatprep.subr.mxu0 0.0
        %940 = vmatpush1.xpose.msra.mxu0 %v923
        %941 = vmatprep.subr.mxu0 0.0
        %942 = vmatpush1.xpose.msra.mxu0 0.0
        %943 = vmatprep.subr.mxu0 0.0
        %944 = vmatpush1.xpose.msra.mxu0 0.0
        %945 = vmatprep.subr.mxu0 0.0
        %946 = vmatpush1.xpose.msra.mxu0 0.0
        %947 = vmatprep.subr.mxu0 0.0
        %948 = vmatpush1.xpose.msra.mxu0 0.0
        %949 = vmatprep.subr.mxu0 0.0
        %950 = vmatpush1.xpose.msra.mxu0 0.0
        %951 = vmatprep.subr.mxu0 0.0
        %952 = vmatpush1.xpose.msra.mxu0 0.0
        %953 = vmatprep.subr.mxu0 0.0
        %954 = vmatpush1.xpose.msra.mxu0 0.0
        %955 = vmatprep.subr.mxu0 0.0
        %956 = vmatpush1.xpose.msra.mxu0 0.0
        %957 = vmatprep.subr.mxu0 0.0
        %958 = vmatpush1.xpose.msra.mxu0 0.0
        %959 = vmatprep.subr.mxu0 0.0
        %960 = vmatpush1.xpose.msra.mxu0 0.0
        %961 = vmatprep.subr.mxu0 0.0
        %962 = vmatpush1.xpose.msra.mxu0 0.0
        %963 = vmatprep.subr.mxu0 0.0
        %964 = vmatpush1.xpose.msra.mxu0 0.0
        %965 = vmatprep.subr.mxu0 0.0
        %966 = vmatpush1.xpose.msra.mxu0 0.0
        %967 = vmatprep.subr.mxu0 0.0
        %968 = vmatpush1.xpose.msra.mxu0 0.0
        %969 = vmatprep.subr.mxu0 0.0
        %970 = vmatpush1.xpose.msra.mxu0 0.0
        %971 = vmatprep.subr.mxu0 0.0
        %972 = vmatpush1.xpose.msra.mxu0 0.0
        %973 = vmatprep.subr.mxu0 0.0
        %974 = vmatpush1.xpose.msra.mxu0 0.0
        %975 = vmatprep.subr.mxu0 0.0
        %976 = vmatpush1.xpose.msra.mxu0 0.0
        %977 = vmatprep.subr.mxu0 0.0
        %978 = vmatpush1.xpose.msra.mxu0 0.0
        %979 = vmatprep.subr.mxu0 0.0
        %980 = vmatpush1.xpose.msra.mxu0 0.0
        %981 = vmatprep.subr.mxu0 0.0
        %982 = vmatpush1.xpose.msra.mxu0 0.0
        %983 = vmatprep.subr.mxu0 0.0
        %984 = vmatpush1.xpose.msra.mxu0 0.0
        %985 = vmatprep.subr.mxu0 0.0
        %986 = vmatpush1.xpose.msra.mxu0 0.0
        %987 = vmatprep.subr.mxu0 0.0
        %988 = vmatpush1.xpose.msra.mxu0 0.0
        %989 = vmatprep.mubr.f32.mxu0 0.0
        %990 = vmatmul.mubr.f32.gmra.mrb[0].mxu0 %v893
        %v991 = vpop.f32.mrb[0].mxu0
        %v992 = vadd.f32 0.0, %v991
        %v993 = vpop.f32.mrb[0].mxu0
        %994 = vmatprep.mubr.f32.mxu0 0.0
        %995 = vmatmul.mubr.f32.gmra.mrb[0].mxu0 %v895
        %v996 = vpop.f32.mrb[0].mxu0
        %v997 = vadd.f32 0.0, %v996
        %v998 = vpop.f32.mrb[0].mxu0
        %999 = vmatprep.mubr.f32.mxu0 0.0
        %1000 = vmatmul.mubr.f32.gmra.mrb[0].mxu0 %v897
        %v1001 = vpop.f32.mrb[0].mxu0
        %v1002 = vadd.f32 0.0, %v1001
        %v1003 = vpop.f32.mrb[0].mxu0
        %1004 = vmatprep.mubr.f32.mxu0 0.0
        %1005 = vmatmul.mubr.f32.gmra.mrb[0].mxu0 %v899
        %v1006 = vpop.f32.mrb[0].mxu0
        %v1007 = vadd.f32 0.0, %v1006
        %v1008 = vpop.f32.mrb[0].mxu0
        %1009 = vmatprep.mubr.f32.mxu0 0.0
        %1010 = vmatmul.mubr.f32.gmra.mrb[0].mxu0 %v901
        %v1011 = vpop.f32.mrb[0].mxu0
        %v1012 = vadd.f32 0.0, %v1011
        %v1013 = vpop.f32.mrb[0].mxu0
        %1014 = vmatprep.mubr.f32.mxu0 0.0
        %1015 = vmatmul.mubr.f32.gmra.mrb[0].mxu0 %v903
        %v1016 = vpop.f32.mrb[0].mxu0
        %v1017 = vadd.f32 0.0, %v1016
        %v1018 = vpop.f32.mrb[0].mxu0
        %1019 = vmatprep.mubr.f32.mxu0 0.0
        %1020 = vmatmul.mubr.f32.gmra.mrb[0].mxu0 %v905
        %v1021 = vpop.f32.mrb[0].mxu0
        %v1022 = vadd.f32 0.0, %v1021
        %v1023 = vpop.f32.mrb[0].mxu0
        %1024 = vmatprep.mubr.f32.mxu0 0.0
        %1025 = vmatmul.mubr.f32.gmra.mrb[0].mxu0 %v907
        %v1026 = vpop.f32.mrb[0].mxu0
        %v1027 = vadd.f32 0.0, %v1026
        %v1028 = vpop.f32.mrb[0].mxu0
        %1029 = vdwg.mxu0
        %v1030 = vmul.f32 %v992, 0.25
        %v1031 = vmul.f32 %v997, 0.25
        %v1032 = vmul.f32 %v1002, 0.25
        %v1033 = vmul.f32 %v1007, 0.25
        %v1034 = vmul.f32 %v1012, 0.25
        %v1035 = vmul.f32 %v1017, 0.25
        %v1036 = vmul.f32 %v1022, 0.25
        %v1037 = vmul.f32 %v1027, 0.25
        %v1038 = vadd.f32 %v1030, %v575
        %v1039 = vadd.f32 %v1031, %v576
        %v1040 = vadd.f32 %v1032, %v577
        %v1041 = vadd.f32 %v1033, %v578
        %v1042 = vadd.f32 %v1034, %v579
        %v1043 = vadd.f32 %v1035, %v580
        %v1044 = vadd.f32 %v1036, %v581
        %v1045 = vadd.f32 %v1037, %v582
        %v1046 = vsel %vm585, %v1038, -inf
        %1047 = vmax.xlane.f32.xlu0 %v1046
        %v1048 = vpop.xlane.xlu0 %1047
        %v1049 = vsel %vm585, %v1039, -inf
        %1050 = vmax.xlane.f32.xlu0 %v1049
        %v1051 = vpop.xlane.xlu0 %1050
        %v1052 = vsel %vm585, %v1040, -inf
        %1053 = vmax.xlane.f32.xlu0 %v1052
        %v1054 = vpop.xlane.xlu0 %1053
        %v1055 = vsel %vm585, %v1041, -inf
        %1056 = vmax.xlane.f32.xlu0 %v1055
        %v1057 = vpop.xlane.xlu0 %1056
        %v1058 = vsel %vm585, %v1042, -inf
        %1059 = vmax.xlane.f32.xlu0 %v1058
        %v1060 = vpop.xlane.xlu0 %1059
        %v1061 = vsel %vm585, %v1043, -inf
        %1062 = vmax.xlane.f32.xlu0 %v1061
        %v1063 = vpop.xlane.xlu0 %1062
        %v1064 = vsel %vm585, %v1044, -inf
        %1065 = vmax.xlane.f32.xlu0 %v1064
        %v1066 = vpop.xlane.xlu0 %1065
        %v1067 = vsel %vm585, %v1045, -inf
        %1068 = vmax.xlane.f32.xlu0 %v1067
        %v1069 = vpop.xlane.xlu0 %1068
        %v1070 = vsub.f32 %v1038, %v1048
        %v1071 = vsub.f32 %v1039, %v1051
        %v1072 = vsub.f32 %v1040, %v1054
        %v1073 = vsub.f32 %v1041, %v1057
        %v1074 = vsub.f32 %v1042, %v1060
        %v1075 = vsub.f32 %v1043, %v1063
        %v1076 = vsub.f32 %v1044, %v1066
        %v1077 = vsub.f32 %v1045, %v1069
        %v1078 = vmul.f32 %v1070, 1.442695
        %v1079 = vpow.pop %v1078
        %v1080 = vmul.f32 %v1071, 1.442695
        %v1081 = vpow.pop %v1080
        %v1082 = vmul.f32 %v1072, 1.442695
        %v1083 = vpow.pop %v1082
        %v1084 = vmul.f32 %v1073, 1.442695
        %v1085 = vpow.pop %v1084
        %v1086 = vmul.f32 %v1074, 1.442695
        %v1087 = vpow.pop %v1086
        %v1088 = vmul.f32 %v1075, 1.442695
        %v1089 = vpow.pop %v1088
        %v1090 = vmul.f32 %v1076, 1.442695
        %v1091 = vpow.pop %v1090
        %v1092 = vmul.f32 %v1077, 1.442695
        %v1093 = vpow.pop %v1092
        %v1094 = vsel %vm585, %v1079, 0.0
        %1095 = vadd.xlane.f32.xlu0 %v1094
        %v1096 = vpop.xlane.xlu0 %1095
        %v1097 = vsel %vm585, %v1081, 0.0
        %1098 = vadd.xlane.f32.xlu0 %v1097
        %v1099 = vpop.xlane.xlu0 %1098
        %v1100 = vsel %vm585, %v1083, 0.0
        %1101 = vadd.xlane.f32.xlu0 %v1100
        %v1102 = vpop.xlane.xlu0 %1101
        %v1103 = vsel %vm585, %v1085, 0.0
        %1104 = vadd.xlane.f32.xlu0 %v1103
        %v1105 = vpop.xlane.xlu0 %1104
        %v1106 = vsel %vm585, %v1087, 0.0
        %1107 = vadd.xlane.f32.xlu0 %v1106
        %v1108 = vpop.xlane.xlu0 %1107
        %v1109 = vsel %vm585, %v1089, 0.0
        %1110 = vadd.xlane.f32.xlu0 %v1109
        %v1111 = vpop.xlane.xlu0 %1110
        %v1112 = vsel %vm585, %v1091, 0.0
        %1113 = vadd.xlane.f32.xlu0 %v1112
        %v1114 = vpop.xlane.xlu0 %1113
        %v1115 = vsel %vm585, %v1093, 0.0
        %1116 = vadd.xlane.f32.xlu0 %v1115
        %v1117 = vpop.xlane.xlu0 %1116
        %v1118 = vrcp.pop %v1096
        %v1119 = vrcp.pop %v1099
        %v1120 = vrcp.pop %v1102
        %v1121 = vrcp.pop %v1105
        %v1122 = vrcp.pop %v1108
        %v1123 = vrcp.pop %v1111
        %v1124 = vrcp.pop %v1114
        %v1125 = vrcp.pop %v1117
        %v1126 = vmul.f32 %v1079, %v1118
        %v1127 = vmul.f32 %v1081, %v1119
        %v1128 = vmul.f32 %v1083, %v1120
        %v1129 = vmul.f32 %v1085, %v1121
        %v1130 = vmul.f32 %v1087, %v1122
        %v1131 = vmul.f32 %v1089, %v1123
        %v1132 = vmul.f32 %v1091, %v1124
        %v1133 = vmul.f32 %v1093, %v1125
        %v1135 = vsel %vm585, %v1126, 0
        %v1138 = vsel %vm585, %v1127, 0
        %v1141 = vsel %vm585, %v1128, 0
        %v1144 = vsel %vm585, %v1129, 0
        %v1147 = vsel %vm585, %v1130, 0
        %v1150 = vsel %vm585, %v1131, 0
        %v1153 = vsel %vm585, %v1132, 0
        %v1156 = vsel %vm585, %v1133, 0
        %1158 = vmatprep.subr.mxu0 0.0
        %1159 = vmatpush1.msra.mxu0 %v832
        %1160 = vmatprep.subr.mxu0 0.0
        %1161 = vmatpush1.msra.mxu0 %v836
        %1162 = vmatprep.subr.mxu0 0.0
        %1163 = vmatpush1.msra.mxu0 %v842
        %1164 = vmatprep.subr.mxu0 0.0
        %1165 = vmatpush1.msra.mxu0 %v846
        %1166 = vmatprep.subr.mxu0 0.0
        %1167 = vmatpush1.msra.mxu0 %v852
        %1168 = vmatprep.subr.mxu0 0.0
        %1169 = vmatpush1.msra.mxu0 %v856
        %1170 = vmatprep.subr.mxu0 0.0
        %1171 = vmatpush1.msra.mxu0 %v862
        %1172 = vmatprep.subr.mxu0 0.0
        %1173 = vmatpush1.msra.mxu0 %v866
        %1174 = vmatprep.subr.mxu0 0.0
        %1175 = vmatpush1.msra.mxu0 0.0
        %1176 = vmatprep.subr.mxu0 0.0
        %1177 = vmatpush1.msra.mxu0 0.0
        %1178 = vmatprep.subr.mxu0 0.0
        %1179 = vmatpush1.msra.mxu0 0.0
        %1180 = vmatprep.subr.mxu0 0.0
        %1181 = vmatpush1.msra.mxu0 0.0
        %1182 = vmatprep.subr.mxu0 0.0
        %1183 = vmatpush1.msra.mxu0 0.0
        %1184 = vmatprep.subr.mxu0 0.0
        %1185 = vmatpush1.msra.mxu0 0.0
        %1186 = vmatprep.subr.mxu0 0.0
        %1187 = vmatpush1.msra.mxu0 0.0
        %1188 = vmatprep.subr.mxu0 0.0
        %1189 = vmatpush1.msra.mxu0 0.0
        %1190 = vmatprep.subr.mxu0 0.0
        %1191 = vmatpush1.msra.mxu0 0.0
        %1192 = vmatprep.subr.mxu0 0.0
        %1193 = vmatpush1.msra.mxu0 0.0
        %1194 = vmatprep.subr.mxu0 0.0
        %1195 = vmatpush1.msra.mxu0 0.0
        %1196 = vmatprep.subr.mxu0 0.0
        %1197 = vmatpush1.msra.mxu0 0.0
        %1198 = vmatprep.subr.mxu0 0.0
        %1199 = vmatpush1.msra.mxu0 0.0
        %1200 = vmatprep.subr.mxu0 0.0
        %1201 = vmatpush1.msra.mxu0 0.0
        %1202 = vmatprep.subr.mxu0 0.0
        %1203 = vmatpush1.msra.mxu0 0.0
        %1204 = vmatprep.subr.mxu0 0.0
        %1205 = vmatpush1.msra.mxu0 0.0
        %1206 = vmatprep.subr.mxu0 0.0
        %1207 = vmatpush1.msra.mxu0 0.0
        %1208 = vmatprep.subr.mxu0 0.0
        %1209 = vmatpush1.msra.mxu0 0.0
        %1210 = vmatprep.subr.mxu0 0.0
        %1211 = vmatpush1.msra.mxu0 0.0
        %1212 = vmatprep.subr.mxu0 0.0
        %1213 = vmatpush1.msra.mxu0 0.0
        %1214 = vmatprep.subr.mxu0 0.0
        %1215 = vmatpush1.msra.mxu0 0.0
        %1216 = vmatprep.subr.mxu0 0.0
        %1217 = vmatpush1.msra.mxu0 0.0
        %1218 = vmatprep.subr.mxu0 0.0
        %1219 = vmatpush1.msra.mxu0 0.0
        %1220 = vmatprep.subr.mxu0 0.0
        %1221 = vmatpush1.msra.mxu0 0.0
        %1222 = vmatprep.mubr.f32.mxu0 0.0
        %1223 = vmatmul.mubr.f32.gmra.mrb[0].mxu0 %v1135
        %v1224 = vpop.f32.mrb[0].mxu0
        %v1225 = vadd.f32 0.0, %v1224
        %v1226 = vpop.f32.mrb[0].mxu0
        %1227 = vmatprep.mubr.f32.mxu0 0.0
        %1228 = vmatmul.mubr.f32.gmra.mrb[0].mxu0 %v1138
        %v1229 = vpop.f32.mrb[0].mxu0
        %v1230 = vadd.f32 0.0, %v1229
        %v1231 = vpop.f32.mrb[0].mxu0
        %1232 = vmatprep.mubr.f32.mxu0 0.0
        %1233 = vmatmul.mubr.f32.gmra.mrb[0].mxu0 %v1141
        %v1234 = vpop.f32.mrb[0].mxu0
        %v1235 = vadd.f32 0.0, %v1234
        %v1236 = vpop.f32.mrb[0].mxu0
        %1237 = vmatprep.mubr.f32.mxu0 0.0
        %1238 = vmatmul.mubr.f32.gmra.mrb[0].mxu0 %v1144
        %v1239 = vpop.f32.mrb[0].mxu0
        %v1240 = vadd.f32 0.0, %v1239
        %v1241 = vpop.f32.mrb[0].mxu0
        %1242 = vmatprep.mubr.f32.mxu0 0.0
        %1243 = vmatmul.mubr.f32.gmra.mrb[0].mxu0 %v1147
        %v1244 = vpop.f32.mrb[0].mxu0
        %v1245 = vadd.f32 0.0, %v1244
        %v1246 = vpop.f32.mrb[0].mxu0
        %1247 = vmatprep.mubr.f32.mxu0 0.0
        %1248 = vmatmul.mubr.f32.gmra.mrb[0].mxu0 %v1150
        %v1249 = vpop.f32.mrb[0].mxu0
        %v1250 = vadd.f32 0.0, %v1249
        %v1251 = vpop.f32.mrb[0].mxu0
        %1252 = vmatprep.mubr.f32.mxu0 0.0
        %1253 = vmatmul.mubr.f32.gmra.mrb[0].mxu0 %v1153
        %v1254 = vpop.f32.mrb[0].mxu0
        %v1255 = vadd.f32 0.0, %v1254
        %v1256 = vpop.f32.mrb[0].mxu0
        %1257 = vmatprep.mubr.f32.mxu0 0.0
        %1258 = vmatmul.mubr.f32.gmra.mrb[0].mxu0 %v1156
        %v1259 = vpop.f32.mrb[0].mxu0
        %v1260 = vadd.f32 0.0, %v1259
        %v1261 = vpop.f32.mrb[0].mxu0
        %1262 = vdwg.mxu0
        %1263 = vrot.lane.b32.xlu0 %v830, 112
        %v1264 = vpop.permute.xlu0 %1263
        %1265 = vrot.lane.b32.xlu0 %v834, 112
        %v1266 = vpop.permute.xlu0 %1265
        %1267 = vrot.lane.b32.xlu0 %v840, 112
        %v1268 = vpop.permute.xlu0 %1267
        %1269 = vrot.lane.b32.xlu0 %v844, 112
        %v1270 = vpop.permute.xlu0 %1269
        %1271 = vrot.lane.b32.xlu0 %v850, 112
        %v1272 = vpop.permute.xlu0 %1271
        %1273 = vrot.lane.b32.xlu0 %v854, 112
        %v1274 = vpop.permute.xlu0 %1273
        %1275 = vrot.lane.b32.xlu0 %v860, 112
        %v1276 = vpop.permute.xlu0 %1275
        %1277 = vrot.lane.b32.xlu0 %v864, 112
        %v1278 = vpop.permute.xlu0 %1277
        %1279 = vrot.lane.b32.xlu0 %v830, 48
        %v1280 = vpop.permute.xlu0 %1279
        %1281 = vrot.lane.b32.xlu0 %v834, 48
        %v1282 = vpop.permute.xlu0 %1281
        %1283 = vrot.lane.b32.xlu0 %v840, 48
        %v1284 = vpop.permute.xlu0 %1283
        %1285 = vrot.lane.b32.xlu0 %v844, 48
        %v1286 = vpop.permute.xlu0 %1285
        %1287 = vrot.lane.b32.xlu0 %v850, 48
        %v1288 = vpop.permute.xlu0 %1287
        %1289 = vrot.lane.b32.xlu0 %v854, 48
        %v1290 = vpop.permute.xlu0 %1289
        %1291 = vrot.lane.b32.xlu0 %v860, 48
        %v1292 = vpop.permute.xlu0 %1291
        %1293 = vrot.lane.b32.xlu0 %v864, 48
        %v1294 = vpop.permute.xlu0 %1293
        %v1295 = vsel %vm892, %v1264, 0
        %v1297 = vsel %vm892, %v1266, 0
        %v1299 = vsel %vm892, %v1268, 0
        %v1301 = vsel %vm892, %v1270, 0
        %v1303 = vsel %vm892, %v1272, 0
        %v1305 = vsel %vm892, %v1274, 0
        %v1307 = vsel %vm892, %v1276, 0
        %v1309 = vsel %vm892, %v1278, 0
        %v1311 = vsel %vm892, %v1280, 0
        %v1313 = vsel %vm892, %v1282, 0
        %v1315 = vsel %vm892, %v1284, 0
        %v1317 = vsel %vm892, %v1286, 0
        %v1319 = vsel %vm892, %v1288, 0
        %v1321 = vsel %vm892, %v1290, 0
        %v1323 = vsel %vm892, %v1292, 0
        %v1325 = vsel %vm892, %v1294, 0
        %1327 = vmatprep.subr.mxu0 0.0
        %1328 = vmatpush1.xpose.msra.mxu0 %v1311
        %1329 = vmatprep.subr.mxu0 0.0
        %1330 = vmatpush1.xpose.msra.mxu0 %v1313
        %1331 = vmatprep.subr.mxu0 0.0
        %1332 = vmatpush1.xpose.msra.mxu0 %v1315
        %1333 = vmatprep.subr.mxu0 0.0
        %1334 = vmatpush1.xpose.msra.mxu0 %v1317
        %1335 = vmatprep.subr.mxu0 0.0
        %1336 = vmatpush1.xpose.msra.mxu0 %v1319
        %1337 = vmatprep.subr.mxu0 0.0
        %1338 = vmatpush1.xpose.msra.mxu0 %v1321
        %1339 = vmatprep.subr.mxu0 0.0
        %1340 = vmatpush1.xpose.msra.mxu0 %v1323
        %1341 = vmatprep.subr.mxu0 0.0
        %1342 = vmatpush1.xpose.msra.mxu0 %v1325
        %1343 = vmatprep.subr.mxu0 0.0
        %1344 = vmatpush1.xpose.msra.mxu0 0.0
        %1345 = vmatprep.subr.mxu0 0.0
        %1346 = vmatpush1.xpose.msra.mxu0 0.0
        %1347 = vmatprep.subr.mxu0 0.0
        %1348 = vmatpush1.xpose.msra.mxu0 0.0
        %1349 = vmatprep.subr.mxu0 0.0
        %1350 = vmatpush1.xpose.msra.mxu0 0.0
        %1351 = vmatprep.subr.mxu0 0.0
        %1352 = vmatpush1.xpose.msra.mxu0 0.0
        %1353 = vmatprep.subr.mxu0 0.0
        %1354 = vmatpush1.xpose.msra.mxu0 0.0
        %1355 = vmatprep.subr.mxu0 0.0
        %1356 = vmatpush1.xpose.msra.mxu0 0.0
        %1357 = vmatprep.subr.mxu0 0.0
        %1358 = vmatpush1.xpose.msra.mxu0 0.0
        %1359 = vmatprep.subr.mxu0 0.0
        %1360 = vmatpush1.xpose.msra.mxu0 0.0
        %1361 = vmatprep.subr.mxu0 0.0
        %1362 = vmatpush1.xpose.msra.mxu0 0.0
        %1363 = vmatprep.subr.mxu0 0.0
        %1364 = vmatpush1.xpose.msra.mxu0 0.0
        %1365 = vmatprep.subr.mxu0 0.0
        %1366 = vmatpush1.xpose.msra.mxu0 0.0
        %1367 = vmatprep.subr.mxu0 0.0
        %1368 = vmatpush1.xpose.msra.mxu0 0.0
        %1369 = vmatprep.subr.mxu0 0.0
        %1370 = vmatpush1.xpose.msra.mxu0 0.0
        %1371 = vmatprep.subr.mxu0 0.0
        %1372 = vmatpush1.xpose.msra.mxu0 0.0
        %1373 = vmatprep.subr.mxu0 0.0
        %1374 = vmatpush1.xpose.msra.mxu0 0.0
        %1375 = vmatprep.subr.mxu0 0.0
        %1376 = vmatpush1.xpose.msra.mxu0 0.0
        %1377 = vmatprep.subr.mxu0 0.0
        %1378 = vmatpush1.xpose.msra.mxu0 0.0
        %1379 = vmatprep.subr.mxu0 0.0
        %1380 = vmatpush1.xpose.msra.mxu0 0.0
        %1381 = vmatprep.subr.mxu0 0.0
        %1382 = vmatpush1.xpose.msra.mxu0 0.0
        %1383 = vmatprep.subr.mxu0 0.0
        %1384 = vmatpush1.xpose.msra.mxu0 0.0
        %1385 = vmatprep.subr.mxu0 0.0
        %1386 = vmatpush1.xpose.msra.mxu0 0.0
        %1387 = vmatprep.subr.mxu0 0.0
        %1388 = vmatpush1.xpose.msra.mxu0 0.0
        %1389 = vmatprep.subr.mxu0 0.0
        %1390 = vmatpush1.xpose.msra.mxu0 0.0
        %1391 = vmatprep.mubr.f32.mxu0 0.0
        %1392 = vmatmul.mubr.f32.gmra.mrb[0].mxu0 %v1295
        %v1393 = vpop.f32.mrb[0].mxu0
        %v1394 = vadd.f32 0.0, %v1393
        %v1395 = vpop.f32.mrb[0].mxu0
        %1396 = vmatprep.mubr.f32.mxu0 0.0
        %1397 = vmatmul.mubr.f32.gmra.mrb[0].mxu0 %v1297
        %v1398 = vpop.f32.mrb[0].mxu0
        %v1399 = vadd.f32 0.0, %v1398
        %v1400 = vpop.f32.mrb[0].mxu0
        %1401 = vmatprep.mubr.f32.mxu0 0.0
        %1402 = vmatmul.mubr.f32.gmra.mrb[0].mxu0 %v1299
        %v1403 = vpop.f32.mrb[0].mxu0
        %v1404 = vadd.f32 0.0, %v1403
        %v1405 = vpop.f32.mrb[0].mxu0
        %1406 = vmatprep.mubr.f32.mxu0 0.0
        %1407 = vmatmul.mubr.f32.gmra.mrb[0].mxu0 %v1301
        %v1408 = vpop.f32.mrb[0].mxu0
        %v1409 = vadd.f32 0.0, %v1408
        %v1410 = vpop.f32.mrb[0].mxu0
        %1411 = vmatprep.mubr.f32.mxu0 0.0
        %1412 = vmatmul.mubr.f32.gmra.mrb[0].mxu0 %v1303
        %v1413 = vpop.f32.mrb[0].mxu0
        %v1414 = vadd.f32 0.0, %v1413
        %v1415 = vpop.f32.mrb[0].mxu0
        %1416 = vmatprep.mubr.f32.mxu0 0.0
        %1417 = vmatmul.mubr.f32.gmra.mrb[0].mxu0 %v1305
        %v1418 = vpop.f32.mrb[0].mxu0
        %v1419 = vadd.f32 0.0, %v1418
        %v1420 = vpop.f32.mrb[0].mxu0
        %1421 = vmatprep.mubr.f32.mxu0 0.0
        %1422 = vmatmul.mubr.f32.gmra.mrb[0].mxu0 %v1307
        %v1423 = vpop.f32.mrb[0].mxu0
        %v1424 = vadd.f32 0.0, %v1423
        %v1425 = vpop.f32.mrb[0].mxu0
        %1426 = vmatprep.mubr.f32.mxu0 0.0
        %1427 = vmatmul.mubr.f32.gmra.mrb[0].mxu0 %v1309
        %v1428 = vpop.f32.mrb[0].mxu0
        %v1429 = vadd.f32 0.0, %v1428
        %v1430 = vpop.f32.mrb[0].mxu0
        %1431 = vdwg.mxu0
        %v1432 = vmul.f32 %v1394, 0.25
        %v1433 = vmul.f32 %v1399, 0.25
        %v1434 = vmul.f32 %v1404, 0.25
        %v1435 = vmul.f32 %v1409, 0.25
        %v1436 = vmul.f32 %v1414, 0.25
        %v1437 = vmul.f32 %v1419, 0.25
        %v1438 = vmul.f32 %v1424, 0.25
        %v1439 = vmul.f32 %v1429, 0.25
        %v1440 = vadd.f32 %v1432, %v575
        %v1441 = vadd.f32 %v1433, %v576
        %v1442 = vadd.f32 %v1434, %v577
        %v1443 = vadd.f32 %v1435, %v578
        %v1444 = vadd.f32 %v1436, %v579
        %v1445 = vadd.f32 %v1437, %v580
        %v1446 = vadd.f32 %v1438, %v581
        %v1447 = vadd.f32 %v1439, %v582
        %v1448 = vsel %vm585, %v1440, -inf
        %1449 = vmax.xlane.f32.xlu0 %v1448
        %v1450 = vpop.xlane.xlu0 %1449
        %v1451 = vsel %vm585, %v1441, -inf
        %1452 = vmax.xlane.f32.xlu0 %v1451
        %v1453 = vpop.xlane.xlu0 %1452
        %v1454 = vsel %vm585, %v1442, -inf
        %1455 = vmax.xlane.f32.xlu0 %v1454
        %v1456 = vpop.xlane.xlu0 %1455
        %v1457 = vsel %vm585, %v1443, -inf
        %1458 = vmax.xlane.f32.xlu0 %v1457
        %v1459 = vpop.xlane.xlu0 %1458
        %v1460 = vsel %vm585, %v1444, -inf
        %1461 = vmax.xlane.f32.xlu0 %v1460
        %v1462 = vpop.xlane.xlu0 %1461
        %v1463 = vsel %vm585, %v1445, -inf
        %1464 = vmax.xlane.f32.xlu0 %v1463
        %v1465 = vpop.xlane.xlu0 %1464
        %v1466 = vsel %vm585, %v1446, -inf
        %1467 = vmax.xlane.f32.xlu0 %v1466
        %v1468 = vpop.xlane.xlu0 %1467
        %v1469 = vsel %vm585, %v1447, -inf
        %1470 = vmax.xlane.f32.xlu0 %v1469
        %v1471 = vpop.xlane.xlu0 %1470
        %v1472 = vsub.f32 %v1440, %v1450
        %v1473 = vsub.f32 %v1441, %v1453
        %v1474 = vsub.f32 %v1442, %v1456
        %v1475 = vsub.f32 %v1443, %v1459
        %v1476 = vsub.f32 %v1444, %v1462
        %v1477 = vsub.f32 %v1445, %v1465
        %v1478 = vsub.f32 %v1446, %v1468
        %v1479 = vsub.f32 %v1447, %v1471
        %v1480 = vmul.f32 %v1472, 1.442695
        %v1481 = vpow.pop %v1480
        %v1482 = vmul.f32 %v1473, 1.442695
        %v1483 = vpow.pop %v1482
        %v1484 = vmul.f32 %v1474, 1.442695
        %v1485 = vpow.pop %v1484
        %v1486 = vmul.f32 %v1475, 1.442695
        %v1487 = vpow.pop %v1486
        %v1488 = vmul.f32 %v1476, 1.442695
        %v1489 = vpow.pop %v1488
        %v1490 = vmul.f32 %v1477, 1.442695
        %v1491 = vpow.pop %v1490
        %v1492 = vmul.f32 %v1478, 1.442695
        %v1493 = vpow.pop %v1492
        %v1494 = vmul.f32 %v1479, 1.442695
        %v1495 = vpow.pop %v1494
        %v1496 = vsel %vm585, %v1481, 0.0
        %1497 = vadd.xlane.f32.xlu0 %v1496
        %v1498 = vpop.xlane.xlu0 %1497
        %v1499 = vsel %vm585, %v1483, 0.0
        %1500 = vadd.xlane.f32.xlu0 %v1499
        %v1501 = vpop.xlane.xlu0 %1500
        %v1502 = vsel %vm585, %v1485, 0.0
        %1503 = vadd.xlane.f32.xlu0 %v1502
        %v1504 = vpop.xlane.xlu0 %1503
        %v1505 = vsel %vm585, %v1487, 0.0
        %1506 = vadd.xlane.f32.xlu0 %v1505
        %v1507 = vpop.xlane.xlu0 %1506
        %v1508 = vsel %vm585, %v1489, 0.0
        %1509 = vadd.xlane.f32.xlu0 %v1508
        %v1510 = vpop.xlane.xlu0 %1509
        %v1511 = vsel %vm585, %v1491, 0.0
        %1512 = vadd.xlane.f32.xlu0 %v1511
        %v1513 = vpop.xlane.xlu0 %1512
        %v1514 = vsel %vm585, %v1493, 0.0
        %1515 = vadd.xlane.f32.xlu0 %v1514
        %v1516 = vpop.xlane.xlu0 %1515
        %v1517 = vsel %vm585, %v1495, 0.0
        %1518 = vadd.xlane.f32.xlu0 %v1517
        %v1519 = vpop.xlane.xlu0 %1518
        %v1520 = vrcp.pop %v1498
        %v1521 = vrcp.pop %v1501
        %v1522 = vrcp.pop %v1504
        %v1523 = vrcp.pop %v1507
        %v1524 = vrcp.pop %v1510
        %v1525 = vrcp.pop %v1513
        %v1526 = vrcp.pop %v1516
        %v1527 = vrcp.pop %v1519
        %v1528 = vmul.f32 %v1481, %v1520
        %v1529 = vmul.f32 %v1483, %v1521
        %v1530 = vmul.f32 %v1485, %v1522
        %v1531 = vmul.f32 %v1487, %v1523
        %v1532 = vmul.f32 %v1489, %v1524
        %v1533 = vmul.f32 %v1491, %v1525
        %v1534 = vmul.f32 %v1493, %v1526
        %v1535 = vmul.f32 %v1495, %v1527
        %1544 = vrot.lane.b32.xlu0 %v832, 112
        %v1545 = vpop.permute.xlu0 %1544
        %1546 = vrot.lane.b32.xlu0 %v836, 112
        %v1547 = vpop.permute.xlu0 %1546
        %1548 = vrot.lane.b32.xlu0 %v842, 112
        %v1549 = vpop.permute.xlu0 %1548
        %1550 = vrot.lane.b32.xlu0 %v846, 112
        %v1551 = vpop.permute.xlu0 %1550
        %1552 = vrot.lane.b32.xlu0 %v852, 112
        %v1553 = vpop.permute.xlu0 %1552
        %1554 = vrot.lane.b32.xlu0 %v856, 112
        %v1555 = vpop.permute.xlu0 %1554
        %1556 = vrot.lane.b32.xlu0 %v862, 112
        %v1557 = vpop.permute.xlu0 %1556
        %1558 = vrot.lane.b32.xlu0 %v866, 112
        %v1559 = vpop.permute.xlu0 %1558
        %v1569 = vsel %vm585, %v1528, 0
        %v1572 = vsel %vm585, %v1529, 0
        %v1575 = vsel %vm585, %v1530, 0
        %v1578 = vsel %vm585, %v1531, 0
        %v1581 = vsel %vm585, %v1532, 0
        %v1584 = vsel %vm585, %v1533, 0
        %v1587 = vsel %vm585, %v1534, 0
        %v1590 = vsel %vm585, %v1535, 0
        %1592 = vmatprep.subr.mxu0 0.0
        %1593 = vmatpush1.msra.mxu0 %v1545
        %1594 = vmatprep.subr.mxu0 0.0
        %1595 = vmatpush1.msra.mxu0 %v1547
        %1596 = vmatprep.subr.mxu0 0.0
        %1597 = vmatpush1.msra.mxu0 %v1549
        %1598 = vmatprep.subr.mxu0 0.0
        %1599 = vmatpush1.msra.mxu0 %v1551
        %1600 = vmatprep.subr.mxu0 0.0
        %1601 = vmatpush1.msra.mxu0 %v1553
        %1602 = vmatprep.subr.mxu0 0.0
        %1603 = vmatpush1.msra.mxu0 %v1555
        %1604 = vmatprep.subr.mxu0 0.0
        %1605 = vmatpush1.msra.mxu0 %v1557
        %1606 = vmatprep.subr.mxu0 0.0
        %1607 = vmatpush1.msra.mxu0 %v1559
        %1608 = vmatprep.subr.mxu0 0.0
        %1609 = vmatpush1.msra.mxu0 0.0
        %1610 = vmatprep.subr.mxu0 0.0
        %1611 = vmatpush1.msra.mxu0 0.0
        %1612 = vmatprep.subr.mxu0 0.0
        %1613 = vmatpush1.msra.mxu0 0.0
        %1614 = vmatprep.subr.mxu0 0.0
        %1615 = vmatpush1.msra.mxu0 0.0
        %1616 = vmatprep.subr.mxu0 0.0
        %1617 = vmatpush1.msra.mxu0 0.0
        %1618 = vmatprep.subr.mxu0 0.0
        %1619 = vmatpush1.msra.mxu0 0.0
        %1620 = vmatprep.subr.mxu0 0.0
        %1621 = vmatpush1.msra.mxu0 0.0
        %1622 = vmatprep.subr.mxu0 0.0
        %1623 = vmatpush1.msra.mxu0 0.0
        %1624 = vmatprep.subr.mxu0 0.0
        %1625 = vmatpush1.msra.mxu0 0.0
        %1626 = vmatprep.subr.mxu0 0.0
        %1627 = vmatpush1.msra.mxu0 0.0
        %1628 = vmatprep.subr.mxu0 0.0
        %1629 = vmatpush1.msra.mxu0 0.0
        %1630 = vmatprep.subr.mxu0 0.0
        %1631 = vmatpush1.msra.mxu0 0.0
        %1632 = vmatprep.subr.mxu0 0.0
        %1633 = vmatpush1.msra.mxu0 0.0
        %1634 = vmatprep.subr.mxu0 0.0
        %1635 = vmatpush1.msra.mxu0 0.0
        %1636 = vmatprep.subr.mxu0 0.0
        %1637 = vmatpush1.msra.mxu0 0.0
        %1638 = vmatprep.subr.mxu0 0.0
        %1639 = vmatpush1.msra.mxu0 0.0
        %1640 = vmatprep.subr.mxu0 0.0
        %1641 = vmatpush1.msra.mxu0 0.0
        %1642 = vmatprep.subr.mxu0 0.0
        %1643 = vmatpush1.msra.mxu0 0.0
        %1644 = vmatprep.subr.mxu0 0.0
        %1645 = vmatpush1.msra.mxu0 0.0
        %1646 = vmatprep.subr.mxu0 0.0
        %1647 = vmatpush1.msra.mxu0 0.0
        %1648 = vmatprep.subr.mxu0 0.0
        %1649 = vmatpush1.msra.mxu0 0.0
        %1650 = vmatprep.subr.mxu0 0.0
        %1651 = vmatpush1.msra.mxu0 0.0
        %1652 = vmatprep.subr.mxu0 0.0
        %1653 = vmatpush1.msra.mxu0 0.0
        %1654 = vmatprep.subr.mxu0 0.0
        %1655 = vmatpush1.msra.mxu0 0.0
        %1656 = vmatprep.mubr.f32.mxu0 0.0
        %1657 = vmatmul.mubr.f32.gmra.mrb[0].mxu0 %v1569
        %v1658 = vpop.f32.mrb[0].mxu0
        %v1659 = vadd.f32 0.0, %v1658
        %v1660 = vpop.f32.mrb[0].mxu0
        %1661 = vmatprep.mubr.f32.mxu0 0.0
        %1662 = vmatmul.mubr.f32.gmra.mrb[0].mxu0 %v1572
        %v1663 = vpop.f32.mrb[0].mxu0
        %v1664 = vadd.f32 0.0, %v1663
        %v1665 = vpop.f32.mrb[0].mxu0
        %1666 = vmatprep.mubr.f32.mxu0 0.0
        %1667 = vmatmul.mubr.f32.gmra.mrb[0].mxu0 %v1575
        %v1668 = vpop.f32.mrb[0].mxu0
        %v1669 = vadd.f32 0.0, %v1668
        %v1670 = vpop.f32.mrb[0].mxu0
        %1671 = vmatprep.mubr.f32.mxu0 0.0
        %1672 = vmatmul.mubr.f32.gmra.mrb[0].mxu0 %v1578
        %v1673 = vpop.f32.mrb[0].mxu0
        %v1674 = vadd.f32 0.0, %v1673
        %v1675 = vpop.f32.mrb[0].mxu0
        %1676 = vmatprep.mubr.f32.mxu0 0.0
        %1677 = vmatmul.mubr.f32.gmra.mrb[0].mxu0 %v1581
        %v1678 = vpop.f32.mrb[0].mxu0
        %v1679 = vadd.f32 0.0, %v1678
        %v1680 = vpop.f32.mrb[0].mxu0
        %1681 = vmatprep.mubr.f32.mxu0 0.0
        %1682 = vmatmul.mubr.f32.gmra.mrb[0].mxu0 %v1584
        %v1683 = vpop.f32.mrb[0].mxu0
        %v1684 = vadd.f32 0.0, %v1683
        %v1685 = vpop.f32.mrb[0].mxu0
        %1686 = vmatprep.mubr.f32.mxu0 0.0
        %1687 = vmatmul.mubr.f32.gmra.mrb[0].mxu0 %v1587
        %v1688 = vpop.f32.mrb[0].mxu0
        %v1689 = vadd.f32 0.0, %v1688
        %v1690 = vpop.f32.mrb[0].mxu0
        %1691 = vmatprep.mubr.f32.mxu0 0.0
        %1692 = vmatmul.mubr.f32.gmra.mrb[0].mxu0 %v1590
        %v1693 = vpop.f32.mrb[0].mxu0
        %v1694 = vadd.f32 0.0, %v1693
        %v1695 = vpop.f32.mrb[0].mxu0
        %1696 = vdwg.mxu0
        %1697 = vrot.lane.b32.xlu0 %v830, 96
        %v1698 = vpop.permute.xlu0 %1697
        %1699 = vrot.lane.b32.xlu0 %v834, 96
        %v1700 = vpop.permute.xlu0 %1699
        %1701 = vrot.lane.b32.xlu0 %v840, 96
        %v1702 = vpop.permute.xlu0 %1701
        %1703 = vrot.lane.b32.xlu0 %v844, 96
        %v1704 = vpop.permute.xlu0 %1703
        %1705 = vrot.lane.b32.xlu0 %v850, 96
        %v1706 = vpop.permute.xlu0 %1705
        %1707 = vrot.lane.b32.xlu0 %v854, 96
        %v1708 = vpop.permute.xlu0 %1707
        %1709 = vrot.lane.b32.xlu0 %v860, 96
        %v1710 = vpop.permute.xlu0 %1709
        %1711 = vrot.lane.b32.xlu0 %v864, 96
        %v1712 = vpop.permute.xlu0 %1711
        %1713 = vrot.lane.b32.xlu0 %v830, 32
        %v1714 = vpop.permute.xlu0 %1713
        %1715 = vrot.lane.b32.xlu0 %v834, 32
        %v1716 = vpop.permute.xlu0 %1715
        %1717 = vrot.lane.b32.xlu0 %v840, 32
        %v1718 = vpop.permute.xlu0 %1717
        %1719 = vrot.lane.b32.xlu0 %v844, 32
        %v1720 = vpop.permute.xlu0 %1719
        %1721 = vrot.lane.b32.xlu0 %v850, 32
        %v1722 = vpop.permute.xlu0 %1721
        %1723 = vrot.lane.b32.xlu0 %v854, 32
        %v1724 = vpop.permute.xlu0 %1723
        %1725 = vrot.lane.b32.xlu0 %v860, 32
        %v1726 = vpop.permute.xlu0 %1725
        %1727 = vrot.lane.b32.xlu0 %v864, 32
        %v1728 = vpop.permute.xlu0 %1727
        %v1729 = vsel %vm892, %v1698, 0
        %v1731 = vsel %vm892, %v1700, 0
        %v1733 = vsel %vm892, %v1702, 0
        %v1735 = vsel %vm892, %v1704, 0
        %v1737 = vsel %vm892, %v1706, 0
        %v1739 = vsel %vm892, %v1708, 0
        %v1741 = vsel %vm892, %v1710, 0
        %v1743 = vsel %vm892, %v1712, 0
        %v1745 = vsel %vm892, %v1714, 0
        %v1747 = vsel %vm892, %v1716, 0
        %v1749 = vsel %vm892, %v1718, 0
        %v1751 = vsel %vm892, %v1720, 0
        %v1753 = vsel %vm892, %v1722, 0
        %v1755 = vsel %vm892, %v1724, 0
        %v1757 = vsel %vm892, %v1726, 0
        %v1759 = vsel %vm892, %v1728, 0
        %1761 = vmatprep.subr.mxu0 0.0
        %1762 = vmatpush1.xpose.msra.mxu0 %v1745
        %1763 = vmatprep.subr.mxu0 0.0
        %1764 = vmatpush1.xpose.msra.mxu0 %v1747
        %1765 = vmatprep.subr.mxu0 0.0
        %1766 = vmatpush1.xpose.msra.mxu0 %v1749
        %1767 = vmatprep.subr.mxu0 0.0
        %1768 = vmatpush1.xpose.msra.mxu0 %v1751
        %1769 = vmatprep.subr.mxu0 0.0
        %1770 = vmatpush1.xpose.msra.mxu0 %v1753
        %1771 = vmatprep.subr.mxu0 0.0
        %1772 = vmatpush1.xpose.msra.mxu0 %v1755
        %1773 = vmatprep.subr.mxu0 0.0
        %1774 = vmatpush1.xpose.msra.mxu0 %v1757
        %1775 = vmatprep.subr.mxu0 0.0
        %1776 = vmatpush1.xpose.msra.mxu0 %v1759
        %1777 = vmatprep.subr.mxu0 0.0
        %1778 = vmatpush1.xpose.msra.mxu0 0.0
        %1779 = vmatprep.subr.mxu0 0.0
        %1780 = vmatpush1.xpose.msra.mxu0 0.0
        %1781 = vmatprep.subr.mxu0 0.0
        %1782 = vmatpush1.xpose.msra.mxu0 0.0
        %1783 = vmatprep.subr.mxu0 0.0
        %1784 = vmatpush1.xpose.msra.mxu0 0.0
        %1785 = vmatprep.subr.mxu0 0.0
        %1786 = vmatpush1.xpose.msra.mxu0 0.0
        %1787 = vmatprep.subr.mxu0 0.0
        %1788 = vmatpush1.xpose.msra.mxu0 0.0
        %1789 = vmatprep.subr.mxu0 0.0
        %1790 = vmatpush1.xpose.msra.mxu0 0.0
        %1791 = vmatprep.subr.mxu0 0.0
        %1792 = vmatpush1.xpose.msra.mxu0 0.0
        %1793 = vmatprep.subr.mxu0 0.0
        %1794 = vmatpush1.xpose.msra.mxu0 0.0
        %1795 = vmatprep.subr.mxu0 0.0
        %1796 = vmatpush1.xpose.msra.mxu0 0.0
        %1797 = vmatprep.subr.mxu0 0.0
        %1798 = vmatpush1.xpose.msra.mxu0 0.0
        %1799 = vmatprep.subr.mxu0 0.0
        %1800 = vmatpush1.xpose.msra.mxu0 0.0
        %1801 = vmatprep.subr.mxu0 0.0
        %1802 = vmatpush1.xpose.msra.mxu0 0.0
        %1803 = vmatprep.subr.mxu0 0.0
        %1804 = vmatpush1.xpose.msra.mxu0 0.0
        %1805 = vmatprep.subr.mxu0 0.0
        %1806 = vmatpush1.xpose.msra.mxu0 0.0
        %1807 = vmatprep.subr.mxu0 0.0
        %1808 = vmatpush1.xpose.msra.mxu0 0.0
        %1809 = vmatprep.subr.mxu0 0.0
        %1810 = vmatpush1.xpose.msra.mxu0 0.0
        %1811 = vmatprep.subr.mxu0 0.0
        %1812 = vmatpush1.xpose.msra.mxu0 0.0
        %1813 = vmatprep.subr.mxu0 0.0
        %1814 = vmatpush1.xpose.msra.mxu0 0.0
        %1815 = vmatprep.subr.mxu0 0.0
        %1816 = vmatpush1.xpose.msra.mxu0 0.0
        %1817 = vmatprep.subr.mxu0 0.0
        %1818 = vmatpush1.xpose.msra.mxu0 0.0
        %1819 = vmatprep.subr.mxu0 0.0
        %1820 = vmatpush1.xpose.msra.mxu0 0.0
        %1821 = vmatprep.subr.mxu0 0.0
        %1822 = vmatpush1.xpose.msra.mxu0 0.0
        %1823 = vmatprep.subr.mxu0 0.0
        %1824 = vmatpush1.xpose.msra.mxu0 0.0
        %1825 = vmatprep.mubr.f32.mxu0 0.0
        %1826 = vmatmul.mubr.f32.gmra.mrb[0].mxu0 %v1729
        %v1827 = vpop.f32.mrb[0].mxu0
        %v1828 = vadd.f32 0.0, %v1827
        %v1829 = vpop.f32.mrb[0].mxu0
        %1830 = vmatprep.mubr.f32.mxu0 0.0
        %1831 = vmatmul.mubr.f32.gmra.mrb[0].mxu0 %v1731
        %v1832 = vpop.f32.mrb[0].mxu0
        %v1833 = vadd.f32 0.0, %v1832
        %v1834 = vpop.f32.mrb[0].mxu0
        %1835 = vmatprep.mubr.f32.mxu0 0.0
        %1836 = vmatmul.mubr.f32.gmra.mrb[0].mxu0 %v1733
        %v1837 = vpop.f32.mrb[0].mxu0
        %v1838 = vadd.f32 0.0, %v1837
        %v1839 = vpop.f32.mrb[0].mxu0
        %1840 = vmatprep.mubr.f32.mxu0 0.0
        %1841 = vmatmul.mubr.f32.gmra.mrb[0].mxu0 %v1735
        %v1842 = vpop.f32.mrb[0].mxu0
        %v1843 = vadd.f32 0.0, %v1842
        %v1844 = vpop.f32.mrb[0].mxu0
        %1845 = vmatprep.mubr.f32.mxu0 0.0
        %1846 = vmatmul.mubr.f32.gmra.mrb[0].mxu0 %v1737
        %v1847 = vpop.f32.mrb[0].mxu0
        %v1848 = vadd.f32 0.0, %v1847
        %v1849 = vpop.f32.mrb[0].mxu0
        %1850 = vmatprep.mubr.f32.mxu0 0.0
        %1851 = vmatmul.mubr.f32.gmra.mrb[0].mxu0 %v1739
        %v1852 = vpop.f32.mrb[0].mxu0
        %v1853 = vadd.f32 0.0, %v1852
        %v1854 = vpop.f32.mrb[0].mxu0
        %1855 = vmatprep.mubr.f32.mxu0 0.0
        %1856 = vmatmul.mubr.f32.gmra.mrb[0].mxu0 %v1741
        %v1857 = vpop.f32.mrb[0].mxu0
        %v1858 = vadd.f32 0.0, %v1857
        %v1859 = vpop.f32.mrb[0].mxu0
        %1860 = vmatprep.mubr.f32.mxu0 0.0
        %1861 = vmatmul.mubr.f32.gmra.mrb[0].mxu0 %v1743
        %v1862 = vpop.f32.mrb[0].mxu0
        %v1863 = vadd.f32 0.0, %v1862
        %v1864 = vpop.f32.mrb[0].mxu0
        %1865 = vdwg.mxu0
        %v1866 = vmul.f32 %v1828, 0.25
        %v1867 = vmul.f32 %v1833, 0.25
        %v1868 = vmul.f32 %v1838, 0.25
        %v1869 = vmul.f32 %v1843, 0.25
        %v1870 = vmul.f32 %v1848, 0.25
        %v1871 = vmul.f32 %v1853, 0.25
        %v1872 = vmul.f32 %v1858, 0.25
        %v1873 = vmul.f32 %v1863, 0.25
        %v1874 = vadd.f32 %v1866, %v575
        %v1875 = vadd.f32 %v1867, %v576
        %v1876 = vadd.f32 %v1868, %v577
        %v1877 = vadd.f32 %v1869, %v578
        %v1878 = vadd.f32 %v1870, %v579
        %v1879 = vadd.f32 %v1871, %v580
        %v1880 = vadd.f32 %v1872, %v581
        %v1881 = vadd.f32 %v1873, %v582
        %v1882 = vsel %vm585, %v1874, -inf
        %1883 = vmax.xlane.f32.xlu0 %v1882
        %v1884 = vpop.xlane.xlu0 %1883
        %v1885 = vsel %vm585, %v1875, -inf
        %1886 = vmax.xlane.f32.xlu0 %v1885
        %v1887 = vpop.xlane.xlu0 %1886
        %v1888 = vsel %vm585, %v1876, -inf
        %1889 = vmax.xlane.f32.xlu0 %v1888
        %v1890 = vpop.xlane.xlu0 %1889
        %v1891 = vsel %vm585, %v1877, -inf
        %1892 = vmax.xlane.f32.xlu0 %v1891
        %v1893 = vpop.xlane.xlu0 %1892
        %v1894 = vsel %vm585, %v1878, -inf
        %1895 = vmax.xlane.f32.xlu0 %v1894
        %v1896 = vpop.xlane.xlu0 %1895
        %v1897 = vsel %vm585, %v1879, -inf
        %1898 = vmax.xlane.f32.xlu0 %v1897
        %v1899 = vpop.xlane.xlu0 %1898
        %v1900 = vsel %vm585, %v1880, -inf
        %1901 = vmax.xlane.f32.xlu0 %v1900
        %v1902 = vpop.xlane.xlu0 %1901
        %v1903 = vsel %vm585, %v1881, -inf
        %1904 = vmax.xlane.f32.xlu0 %v1903
        %v1905 = vpop.xlane.xlu0 %1904
        %v1906 = vsub.f32 %v1874, %v1884
        %v1907 = vsub.f32 %v1875, %v1887
        %v1908 = vsub.f32 %v1876, %v1890
        %v1909 = vsub.f32 %v1877, %v1893
        %v1910 = vsub.f32 %v1878, %v1896
        %v1911 = vsub.f32 %v1879, %v1899
        %v1912 = vsub.f32 %v1880, %v1902
        %v1913 = vsub.f32 %v1881, %v1905
        %v1914 = vmul.f32 %v1906, 1.442695
        %v1915 = vpow.pop %v1914
        %v1916 = vmul.f32 %v1907, 1.442695
        %v1917 = vpow.pop %v1916
        %v1918 = vmul.f32 %v1908, 1.442695
        %v1919 = vpow.pop %v1918
        %v1920 = vmul.f32 %v1909, 1.442695
        %v1921 = vpow.pop %v1920
        %v1922 = vmul.f32 %v1910, 1.442695
        %v1923 = vpow.pop %v1922
        %v1924 = vmul.f32 %v1911, 1.442695
        %v1925 = vpow.pop %v1924
        %v1926 = vmul.f32 %v1912, 1.442695
        %v1927 = vpow.pop %v1926
        %v1928 = vmul.f32 %v1913, 1.442695
        %v1929 = vpow.pop %v1928
        %v1930 = vsel %vm585, %v1915, 0.0
        %1931 = vadd.xlane.f32.xlu0 %v1930
        %v1932 = vpop.xlane.xlu0 %1931
        %v1933 = vsel %vm585, %v1917, 0.0
        %1934 = vadd.xlane.f32.xlu0 %v1933
        %v1935 = vpop.xlane.xlu0 %1934
        %v1936 = vsel %vm585, %v1919, 0.0
        %1937 = vadd.xlane.f32.xlu0 %v1936
        %v1938 = vpop.xlane.xlu0 %1937
        %v1939 = vsel %vm585, %v1921, 0.0
        %1940 = vadd.xlane.f32.xlu0 %v1939
        %v1941 = vpop.xlane.xlu0 %1940
        %v1942 = vsel %vm585, %v1923, 0.0
        %1943 = vadd.xlane.f32.xlu0 %v1942
        %v1944 = vpop.xlane.xlu0 %1943
        %v1945 = vsel %vm585, %v1925, 0.0
        %1946 = vadd.xlane.f32.xlu0 %v1945
        %v1947 = vpop.xlane.xlu0 %1946
        %v1948 = vsel %vm585, %v1927, 0.0
        %1949 = vadd.xlane.f32.xlu0 %v1948
        %v1950 = vpop.xlane.xlu0 %1949
        %v1951 = vsel %vm585, %v1929, 0.0
        %1952 = vadd.xlane.f32.xlu0 %v1951
        %v1953 = vpop.xlane.xlu0 %1952
        %v1954 = vrcp.pop %v1932
        %v1955 = vrcp.pop %v1935
        %v1956 = vrcp.pop %v1938
        %v1957 = vrcp.pop %v1941
        %v1958 = vrcp.pop %v1944
        %v1959 = vrcp.pop %v1947
        %v1960 = vrcp.pop %v1950
        %v1961 = vrcp.pop %v1953
        %v1962 = vmul.f32 %v1915, %v1954
        %v1963 = vmul.f32 %v1917, %v1955
        %v1964 = vmul.f32 %v1919, %v1956
        %v1965 = vmul.f32 %v1921, %v1957
        %v1966 = vmul.f32 %v1923, %v1958
        %v1967 = vmul.f32 %v1925, %v1959
        %v1968 = vmul.f32 %v1927, %v1960
        %v1969 = vmul.f32 %v1929, %v1961
        %1970 = vrot.lane.b32.xlu0 %v832, 96
        %v1971 = vpop.permute.xlu0 %1970
        %1972 = vrot.lane.b32.xlu0 %v836, 96
        %v1973 = vpop.permute.xlu0 %1972
        %1974 = vrot.lane.b32.xlu0 %v842, 96
        %v1975 = vpop.permute.xlu0 %1974
        %1976 = vrot.lane.b32.xlu0 %v846, 96
        %v1977 = vpop.permute.xlu0 %1976
        %1978 = vrot.lane.b32.xlu0 %v852, 96
        %v1979 = vpop.permute.xlu0 %1978
        %1980 = vrot.lane.b32.xlu0 %v856, 96
        %v1981 = vpop.permute.xlu0 %1980
        %1982 = vrot.lane.b32.xlu0 %v862, 96
        %v1983 = vpop.permute.xlu0 %1982
        %1984 = vrot.lane.b32.xlu0 %v866, 96
        %v1985 = vpop.permute.xlu0 %1984
        %v1995 = vsel %vm585, %v1962, 0
        %v1998 = vsel %vm585, %v1963, 0
        %v2001 = vsel %vm585, %v1964, 0
        %v2004 = vsel %vm585, %v1965, 0
        %v2007 = vsel %vm585, %v1966, 0
        %v2010 = vsel %vm585, %v1967, 0
        %v2013 = vsel %vm585, %v1968, 0
        %v2016 = vsel %vm585, %v1969, 0
        %2018 = vmatprep.subr.mxu0 0.0
        %2019 = vmatpush1.msra.mxu0 %v1971
        %2020 = vmatprep.subr.mxu0 0.0
        %2021 = vmatpush1.msra.mxu0 %v1973
        %2022 = vmatprep.subr.mxu0 0.0
        %2023 = vmatpush1.msra.mxu0 %v1975
        %2024 = vmatprep.subr.mxu0 0.0
        %2025 = vmatpush1.msra.mxu0 %v1977
        %2026 = vmatprep.subr.mxu0 0.0
        %2027 = vmatpush1.msra.mxu0 %v1979
        %2028 = vmatprep.subr.mxu0 0.0
        %2029 = vmatpush1.msra.mxu0 %v1981
        %2030 = vmatprep.subr.mxu0 0.0
        %2031 = vmatpush1.msra.mxu0 %v1983
        %2032 = vmatprep.subr.mxu0 0.0
        %2033 = vmatpush1.msra.mxu0 %v1985
        %2034 = vmatprep.subr.mxu0 0.0
        %2035 = vmatpush1.msra.mxu0 0.0
        %2036 = vmatprep.subr.mxu0 0.0
        %2037 = vmatpush1.msra.mxu0 0.0
        %2038 = vmatprep.subr.mxu0 0.0
        %2039 = vmatpush1.msra.mxu0 0.0
        %2040 = vmatprep.subr.mxu0 0.0
        %2041 = vmatpush1.msra.mxu0 0.0
        %2042 = vmatprep.subr.mxu0 0.0
        %2043 = vmatpush1.msra.mxu0 0.0
        %2044 = vmatprep.subr.mxu0 0.0
        %2045 = vmatpush1.msra.mxu0 0.0
        %2046 = vmatprep.subr.mxu0 0.0
        %2047 = vmatpush1.msra.mxu0 0.0
        %2048 = vmatprep.subr.mxu0 0.0
        %2049 = vmatpush1.msra.mxu0 0.0
        %2050 = vmatprep.subr.mxu0 0.0
        %2051 = vmatpush1.msra.mxu0 0.0
        %2052 = vmatprep.subr.mxu0 0.0
        %2053 = vmatpush1.msra.mxu0 0.0
        %2054 = vmatprep.subr.mxu0 0.0
        %2055 = vmatpush1.msra.mxu0 0.0
        %2056 = vmatprep.subr.mxu0 0.0
        %2057 = vmatpush1.msra.mxu0 0.0
        %2058 = vmatprep.subr.mxu0 0.0
        %2059 = vmatpush1.msra.mxu0 0.0
        %2060 = vmatprep.subr.mxu0 0.0
        %2061 = vmatpush1.msra.mxu0 0.0
        %2062 = vmatprep.subr.mxu0 0.0
        %2063 = vmatpush1.msra.mxu0 0.0
        %2064 = vmatprep.subr.mxu0 0.0
        %2065 = vmatpush1.msra.mxu0 0.0
        %2066 = vmatprep.subr.mxu0 0.0
        %2067 = vmatpush1.msra.mxu0 0.0
        %2068 = vmatprep.subr.mxu0 0.0
        %2069 = vmatpush1.msra.mxu0 0.0
        %2070 = vmatprep.subr.mxu0 0.0
        %2071 = vmatpush1.msra.mxu0 0.0
        %2072 = vmatprep.subr.mxu0 0.0
        %2073 = vmatpush1.msra.mxu0 0.0
        %2074 = vmatprep.subr.mxu0 0.0
        %2075 = vmatpush1.msra.mxu0 0.0
        %2076 = vmatprep.subr.mxu0 0.0
        %2077 = vmatpush1.msra.mxu0 0.0
        %2078 = vmatprep.subr.mxu0 0.0
        %2079 = vmatpush1.msra.mxu0 0.0
        %2080 = vmatprep.subr.mxu0 0.0
        %2081 = vmatpush1.msra.mxu0 0.0
        %2082 = vmatprep.mubr.f32.mxu0 0.0
        %2083 = vmatmul.mubr.f32.gmra.mrb[0].mxu0 %v1995
        %v2084 = vpop.f32.mrb[0].mxu0
        %v2085 = vadd.f32 0.0, %v2084
        %v2086 = vpop.f32.mrb[0].mxu0
        %2087 = vmatprep.mubr.f32.mxu0 0.0
        %2088 = vmatmul.mubr.f32.gmra.mrb[0].mxu0 %v1998
        %v2089 = vpop.f32.mrb[0].mxu0
        %v2090 = vadd.f32 0.0, %v2089
        %v2091 = vpop.f32.mrb[0].mxu0
        %2092 = vmatprep.mubr.f32.mxu0 0.0
        %2093 = vmatmul.mubr.f32.gmra.mrb[0].mxu0 %v2001
        %v2094 = vpop.f32.mrb[0].mxu0
        %v2095 = vadd.f32 0.0, %v2094
        %v2096 = vpop.f32.mrb[0].mxu0
        %2097 = vmatprep.mubr.f32.mxu0 0.0
        %2098 = vmatmul.mubr.f32.gmra.mrb[0].mxu0 %v2004
        %v2099 = vpop.f32.mrb[0].mxu0
        %v2100 = vadd.f32 0.0, %v2099
        %v2101 = vpop.f32.mrb[0].mxu0
        %2102 = vmatprep.mubr.f32.mxu0 0.0
        %2103 = vmatmul.mubr.f32.gmra.mrb[0].mxu0 %v2007
        %v2104 = vpop.f32.mrb[0].mxu0
        %v2105 = vadd.f32 0.0, %v2104
        %v2106 = vpop.f32.mrb[0].mxu0
        %2107 = vmatprep.mubr.f32.mxu0 0.0
        %2108 = vmatmul.mubr.f32.gmra.mrb[0].mxu0 %v2010
        %v2109 = vpop.f32.mrb[0].mxu0
        %v2110 = vadd.f32 0.0, %v2109
        %v2111 = vpop.f32.mrb[0].mxu0
        %2112 = vmatprep.mubr.f32.mxu0 0.0
        %2113 = vmatmul.mubr.f32.gmra.mrb[0].mxu0 %v2013
        %v2114 = vpop.f32.mrb[0].mxu0
        %v2115 = vadd.f32 0.0, %v2114
        %v2116 = vpop.f32.mrb[0].mxu0
        %2117 = vmatprep.mubr.f32.mxu0 0.0
        %2118 = vmatmul.mubr.f32.gmra.mrb[0].mxu0 %v2016
        %v2119 = vpop.f32.mrb[0].mxu0
        %v2120 = vadd.f32 0.0, %v2119
        %v2121 = vpop.f32.mrb[0].mxu0
        %2122 = vdwg.mxu0
        %2123 = vrot.lane.b32.xlu0 %v830, 80
        %v2124 = vpop.permute.xlu0 %2123
        %2125 = vrot.lane.b32.xlu0 %v834, 80
        %v2126 = vpop.permute.xlu0 %2125
        %2127 = vrot.lane.b32.xlu0 %v840, 80
        %v2128 = vpop.permute.xlu0 %2127
        %2129 = vrot.lane.b32.xlu0 %v844, 80
        %v2130 = vpop.permute.xlu0 %2129
        %2131 = vrot.lane.b32.xlu0 %v850, 80
        %v2132 = vpop.permute.xlu0 %2131
        %2133 = vrot.lane.b32.xlu0 %v854, 80
        %v2134 = vpop.permute.xlu0 %2133
        %2135 = vrot.lane.b32.xlu0 %v860, 80
        %v2136 = vpop.permute.xlu0 %2135
        %2137 = vrot.lane.b32.xlu0 %v864, 80
        %v2138 = vpop.permute.xlu0 %2137
        %2139 = vrot.lane.b32.xlu0 %v830, 16
        %v2140 = vpop.permute.xlu0 %2139
        %2141 = vrot.lane.b32.xlu0 %v834, 16
        %v2142 = vpop.permute.xlu0 %2141
        %2143 = vrot.lane.b32.xlu0 %v840, 16
        %v2144 = vpop.permute.xlu0 %2143
        %2145 = vrot.lane.b32.xlu0 %v844, 16
        %v2146 = vpop.permute.xlu0 %2145
        %2147 = vrot.lane.b32.xlu0 %v850, 16
        %v2148 = vpop.permute.xlu0 %2147
        %2149 = vrot.lane.b32.xlu0 %v854, 16
        %v2150 = vpop.permute.xlu0 %2149
        %2151 = vrot.lane.b32.xlu0 %v860, 16
        %v2152 = vpop.permute.xlu0 %2151
        %2153 = vrot.lane.b32.xlu0 %v864, 16
        %v2154 = vpop.permute.xlu0 %2153
        %v2155 = vsel %vm892, %v2124, 0
        %v2157 = vsel %vm892, %v2126, 0
        %v2159 = vsel %vm892, %v2128, 0
        %v2161 = vsel %vm892, %v2130, 0
        %v2163 = vsel %vm892, %v2132, 0
        %v2165 = vsel %vm892, %v2134, 0
        %v2167 = vsel %vm892, %v2136, 0
        %v2169 = vsel %vm892, %v2138, 0
        %v2171 = vsel %vm892, %v2140, 0
        %v2173 = vsel %vm892, %v2142, 0
        %v2175 = vsel %vm892, %v2144, 0
        %v2177 = vsel %vm892, %v2146, 0
        %v2179 = vsel %vm892, %v2148, 0
        %v2181 = vsel %vm892, %v2150, 0
        %v2183 = vsel %vm892, %v2152, 0
        %v2185 = vsel %vm892, %v2154, 0
        %2187 = vmatprep.subr.mxu0 0.0
        %2188 = vmatpush1.xpose.msra.mxu0 %v2171
        %2189 = vmatprep.subr.mxu0 0.0
        %2190 = vmatpush1.xpose.msra.mxu0 %v2173
        %2191 = vmatprep.subr.mxu0 0.0
        %2192 = vmatpush1.xpose.msra.mxu0 %v2175
        %2193 = vmatprep.subr.mxu0 0.0
        %2194 = vmatpush1.xpose.msra.mxu0 %v2177
        %2195 = vmatprep.subr.mxu0 0.0
        %2196 = vmatpush1.xpose.msra.mxu0 %v2179
        %2197 = vmatprep.subr.mxu0 0.0
        %2198 = vmatpush1.xpose.msra.mxu0 %v2181
        %2199 = vmatprep.subr.mxu0 0.0
        %2200 = vmatpush1.xpose.msra.mxu0 %v2183
        %2201 = vmatprep.subr.mxu0 0.0
        %2202 = vmatpush1.xpose.msra.mxu0 %v2185
        %2203 = vmatprep.subr.mxu0 0.0
        %2204 = vmatpush1.xpose.msra.mxu0 0.0
        %2205 = vmatprep.subr.mxu0 0.0
        %2206 = vmatpush1.xpose.msra.mxu0 0.0
        %2207 = vmatprep.subr.mxu0 0.0
        %2208 = vmatpush1.xpose.msra.mxu0 0.0
        %2209 = vmatprep.subr.mxu0 0.0
        %2210 = vmatpush1.xpose.msra.mxu0 0.0
        %2211 = vmatprep.subr.mxu0 0.0
        %2212 = vmatpush1.xpose.msra.mxu0 0.0
        %2213 = vmatprep.subr.mxu0 0.0
        %2214 = vmatpush1.xpose.msra.mxu0 0.0
        %2215 = vmatprep.subr.mxu0 0.0
        %2216 = vmatpush1.xpose.msra.mxu0 0.0
        %2217 = vmatprep.subr.mxu0 0.0
        %2218 = vmatpush1.xpose.msra.mxu0 0.0
        %2219 = vmatprep.subr.mxu0 0.0
        %2220 = vmatpush1.xpose.msra.mxu0 0.0
        %2221 = vmatprep.subr.mxu0 0.0
        %2222 = vmatpush1.xpose.msra.mxu0 0.0
        %2223 = vmatprep.subr.mxu0 0.0
        %2224 = vmatpush1.xpose.msra.mxu0 0.0
        %2225 = vmatprep.subr.mxu0 0.0
        %2226 = vmatpush1.xpose.msra.mxu0 0.0
        %2227 = vmatprep.subr.mxu0 0.0
        %2228 = vmatpush1.xpose.msra.mxu0 0.0
        %2229 = vmatprep.subr.mxu0 0.0
        %2230 = vmatpush1.xpose.msra.mxu0 0.0
        %2231 = vmatprep.subr.mxu0 0.0
        %2232 = vmatpush1.xpose.msra.mxu0 0.0
        %2233 = vmatprep.subr.mxu0 0.0
        %2234 = vmatpush1.xpose.msra.mxu0 0.0
        %2235 = vmatprep.subr.mxu0 0.0
        %2236 = vmatpush1.xpose.msra.mxu0 0.0
        %2237 = vmatprep.subr.mxu0 0.0
        %2238 = vmatpush1.xpose.msra.mxu0 0.0
        %2239 = vmatprep.subr.mxu0 0.0
        %2240 = vmatpush1.xpose.msra.mxu0 0.0
        %2241 = vmatprep.subr.mxu0 0.0
        %2242 = vmatpush1.xpose.msra.mxu0 0.0
        %2243 = vmatprep.subr.mxu0 0.0
        %2244 = vmatpush1.xpose.msra.mxu0 0.0
        %2245 = vmatprep.subr.mxu0 0.0
        %2246 = vmatpush1.xpose.msra.mxu0 0.0
        %2247 = vmatprep.subr.mxu0 0.0
        %2248 = vmatpush1.xpose.msra.mxu0 0.0
        %2249 = vmatprep.subr.mxu0 0.0
        %2250 = vmatpush1.xpose.msra.mxu0 0.0
        %2251 = vmatprep.mubr.f32.mxu0 0.0
        %2252 = vmatmul.mubr.f32.gmra.mrb[0].mxu0 %v2155
        %v2253 = vpop.f32.mrb[0].mxu0
        %v2254 = vadd.f32 0.0, %v2253
        %v2255 = vpop.f32.mrb[0].mxu0
        %2256 = vmatprep.mubr.f32.mxu0 0.0
        %2257 = vmatmul.mubr.f32.gmra.mrb[0].mxu0 %v2157
        %v2258 = vpop.f32.mrb[0].mxu0
        %v2259 = vadd.f32 0.0, %v2258
        %v2260 = vpop.f32.mrb[0].mxu0
        %2261 = vmatprep.mubr.f32.mxu0 0.0
        %2262 = vmatmul.mubr.f32.gmra.mrb[0].mxu0 %v2159
        %v2263 = vpop.f32.mrb[0].mxu0
        %v2264 = vadd.f32 0.0, %v2263
        %v2265 = vpop.f32.mrb[0].mxu0
        %2266 = vmatprep.mubr.f32.mxu0 0.0
        %2267 = vmatmul.mubr.f32.gmra.mrb[0].mxu0 %v2161
        %v2268 = vpop.f32.mrb[0].mxu0
        %v2269 = vadd.f32 0.0, %v2268
        %v2270 = vpop.f32.mrb[0].mxu0
        %2271 = vmatprep.mubr.f32.mxu0 0.0
        %2272 = vmatmul.mubr.f32.gmra.mrb[0].mxu0 %v2163
        %v2273 = vpop.f32.mrb[0].mxu0
        %v2274 = vadd.f32 0.0, %v2273
        %v2275 = vpop.f32.mrb[0].mxu0
        %2276 = vmatprep.mubr.f32.mxu0 0.0
        %2277 = vmatmul.mubr.f32.gmra.mrb[0].mxu0 %v2165
        %v2278 = vpop.f32.mrb[0].mxu0
        %v2279 = vadd.f32 0.0, %v2278
        %v2280 = vpop.f32.mrb[0].mxu0
        %2281 = vmatprep.mubr.f32.mxu0 0.0
        %2282 = vmatmul.mubr.f32.gmra.mrb[0].mxu0 %v2167
        %v2283 = vpop.f32.mrb[0].mxu0
        %v2284 = vadd.f32 0.0, %v2283
        %v2285 = vpop.f32.mrb[0].mxu0
        %2286 = vmatprep.mubr.f32.mxu0 0.0
        %2287 = vmatmul.mubr.f32.gmra.mrb[0].mxu0 %v2169
        %v2288 = vpop.f32.mrb[0].mxu0
        %v2289 = vadd.f32 0.0, %v2288
        %v2290 = vpop.f32.mrb[0].mxu0
        %2291 = vdwg.mxu0
        %v2292 = vmul.f32 %v2254, 0.25
        %v2293 = vmul.f32 %v2259, 0.25
        %v2294 = vmul.f32 %v2264, 0.25
        %v2295 = vmul.f32 %v2269, 0.25
        %v2296 = vmul.f32 %v2274, 0.25
        %v2297 = vmul.f32 %v2279, 0.25
        %v2298 = vmul.f32 %v2284, 0.25
        %v2299 = vmul.f32 %v2289, 0.25
        %v2300 = vadd.f32 %v2292, %v575
        %v2301 = vadd.f32 %v2293, %v576
        %v2302 = vadd.f32 %v2294, %v577
        %v2303 = vadd.f32 %v2295, %v578
        %v2304 = vadd.f32 %v2296, %v579
        %v2305 = vadd.f32 %v2297, %v580
        %v2306 = vadd.f32 %v2298, %v581
        %v2307 = vadd.f32 %v2299, %v582
        %v2308 = vsel %vm585, %v2300, -inf
        %2309 = vmax.xlane.f32.xlu0 %v2308
        %v2310 = vpop.xlane.xlu0 %2309
        %v2311 = vsel %vm585, %v2301, -inf
        %2312 = vmax.xlane.f32.xlu0 %v2311
        %v2313 = vpop.xlane.xlu0 %2312
        %v2314 = vsel %vm585, %v2302, -inf
        %2315 = vmax.xlane.f32.xlu0 %v2314
        %v2316 = vpop.xlane.xlu0 %2315
        %v2317 = vsel %vm585, %v2303, -inf
        %2318 = vmax.xlane.f32.xlu0 %v2317
        %v2319 = vpop.xlane.xlu0 %2318
        %v2320 = vsel %vm585, %v2304, -inf
        %2321 = vmax.xlane.f32.xlu0 %v2320
        %v2322 = vpop.xlane.xlu0 %2321
        %v2323 = vsel %vm585, %v2305, -inf
        %2324 = vmax.xlane.f32.xlu0 %v2323
        %v2325 = vpop.xlane.xlu0 %2324
        %v2326 = vsel %vm585, %v2306, -inf
        %2327 = vmax.xlane.f32.xlu0 %v2326
        %v2328 = vpop.xlane.xlu0 %2327
        %v2329 = vsel %vm585, %v2307, -inf
        %2330 = vmax.xlane.f32.xlu0 %v2329
        %v2331 = vpop.xlane.xlu0 %2330
        %v2332 = vsub.f32 %v2300, %v2310
        %v2333 = vsub.f32 %v2301, %v2313
        %v2334 = vsub.f32 %v2302, %v2316
        %v2335 = vsub.f32 %v2303, %v2319
        %v2336 = vsub.f32 %v2304, %v2322
        %v2337 = vsub.f32 %v2305, %v2325
        %v2338 = vsub.f32 %v2306, %v2328
        %v2339 = vsub.f32 %v2307, %v2331
        %v2340 = vmul.f32 %v2332, 1.442695
        %v2341 = vpow.pop %v2340
        %v2342 = vmul.f32 %v2333, 1.442695
        %v2343 = vpow.pop %v2342
        %v2344 = vmul.f32 %v2334, 1.442695
        %v2345 = vpow.pop %v2344
        %v2346 = vmul.f32 %v2335, 1.442695
        %v2347 = vpow.pop %v2346
        %v2348 = vmul.f32 %v2336, 1.442695
        %v2349 = vpow.pop %v2348
        %v2350 = vmul.f32 %v2337, 1.442695
        %v2351 = vpow.pop %v2350
        %v2352 = vmul.f32 %v2338, 1.442695
        %v2353 = vpow.pop %v2352
        %v2354 = vmul.f32 %v2339, 1.442695
        %v2355 = vpow.pop %v2354
        %v2356 = vsel %vm585, %v2341, 0.0
        %2357 = vadd.xlane.f32.xlu0 %v2356
        %v2358 = vpop.xlane.xlu0 %2357
        %v2359 = vsel %vm585, %v2343, 0.0
        %2360 = vadd.xlane.f32.xlu0 %v2359
        %v2361 = vpop.xlane.xlu0 %2360
        %v2362 = vsel %vm585, %v2345, 0.0
        %2363 = vadd.xlane.f32.xlu0 %v2362
        %v2364 = vpop.xlane.xlu0 %2363
        %v2365 = vsel %vm585, %v2347, 0.0
        %2366 = vadd.xlane.f32.xlu0 %v2365
        %v2367 = vpop.xlane.xlu0 %2366
        %v2368 = vsel %vm585, %v2349, 0.0
        %2369 = vadd.xlane.f32.xlu0 %v2368
        %v2370 = vpop.xlane.xlu0 %2369
        %v2371 = vsel %vm585, %v2351, 0.0
        %2372 = vadd.xlane.f32.xlu0 %v2371
        %v2373 = vpop.xlane.xlu0 %2372
        %v2374 = vsel %vm585, %v2353, 0.0
        %2375 = vadd.xlane.f32.xlu0 %v2374
        %v2376 = vpop.xlane.xlu0 %2375
        %v2377 = vsel %vm585, %v2355, 0.0
        %2378 = vadd.xlane.f32.xlu0 %v2377
        %v2379 = vpop.xlane.xlu0 %2378
        %v2380 = vrcp.pop %v2358
        %v2381 = vrcp.pop %v2361
        %v2382 = vrcp.pop %v2364
        %v2383 = vrcp.pop %v2367
        %v2384 = vrcp.pop %v2370
        %v2385 = vrcp.pop %v2373
        %v2386 = vrcp.pop %v2376
        %v2387 = vrcp.pop %v2379
        %v2388 = vmul.f32 %v2341, %v2380
        %v2389 = vmul.f32 %v2343, %v2381
        %v2390 = vmul.f32 %v2345, %v2382
        %v2391 = vmul.f32 %v2347, %v2383
        %v2392 = vmul.f32 %v2349, %v2384
        %v2393 = vmul.f32 %v2351, %v2385
        %v2394 = vmul.f32 %v2353, %v2386
        %v2395 = vmul.f32 %v2355, %v2387
        %2396 = vrot.lane.b32.xlu0 %v832, 80
        %v2397 = vpop.permute.xlu0 %2396
        %2398 = vrot.lane.b32.xlu0 %v836, 80
        %v2399 = vpop.permute.xlu0 %2398
        %2400 = vrot.lane.b32.xlu0 %v842, 80
        %v2401 = vpop.permute.xlu0 %2400
        %2402 = vrot.lane.b32.xlu0 %v846, 80
        %v2403 = vpop.permute.xlu0 %2402
        %2404 = vrot.lane.b32.xlu0 %v852, 80
        %v2405 = vpop.permute.xlu0 %2404
        %2406 = vrot.lane.b32.xlu0 %v856, 80
        %v2407 = vpop.permute.xlu0 %2406
        %2408 = vrot.lane.b32.xlu0 %v862, 80
        %v2409 = vpop.permute.xlu0 %2408
        %2410 = vrot.lane.b32.xlu0 %v866, 80
        %v2411 = vpop.permute.xlu0 %2410
        %v2421 = vsel %vm585, %v2388, 0
        %v2424 = vsel %vm585, %v2389, 0
        %v2427 = vsel %vm585, %v2390, 0
        %v2430 = vsel %vm585, %v2391, 0
        %v2433 = vsel %vm585, %v2392, 0
        %v2436 = vsel %vm585, %v2393, 0
        %v2439 = vsel %vm585, %v2394, 0
        %v2442 = vsel %vm585, %v2395, 0
        %2444 = vmatprep.subr.mxu0 0.0
        %2445 = vmatpush1.msra.mxu0 %v2397
        %2446 = vmatprep.subr.mxu0 0.0
        %2447 = vmatpush1.msra.mxu0 %v2399
        %2448 = vmatprep.subr.mxu0 0.0
        %2449 = vmatpush1.msra.mxu0 %v2401
        %2450 = vmatprep.subr.mxu0 0.0
        %2451 = vmatpush1.msra.mxu0 %v2403
        %2452 = vmatprep.subr.mxu0 0.0
        %2453 = vmatpush1.msra.mxu0 %v2405
        %2454 = vmatprep.subr.mxu0 0.0
        %2455 = vmatpush1.msra.mxu0 %v2407
        %2456 = vmatprep.subr.mxu0 0.0
        %2457 = vmatpush1.msra.mxu0 %v2409
        %2458 = vmatprep.subr.mxu0 0.0
        %2459 = vmatpush1.msra.mxu0 %v2411
        %2460 = vmatprep.subr.mxu0 0.0
        %2461 = vmatpush1.msra.mxu0 0.0
        %2462 = vmatprep.subr.mxu0 0.0
        %2463 = vmatpush1.msra.mxu0 0.0
        %2464 = vmatprep.subr.mxu0 0.0
        %2465 = vmatpush1.msra.mxu0 0.0
        %2466 = vmatprep.subr.mxu0 0.0
        %2467 = vmatpush1.msra.mxu0 0.0
        %2468 = vmatprep.subr.mxu0 0.0
        %2469 = vmatpush1.msra.mxu0 0.0
        %2470 = vmatprep.subr.mxu0 0.0
        %2471 = vmatpush1.msra.mxu0 0.0
        %2472 = vmatprep.subr.mxu0 0.0
        %2473 = vmatpush1.msra.mxu0 0.0
        %2474 = vmatprep.subr.mxu0 0.0
        %2475 = vmatpush1.msra.mxu0 0.0
        %2476 = vmatprep.subr.mxu0 0.0
        %2477 = vmatpush1.msra.mxu0 0.0
        %2478 = vmatprep.subr.mxu0 0.0
        %2479 = vmatpush1.msra.mxu0 0.0
        %2480 = vmatprep.subr.mxu0 0.0
        %2481 = vmatpush1.msra.mxu0 0.0
        %2482 = vmatprep.subr.mxu0 0.0
        %2483 = vmatpush1.msra.mxu0 0.0
        %2484 = vmatprep.subr.mxu0 0.0
        %2485 = vmatpush1.msra.mxu0 0.0
        %2486 = vmatprep.subr.mxu0 0.0
        %2487 = vmatpush1.msra.mxu0 0.0
        %2488 = vmatprep.subr.mxu0 0.0
        %2489 = vmatpush1.msra.mxu0 0.0
        %2490 = vmatprep.subr.mxu0 0.0
        %2491 = vmatpush1.msra.mxu0 0.0
        %2492 = vmatprep.subr.mxu0 0.0
        %2493 = vmatpush1.msra.mxu0 0.0
        %2494 = vmatprep.subr.mxu0 0.0
        %2495 = vmatpush1.msra.mxu0 0.0
        %2496 = vmatprep.subr.mxu0 0.0
        %2497 = vmatpush1.msra.mxu0 0.0
        %2498 = vmatprep.subr.mxu0 0.0
        %2499 = vmatpush1.msra.mxu0 0.0
        %2500 = vmatprep.subr.mxu0 0.0
        %2501 = vmatpush1.msra.mxu0 0.0
        %2502 = vmatprep.subr.mxu0 0.0
        %2503 = vmatpush1.msra.mxu0 0.0
        %2504 = vmatprep.subr.mxu0 0.0
        %2505 = vmatpush1.msra.mxu0 0.0
        %2506 = vmatprep.subr.mxu0 0.0
        %2507 = vmatpush1.msra.mxu0 0.0
        %2508 = vmatprep.mubr.f32.mxu0 0.0
        %2509 = vmatmul.mubr.f32.gmra.mrb[0].mxu0 %v2421
        %v2510 = vpop.f32.mrb[0].mxu0
        %v2511 = vadd.f32 0.0, %v2510
        %v2512 = vpop.f32.mrb[0].mxu0
        %2513 = vmatprep.mubr.f32.mxu0 0.0
        %2514 = vmatmul.mubr.f32.gmra.mrb[0].mxu0 %v2424
        %v2515 = vpop.f32.mrb[0].mxu0
        %v2516 = vadd.f32 0.0, %v2515
        %v2517 = vpop.f32.mrb[0].mxu0
        %2518 = vmatprep.mubr.f32.mxu0 0.0
        %2519 = vmatmul.mubr.f32.gmra.mrb[0].mxu0 %v2427
        %v2520 = vpop.f32.mrb[0].mxu0
        %v2521 = vadd.f32 0.0, %v2520
        %v2522 = vpop.f32.mrb[0].mxu0
        %2523 = vmatprep.mubr.f32.mxu0 0.0
        %2524 = vmatmul.mubr.f32.gmra.mrb[0].mxu0 %v2430
        %v2525 = vpop.f32.mrb[0].mxu0
        %v2526 = vadd.f32 0.0, %v2525
        %v2527 = vpop.f32.mrb[0].mxu0
        %2528 = vmatprep.mubr.f32.mxu0 0.0
        %2529 = vmatmul.mubr.f32.gmra.mrb[0].mxu0 %v2433
        %v2530 = vpop.f32.mrb[0].mxu0
        %v2531 = vadd.f32 0.0, %v2530
        %v2532 = vpop.f32.mrb[0].mxu0
        %2533 = vmatprep.mubr.f32.mxu0 0.0
        %2534 = vmatmul.mubr.f32.gmra.mrb[0].mxu0 %v2436
        %v2535 = vpop.f32.mrb[0].mxu0
        %v2536 = vadd.f32 0.0, %v2535
        %v2537 = vpop.f32.mrb[0].mxu0
        %2538 = vmatprep.mubr.f32.mxu0 0.0
        %2539 = vmatmul.mubr.f32.gmra.mrb[0].mxu0 %v2439
        %v2540 = vpop.f32.mrb[0].mxu0
        %v2541 = vadd.f32 0.0, %v2540
        %v2542 = vpop.f32.mrb[0].mxu0
        %2543 = vmatprep.mubr.f32.mxu0 0.0
        %2544 = vmatmul.mubr.f32.gmra.mrb[0].mxu0 %v2442
        %v2545 = vpop.f32.mrb[0].mxu0
        %v2546 = vadd.f32 0.0, %v2545
        %v2547 = vpop.f32.mrb[0].mxu0
        %2548 = vdwg.mxu0
        %2557 = vrot.lane.b32.xlu0 %v1659, 16
        %v2558 = vpop.permute.xlu0 %2557
        %2559 = vrot.lane.b32.xlu0 %v1664, 16
        %v2560 = vpop.permute.xlu0 %2559
        %2561 = vrot.lane.b32.xlu0 %v1669, 16
        %v2562 = vpop.permute.xlu0 %2561
        %2563 = vrot.lane.b32.xlu0 %v1674, 16
        %v2564 = vpop.permute.xlu0 %2563
        %2565 = vrot.lane.b32.xlu0 %v1679, 16
        %v2566 = vpop.permute.xlu0 %2565
        %2567 = vrot.lane.b32.xlu0 %v1684, 16
        %v2568 = vpop.permute.xlu0 %2567
        %2569 = vrot.lane.b32.xlu0 %v1689, 16
        %v2570 = vpop.permute.xlu0 %2569
        %2571 = vrot.lane.b32.xlu0 %v1694, 16
        %v2572 = vpop.permute.xlu0 %2571
        %2589 = vrot.lane.b32.xlu0 %v2085, 32
        %v2590 = vpop.permute.xlu0 %2589
        %2591 = vrot.lane.b32.xlu0 %v2090, 32
        %v2592 = vpop.permute.xlu0 %2591
        %2593 = vrot.lane.b32.xlu0 %v2095, 32
        %v2594 = vpop.permute.xlu0 %2593
        %2595 = vrot.lane.b32.xlu0 %v2100, 32
        %v2596 = vpop.permute.xlu0 %2595
        %2597 = vrot.lane.b32.xlu0 %v2105, 32
        %v2598 = vpop.permute.xlu0 %2597
        %2599 = vrot.lane.b32.xlu0 %v2110, 32
        %v2600 = vpop.permute.xlu0 %2599
        %2601 = vrot.lane.b32.xlu0 %v2115, 32
        %v2602 = vpop.permute.xlu0 %2601
        %2603 = vrot.lane.b32.xlu0 %v2120, 32
        %v2604 = vpop.permute.xlu0 %2603
        %2621 = vrot.lane.b32.xlu0 %v2511, 48
        %v2622 = vpop.permute.xlu0 %2621
        %2623 = vrot.lane.b32.xlu0 %v2516, 48
        %v2624 = vpop.permute.xlu0 %2623
        %2625 = vrot.lane.b32.xlu0 %v2521, 48
        %v2626 = vpop.permute.xlu0 %2625
        %2627 = vrot.lane.b32.xlu0 %v2526, 48
        %v2628 = vpop.permute.xlu0 %2627
        %2629 = vrot.lane.b32.xlu0 %v2531, 48
        %v2630 = vpop.permute.xlu0 %2629
        %2631 = vrot.lane.b32.xlu0 %v2536, 48
        %v2632 = vpop.permute.xlu0 %2631
        %2633 = vrot.lane.b32.xlu0 %v2541, 48
        %v2634 = vpop.permute.xlu0 %2633
        %2635 = vrot.lane.b32.xlu0 %v2546, 48
        %v2636 = vpop.permute.xlu0 %2635
        %v2645 = vsel %vm892, %v1225, %v2558
        %v2646 = vsel %vm892, %v1230, %v2560
        %v2647 = vsel %vm892, %v1235, %v2562
        %v2648 = vsel %vm892, %v1240, %v2564
        %v2649 = vsel %vm892, %v1245, %v2566
        %v2650 = vsel %vm892, %v1250, %v2568
        %v2651 = vsel %vm892, %v1255, %v2570
        %v2652 = vsel %vm892, %v1260, %v2572
        %vm2653 = vcmask 261120
        %v2654 = vsel %vm2653, %v2645, %v2590
        %v2655 = vsel %vm2653, %v2646, %v2592
        %v2656 = vsel %vm2653, %v2647, %v2594
        %v2657 = vsel %vm2653, %v2648, %v2596
        %v2658 = vsel %vm2653, %v2649, %v2598
        %v2659 = vsel %vm2653, %v2650, %v2600
        %v2660 = vsel %vm2653, %v2651, %v2602
        %v2661 = vsel %vm2653, %v2652, %v2604
        %vm2662 = vcmask 392192
        %v2663 = vsel %vm2662, %v2654, %v2622
        %v2664 = vsel %vm2662, %v2655, %v2624
        %v2665 = vsel %vm2662, %v2656, %v2626
        %v2666 = vsel %vm2662, %v2657, %v2628
        %v2667 = vsel %vm2662, %v2658, %v2630
        %v2668 = vsel %vm2662, %v2659, %v2632
        %v2669 = vsel %vm2662, %v2660, %v2634
        %v2670 = vsel %vm2662, %v2661, %v2636
        %v2671 = vpack.c.bf16 %v2664, %v2663
        %v2672 = vpack.c.bf16 %v2666, %v2665
        %v2673 = vpack.c.bf16 %v2668, %v2667
        %v2674 = vpack.c.bf16 %v2670, %v2669
        %v2675 = vld [vmem:[%s5] sm:$0xf]
        %v2676 = vld [vmem:[%s5 + $0x4] sm:$0xf]
        %v2677 = vld [vmem:[%s5 + $0x8] sm:$0xf]
        %v2678 = vld [vmem:[%s5 + $0xc] sm:$0xf]
        %v2679 = vld [vmem:[%s5 + $0x10] sm:$0xf]
        %v2680 = vld [vmem:[%s5 + $0x14] sm:$0xf]
        %v2681 = vld [vmem:[%s5 + $0x18] sm:$0xf]
        %v2682 = vld [vmem:[%s5 + $0x1c] sm:$0xf]
        %v2691 = vunpack.c.l.b16 %v2675
        %v2692 = vunpack.c.l.b16 %v2676
        %v2693 = vunpack.c.l.b16 %v2677
        %v2694 = vunpack.c.l.b16 %v2678
        %v2695 = vunpack.c.l.b16 %v2679
        %v2696 = vunpack.c.l.b16 %v2680
        %v2697 = vunpack.c.l.b16 %v2681
        %v2698 = vunpack.c.l.b16 %v2682
        %v2699 = vpack.c.b16 %v2692, %v2691
        %v2700 = vpack.c.b16 %v2694, %v2693
        %v2701 = vpack.c.b16 %v2696, %v2695
        %v2702 = vpack.c.b16 %v2698, %v2697
        %v2708 = vsel %vm585, %v2671, 0
        %v2711 = vsel %vm585, %v2672, 0
        %v2714 = vsel %vm585, %v2673, 0
        %v2717 = vsel %vm585, %v2674, 0
        %2719 = vmatprep.subr.bf16.mxu0 0
        %2720 = vmatpush1.bf16.msra.mxu0 %v2699
        %2721 = vmatprep.subr.bf16.mxu0 0
        %2722 = vmatpush1.bf16.msra.mxu0 %v2700
        %2723 = vmatprep.subr.bf16.mxu0 0
        %2724 = vmatpush1.bf16.msra.mxu0 %v2701
        %2725 = vmatprep.subr.bf16.mxu0 0
        %2726 = vmatpush1.bf16.msra.mxu0 %v2702
        %2727 = vmatprep.subr.bf16.mxu0 0
        %2728 = vmatpush1.bf16.msra.mxu0 0
        %2729 = vmatprep.subr.bf16.mxu0 0
        %2730 = vmatpush1.bf16.msra.mxu0 0
        %2731 = vmatprep.subr.bf16.mxu0 0
        %2732 = vmatpush1.bf16.msra.mxu0 0
        %2733 = vmatprep.subr.bf16.mxu0 0
        %2734 = vmatpush1.bf16.msra.mxu0 0
        %2735 = vmatprep.subr.bf16.mxu0 0
        %2736 = vmatpush1.bf16.msra.mxu0 0
        %2737 = vmatprep.subr.bf16.mxu0 0
        %2738 = vmatpush1.bf16.msra.mxu0 0
        %2739 = vmatprep.subr.bf16.mxu0 0
        %2740 = vmatpush1.bf16.msra.mxu0 0
        %2741 = vmatprep.subr.bf16.mxu0 0
        %2742 = vmatpush1.bf16.msra.mxu0 0
        %2743 = vmatprep.subr.bf16.mxu0 0
        %2744 = vmatpush1.bf16.msra.mxu0 0
        %2745 = vmatprep.subr.bf16.mxu0 0
        %2746 = vmatpush1.bf16.msra.mxu0 0
        %2747 = vmatprep.subr.bf16.mxu0 0
        %2748 = vmatpush1.bf16.msra.mxu0 0
        %2749 = vmatprep.subr.bf16.mxu0 0
        %2750 = vmatpush1.bf16.msra.mxu0 0
        %2751 = vmatprep.mubr.bf16.mxu0 0
        %2752 = vmatmul.mubr.bf16.gmra.mrb[0].mxu0 %v2708
        %v2753 = vpop.f32.mrb[0].mxu0
        %v2754 = vadd.f32 0.0, %v2753
        %v2755 = vpop.f32.mrb[0].mxu0
        %v2756 = vpop.f32.mrb[0].mxu0
        %v2757 = vadd.f32 0.0, %v2756
        %v2758 = vpop.f32.mrb[0].mxu0
        %2759 = vmatprep.mubr.bf16.mxu0 0
        %2760 = vmatmul.mubr.bf16.gmra.mrb[0].mxu0 %v2711
        %v2761 = vpop.f32.mrb[0].mxu0
        %v2762 = vadd.f32 0.0, %v2761
        %v2763 = vpop.f32.mrb[0].mxu0
        %v2764 = vpop.f32.mrb[0].mxu0
        %v2765 = vadd.f32 0.0, %v2764
        %v2766 = vpop.f32.mrb[0].mxu0
        %2767 = vmatprep.mubr.bf16.mxu0 0
        %2768 = vmatmul.mubr.bf16.gmra.mrb[0].mxu0 %v2714
        %v2769 = vpop.f32.mrb[0].mxu0
        %v2770 = vadd.f32 0.0, %v2769
        %v2771 = vpop.f32.mrb[0].mxu0
        %v2772 = vpop.f32.mrb[0].mxu0
        %v2773 = vadd.f32 0.0, %v2772
        %v2774 = vpop.f32.mrb[0].mxu0
        %2775 = vmatprep.mubr.bf16.mxu0 0
        %2776 = vmatmul.mubr.bf16.gmra.mrb[0].mxu0 %v2717
        %v2777 = vpop.f32.mrb[0].mxu0
        %v2778 = vadd.f32 0.0, %v2777
        %v2779 = vpop.f32.mrb[0].mxu0
        %v2780 = vpop.f32.mrb[0].mxu0
        %v2781 = vadd.f32 0.0, %v2780
        %v2782 = vpop.f32.mrb[0].mxu0
        %2783 = vdwg.mxu0
        %v2784 = vadd.f32 %v548, %v2754
        %v2785 = vadd.f32 %v549, %v2757
        %v2786 = vadd.f32 %v550, %v2762
        %v2787 = vadd.f32 %v551, %v2765
        %v2788 = vadd.f32 %v552, %v2770
        %v2789 = vadd.f32 %v553, %v2773
        %v2790 = vadd.f32 %v554, %v2778
        %v2791 = vadd.f32 %v555, %v2781
        %v2792 = vld [vmem:[%s6] sm:$0x1]
        %v2794 = vlaneseq
        %v2795 = vshrl.u32 %v2794, 7
        %v2796 = vsub.s32 0, %v2795
        %v2797 = vrot.slane %v2792, %v2796
        %v2799 = vadd.f32 %v2784, %v2797
        %v2800 = vadd.f32 %v2785, %v2797
        %v2801 = vadd.f32 %v2786, %v2797
        %v2802 = vadd.f32 %v2787, %v2797
        %v2803 = vadd.f32 %v2788, %v2797
        %v2804 = vadd.f32 %v2789, %v2797
        %v2805 = vadd.f32 %v2790, %v2797
        %v2806 = vadd.f32 %v2791, %v2797
        %v2807 = vld [vmem:[%s7] sm:$0x1]
        %v2808 = vld [vmem:[%s8] sm:$0x1]
        %v2809 = vsel %vm585, %v2799, 0.0
        %2810 = vadd.xlane.f32.xlu0 %v2809
        %v2811 = vpop.xlane.xlu0 %2810
        %v2812 = vsel %vm585, %v2800, 0.0
        %2813 = vadd.xlane.f32.xlu0 %v2812
        %v2814 = vpop.xlane.xlu0 %2813
        %v2815 = vsel %vm585, %v2801, 0.0
        %2816 = vadd.xlane.f32.xlu0 %v2815
        %v2817 = vpop.xlane.xlu0 %2816
        %v2818 = vsel %vm585, %v2802, 0.0
        %2819 = vadd.xlane.f32.xlu0 %v2818
        %v2820 = vpop.xlane.xlu0 %2819
        %v2821 = vsel %vm585, %v2803, 0.0
        %2822 = vadd.xlane.f32.xlu0 %v2821
        %v2823 = vpop.xlane.xlu0 %2822
        %v2824 = vsel %vm585, %v2804, 0.0
        %2825 = vadd.xlane.f32.xlu0 %v2824
        %v2826 = vpop.xlane.xlu0 %2825
        %v2827 = vsel %vm585, %v2805, 0.0
        %2828 = vadd.xlane.f32.xlu0 %v2827
        %v2829 = vpop.xlane.xlu0 %2828
        %v2830 = vsel %vm585, %v2806, 0.0
        %2831 = vadd.xlane.f32.xlu0 %v2830
        %v2832 = vpop.xlane.xlu0 %2831
        %v2833 = vmul.f32 %v2811, %v610
        %v2834 = vmul.f32 %v2814, %v610
        %v2835 = vmul.f32 %v2817, %v610
        %v2836 = vmul.f32 %v2820, %v610
        %v2837 = vmul.f32 %v2823, %v610
        %v2838 = vmul.f32 %v2826, %v610
        %v2839 = vmul.f32 %v2829, %v610
        %v2840 = vmul.f32 %v2832, %v610
        %v2841 = vsub.f32 %v2799, %v2833
        %v2842 = vsub.f32 %v2800, %v2834
        %v2843 = vsub.f32 %v2801, %v2835
        %v2844 = vsub.f32 %v2802, %v2836
        %v2845 = vsub.f32 %v2803, %v2837
        %v2846 = vsub.f32 %v2804, %v2838
        %v2847 = vsub.f32 %v2805, %v2839
        %v2848 = vsub.f32 %v2806, %v2840
        %v2849 = vmul.f32 %v2841, %v2841
        %v2850 = vmul.f32 %v2842, %v2842
        %v2851 = vmul.f32 %v2843, %v2843
        %v2852 = vmul.f32 %v2844, %v2844
        %v2853 = vmul.f32 %v2845, %v2845
        %v2854 = vmul.f32 %v2846, %v2846
        %v2855 = vmul.f32 %v2847, %v2847
        %v2856 = vmul.f32 %v2848, %v2848
        %v2857 = vsel %vm585, %v2849, 0.0
        %2858 = vadd.xlane.f32.xlu0 %v2857
        %v2859 = vpop.xlane.xlu0 %2858
        %v2860 = vsel %vm585, %v2850, 0.0
        %2861 = vadd.xlane.f32.xlu0 %v2860
        %v2862 = vpop.xlane.xlu0 %2861
        %v2863 = vsel %vm585, %v2851, 0.0
        %2864 = vadd.xlane.f32.xlu0 %v2863
        %v2865 = vpop.xlane.xlu0 %2864
        %v2866 = vsel %vm585, %v2852, 0.0
        %2867 = vadd.xlane.f32.xlu0 %v2866
        %v2868 = vpop.xlane.xlu0 %2867
        %v2869 = vsel %vm585, %v2853, 0.0
        %2870 = vadd.xlane.f32.xlu0 %v2869
        %v2871 = vpop.xlane.xlu0 %2870
        %v2872 = vsel %vm585, %v2854, 0.0
        %2873 = vadd.xlane.f32.xlu0 %v2872
        %v2874 = vpop.xlane.xlu0 %2873
        %v2875 = vsel %vm585, %v2855, 0.0
        %2876 = vadd.xlane.f32.xlu0 %v2875
        %v2877 = vpop.xlane.xlu0 %2876
        %v2878 = vsel %vm585, %v2856, 0.0
        %2879 = vadd.xlane.f32.xlu0 %v2878
        %v2880 = vpop.xlane.xlu0 %2879
        %v2881 = vmul.f32 %v2859, %v610
        %v2882 = vmul.f32 %v2862, %v610
        %v2883 = vmul.f32 %v2865, %v610
        %v2884 = vmul.f32 %v2868, %v610
        %v2885 = vmul.f32 %v2871, %v610
        %v2886 = vmul.f32 %v2874, %v610
        %v2887 = vmul.f32 %v2877, %v610
        %v2888 = vmul.f32 %v2880, %v610
        %v2889 = vadd.f32 %v2881, 1e-05
        %v2890 = vadd.f32 %v2882, 1e-05
        %v2891 = vadd.f32 %v2883, 1e-05
        %v2892 = vadd.f32 %v2884, 1e-05
        %v2893 = vadd.f32 %v2885, 1e-05
        %v2894 = vadd.f32 %v2886, 1e-05
        %v2895 = vadd.f32 %v2887, 1e-05
        %v2896 = vadd.f32 %v2888, 1e-05
        %v2897 = vrsqrt.pop %v2889
        %v2898 = vrsqrt.pop %v2890
        %v2899 = vrsqrt.pop %v2891
        %v2900 = vrsqrt.pop %v2892
        %v2901 = vrsqrt.pop %v2893
        %v2902 = vrsqrt.pop %v2894
        %v2903 = vrsqrt.pop %v2895
        %v2904 = vrsqrt.pop %v2896
        %v2905 = vmul.f32 %v2841, %v2897
        %v2906 = vmul.f32 %v2842, %v2898
        %v2907 = vmul.f32 %v2843, %v2899
        %v2908 = vmul.f32 %v2844, %v2900
        %v2909 = vmul.f32 %v2845, %v2901
        %v2910 = vmul.f32 %v2846, %v2902
        %v2911 = vmul.f32 %v2847, %v2903
        %v2912 = vmul.f32 %v2848, %v2904
        %v2914 = vlaneseq
        %v2915 = vshrl.u32 %v2914, 7
        %v2916 = vsub.s32 0, %v2915
        %v2917 = vrot.slane %v2807, %v2916
        %v2919 = vmul.f32 %v2905, %v2917
        %v2920 = vmul.f32 %v2906, %v2917
        %v2921 = vmul.f32 %v2907, %v2917
        %v2922 = vmul.f32 %v2908, %v2917
        %v2923 = vmul.f32 %v2909, %v2917
        %v2924 = vmul.f32 %v2910, %v2917
        %v2925 = vmul.f32 %v2911, %v2917
        %v2926 = vmul.f32 %v2912, %v2917
        %v2928 = vlaneseq
        %v2929 = vshrl.u32 %v2928, 7
        %v2930 = vsub.s32 0, %v2929
        %v2931 = vrot.slane %v2808, %v2930
        %v2933 = vadd.f32 %v2919, %v2931
        %v2934 = vadd.f32 %v2920, %v2931
        %v2935 = vadd.f32 %v2921, %v2931
        %v2936 = vadd.f32 %v2922, %v2931
        %v2937 = vadd.f32 %v2923, %v2931
        %v2938 = vadd.f32 %v2924, %v2931
        %v2939 = vadd.f32 %v2925, %v2931
        %v2940 = vadd.f32 %v2926, %v2931
        %v2941 = vpack.c.bf16 %v2934, %v2933
        %v2942 = vpack.c.bf16 %v2936, %v2935
        %v2943 = vpack.c.bf16 %v2938, %v2937
        %v2944 = vpack.c.bf16 %v2940, %v2939
        %v2945 = vld [vmem:[%s9] sm:$0xff]
        %v2946 = vld [vmem:[%s9 + $0x8] sm:$0xff]
        %v2947 = vld [vmem:[%s9 + $0x10] sm:$0xff]
        %v2948 = vld [vmem:[%s9 + $0x18] sm:$0xff]
        %v2949 = vld [vmem:[%s9 + $0x20] sm:$0xff]
        %v2950 = vld [vmem:[%s9 + $0x28] sm:$0xff]
        %v2951 = vld [vmem:[%s9 + $0x30] sm:$0xff]
        %v2952 = vld [vmem:[%s9 + $0x38] sm:$0xff]
        %v2953 = vld [vmem:[%s10] sm:$0x3]
        %v2955 = vlaneseq
        %v2956 = vshrl.u32 %v2955, 7
        %v2957 = vsub.s32 0, %v2956
        %v2958 = vrot.slane %v2953, %v2957
        %v2959 = vlaneseq
        %v2960 = vshrl.u32 %v2959, 7
        %v2961 = vsub.s32 1, %v2960
        %v2962 = vrot.slane %v2953, %v2961
        %v2973 = vunpack.c.l.b16 %v2945
        %v2974 = vunpack.c.h.b16 %v2945
        %v2975 = vunpack.c.l.b16 %v2946
        %v2976 = vunpack.c.h.b16 %v2946
        %v2977 = vunpack.c.l.b16 %v2947
        %v2978 = vunpack.c.h.b16 %v2947
        %v2979 = vunpack.c.l.b16 %v2948
        %v2980 = vunpack.c.h.b16 %v2948
        %v2981 = vunpack.c.l.b16 %v2949
        %v2982 = vunpack.c.h.b16 %v2949
        %v2983 = vunpack.c.l.b16 %v2950
        %v2984 = vunpack.c.h.b16 %v2950
        %v2985 = vunpack.c.l.b16 %v2951
        %v2986 = vunpack.c.h.b16 %v2951
        %v2987 = vunpack.c.l.b16 %v2952
        %v2988 = vunpack.c.h.b16 %v2952
        %v2989 = vpack.c.b16 %v2975, %v2973
        %v2990 = vpack.c.b16 %v2976, %v2974
        %v2991 = vpack.c.b16 %v2979, %v2977
        %v2992 = vpack.c.b16 %v2980, %v2978
        %v2993 = vpack.c.b16 %v2983, %v2981
        %v2994 = vpack.c.b16 %v2984, %v2982
        %v2995 = vpack.c.b16 %v2987, %v2985
        %v2996 = vpack.c.b16 %v2988, %v2986
        %v3006 = vsel %vm585, %v2941, 0
        %v3009 = vsel %vm585, %v2942, 0
        %v3012 = vsel %vm585, %v2943, 0
        %v3015 = vsel %vm585, %v2944, 0
        %3017 = vmatprep.subr.bf16.mxu0 %v2990
        %3018 = vmatpush1.bf16.msra.mxu0 %v2989
        %3019 = vmatprep.subr.bf16.mxu0 %v2992
        %3020 = vmatpush1.bf16.msra.mxu0 %v2991
        %3021 = vmatprep.subr.bf16.mxu0 %v2994
        %3022 = vmatpush1.bf16.msra.mxu0 %v2993
        %3023 = vmatprep.subr.bf16.mxu0 %v2996
        %3024 = vmatpush1.bf16.msra.mxu0 %v2995
        %3025 = vmatprep.subr.bf16.mxu0 0
        %3026 = vmatpush1.bf16.msra.mxu0 0
        %3027 = vmatprep.subr.bf16.mxu0 0
        %3028 = vmatpush1.bf16.msra.mxu0 0
        %3029 = vmatprep.subr.bf16.mxu0 0
        %3030 = vmatpush1.bf16.msra.mxu0 0
        %3031 = vmatprep.subr.bf16.mxu0 0
        %3032 = vmatpush1.bf16.msra.mxu0 0
        %3033 = vmatprep.subr.bf16.mxu0 0
        %3034 = vmatpush1.bf16.msra.mxu0 0
        %3035 = vmatprep.subr.bf16.mxu0 0
        %3036 = vmatpush1.bf16.msra.mxu0 0
        %3037 = vmatprep.subr.bf16.mxu0 0
        %3038 = vmatpush1.bf16.msra.mxu0 0
        %3039 = vmatprep.subr.bf16.mxu0 0
        %3040 = vmatpush1.bf16.msra.mxu0 0
        %3041 = vmatprep.subr.bf16.mxu0 0
        %3042 = vmatpush1.bf16.msra.mxu0 0
        %3043 = vmatprep.subr.bf16.mxu0 0
        %3044 = vmatpush1.bf16.msra.mxu0 0
        %3045 = vmatprep.subr.bf16.mxu0 0
        %3046 = vmatpush1.bf16.msra.mxu0 0
        %3047 = vmatprep.subr.bf16.mxu0 0
        %3048 = vmatpush1.bf16.msra.mxu0 0
        %3049 = vmatprep.mubr.bf16.mxu0 0
        %3050 = vmatmul.mubr.bf16.gmra.mrb[0].mxu0 %v3006
        %v3051 = vpop.f32.mrb[0].mxu0
        %v3052 = vadd.f32 %v2958, %v3051
        %v3053 = vpop.f32.mrb[0].mxu0
        %v3054 = vadd.f32 %v2962, %v3053
        %v3055 = vpop.f32.mrb[0].mxu0
        %v3056 = vadd.f32 %v2958, %v3055
        %v3057 = vpop.f32.mrb[0].mxu0
        %v3058 = vadd.f32 %v2962, %v3057
        %3059 = vmatprep.mubr.bf16.mxu0 0
        %3060 = vmatmul.mubr.bf16.gmra.mrb[0].mxu0 %v3009
        %v3061 = vpop.f32.mrb[0].mxu0
        %v3062 = vadd.f32 %v2958, %v3061
        %v3063 = vpop.f32.mrb[0].mxu0
        %v3064 = vadd.f32 %v2962, %v3063
        %v3065 = vpop.f32.mrb[0].mxu0
        %v3066 = vadd.f32 %v2958, %v3065
        %v3067 = vpop.f32.mrb[0].mxu0
        %v3068 = vadd.f32 %v2962, %v3067
        %3069 = vmatprep.mubr.bf16.mxu0 0
        %3070 = vmatmul.mubr.bf16.gmra.mrb[0].mxu0 %v3012
        %v3071 = vpop.f32.mrb[0].mxu0
        %v3072 = vadd.f32 %v2958, %v3071
        %v3073 = vpop.f32.mrb[0].mxu0
        %v3074 = vadd.f32 %v2962, %v3073
        %v3075 = vpop.f32.mrb[0].mxu0
        %v3076 = vadd.f32 %v2958, %v3075
        %v3077 = vpop.f32.mrb[0].mxu0
        %v3078 = vadd.f32 %v2962, %v3077
        %3079 = vmatprep.mubr.bf16.mxu0 0
        %3080 = vmatmul.mubr.bf16.gmra.mrb[0].mxu0 %v3015
        %v3081 = vpop.f32.mrb[0].mxu0
        %v3082 = vadd.f32 %v2958, %v3081
        %v3083 = vpop.f32.mrb[0].mxu0
        %v3084 = vadd.f32 %v2962, %v3083
        %v3085 = vpop.f32.mrb[0].mxu0
        %v3086 = vadd.f32 %v2958, %v3085
        %v3087 = vpop.f32.mrb[0].mxu0
        %v3088 = vadd.f32 %v2962, %v3087
        %3089 = vdwg.mxu0
        %v3090 = vmul.f32 %v3052, %v3052
        %v3091 = vmul.f32 %v3054, %v3054
        %v3092 = vmul.f32 %v3056, %v3056
        %v3093 = vmul.f32 %v3058, %v3058
        %v3094 = vmul.f32 %v3062, %v3062
        %v3095 = vmul.f32 %v3064, %v3064
        %v3096 = vmul.f32 %v3066, %v3066
        %v3097 = vmul.f32 %v3068, %v3068
        %v3098 = vmul.f32 %v3072, %v3072
        %v3099 = vmul.f32 %v3074, %v3074
        %v3100 = vmul.f32 %v3076, %v3076
        %v3101 = vmul.f32 %v3078, %v3078
        %v3102 = vmul.f32 %v3082, %v3082
        %v3103 = vmul.f32 %v3084, %v3084
        %v3104 = vmul.f32 %v3086, %v3086
        %v3105 = vmul.f32 %v3088, %v3088
        %v3106 = vmul.f32 %v3052, %v3090
        %v3107 = vmul.f32 %v3054, %v3091
        %v3108 = vmul.f32 %v3056, %v3092
        %v3109 = vmul.f32 %v3058, %v3093
        %v3110 = vmul.f32 %v3062, %v3094
        %v3111 = vmul.f32 %v3064, %v3095
        %v3112 = vmul.f32 %v3066, %v3096
        %v3113 = vmul.f32 %v3068, %v3097
        %v3114 = vmul.f32 %v3072, %v3098
        %v3115 = vmul.f32 %v3074, %v3099
        %v3116 = vmul.f32 %v3076, %v3100
        %v3117 = vmul.f32 %v3078, %v3101
        %v3118 = vmul.f32 %v3082, %v3102
        %v3119 = vmul.f32 %v3084, %v3103
        %v3120 = vmul.f32 %v3086, %v3104
        %v3121 = vmul.f32 %v3088, %v3105
        %v3122 = vmul.f32 %v3106, 0.044715
        %v3123 = vmul.f32 %v3107, 0.044715
        %v3124 = vmul.f32 %v3108, 0.044715
        %v3125 = vmul.f32 %v3109, 0.044715
        %v3126 = vmul.f32 %v3110, 0.044715
        %v3127 = vmul.f32 %v3111, 0.044715
        %v3128 = vmul.f32 %v3112, 0.044715
        %v3129 = vmul.f32 %v3113, 0.044715
        %v3130 = vmul.f32 %v3114, 0.044715
        %v3131 = vmul.f32 %v3115, 0.044715
        %v3132 = vmul.f32 %v3116, 0.044715
        %v3133 = vmul.f32 %v3117, 0.044715
        %v3134 = vmul.f32 %v3118, 0.044715
        %v3135 = vmul.f32 %v3119, 0.044715
        %v3136 = vmul.f32 %v3120, 0.044715
        %v3137 = vmul.f32 %v3121, 0.044715
        %v3138 = vadd.f32 %v3052, %v3122
        %v3139 = vadd.f32 %v3054, %v3123
        %v3140 = vadd.f32 %v3056, %v3124
        %v3141 = vadd.f32 %v3058, %v3125
        %v3142 = vadd.f32 %v3062, %v3126
        %v3143 = vadd.f32 %v3064, %v3127
        %v3144 = vadd.f32 %v3066, %v3128
        %v3145 = vadd.f32 %v3068, %v3129
        %v3146 = vadd.f32 %v3072, %v3130
        %v3147 = vadd.f32 %v3074, %v3131
        %v3148 = vadd.f32 %v3076, %v3132
        %v3149 = vadd.f32 %v3078, %v3133
        %v3150 = vadd.f32 %v3082, %v3134
        %v3151 = vadd.f32 %v3084, %v3135
        %v3152 = vadd.f32 %v3086, %v3136
        %v3153 = vadd.f32 %v3088, %v3137
        %v3154 = vmul.f32 %v3138, 0.7978846
        %v3155 = vmul.f32 %v3139, 0.7978846
        %v3156 = vmul.f32 %v3140, 0.7978846
        %v3157 = vmul.f32 %v3141, 0.7978846
        %v3158 = vmul.f32 %v3142, 0.7978846
        %v3159 = vmul.f32 %v3143, 0.7978846
        %v3160 = vmul.f32 %v3144, 0.7978846
        %v3161 = vmul.f32 %v3145, 0.7978846
        %v3162 = vmul.f32 %v3146, 0.7978846
        %v3163 = vmul.f32 %v3147, 0.7978846
        %v3164 = vmul.f32 %v3148, 0.7978846
        %v3165 = vmul.f32 %v3149, 0.7978846
        %v3166 = vmul.f32 %v3150, 0.7978846
        %v3167 = vmul.f32 %v3151, 0.7978846
        %v3168 = vmul.f32 %v3152, 0.7978846
        %v3169 = vmul.f32 %v3153, 0.7978846
        %v3170 = vtanh.pop %v3154
        %v3171 = vtanh.pop %v3155
        %v3172 = vtanh.pop %v3156
        %v3173 = vtanh.pop %v3157
        %v3174 = vtanh.pop %v3158
        %v3175 = vtanh.pop %v3159
        %v3176 = vtanh.pop %v3160
        %v3177 = vtanh.pop %v3161
        %v3178 = vtanh.pop %v3162
        %v3179 = vtanh.pop %v3163
        %v3180 = vtanh.pop %v3164
        %v3181 = vtanh.pop %v3165
        %v3182 = vtanh.pop %v3166
        %v3183 = vtanh.pop %v3167
        %v3184 = vtanh.pop %v3168
        %v3185 = vtanh.pop %v3169
        %v3186 = vadd.f32 %v3170, 1.0
        %v3187 = vadd.f32 %v3171, 1.0
        %v3188 = vadd.f32 %v3172, 1.0
        %v3189 = vadd.f32 %v3173, 1.0
        %v3190 = vadd.f32 %v3174, 1.0
        %v3191 = vadd.f32 %v3175, 1.0
        %v3192 = vadd.f32 %v3176, 1.0
        %v3193 = vadd.f32 %v3177, 1.0
        %v3194 = vadd.f32 %v3178, 1.0
        %v3195 = vadd.f32 %v3179, 1.0
        %v3196 = vadd.f32 %v3180, 1.0
        %v3197 = vadd.f32 %v3181, 1.0
        %v3198 = vadd.f32 %v3182, 1.0
        %v3199 = vadd.f32 %v3183, 1.0
        %v3200 = vadd.f32 %v3184, 1.0
        %v3201 = vadd.f32 %v3185, 1.0
        %v3202 = vmul.f32 %v3186, 0.5
        %v3203 = vmul.f32 %v3187, 0.5
        %v3204 = vmul.f32 %v3188, 0.5
        %v3205 = vmul.f32 %v3189, 0.5
        %v3206 = vmul.f32 %v3190, 0.5
        %v3207 = vmul.f32 %v3191, 0.5
        %v3208 = vmul.f32 %v3192, 0.5
        %v3209 = vmul.f32 %v3193, 0.5
        %v3210 = vmul.f32 %v3194, 0.5
        %v3211 = vmul.f32 %v3195, 0.5
        %v3212 = vmul.f32 %v3196, 0.5
        %v3213 = vmul.f32 %v3197, 0.5
        %v3214 = vmul.f32 %v3198, 0.5
        %v3215 = vmul.f32 %v3199, 0.5
        %v3216 = vmul.f32 %v3200, 0.5
        %v3217 = vmul.f32 %v3201, 0.5
        %v3218 = vmul.f32 %v3052, %v3202
        %v3219 = vmul.f32 %v3054, %v3203
        %v3220 = vmul.f32 %v3056, %v3204
        %v3221 = vmul.f32 %v3058, %v3205
        %v3222 = vmul.f32 %v3062, %v3206
        %v3223 = vmul.f32 %v3064, %v3207
        %v3224 = vmul.f32 %v3066, %v3208
        %v3225 = vmul.f32 %v3068, %v3209
        %v3226 = vmul.f32 %v3072, %v3210
        %v3227 = vmul.f32 %v3074, %v3211
        %v3228 = vmul.f32 %v3076, %v3212
        %v3229 = vmul.f32 %v3078, %v3213
        %v3230 = vmul.f32 %v3082, %v3214
        %v3231 = vmul.f32 %v3084, %v3215
        %v3232 = vmul.f32 %v3086, %v3216
        %v3233 = vmul.f32 %v3088, %v3217
        %v3234 = vpack.c.bf16 %v3220, %v3218
        %v3235 = vpack.c.bf16 %v3221, %v3219
        %v3236 = vpack.c.bf16 %v3224, %v3222
        %v3237 = vpack.c.bf16 %v3225, %v3223
        %v3238 = vpack.c.bf16 %v3228, %v3226
        %v3239 = vpack.c.bf16 %v3229, %v3227
        %v3240 = vpack.c.bf16 %v3232, %v3230
        %v3241 = vpack.c.bf16 %v3233, %v3231
        %v3242 = vld [vmem:[%s11] sm:$0xf]
        %v3243 = vld [vmem:[%s11 + $0x4] sm:$0xf]
        %v3244 = vld [vmem:[%s11 + $0x8] sm:$0xf]
        %v3245 = vld [vmem:[%s11 + $0xc] sm:$0xf]
        %v3246 = vld [vmem:[%s11 + $0x10] sm:$0xf]
        %v3247 = vld [vmem:[%s11 + $0x14] sm:$0xf]
        %v3248 = vld [vmem:[%s11 + $0x18] sm:$0xf]
        %v3249 = vld [vmem:[%s11 + $0x1c] sm:$0xf]
        %v3250 = vld [vmem:[%s11 + $0x20] sm:$0xf]
        %v3251 = vld [vmem:[%s11 + $0x24] sm:$0xf]
        %v3252 = vld [vmem:[%s11 + $0x28] sm:$0xf]
        %v3253 = vld [vmem:[%s11 + $0x2c] sm:$0xf]
        %v3254 = vld [vmem:[%s11 + $0x30] sm:$0xf]
        %v3255 = vld [vmem:[%s11 + $0x34] sm:$0xf]
        %v3256 = vld [vmem:[%s11 + $0x38] sm:$0xf]
        %v3257 = vld [vmem:[%s11 + $0x3c] sm:$0xf]
        %v3258 = vld [vmem:[%s11 + $0x40] sm:$0xf]
        %v3259 = vld [vmem:[%s11 + $0x44] sm:$0xf]
        %v3260 = vld [vmem:[%s11 + $0x48] sm:$0xf]
        %v3261 = vld [vmem:[%s11 + $0x4c] sm:$0xf]
        %v3262 = vld [vmem:[%s11 + $0x50] sm:$0xf]
        %v3263 = vld [vmem:[%s11 + $0x54] sm:$0xf]
        %v3264 = vld [vmem:[%s11 + $0x58] sm:$0xf]
        %v3265 = vld [vmem:[%s11 + $0x5c] sm:$0xf]
        %v3266 = vld [vmem:[%s11 + $0x60] sm:$0xf]
        %v3267 = vld [vmem:[%s11 + $0x64] sm:$0xf]
        %v3268 = vld [vmem:[%s11 + $0x68] sm:$0xf]
        %v3269 = vld [vmem:[%s11 + $0x6c] sm:$0xf]
        %v3270 = vld [vmem:[%s11 + $0x70] sm:$0xf]
        %v3271 = vld [vmem:[%s11 + $0x74] sm:$0xf]
        %v3272 = vld [vmem:[%s11 + $0x78] sm:$0xf]
        %v3273 = vld [vmem:[%s11 + $0x7c] sm:$0xf]
        %v3306 = vunpack.c.l.b16 %v3242
        %v3307 = vunpack.c.l.b16 %v3243
        %v3308 = vunpack.c.l.b16 %v3244
        %v3309 = vunpack.c.l.b16 %v3245
        %v3310 = vunpack.c.l.b16 %v3246
        %v3311 = vunpack.c.l.b16 %v3247
        %v3312 = vunpack.c.l.b16 %v3248
        %v3313 = vunpack.c.l.b16 %v3249
        %v3314 = vunpack.c.l.b16 %v3250
        %v3315 = vunpack.c.l.b16 %v3251
        %v3316 = vunpack.c.l.b16 %v3252
        %v3317 = vunpack.c.l.b16 %v3253
        %v3318 = vunpack.c.l.b16 %v3254
        %v3319 = vunpack.c.l.b16 %v3255
        %v3320 = vunpack.c.l.b16 %v3256
        %v3321 = vunpack.c.l.b16 %v3257
        %v3322 = vunpack.c.l.b16 %v3258
        %v3323 = vunpack.c.l.b16 %v3259
        %v3324 = vunpack.c.l.b16 %v3260
        %v3325 = vunpack.c.l.b16 %v3261
        %v3326 = vunpack.c.l.b16 %v3262
        %v3327 = vunpack.c.l.b16 %v3263
        %v3328 = vunpack.c.l.b16 %v3264
        %v3329 = vunpack.c.l.b16 %v3265
        %v3330 = vunpack.c.l.b16 %v3266
        %v3331 = vunpack.c.l.b16 %v3267
        %v3332 = vunpack.c.l.b16 %v3268
        %v3333 = vunpack.c.l.b16 %v3269
        %v3334 = vunpack.c.l.b16 %v3270
        %v3335 = vunpack.c.l.b16 %v3271
        %v3336 = vunpack.c.l.b16 %v3272
        %v3337 = vunpack.c.l.b16 %v3273
        %v3338 = vpack.c.b16 %v3307, %v3306
        %v3339 = vpack.c.b16 %v3309, %v3308
        %v3340 = vpack.c.b16 %v3311, %v3310
        %v3341 = vpack.c.b16 %v3313, %v3312
        %v3342 = vpack.c.b16 %v3315, %v3314
        %v3343 = vpack.c.b16 %v3317, %v3316
        %v3344 = vpack.c.b16 %v3319, %v3318
        %v3345 = vpack.c.b16 %v3321, %v3320
        %v3346 = vpack.c.b16 %v3323, %v3322
        %v3347 = vpack.c.b16 %v3325, %v3324
        %v3348 = vpack.c.b16 %v3327, %v3326
        %v3349 = vpack.c.b16 %v3329, %v3328
        %v3350 = vpack.c.b16 %v3331, %v3330
        %v3351 = vpack.c.b16 %v3333, %v3332
        %v3352 = vpack.c.b16 %v3335, %v3334
        %v3353 = vpack.c.b16 %v3337, %v3336
        %3370 = vmatprep.subr.bf16.mxu0 0
        %3371 = vmatpush1.bf16.msra.mxu0 %v3338
        %3372 = vmatprep.subr.bf16.mxu0 0
        %3373 = vmatpush1.bf16.msra.mxu0 %v3339
        %3374 = vmatprep.subr.bf16.mxu0 0
        %3375 = vmatpush1.bf16.msra.mxu0 %v3340
        %3376 = vmatprep.subr.bf16.mxu0 0
        %3377 = vmatpush1.bf16.msra.mxu0 %v3341
        %3378 = vmatprep.subr.bf16.mxu0 0
        %3379 = vmatpush1.bf16.msra.mxu0 %v3342
        %3380 = vmatprep.subr.bf16.mxu0 0
        %3381 = vmatpush1.bf16.msra.mxu0 %v3343
        %3382 = vmatprep.subr.bf16.mxu0 0
        %3383 = vmatpush1.bf16.msra.mxu0 %v3344
        %3384 = vmatprep.subr.bf16.mxu0 0
        %3385 = vmatpush1.bf16.msra.mxu0 %v3345
        %3386 = vmatprep.subr.bf16.mxu0 0
        %3387 = vmatpush1.bf16.msra.mxu0 %v3346
        %3388 = vmatprep.subr.bf16.mxu0 0
        %3389 = vmatpush1.bf16.msra.mxu0 %v3347
        %3390 = vmatprep.subr.bf16.mxu0 0
        %3391 = vmatpush1.bf16.msra.mxu0 %v3348
        %3392 = vmatprep.subr.bf16.mxu0 0
        %3393 = vmatpush1.bf16.msra.mxu0 %v3349
        %3394 = vmatprep.subr.bf16.mxu0 0
        %3395 = vmatpush1.bf16.msra.mxu0 %v3350
        %3396 = vmatprep.subr.bf16.mxu0 0
        %3397 = vmatpush1.bf16.msra.mxu0 %v3351
        %3398 = vmatprep.subr.bf16.mxu0 0
        %3399 = vmatpush1.bf16.msra.mxu0 %v3352
        %3400 = vmatprep.subr.bf16.mxu0 0
        %3401 = vmatpush1.bf16.msra.mxu0 %v3353
        %3402 = vmatprep.mubr.bf16.mxu0 %v3235
        %3403 = vmatmul.mubr.bf16.gmra.mrb[0].mxu0 %v3234
        %v3404 = vpop.f32.mrb[0].mxu0
        %v3405 = vadd.f32 0.0, %v3404
        %v3406 = vpop.f32.mrb[0].mxu0
        %v3407 = vpop.f32.mrb[0].mxu0
        %v3408 = vadd.f32 0.0, %v3407
        %v3409 = vpop.f32.mrb[0].mxu0
        %3410 = vmatprep.mubr.bf16.mxu0 %v3237
        %3411 = vmatmul.mubr.bf16.gmra.mrb[0].mxu0 %v3236
        %v3412 = vpop.f32.mrb[0].mxu0
        %v3413 = vadd.f32 0.0, %v3412
        %v3414 = vpop.f32.mrb[0].mxu0
        %v3415 = vpop.f32.mrb[0].mxu0
        %v3416 = vadd.f32 0.0, %v3415
        %v3417 = vpop.f32.mrb[0].mxu0
        %3418 = vmatprep.mubr.bf16.mxu0 %v3239
        %3419 = vmatmul.mubr.bf16.gmra.mrb[0].mxu0 %v3238
        %v3420 = vpop.f32.mrb[0].mxu0
        %v3421 = vadd.f32 0.0, %v3420
        %v3422 = vpop.f32.mrb[0].mxu0
        %v3423 = vpop.f32.mrb[0].mxu0
        %v3424 = vadd.f32 0.0, %v3423
        %v3425 = vpop.f32.mrb[0].mxu0
        %3426 = vmatprep.mubr.bf16.mxu0 %v3241
        %3427 = vmatmul.mubr.bf16.gmra.mrb[0].mxu0 %v3240
        %v3428 = vpop.f32.mrb[0].mxu0
        %v3429 = vadd.f32 0.0, %v3428
        %v3430 = vpop.f32.mrb[0].mxu0
        %v3431 = vpop.f32.mrb[0].mxu0
        %v3432 = vadd.f32 0.0, %v3431
        %v3433 = vpop.f32.mrb[0].mxu0
        %3434 = vdwg.mxu0
        %v3435 = vadd.f32 %v2799, %v3405
        %v3436 = vadd.f32 %v2800, %v3408
        %v3437 = vadd.f32 %v2801, %v3413
        %v3438 = vadd.f32 %v2802, %v3416
        %v3439 = vadd.f32 %v2803, %v3421
        %v3440 = vadd.f32 %v2804, %v3424
        %v3441 = vadd.f32 %v2805, %v3429
        %v3442 = vadd.f32 %v2806, %v3432
        %v3443 = vld [vmem:[%s12] sm:$0x1]
        %v3445 = vlaneseq
        %v3446 = vshrl.u32 %v3445, 7
        %v3447 = vsub.s32 0, %v3446
        %v3448 = vrot.slane %v3443, %v3447
        %v3450 = vadd.f32 %v3435, %v3448
        %v3451 = vadd.f32 %v3436, %v3448
        %v3452 = vadd.f32 %v3437, %v3448
        %v3453 = vadd.f32 %v3438, %v3448
        %v3454 = vadd.f32 %v3439, %v3448
        %v3455 = vadd.f32 %v3440, %v3448
        %v3456 = vadd.f32 %v3441, %v3448
        %v3457 = vadd.f32 %v3442, %v3448
        %s3458 = scalar_lea.vmem %s1, 1
        %v3459 = vld [vmem:[%s3458] sm:$0x1]
        %s3460 = scalar_lea.vmem %s2, 1
        %v3461 = vld [vmem:[%s3460] sm:$0x1]
        %v3462 = vsel %vm585, %v3450, 0.0
        %3463 = vadd.xlane.f32.xlu0 %v3462
        %v3464 = vpop.xlane.xlu0 %3463
        %v3465 = vsel %vm585, %v3451, 0.0
        %3466 = vadd.xlane.f32.xlu0 %v3465
        %v3467 = vpop.xlane.xlu0 %3466
        %v3468 = vsel %vm585, %v3452, 0.0
        %3469 = vadd.xlane.f32.xlu0 %v3468
        %v3470 = vpop.xlane.xlu0 %3469
        %v3471 = vsel %vm585, %v3453, 0.0
        %3472 = vadd.xlane.f32.xlu0 %v3471
        %v3473 = vpop.xlane.xlu0 %3472
        %v3474 = vsel %vm585, %v3454, 0.0
        %3475 = vadd.xlane.f32.xlu0 %v3474
        %v3476 = vpop.xlane.xlu0 %3475
        %v3477 = vsel %vm585, %v3455, 0.0
        %3478 = vadd.xlane.f32.xlu0 %v3477
        %v3479 = vpop.xlane.xlu0 %3478
        %v3480 = vsel %vm585, %v3456, 0.0
        %3481 = vadd.xlane.f32.xlu0 %v3480
        %v3482 = vpop.xlane.xlu0 %3481
        %v3483 = vsel %vm585, %v3457, 0.0
        %3484 = vadd.xlane.f32.xlu0 %v3483
        %v3485 = vpop.xlane.xlu0 %3484
        %v3486 = vmul.f32 %v3464, %v610
        %v3487 = vmul.f32 %v3467, %v610
        %v3488 = vmul.f32 %v3470, %v610
        %v3489 = vmul.f32 %v3473, %v610
        %v3490 = vmul.f32 %v3476, %v610
        %v3491 = vmul.f32 %v3479, %v610
        %v3492 = vmul.f32 %v3482, %v610
        %v3493 = vmul.f32 %v3485, %v610
        %v3494 = vsub.f32 %v3450, %v3486
        %v3495 = vsub.f32 %v3451, %v3487
        %v3496 = vsub.f32 %v3452, %v3488
        %v3497 = vsub.f32 %v3453, %v3489
        %v3498 = vsub.f32 %v3454, %v3490
        %v3499 = vsub.f32 %v3455, %v3491
        %v3500 = vsub.f32 %v3456, %v3492
        %v3501 = vsub.f32 %v3457, %v3493
        %v3502 = vmul.f32 %v3494, %v3494
        %v3503 = vmul.f32 %v3495, %v3495
        %v3504 = vmul.f32 %v3496, %v3496
        %v3505 = vmul.f32 %v3497, %v3497
        %v3506 = vmul.f32 %v3498, %v3498
        %v3507 = vmul.f32 %v3499, %v3499
        %v3508 = vmul.f32 %v3500, %v3500
        %v3509 = vmul.f32 %v3501, %v3501
        %v3510 = vsel %vm585, %v3502, 0.0
        %3511 = vadd.xlane.f32.xlu0 %v3510
        %v3512 = vpop.xlane.xlu0 %3511
        %v3513 = vsel %vm585, %v3503, 0.0
        %3514 = vadd.xlane.f32.xlu0 %v3513
        %v3515 = vpop.xlane.xlu0 %3514
        %v3516 = vsel %vm585, %v3504, 0.0
        %3517 = vadd.xlane.f32.xlu0 %v3516
        %v3518 = vpop.xlane.xlu0 %3517
        %v3519 = vsel %vm585, %v3505, 0.0
        %3520 = vadd.xlane.f32.xlu0 %v3519
        %v3521 = vpop.xlane.xlu0 %3520
        %v3522 = vsel %vm585, %v3506, 0.0
        %3523 = vadd.xlane.f32.xlu0 %v3522
        %v3524 = vpop.xlane.xlu0 %3523
        %v3525 = vsel %vm585, %v3507, 0.0
        %3526 = vadd.xlane.f32.xlu0 %v3525
        %v3527 = vpop.xlane.xlu0 %3526
        %v3528 = vsel %vm585, %v3508, 0.0
        %3529 = vadd.xlane.f32.xlu0 %v3528
        %v3530 = vpop.xlane.xlu0 %3529
        %v3531 = vsel %vm585, %v3509, 0.0
        %3532 = vadd.xlane.f32.xlu0 %v3531
        %v3533 = vpop.xlane.xlu0 %3532
        %v3534 = vmul.f32 %v3512, %v610
        %v3535 = vmul.f32 %v3515, %v610
        %v3536 = vmul.f32 %v3518, %v610
        %v3537 = vmul.f32 %v3521, %v610
        %v3538 = vmul.f32 %v3524, %v610
        %v3539 = vmul.f32 %v3527, %v610
        %v3540 = vmul.f32 %v3530, %v610
        %v3541 = vmul.f32 %v3533, %v610
        %v3542 = vadd.f32 %v3534, 1e-05
        %v3543 = vadd.f32 %v3535, 1e-05
        %v3544 = vadd.f32 %v3536, 1e-05
        %v3545 = vadd.f32 %v3537, 1e-05
        %v3546 = vadd.f32 %v3538, 1e-05
        %v3547 = vadd.f32 %v3539, 1e-05
        %v3548 = vadd.f32 %v3540, 1e-05
        %v3549 = vadd.f32 %v3541, 1e-05
        %v3550 = vrsqrt.pop %v3542
        %v3551 = vrsqrt.pop %v3543
        %v3552 = vrsqrt.pop %v3544
        %v3553 = vrsqrt.pop %v3545
        %v3554 = vrsqrt.pop %v3546
        %v3555 = vrsqrt.pop %v3547
        %v3556 = vrsqrt.pop %v3548
        %v3557 = vrsqrt.pop %v3549
        %v3558 = vmul.f32 %v3494, %v3550
        %v3559 = vmul.f32 %v3495, %v3551
        %v3560 = vmul.f32 %v3496, %v3552
        %v3561 = vmul.f32 %v3497, %v3553
        %v3562 = vmul.f32 %v3498, %v3554
        %v3563 = vmul.f32 %v3499, %v3555
        %v3564 = vmul.f32 %v3500, %v3556
        %v3565 = vmul.f32 %v3501, %v3557
        %v3567 = vlaneseq
        %v3568 = vshrl.u32 %v3567, 7
        %v3569 = vsub.s32 0, %v3568
        %v3570 = vrot.slane %v3459, %v3569
        %v3572 = vmul.f32 %v3558, %v3570
        %v3573 = vmul.f32 %v3559, %v3570
        %v3574 = vmul.f32 %v3560, %v3570
        %v3575 = vmul.f32 %v3561, %v3570
        %v3576 = vmul.f32 %v3562, %v3570
        %v3577 = vmul.f32 %v3563, %v3570
        %v3578 = vmul.f32 %v3564, %v3570
        %v3579 = vmul.f32 %v3565, %v3570
        %v3581 = vlaneseq
        %v3582 = vshrl.u32 %v3581, 7
        %v3583 = vsub.s32 0, %v3582
        %v3584 = vrot.slane %v3461, %v3583
        %v3586 = vadd.f32 %v3572, %v3584
        %v3587 = vadd.f32 %v3573, %v3584
        %v3588 = vadd.f32 %v3574, %v3584
        %v3589 = vadd.f32 %v3575, %v3584
        %v3590 = vadd.f32 %v3576, %v3584
        %v3591 = vadd.f32 %v3577, %v3584
        %v3592 = vadd.f32 %v3578, %v3584
        %v3593 = vadd.f32 %v3579, %v3584
        %v3594 = vpack.c.bf16 %v3587, %v3586
        %v3595 = vpack.c.bf16 %v3589, %v3588
        %v3596 = vpack.c.bf16 %v3591, %v3590
        %v3597 = vpack.c.bf16 %v3593, %v3592
        %s3598 = scalar_lea.vmem %s3, 64
        %v3599 = vld [vmem:[%s3598] sm:$0xff]
        %v3600 = vld [vmem:[%s3598 + $0x8] sm:$0xff]
        %v3601 = vld [vmem:[%s3598 + $0x10] sm:$0xff]
        %v3602 = vld [vmem:[%s3598 + $0x18] sm:$0xff]
        %v3603 = vld [vmem:[%s3598 + $0x20] sm:$0xff]
        %v3604 = vld [vmem:[%s3598 + $0x28] sm:$0xff]
        %v3605 = vld [vmem:[%s3598 + $0x30] sm:$0xff]
        %v3606 = vld [vmem:[%s3598 + $0x38] sm:$0xff]
        %s3607 = scalar_lea.vmem %s4, 2
        %v3608 = vld [vmem:[%s3607] sm:$0x3]
        %v3610 = vlaneseq
        %v3611 = vshrl.u32 %v3610, 7
        %v3612 = vsub.s32 0, %v3611
        %v3613 = vrot.slane %v3608, %v3612
        %v3614 = vlaneseq
        %v3615 = vshrl.u32 %v3614, 7
        %v3616 = vsub.s32 1, %v3615
        %v3617 = vrot.slane %v3608, %v3616
        %v3628 = vunpack.c.l.b16 %v3599
        %v3629 = vunpack.c.h.b16 %v3599
        %v3630 = vunpack.c.l.b16 %v3600
        %v3631 = vunpack.c.h.b16 %v3600
        %v3632 = vunpack.c.l.b16 %v3601
        %v3633 = vunpack.c.h.b16 %v3601
        %v3634 = vunpack.c.l.b16 %v3602
        %v3635 = vunpack.c.h.b16 %v3602
        %v3636 = vunpack.c.l.b16 %v3603
        %v3637 = vunpack.c.h.b16 %v3603
        %v3638 = vunpack.c.l.b16 %v3604
        %v3639 = vunpack.c.h.b16 %v3604
        %v3640 = vunpack.c.l.b16 %v3605
        %v3641 = vunpack.c.h.b16 %v3605
        %v3642 = vunpack.c.l.b16 %v3606
        %v3643 = vunpack.c.h.b16 %v3606
        %v3644 = vpack.c.b16 %v3630, %v3628
        %v3645 = vpack.c.b16 %v3631, %v3629
        %v3646 = vpack.c.b16 %v3634, %v3632
        %v3647 = vpack.c.b16 %v3635, %v3633
        %v3648 = vpack.c.b16 %v3638, %v3636
        %v3649 = vpack.c.b16 %v3639, %v3637
        %v3650 = vpack.c.b16 %v3642, %v3640
        %v3651 = vpack.c.b16 %v3643, %v3641
        %v3661 = vsel %vm585, %v3594, 0
        %v3664 = vsel %vm585, %v3595, 0
        %v3667 = vsel %vm585, %v3596, 0
        %v3670 = vsel %vm585, %v3597, 0
        %3672 = vmatprep.subr.bf16.mxu0 %v3645
        %3673 = vmatpush1.bf16.msra.mxu0 %v3644
        %3674 = vmatprep.subr.bf16.mxu0 %v3647
        %3675 = vmatpush1.bf16.msra.mxu0 %v3646
        %3676 = vmatprep.subr.bf16.mxu0 %v3649
        %3677 = vmatpush1.bf16.msra.mxu0 %v3648
        %3678 = vmatprep.subr.bf16.mxu0 %v3651
        %3679 = vmatpush1.bf16.msra.mxu0 %v3650
        %3680 = vmatprep.subr.bf16.mxu0 0
        %3681 = vmatpush1.bf16.msra.mxu0 0
        %3682 = vmatprep.subr.bf16.mxu0 0
        %3683 = vmatpush1.bf16.msra.mxu0 0
        %3684 = vmatprep.subr.bf16.mxu0 0
        %3685 = vmatpush1.bf16.msra.mxu0 0
        %3686 = vmatprep.subr.bf16.mxu0 0
        %3687 = vmatpush1.bf16.msra.mxu0 0
        %3688 = vmatprep.subr.bf16.mxu0 0
        %3689 = vmatpush1.bf16.msra.mxu0 0
        %3690 = vmatprep.subr.bf16.mxu0 0
        %3691 = vmatpush1.bf16.msra.mxu0 0
        %3692 = vmatprep.subr.bf16.mxu0 0
        %3693 = vmatpush1.bf16.msra.mxu0 0
        %3694 = vmatprep.subr.bf16.mxu0 0
        %3695 = vmatpush1.bf16.msra.mxu0 0
        %3696 = vmatprep.subr.bf16.mxu0 0
        %3697 = vmatpush1.bf16.msra.mxu0 0
        %3698 = vmatprep.subr.bf16.mxu0 0
        %3699 = vmatpush1.bf16.msra.mxu0 0
        %3700 = vmatprep.subr.bf16.mxu0 0
        %3701 = vmatpush1.bf16.msra.mxu0 0
        %3702 = vmatprep.subr.bf16.mxu0 0
        %3703 = vmatpush1.bf16.msra.mxu0 0
        %3704 = vmatprep.mubr.bf16.mxu0 0
        %3705 = vmatmul.mubr.bf16.gmra.mrb[0].mxu0 %v3661
        %v3706 = vpop.f32.mrb[0].mxu0
        %v3707 = vadd.f32 %v3613, %v3706
        %v3708 = vpop.f32.mrb[0].mxu0
        %v3709 = vadd.f32 %v3617, %v3708
        %v3710 = vpop.f32.mrb[0].mxu0
        %v3711 = vadd.f32 %v3613, %v3710
        %v3712 = vpop.f32.mrb[0].mxu0
        %v3713 = vadd.f32 %v3617, %v3712
        %3714 = vmatprep.mubr.bf16.mxu0 0
        %3715 = vmatmul.mubr.bf16.gmra.mrb[0].mxu0 %v3664
        %v3716 = vpop.f32.mrb[0].mxu0
        %v3717 = vadd.f32 %v3613, %v3716
        %v3718 = vpop.f32.mrb[0].mxu0
        %v3719 = vadd.f32 %v3617, %v3718
        %v3720 = vpop.f32.mrb[0].mxu0
        %v3721 = vadd.f32 %v3613, %v3720
        %v3722 = vpop.f32.mrb[0].mxu0
        %v3723 = vadd.f32 %v3617, %v3722
        %3724 = vmatprep.mubr.bf16.mxu0 0
        %3725 = vmatmul.mubr.bf16.gmra.mrb[0].mxu0 %v3667
        %v3726 = vpop.f32.mrb[0].mxu0
        %v3727 = vadd.f32 %v3613, %v3726
        %v3728 = vpop.f32.mrb[0].mxu0
        %v3729 = vadd.f32 %v3617, %v3728
        %v3730 = vpop.f32.mrb[0].mxu0
        %v3731 = vadd.f32 %v3613, %v3730
        %v3732 = vpop.f32.mrb[0].mxu0
        %v3733 = vadd.f32 %v3617, %v3732
        %3734 = vmatprep.mubr.bf16.mxu0 0
        %3735 = vmatmul.mubr.bf16.gmra.mrb[0].mxu0 %v3670
        %v3736 = vpop.f32.mrb[0].mxu0
        %v3737 = vadd.f32 %v3613, %v3736
        %v3738 = vpop.f32.mrb[0].mxu0
        %v3739 = vadd.f32 %v3617, %v3738
        %v3740 = vpop.f32.mrb[0].mxu0
        %v3741 = vadd.f32 %v3613, %v3740
        %v3742 = vpop.f32.mrb[0].mxu0
        %v3743 = vadd.f32 %v3617, %v3742
        %3744 = vdwg.mxu0
        %3753 = vrot.lane.b32.xlu0 %v3707, 64
        %v3754 = vpop.permute.xlu0 %3753
        %3755 = vrot.lane.b32.xlu0 %v3711, 64
        %v3756 = vpop.permute.xlu0 %3755
        %3757 = vrot.lane.b32.xlu0 %v3717, 64
        %v3758 = vpop.permute.xlu0 %3757
        %3759 = vrot.lane.b32.xlu0 %v3721, 64
        %v3760 = vpop.permute.xlu0 %3759
        %3761 = vrot.lane.b32.xlu0 %v3727, 64
        %v3762 = vpop.permute.xlu0 %3761
        %3763 = vrot.lane.b32.xlu0 %v3731, 64
        %v3764 = vpop.permute.xlu0 %3763
        %3765 = vrot.lane.b32.xlu0 %v3737, 64
        %v3766 = vpop.permute.xlu0 %3765
        %3767 = vrot.lane.b32.xlu0 %v3741, 64
        %v3768 = vpop.permute.xlu0 %3767
        %v3769 = vsel %vm892, %v3707, 0
        %v3771 = vsel %vm892, %v3711, 0
        %v3773 = vsel %vm892, %v3717, 0
        %v3775 = vsel %vm892, %v3721, 0
        %v3777 = vsel %vm892, %v3727, 0
        %v3779 = vsel %vm892, %v3731, 0
        %v3781 = vsel %vm892, %v3737, 0
        %v3783 = vsel %vm892, %v3741, 0
        %v3785 = vsel %vm892, %v3754, 0
        %v3787 = vsel %vm892, %v3756, 0
        %v3789 = vsel %vm892, %v3758, 0
        %v3791 = vsel %vm892, %v3760, 0
        %v3793 = vsel %vm892, %v3762, 0
        %v3795 = vsel %vm892, %v3764, 0
        %v3797 = vsel %vm892, %v3766, 0
        %v3799 = vsel %vm892, %v3768, 0
        %3801 = vmatprep.subr.mxu0 0.0
        %3802 = vmatpush1.xpose.msra.mxu0 %v3785
        %3803 = vmatprep.subr.mxu0 0.0
        %3804 = vmatpush1.xpose.msra.mxu0 %v3787
        %3805 = vmatprep.subr.mxu0 0.0
        %3806 = vmatpush1.xpose.msra.mxu0 %v3789
        %3807 = vmatprep.subr.mxu0 0.0
        %3808 = vmatpush1.xpose.msra.mxu0 %v3791
        %3809 = vmatprep.subr.mxu0 0.0
        %3810 = vmatpush1.xpose.msra.mxu0 %v3793
        %3811 = vmatprep.subr.mxu0 0.0
        %3812 = vmatpush1.xpose.msra.mxu0 %v3795
        %3813 = vmatprep.subr.mxu0 0.0
        %3814 = vmatpush1.xpose.msra.mxu0 %v3797
        %3815 = vmatprep.subr.mxu0 0.0
        %3816 = vmatpush1.xpose.msra.mxu0 %v3799
        %3817 = vmatprep.subr.mxu0 0.0
        %3818 = vmatpush1.xpose.msra.mxu0 0.0
        %3819 = vmatprep.subr.mxu0 0.0
        %3820 = vmatpush1.xpose.msra.mxu0 0.0
        %3821 = vmatprep.subr.mxu0 0.0
        %3822 = vmatpush1.xpose.msra.mxu0 0.0
        %3823 = vmatprep.subr.mxu0 0.0
        %3824 = vmatpush1.xpose.msra.mxu0 0.0
        %3825 = vmatprep.subr.mxu0 0.0
        %3826 = vmatpush1.xpose.msra.mxu0 0.0
        %3827 = vmatprep.subr.mxu0 0.0
        %3828 = vmatpush1.xpose.msra.mxu0 0.0
        %3829 = vmatprep.subr.mxu0 0.0
        %3830 = vmatpush1.xpose.msra.mxu0 0.0
        %3831 = vmatprep.subr.mxu0 0.0
        %3832 = vmatpush1.xpose.msra.mxu0 0.0
        %3833 = vmatprep.subr.mxu0 0.0
        %3834 = vmatpush1.xpose.msra.mxu0 0.0
        %3835 = vmatprep.subr.mxu0 0.0
        %3836 = vmatpush1.xpose.msra.mxu0 0.0
        %3837 = vmatprep.subr.mxu0 0.0
        %3838 = vmatpush1.xpose.msra.mxu0 0.0
        %3839 = vmatprep.subr.mxu0 0.0
        %3840 = vmatpush1.xpose.msra.mxu0 0.0
        %3841 = vmatprep.subr.mxu0 0.0
        %3842 = vmatpush1.xpose.msra.mxu0 0.0
        %3843 = vmatprep.subr.mxu0 0.0
        %3844 = vmatpush1.xpose.msra.mxu0 0.0
        %3845 = vmatprep.subr.mxu0 0.0
        %3846 = vmatpush1.xpose.msra.mxu0 0.0
        %3847 = vmatprep.subr.mxu0 0.0
        %3848 = vmatpush1.xpose.msra.mxu0 0.0
        %3849 = vmatprep.subr.mxu0 0.0
        %3850 = vmatpush1.xpose.msra.mxu0 0.0
        %3851 = vmatprep.subr.mxu0 0.0
        %3852 = vmatpush1.xpose.msra.mxu0 0.0
        %3853 = vmatprep.subr.mxu0 0.0
        %3854 = vmatpush1.xpose.msra.mxu0 0.0
        %3855 = vmatprep.subr.mxu0 0.0
        %3856 = vmatpush1.xpose.msra.mxu0 0.0
        %3857 = vmatprep.subr.mxu0 0.0
        %3858 = vmatpush1.xpose.msra.mxu0 0.0
        %3859 = vmatprep.subr.mxu0 0.0
        %3860 = vmatpush1.xpose.msra.mxu0 0.0
        %3861 = vmatprep.subr.mxu0 0.0
        %3862 = vmatpush1.xpose.msra.mxu0 0.0
        %3863 = vmatprep.subr.mxu0 0.0
        %3864 = vmatpush1.xpose.msra.mxu0 0.0
        %3865 = vmatprep.mubr.f32.mxu0 0.0
        %3866 = vmatmul.mubr.f32.gmra.mrb[0].mxu0 %v3769
        %v3867 = vpop.f32.mrb[0].mxu0
        %v3868 = vadd.f32 0.0, %v3867
        %v3869 = vpop.f32.mrb[0].mxu0
        %3870 = vmatprep.mubr.f32.mxu0 0.0
        %3871 = vmatmul.mubr.f32.gmra.mrb[0].mxu0 %v3771
        %v3872 = vpop.f32.mrb[0].mxu0
        %v3873 = vadd.f32 0.0, %v3872
        %v3874 = vpop.f32.mrb[0].mxu0
        %3875 = vmatprep.mubr.f32.mxu0 0.0
        %3876 = vmatmul.mubr.f32.gmra.mrb[0].mxu0 %v3773
        %v3877 = vpop.f32.mrb[0].mxu0
        %v3878 = vadd.f32 0.0, %v3877
        %v3879 = vpop.f32.mrb[0].mxu0
        %3880 = vmatprep.mubr.f32.mxu0 0.0
        %3881 = vmatmul.mubr.f32.gmra.mrb[0].mxu0 %v3775
        %v3882 = vpop.f32.mrb[0].mxu0
        %v3883 = vadd.f32 0.0, %v3882
        %v3884 = vpop.f32.mrb[0].mxu0
        %3885 = vmatprep.mubr.f32.mxu0 0.0
        %3886 = vmatmul.mubr.f32.gmra.mrb[0].mxu0 %v3777
        %v3887 = vpop.f32.mrb[0].mxu0
        %v3888 = vadd.f32 0.0, %v3887
        %v3889 = vpop.f32.mrb[0].mxu0
        %3890 = vmatprep.mubr.f32.mxu0 0.0
        %3891 = vmatmul.mubr.f32.gmra.mrb[0].mxu0 %v3779
        %v3892 = vpop.f32.mrb[0].mxu0
        %v3893 = vadd.f32 0.0, %v3892
        %v3894 = vpop.f32.mrb[0].mxu0
        %3895 = vmatprep.mubr.f32.mxu0 0.0
        %3896 = vmatmul.mubr.f32.gmra.mrb[0].mxu0 %v3781
        %v3897 = vpop.f32.mrb[0].mxu0
        %v3898 = vadd.f32 0.0, %v3897
        %v3899 = vpop.f32.mrb[0].mxu0
        %3900 = vmatprep.mubr.f32.mxu0 0.0
        %3901 = vmatmul.mubr.f32.gmra.mrb[0].mxu0 %v3783
        %v3902 = vpop.f32.mrb[0].mxu0
        %v3903 = vadd.f32 0.0, %v3902
        %v3904 = vpop.f32.mrb[0].mxu0
        %3905 = vdwg.mxu0
        %v3906 = vmul.f32 %v3868, 0.25
        %v3907 = vmul.f32 %v3873, 0.25
        %v3908 = vmul.f32 %v3878, 0.25
        %v3909 = vmul.f32 %v3883, 0.25
        %v3910 = vmul.f32 %v3888, 0.25
        %v3911 = vmul.f32 %v3893, 0.25
        %v3912 = vmul.f32 %v3898, 0.25
        %v3913 = vmul.f32 %v3903, 0.25
        %v3914 = vadd.f32 %v3906, %v575
        %v3915 = vadd.f32 %v3907, %v576
        %v3916 = vadd.f32 %v3908, %v577
        %v3917 = vadd.f32 %v3909, %v578
        %v3918 = vadd.f32 %v3910, %v579
        %v3919 = vadd.f32 %v3911, %v580
        %v3920 = vadd.f32 %v3912, %v581
        %v3921 = vadd.f32 %v3913, %v582
        %v3922 = vsel %vm585, %v3914, -inf
        %3923 = vmax.xlane.f32.xlu0 %v3922
        %v3924 = vpop.xlane.xlu0 %3923
        %v3925 = vsel %vm585, %v3915, -inf
        %3926 = vmax.xlane.f32.xlu0 %v3925
        %v3927 = vpop.xlane.xlu0 %3926
        %v3928 = vsel %vm585, %v3916, -inf
        %3929 = vmax.xlane.f32.xlu0 %v3928
        %v3930 = vpop.xlane.xlu0 %3929
        %v3931 = vsel %vm585, %v3917, -inf
        %3932 = vmax.xlane.f32.xlu0 %v3931
        %v3933 = vpop.xlane.xlu0 %3932
        %v3934 = vsel %vm585, %v3918, -inf
        %3935 = vmax.xlane.f32.xlu0 %v3934
        %v3936 = vpop.xlane.xlu0 %3935
        %v3937 = vsel %vm585, %v3919, -inf
        %3938 = vmax.xlane.f32.xlu0 %v3937
        %v3939 = vpop.xlane.xlu0 %3938
        %v3940 = vsel %vm585, %v3920, -inf
        %3941 = vmax.xlane.f32.xlu0 %v3940
        %v3942 = vpop.xlane.xlu0 %3941
        %v3943 = vsel %vm585, %v3921, -inf
        %3944 = vmax.xlane.f32.xlu0 %v3943
        %v3945 = vpop.xlane.xlu0 %3944
        %v3946 = vsub.f32 %v3914, %v3924
        %v3947 = vsub.f32 %v3915, %v3927
        %v3948 = vsub.f32 %v3916, %v3930
        %v3949 = vsub.f32 %v3917, %v3933
        %v3950 = vsub.f32 %v3918, %v3936
        %v3951 = vsub.f32 %v3919, %v3939
        %v3952 = vsub.f32 %v3920, %v3942
        %v3953 = vsub.f32 %v3921, %v3945
        %v3954 = vmul.f32 %v3946, 1.442695
        %v3955 = vpow.pop %v3954
        %v3956 = vmul.f32 %v3947, 1.442695
        %v3957 = vpow.pop %v3956
        %v3958 = vmul.f32 %v3948, 1.442695
        %v3959 = vpow.pop %v3958
        %v3960 = vmul.f32 %v3949, 1.442695
        %v3961 = vpow.pop %v3960
        %v3962 = vmul.f32 %v3950, 1.442695
        %v3963 = vpow.pop %v3962
        %v3964 = vmul.f32 %v3951, 1.442695
        %v3965 = vpow.pop %v3964
        %v3966 = vmul.f32 %v3952, 1.442695
        %v3967 = vpow.pop %v3966
        %v3968 = vmul.f32 %v3953, 1.442695
        %v3969 = vpow.pop %v3968
        %v3970 = vsel %vm585, %v3955, 0.0
        %3971 = vadd.xlane.f32.xlu0 %v3970
        %v3972 = vpop.xlane.xlu0 %3971
        %v3973 = vsel %vm585, %v3957, 0.0
        %3974 = vadd.xlane.f32.xlu0 %v3973
        %v3975 = vpop.xlane.xlu0 %3974
        %v3976 = vsel %vm585, %v3959, 0.0
        %3977 = vadd.xlane.f32.xlu0 %v3976
        %v3978 = vpop.xlane.xlu0 %3977
        %v3979 = vsel %vm585, %v3961, 0.0
        %3980 = vadd.xlane.f32.xlu0 %v3979
        %v3981 = vpop.xlane.xlu0 %3980
        %v3982 = vsel %vm585, %v3963, 0.0
        %3983 = vadd.xlane.f32.xlu0 %v3982
        %v3984 = vpop.xlane.xlu0 %3983
        %v3985 = vsel %vm585, %v3965, 0.0
        %3986 = vadd.xlane.f32.xlu0 %v3985
        %v3987 = vpop.xlane.xlu0 %3986
        %v3988 = vsel %vm585, %v3967, 0.0
        %3989 = vadd.xlane.f32.xlu0 %v3988
        %v3990 = vpop.xlane.xlu0 %3989
        %v3991 = vsel %vm585, %v3969, 0.0
        %3992 = vadd.xlane.f32.xlu0 %v3991
        %v3993 = vpop.xlane.xlu0 %3992
        %v3994 = vrcp.pop %v3972
        %v3995 = vrcp.pop %v3975
        %v3996 = vrcp.pop %v3978
        %v3997 = vrcp.pop %v3981
        %v3998 = vrcp.pop %v3984
        %v3999 = vrcp.pop %v3987
        %v4000 = vrcp.pop %v3990
        %v4001 = vrcp.pop %v3993
        %v4002 = vmul.f32 %v3955, %v3994
        %v4003 = vmul.f32 %v3957, %v3995
        %v4004 = vmul.f32 %v3959, %v3996
        %v4005 = vmul.f32 %v3961, %v3997
        %v4006 = vmul.f32 %v3963, %v3998
        %v4007 = vmul.f32 %v3965, %v3999
        %v4008 = vmul.f32 %v3967, %v4000
        %v4009 = vmul.f32 %v3969, %v4001
        %v4011 = vsel %vm585, %v4002, 0
        %v4014 = vsel %vm585, %v4003, 0
        %v4017 = vsel %vm585, %v4004, 0
        %v4020 = vsel %vm585, %v4005, 0
        %v4023 = vsel %vm585, %v4006, 0
        %v4026 = vsel %vm585, %v4007, 0
        %v4029 = vsel %vm585, %v4008, 0
        %v4032 = vsel %vm585, %v4009, 0
        %4034 = vmatprep.subr.mxu0 0.0
        %4035 = vmatpush1.msra.mxu0 %v3709
        %4036 = vmatprep.subr.mxu0 0.0
        %4037 = vmatpush1.msra.mxu0 %v3713
        %4038 = vmatprep.subr.mxu0 0.0
        %4039 = vmatpush1.msra.mxu0 %v3719
        %4040 = vmatprep.subr.mxu0 0.0
        %4041 = vmatpush1.msra.mxu0 %v3723
        %4042 = vmatprep.subr.mxu0 0.0
        %4043 = vmatpush1.msra.mxu0 %v3729
        %4044 = vmatprep.subr.mxu0 0.0
        %4045 = vmatpush1.msra.mxu0 %v3733
        %4046 = vmatprep.subr.mxu0 0.0
        %4047 = vmatpush1.msra.mxu0 %v3739
        %4048 = vmatprep.subr.mxu0 0.0
        %4049 = vmatpush1.msra.mxu0 %v3743
        %4050 = vmatprep.subr.mxu0 0.0
        %4051 = vmatpush1.msra.mxu0 0.0
        %4052 = vmatprep.subr.mxu0 0.0
        %4053 = vmatpush1.msra.mxu0 0.0
        %4054 = vmatprep.subr.mxu0 0.0
        %4055 = vmatpush1.msra.mxu0 0.0
        %4056 = vmatprep.subr.mxu0 0.0
        %4057 = vmatpush1.msra.mxu0 0.0
        %4058 = vmatprep.subr.mxu0 0.0
        %4059 = vmatpush1.msra.mxu0 0.0
        %4060 = vmatprep.subr.mxu0 0.0
        %4061 = vmatpush1.msra.mxu0 0.0
        %4062 = vmatprep.subr.mxu0 0.0
        %4063 = vmatpush1.msra.mxu0 0.0
        %4064 = vmatprep.subr.mxu0 0.0
        %4065 = vmatpush1.msra.mxu0 0.0
        %4066 = vmatprep.subr.mxu0 0.0
        %4067 = vmatpush1.msra.mxu0 0.0
        %4068 = vmatprep.subr.mxu0 0.0
        %4069 = vmatpush1.msra.mxu0 0.0
        %4070 = vmatprep.subr.mxu0 0.0
        %4071 = vmatpush1.msra.mxu0 0.0
        %4072 = vmatprep.subr.mxu0 0.0
        %4073 = vmatpush1.msra.mxu0 0.0
        %4074 = vmatprep.subr.mxu0 0.0
        %4075 = vmatpush1.msra.mxu0 0.0
        %4076 = vmatprep.subr.mxu0 0.0
        %4077 = vmatpush1.msra.mxu0 0.0
        %4078 = vmatprep.subr.mxu0 0.0
        %4079 = vmatpush1.msra.mxu0 0.0
        %4080 = vmatprep.subr.mxu0 0.0
        %4081 = vmatpush1.msra.mxu0 0.0
        %4082 = vmatprep.subr.mxu0 0.0
        %4083 = vmatpush1.msra.mxu0 0.0
        %4084 = vmatprep.subr.mxu0 0.0
        %4085 = vmatpush1.msra.mxu0 0.0
        %4086 = vmatprep.subr.mxu0 0.0
        %4087 = vmatpush1.msra.mxu0 0.0
        %4088 = vmatprep.subr.mxu0 0.0
        %4089 = vmatpush1.msra.mxu0 0.0
        %4090 = vmatprep.subr.mxu0 0.0
        %4091 = vmatpush1.msra.mxu0 0.0
        %4092 = vmatprep.subr.mxu0 0.0
        %4093 = vmatpush1.msra.mxu0 0.0
        %4094 = vmatprep.subr.mxu0 0.0
        %4095 = vmatpush1.msra.mxu0 0.0
        %4096 = vmatprep.subr.mxu0 0.0
        %4097 = vmatpush1.msra.mxu0 0.0
        %4098 = vmatprep.mubr.f32.mxu0 0.0
        %4099 = vmatmul.mubr.f32.gmra.mrb[0].mxu0 %v4011
        %v4100 = vpop.f32.mrb[0].mxu0
        %v4101 = vadd.f32 0.0, %v4100
        %v4102 = vpop.f32.mrb[0].mxu0
        %4103 = vmatprep.mubr.f32.mxu0 0.0
        %4104 = vmatmul.mubr.f32.gmra.mrb[0].mxu0 %v4014
        %v4105 = vpop.f32.mrb[0].mxu0
        %v4106 = vadd.f32 0.0, %v4105
        %v4107 = vpop.f32.mrb[0].mxu0
        %4108 = vmatprep.mubr.f32.mxu0 0.0
        %4109 = vmatmul.mubr.f32.gmra.mrb[0].mxu0 %v4017
        %v4110 = vpop.f32.mrb[0].mxu0
        %v4111 = vadd.f32 0.0, %v4110
        %v4112 = vpop.f32.mrb[0].mxu0
        %4113 = vmatprep.mubr.f32.mxu0 0.0
        %4114 = vmatmul.mubr.f32.gmra.mrb[0].mxu0 %v4020
        %v4115 = vpop.f32.mrb[0].mxu0
        %v4116 = vadd.f32 0.0, %v4115
        %v4117 = vpop.f32.mrb[0].mxu0
        %4118 = vmatprep.mubr.f32.mxu0 0.0
        %4119 = vmatmul.mubr.f32.gmra.mrb[0].mxu0 %v4023
        %v4120 = vpop.f32.mrb[0].mxu0
        %v4121 = vadd.f32 0.0, %v4120
        %v4122 = vpop.f32.mrb[0].mxu0
        %4123 = vmatprep.mubr.f32.mxu0 0.0
        %4124 = vmatmul.mubr.f32.gmra.mrb[0].mxu0 %v4026
        %v4125 = vpop.f32.mrb[0].mxu0
        %v4126 = vadd.f32 0.0, %v4125
        %v4127 = vpop.f32.mrb[0].mxu0
        %4128 = vmatprep.mubr.f32.mxu0 0.0
        %4129 = vmatmul.mubr.f32.gmra.mrb[0].mxu0 %v4029
        %v4130 = vpop.f32.mrb[0].mxu0
        %v4131 = vadd.f32 0.0, %v4130
        %v4132 = vpop.f32.mrb[0].mxu0
        %4133 = vmatprep.mubr.f32.mxu0 0.0
        %4134 = vmatmul.mubr.f32.gmra.mrb[0].mxu0 %v4032
        %v4135 = vpop.f32.mrb[0].mxu0
        %v4136 = vadd.f32 0.0, %v4135
        %v4137 = vpop.f32.mrb[0].mxu0
        %4138 = vdwg.mxu0
        %4139 = vrot.lane.b32.xlu0 %v3707, 112
        %v4140 = vpop.permute.xlu0 %4139
        %4141 = vrot.lane.b32.xlu0 %v3711, 112
        %v4142 = vpop.permute.xlu0 %4141
        %4143 = vrot.lane.b32.xlu0 %v3717, 112
        %v4144 = vpop.permute.xlu0 %4143
        %4145 = vrot.lane.b32.xlu0 %v3721, 112
        %v4146 = vpop.permute.xlu0 %4145
        %4147 = vrot.lane.b32.xlu0 %v3727, 112
        %v4148 = vpop.permute.xlu0 %4147
        %4149 = vrot.lane.b32.xlu0 %v3731, 112
        %v4150 = vpop.permute.xlu0 %4149
        %4151 = vrot.lane.b32.xlu0 %v3737, 112
        %v4152 = vpop.permute.xlu0 %4151
        %4153 = vrot.lane.b32.xlu0 %v3741, 112
        %v4154 = vpop.permute.xlu0 %4153
        %4155 = vrot.lane.b32.xlu0 %v3707, 48
        %v4156 = vpop.permute.xlu0 %4155
        %4157 = vrot.lane.b32.xlu0 %v3711, 48
        %v4158 = vpop.permute.xlu0 %4157
        %4159 = vrot.lane.b32.xlu0 %v3717, 48
        %v4160 = vpop.permute.xlu0 %4159
        %4161 = vrot.lane.b32.xlu0 %v3721, 48
        %v4162 = vpop.permute.xlu0 %4161
        %4163 = vrot.lane.b32.xlu0 %v3727, 48
        %v4164 = vpop.permute.xlu0 %4163
        %4165 = vrot.lane.b32.xlu0 %v3731, 48
        %v4166 = vpop.permute.xlu0 %4165
        %4167 = vrot.lane.b32.xlu0 %v3737, 48
        %v4168 = vpop.permute.xlu0 %4167
        %4169 = vrot.lane.b32.xlu0 %v3741, 48
        %v4170 = vpop.permute.xlu0 %4169
        %v4171 = vsel %vm892, %v4140, 0
        %v4173 = vsel %vm892, %v4142, 0
        %v4175 = vsel %vm892, %v4144, 0
        %v4177 = vsel %vm892, %v4146, 0
        %v4179 = vsel %vm892, %v4148, 0
        %v4181 = vsel %vm892, %v4150, 0
        %v4183 = vsel %vm892, %v4152, 0
        %v4185 = vsel %vm892, %v4154, 0
        %v4187 = vsel %vm892, %v4156, 0
        %v4189 = vsel %vm892, %v4158, 0
        %v4191 = vsel %vm892, %v4160, 0
        %v4193 = vsel %vm892, %v4162, 0
        %v4195 = vsel %vm892, %v4164, 0
        %v4197 = vsel %vm892, %v4166, 0
        %v4199 = vsel %vm892, %v4168, 0
        %v4201 = vsel %vm892, %v4170, 0
        %4203 = vmatprep.subr.mxu0 0.0
        %4204 = vmatpush1.xpose.msra.mxu0 %v4187
        %4205 = vmatprep.subr.mxu0 0.0
        %4206 = vmatpush1.xpose.msra.mxu0 %v4189
        %4207 = vmatprep.subr.mxu0 0.0
        %4208 = vmatpush1.xpose.msra.mxu0 %v4191
        %4209 = vmatprep.subr.mxu0 0.0
        %4210 = vmatpush1.xpose.msra.mxu0 %v4193
        %4211 = vmatprep.subr.mxu0 0.0
        %4212 = vmatpush1.xpose.msra.mxu0 %v4195
        %4213 = vmatprep.subr.mxu0 0.0
        %4214 = vmatpush1.xpose.msra.mxu0 %v4197
        %4215 = vmatprep.subr.mxu0 0.0
        %4216 = vmatpush1.xpose.msra.mxu0 %v4199
        %4217 = vmatprep.subr.mxu0 0.0
        %4218 = vmatpush1.xpose.msra.mxu0 %v4201
        %4219 = vmatprep.subr.mxu0 0.0
        %4220 = vmatpush1.xpose.msra.mxu0 0.0
        %4221 = vmatprep.subr.mxu0 0.0
        %4222 = vmatpush1.xpose.msra.mxu0 0.0
        %4223 = vmatprep.subr.mxu0 0.0
        %4224 = vmatpush1.xpose.msra.mxu0 0.0
        %4225 = vmatprep.subr.mxu0 0.0
        %4226 = vmatpush1.xpose.msra.mxu0 0.0
        %4227 = vmatprep.subr.mxu0 0.0
        %4228 = vmatpush1.xpose.msra.mxu0 0.0
        %4229 = vmatprep.subr.mxu0 0.0
        %4230 = vmatpush1.xpose.msra.mxu0 0.0
        %4231 = vmatprep.subr.mxu0 0.0
        %4232 = vmatpush1.xpose.msra.mxu0 0.0
        %4233 = vmatprep.subr.mxu0 0.0
        %4234 = vmatpush1.xpose.msra.mxu0 0.0
        %4235 = vmatprep.subr.mxu0 0.0
        %4236 = vmatpush1.xpose.msra.mxu0 0.0
        %4237 = vmatprep.subr.mxu0 0.0
        %4238 = vmatpush1.xpose.msra.mxu0 0.0
        %4239 = vmatprep.subr.mxu0 0.0
        %4240 = vmatpush1.xpose.msra.mxu0 0.0
        %4241 = vmatprep.subr.mxu0 0.0
        %4242 = vmatpush1.xpose.msra.mxu0 0.0
        %4243 = vmatprep.subr.mxu0 0.0
        %4244 = vmatpush1.xpose.msra.mxu0 0.0
        %4245 = vmatprep.subr.mxu0 0.0
        %4246 = vmatpush1.xpose.msra.mxu0 0.0
        %4247 = vmatprep.subr.mxu0 0.0
        %4248 = vmatpush1.xpose.msra.mxu0 0.0
        %4249 = vmatprep.subr.mxu0 0.0
        %4250 = vmatpush1.xpose.msra.mxu0 0.0
        %4251 = vmatprep.subr.mxu0 0.0
        %4252 = vmatpush1.xpose.msra.mxu0 0.0
        %4253 = vmatprep.subr.mxu0 0.0
        %4254 = vmatpush1.xpose.msra.mxu0 0.0
        %4255 = vmatprep.subr.mxu0 0.0
        %4256 = vmatpush1.xpose.msra.mxu0 0.0
        %4257 = vmatprep.subr.mxu0 0.0
        %4258 = vmatpush1.xpose.msra.mxu0 0.0
        %4259 = vmatprep.subr.mxu0 0.0
        %4260 = vmatpush1.xpose.msra.mxu0 0.0
        %4261 = vmatprep.subr.mxu0 0.0
        %4262 = vmatpush1.xpose.msra.mxu0 0.0
        %4263 = vmatprep.subr.mxu0 0.0
        %4264 = vmatpush1.xpose.msra.mxu0 0.0
        %4265 = vmatprep.subr.mxu0 0.0
        %4266 = vmatpush1.xpose.msra.mxu0 0.0
        %4267 = vmatprep.mubr.f32.mxu0 0.0
        %4268 = vmatmul.mubr.f32.gmra.mrb[0].mxu0 %v4171
        %v4269 = vpop.f32.mrb[0].mxu0
        %v4270 = vadd.f32 0.0, %v4269
        %v4271 = vpop.f32.mrb[0].mxu0
        %4272 = vmatprep.mubr.f32.mxu0 0.0
        %4273 = vmatmul.mubr.f32.gmra.mrb[0].mxu0 %v4173
        %v4274 = vpop.f32.mrb[0].mxu0
        %v4275 = vadd.f32 0.0, %v4274
        %v4276 = vpop.f32.mrb[0].mxu0
        %4277 = vmatprep.mubr.f32.mxu0 0.0
        %4278 = vmatmul.mubr.f32.gmra.mrb[0].mxu0 %v4175
        %v4279 = vpop.f32.mrb[0].mxu0
        %v4280 = vadd.f32 0.0, %v4279
        %v4281 = vpop.f32.mrb[0].mxu0
        %4282 = vmatprep.mubr.f32.mxu0 0.0
        %4283 = vmatmul.mubr.f32.gmra.mrb[0].mxu0 %v4177
        %v4284 = vpop.f32.mrb[0].mxu0
        %v4285 = vadd.f32 0.0, %v4284
        %v4286 = vpop.f32.mrb[0].mxu0
        %4287 = vmatprep.mubr.f32.mxu0 0.0
        %4288 = vmatmul.mubr.f32.gmra.mrb[0].mxu0 %v4179
        %v4289 = vpop.f32.mrb[0].mxu0
        %v4290 = vadd.f32 0.0, %v4289
        %v4291 = vpop.f32.mrb[0].mxu0
        %4292 = vmatprep.mubr.f32.mxu0 0.0
        %4293 = vmatmul.mubr.f32.gmra.mrb[0].mxu0 %v4181
        %v4294 = vpop.f32.mrb[0].mxu0
        %v4295 = vadd.f32 0.0, %v4294
        %v4296 = vpop.f32.mrb[0].mxu0
        %4297 = vmatprep.mubr.f32.mxu0 0.0
        %4298 = vmatmul.mubr.f32.gmra.mrb[0].mxu0 %v4183
        %v4299 = vpop.f32.mrb[0].mxu0
        %v4300 = vadd.f32 0.0, %v4299
        %v4301 = vpop.f32.mrb[0].mxu0
        %4302 = vmatprep.mubr.f32.mxu0 0.0
        %4303 = vmatmul.mubr.f32.gmra.mrb[0].mxu0 %v4185
        %v4304 = vpop.f32.mrb[0].mxu0
        %v4305 = vadd.f32 0.0, %v4304
        %v4306 = vpop.f32.mrb[0].mxu0
        %4307 = vdwg.mxu0
        %v4308 = vmul.f32 %v4270, 0.25
        %v4309 = vmul.f32 %v4275, 0.25
        %v4310 = vmul.f32 %v4280, 0.25
        %v4311 = vmul.f32 %v4285, 0.25
        %v4312 = vmul.f32 %v4290, 0.25
        %v4313 = vmul.f32 %v4295, 0.25
        %v4314 = vmul.f32 %v4300, 0.25
        %v4315 = vmul.f32 %v4305, 0.25
        %v4316 = vadd.f32 %v4308, %v575
        %v4317 = vadd.f32 %v4309, %v576
        %v4318 = vadd.f32 %v4310, %v577
        %v4319 = vadd.f32 %v4311, %v578
        %v4320 = vadd.f32 %v4312, %v579
        %v4321 = vadd.f32 %v4313, %v580
        %v4322 = vadd.f32 %v4314, %v581
        %v4323 = vadd.f32 %v4315, %v582
        %v4324 = vsel %vm585, %v4316, -inf
        %4325 = vmax.xlane.f32.xlu0 %v4324
        %v4326 = vpop.xlane.xlu0 %4325
        %v4327 = vsel %vm585, %v4317, -inf
        %4328 = vmax.xlane.f32.xlu0 %v4327
        %v4329 = vpop.xlane.xlu0 %4328
        %v4330 = vsel %vm585, %v4318, -inf
        %4331 = vmax.xlane.f32.xlu0 %v4330
        %v4332 = vpop.xlane.xlu0 %4331
        %v4333 = vsel %vm585, %v4319, -inf
        %4334 = vmax.xlane.f32.xlu0 %v4333
        %v4335 = vpop.xlane.xlu0 %4334
        %v4336 = vsel %vm585, %v4320, -inf
        %4337 = vmax.xlane.f32.xlu0 %v4336
        %v4338 = vpop.xlane.xlu0 %4337
        %v4339 = vsel %vm585, %v4321, -inf
        %4340 = vmax.xlane.f32.xlu0 %v4339
        %v4341 = vpop.xlane.xlu0 %4340
        %v4342 = vsel %vm585, %v4322, -inf
        %4343 = vmax.xlane.f32.xlu0 %v4342
        %v4344 = vpop.xlane.xlu0 %4343
        %v4345 = vsel %vm585, %v4323, -inf
        %4346 = vmax.xlane.f32.xlu0 %v4345
        %v4347 = vpop.xlane.xlu0 %4346
        %v4348 = vsub.f32 %v4316, %v4326
        %v4349 = vsub.f32 %v4317, %v4329
        %v4350 = vsub.f32 %v4318, %v4332
        %v4351 = vsub.f32 %v4319, %v4335
        %v4352 = vsub.f32 %v4320, %v4338
        %v4353 = vsub.f32 %v4321, %v4341
        %v4354 = vsub.f32 %v4322, %v4344
        %v4355 = vsub.f32 %v4323, %v4347
        %v4356 = vmul.f32 %v4348, 1.442695
        %v4357 = vpow.pop %v4356
        %v4358 = vmul.f32 %v4349, 1.442695
        %v4359 = vpow.pop %v4358
        %v4360 = vmul.f32 %v4350, 1.442695
        %v4361 = vpow.pop %v4360
        %v4362 = vmul.f32 %v4351, 1.442695
        %v4363 = vpow.pop %v4362
        %v4364 = vmul.f32 %v4352, 1.442695
        %v4365 = vpow.pop %v4364
        %v4366 = vmul.f32 %v4353, 1.442695
        %v4367 = vpow.pop %v4366
        %v4368 = vmul.f32 %v4354, 1.442695
        %v4369 = vpow.pop %v4368
        %v4370 = vmul.f32 %v4355, 1.442695
        %v4371 = vpow.pop %v4370
        %v4372 = vsel %vm585, %v4357, 0.0
        %4373 = vadd.xlane.f32.xlu0 %v4372
        %v4374 = vpop.xlane.xlu0 %4373
        %v4375 = vsel %vm585, %v4359, 0.0
        %4376 = vadd.xlane.f32.xlu0 %v4375
        %v4377 = vpop.xlane.xlu0 %4376
        %v4378 = vsel %vm585, %v4361, 0.0
        %4379 = vadd.xlane.f32.xlu0 %v4378
        %v4380 = vpop.xlane.xlu0 %4379
        %v4381 = vsel %vm585, %v4363, 0.0
        %4382 = vadd.xlane.f32.xlu0 %v4381
        %v4383 = vpop.xlane.xlu0 %4382
        %v4384 = vsel %vm585, %v4365, 0.0
        %4385 = vadd.xlane.f32.xlu0 %v4384
        %v4386 = vpop.xlane.xlu0 %4385
        %v4387 = vsel %vm585, %v4367, 0.0
        %4388 = vadd.xlane.f32.xlu0 %v4387
        %v4389 = vpop.xlane.xlu0 %4388
        %v4390 = vsel %vm585, %v4369, 0.0
        %4391 = vadd.xlane.f32.xlu0 %v4390
        %v4392 = vpop.xlane.xlu0 %4391
        %v4393 = vsel %vm585, %v4371, 0.0
        %4394 = vadd.xlane.f32.xlu0 %v4393
        %v4395 = vpop.xlane.xlu0 %4394
        %v4396 = vrcp.pop %v4374
        %v4397 = vrcp.pop %v4377
        %v4398 = vrcp.pop %v4380
        %v4399 = vrcp.pop %v4383
        %v4400 = vrcp.pop %v4386
        %v4401 = vrcp.pop %v4389
        %v4402 = vrcp.pop %v4392
        %v4403 = vrcp.pop %v4395
        %v4404 = vmul.f32 %v4357, %v4396
        %v4405 = vmul.f32 %v4359, %v4397
        %v4406 = vmul.f32 %v4361, %v4398
        %v4407 = vmul.f32 %v4363, %v4399
        %v4408 = vmul.f32 %v4365, %v4400
        %v4409 = vmul.f32 %v4367, %v4401
        %v4410 = vmul.f32 %v4369, %v4402
        %v4411 = vmul.f32 %v4371, %v4403
        %4420 = vrot.lane.b32.xlu0 %v3709, 112
        %v4421 = vpop.permute.xlu0 %4420
        %4422 = vrot.lane.b32.xlu0 %v3713, 112
        %v4423 = vpop.permute.xlu0 %4422
        %4424 = vrot.lane.b32.xlu0 %v3719, 112
        %v4425 = vpop.permute.xlu0 %4424
        %4426 = vrot.lane.b32.xlu0 %v3723, 112
        %v4427 = vpop.permute.xlu0 %4426
        %4428 = vrot.lane.b32.xlu0 %v3729, 112
        %v4429 = vpop.permute.xlu0 %4428
        %4430 = vrot.lane.b32.xlu0 %v3733, 112
        %v4431 = vpop.permute.xlu0 %4430
        %4432 = vrot.lane.b32.xlu0 %v3739, 112
        %v4433 = vpop.permute.xlu0 %4432
        %4434 = vrot.lane.b32.xlu0 %v3743, 112
        %v4435 = vpop.permute.xlu0 %4434
        %v4445 = vsel %vm585, %v4404, 0
        %v4448 = vsel %vm585, %v4405, 0
        %v4451 = vsel %vm585, %v4406, 0
        %v4454 = vsel %vm585, %v4407, 0
        %v4457 = vsel %vm585, %v4408, 0
        %v4460 = vsel %vm585, %v4409, 0
        %v4463 = vsel %vm585, %v4410, 0
        %v4466 = vsel %vm585, %v4411, 0
        %4468 = vmatprep.subr.mxu0 0.0
        %4469 = vmatpush1.msra.mxu0 %v4421
        %4470 = vmatprep.subr.mxu0 0.0
        %4471 = vmatpush1.msra.mxu0 %v4423
        %4472 = vmatprep.subr.mxu0 0.0
        %4473 = vmatpush1.msra.mxu0 %v4425
        %4474 = vmatprep.subr.mxu0 0.0
        %4475 = vmatpush1.msra.mxu0 %v4427
        %4476 = vmatprep.subr.mxu0 0.0
        %4477 = vmatpush1.msra.mxu0 %v4429
        %4478 = vmatprep.subr.mxu0 0.0
        %4479 = vmatpush1.msra.mxu0 %v4431
        %4480 = vmatprep.subr.mxu0 0.0
        %4481 = vmatpush1.msra.mxu0 %v4433
        %4482 = vmatprep.subr.mxu0 0.0
        %4483 = vmatpush1.msra.mxu0 %v4435
        %4484 = vmatprep.subr.mxu0 0.0
        %4485 = vmatpush1.msra.mxu0 0.0
        %4486 = vmatprep.subr.mxu0 0.0
        %4487 = vmatpush1.msra.mxu0 0.0
        %4488 = vmatprep.subr.mxu0 0.0
        %4489 = vmatpush1.msra.mxu0 0.0
        %4490 = vmatprep.subr.mxu0 0.0
        %4491 = vmatpush1.msra.mxu0 0.0
        %4492 = vmatprep.subr.mxu0 0.0
        %4493 = vmatpush1.msra.mxu0 0.0
        %4494 = vmatprep.subr.mxu0 0.0
        %4495 = vmatpush1.msra.mxu0 0.0
        %4496 = vmatprep.subr.mxu0 0.0
        %4497 = vmatpush1.msra.mxu0 0.0
        %4498 = vmatprep.subr.mxu0 0.0
        %4499 = vmatpush1.msra.mxu0 0.0
        %4500 = vmatprep.subr.mxu0 0.0
        %4501 = vmatpush1.msra.mxu0 0.0
        %4502 = vmatprep.subr.mxu0 0.0
        %4503 = vmatpush1.msra.mxu0 0.0
        %4504 = vmatprep.subr.mxu0 0.0
        %4505 = vmatpush1.msra.mxu0 0.0
        %4506 = vmatprep.subr.mxu0 0.0
        %4507 = vmatpush1.msra.mxu0 0.0
        %4508 = vmatprep.subr.mxu0 0.0
        %4509 = vmatpush1.msra.mxu0 0.0
        %4510 = vmatprep.subr.mxu0 0.0
        %4511 = vmatpush1.msra.mxu0 0.0
        %4512 = vmatprep.subr.mxu0 0.0
        %4513 = vmatpush1.msra.mxu0 0.0
        %4514 = vmatprep.subr.mxu0 0.0
        %4515 = vmatpush1.msra.mxu0 0.0
        %4516 = vmatprep.subr.mxu0 0.0
        %4517 = vmatpush1.msra.mxu0 0.0
        %4518 = vmatprep.subr.mxu0 0.0
        %4519 = vmatpush1.msra.mxu0 0.0
        %4520 = vmatprep.subr.mxu0 0.0
        %4521 = vmatpush1.msra.mxu0 0.0
        %4522 = vmatprep.subr.mxu0 0.0
        %4523 = vmatpush1.msra.mxu0 0.0
        %4524 = vmatprep.subr.mxu0 0.0
        %4525 = vmatpush1.msra.mxu0 0.0
        %4526 = vmatprep.subr.mxu0 0.0
        %4527 = vmatpush1.msra.mxu0 0.0
        %4528 = vmatprep.subr.mxu0 0.0
        %4529 = vmatpush1.msra.mxu0 0.0
        %4530 = vmatprep.subr.mxu0 0.0
        %4531 = vmatpush1.msra.mxu0 0.0
        %4532 = vmatprep.mubr.f32.mxu0 0.0
        %4533 = vmatmul.mubr.f32.gmra.mrb[0].mxu0 %v4445
        %v4534 = vpop.f32.mrb[0].mxu0
        %v4535 = vadd.f32 0.0, %v4534
        %v4536 = vpop.f32.mrb[0].mxu0
        %4537 = vmatprep.mubr.f32.mxu0 0.0
        %4538 = vmatmul.mubr.f32.gmra.mrb[0].mxu0 %v4448
        %v4539 = vpop.f32.mrb[0].mxu0
        %v4540 = vadd.f32 0.0, %v4539
        %v4541 = vpop.f32.mrb[0].mxu0
        %4542 = vmatprep.mubr.f32.mxu0 0.0
        %4543 = vmatmul.mubr.f32.gmra.mrb[0].mxu0 %v4451
        %v4544 = vpop.f32.mrb[0].mxu0
        %v4545 = vadd.f32 0.0, %v4544
        %v4546 = vpop.f32.mrb[0].mxu0
        %4547 = vmatprep.mubr.f32.mxu0 0.0
        %4548 = vmatmul.mubr.f32.gmra.mrb[0].mxu0 %v4454
        %v4549 = vpop.f32.mrb[0].mxu0
        %v4550 = vadd.f32 0.0, %v4549
        %v4551 = vpop.f32.mrb[0].mxu0
        %4552 = vmatprep.mubr.f32.mxu0 0.0
        %4553 = vmatmul.mubr.f32.gmra.mrb[0].mxu0 %v4457
        %v4554 = vpop.f32.mrb[0].mxu0
        %v4555 = vadd.f32 0.0, %v4554
        %v4556 = vpop.f32.mrb[0].mxu0
        %4557 = vmatprep.mubr.f32.mxu0 0.0
        %4558 = vmatmul.mubr.f32.gmra.mrb[0].mxu0 %v4460
        %v4559 = vpop.f32.mrb[0].mxu0
        %v4560 = vadd.f32 0.0, %v4559
        %v4561 = vpop.f32.mrb[0].mxu0
        %4562 = vmatprep.mubr.f32.mxu0 0.0
        %4563 = vmatmul.mubr.f32.gmra.mrb[0].mxu0 %v4463
        %v4564 = vpop.f32.mrb[0].mxu0
        %v4565 = vadd.f32 0.0, %v4564
        %v4566 = vpop.f32.mrb[0].mxu0
        %4567 = vmatprep.mubr.f32.mxu0 0.0
        %4568 = vmatmul.mubr.f32.gmra.mrb[0].mxu0 %v4466
        %v4569 = vpop.f32.mrb[0].mxu0
        %v4570 = vadd.f32 0.0, %v4569
        %v4571 = vpop.f32.mrb[0].mxu0
        %4572 = vdwg.mxu0
        %4573 = vrot.lane.b32.xlu0 %v3707, 96
        %v4574 = vpop.permute.xlu0 %4573
        %4575 = vrot.lane.b32.xlu0 %v3711, 96
        %v4576 = vpop.permute.xlu0 %4575
        %4577 = vrot.lane.b32.xlu0 %v3717, 96
        %v4578 = vpop.permute.xlu0 %4577
        %4579 = vrot.lane.b32.xlu0 %v3721, 96
        %v4580 = vpop.permute.xlu0 %4579
        %4581 = vrot.lane.b32.xlu0 %v3727, 96
        %v4582 = vpop.permute.xlu0 %4581
        %4583 = vrot.lane.b32.xlu0 %v3731, 96
        %v4584 = vpop.permute.xlu0 %4583
        %4585 = vrot.lane.b32.xlu0 %v3737, 96
        %v4586 = vpop.permute.xlu0 %4585
        %4587 = vrot.lane.b32.xlu0 %v3741, 96
        %v4588 = vpop.permute.xlu0 %4587
        %4589 = vrot.lane.b32.xlu0 %v3707, 32
        %v4590 = vpop.permute.xlu0 %4589
        %4591 = vrot.lane.b32.xlu0 %v3711, 32
        %v4592 = vpop.permute.xlu0 %4591
        %4593 = vrot.lane.b32.xlu0 %v3717, 32
        %v4594 = vpop.permute.xlu0 %4593
        %4595 = vrot.lane.b32.xlu0 %v3721, 32
        %v4596 = vpop.permute.xlu0 %4595
        %4597 = vrot.lane.b32.xlu0 %v3727, 32
        %v4598 = vpop.permute.xlu0 %4597
        %4599 = vrot.lane.b32.xlu0 %v3731, 32
        %v4600 = vpop.permute.xlu0 %4599
        %4601 = vrot.lane.b32.xlu0 %v3737, 32
        %v4602 = vpop.permute.xlu0 %4601
        %4603 = vrot.lane.b32.xlu0 %v3741, 32
        %v4604 = vpop.permute.xlu0 %4603
        %v4605 = vsel %vm892, %v4574, 0
        %v4607 = vsel %vm892, %v4576, 0
        %v4609 = vsel %vm892, %v4578, 0
        %v4611 = vsel %vm892, %v4580, 0
        %v4613 = vsel %vm892, %v4582, 0
        %v4615 = vsel %vm892, %v4584, 0
        %v4617 = vsel %vm892, %v4586, 0
        %v4619 = vsel %vm892, %v4588, 0
        %v4621 = vsel %vm892, %v4590, 0
        %v4623 = vsel %vm892, %v4592, 0
        %v4625 = vsel %vm892, %v4594, 0
        %v4627 = vsel %vm892, %v4596, 0
        %v4629 = vsel %vm892, %v4598, 0
        %v4631 = vsel %vm892, %v4600, 0
        %v4633 = vsel %vm892, %v4602, 0
        %v4635 = vsel %vm892, %v4604, 0
        %4637 = vmatprep.subr.mxu0 0.0
        %4638 = vmatpush1.xpose.msra.mxu0 %v4621
        %4639 = vmatprep.subr.mxu0 0.0
        %4640 = vmatpush1.xpose.msra.mxu0 %v4623
        %4641 = vmatprep.subr.mxu0 0.0
        %4642 = vmatpush1.xpose.msra.mxu0 %v4625
        %4643 = vmatprep.subr.mxu0 0.0
        %4644 = vmatpush1.xpose.msra.mxu0 %v4627
        %4645 = vmatprep.subr.mxu0 0.0
        %4646 = vmatpush1.xpose.msra.mxu0 %v4629
        %4647 = vmatprep.subr.mxu0 0.0
        %4648 = vmatpush1.xpose.msra.mxu0 %v4631
        %4649 = vmatprep.subr.mxu0 0.0
        %4650 = vmatpush1.xpose.msra.mxu0 %v4633
        %4651 = vmatprep.subr.mxu0 0.0
        %4652 = vmatpush1.xpose.msra.mxu0 %v4635
        %4653 = vmatprep.subr.mxu0 0.0
        %4654 = vmatpush1.xpose.msra.mxu0 0.0
        %4655 = vmatprep.subr.mxu0 0.0
        %4656 = vmatpush1.xpose.msra.mxu0 0.0
        %4657 = vmatprep.subr.mxu0 0.0
        %4658 = vmatpush1.xpose.msra.mxu0 0.0
        %4659 = vmatprep.subr.mxu0 0.0
        %4660 = vmatpush1.xpose.msra.mxu0 0.0
        %4661 = vmatprep.subr.mxu0 0.0
        %4662 = vmatpush1.xpose.msra.mxu0 0.0
        %4663 = vmatprep.subr.mxu0 0.0
        %4664 = vmatpush1.xpose.msra.mxu0 0.0
        %4665 = vmatprep.subr.mxu0 0.0
        %4666 = vmatpush1.xpose.msra.mxu0 0.0
        %4667 = vmatprep.subr.mxu0 0.0
        %4668 = vmatpush1.xpose.msra.mxu0 0.0
        %4669 = vmatprep.subr.mxu0 0.0
        %4670 = vmatpush1.xpose.msra.mxu0 0.0
        %4671 = vmatprep.subr.mxu0 0.0
        %4672 = vmatpush1.xpose.msra.mxu0 0.0
        %4673 = vmatprep.subr.mxu0 0.0
        %4674 = vmatpush1.xpose.msra.mxu0 0.0
        %4675 = vmatprep.subr.mxu0 0.0
        %4676 = vmatpush1.xpose.msra.mxu0 0.0
        %4677 = vmatprep.subr.mxu0 0.0
        %4678 = vmatpush1.xpose.msra.mxu0 0.0
        %4679 = vmatprep.subr.mxu0 0.0
        %4680 = vmatpush1.xpose.msra.mxu0 0.0
        %4681 = vmatprep.subr.mxu0 0.0
        %4682 = vmatpush1.xpose.msra.mxu0 0.0
        %4683 = vmatprep.subr.mxu0 0.0
        %4684 = vmatpush1.xpose.msra.mxu0 0.0
        %4685 = vmatprep.subr.mxu0 0.0
        %4686 = vmatpush1.xpose.msra.mxu0 0.0
        %4687 = vmatprep.subr.mxu0 0.0
        %4688 = vmatpush1.xpose.msra.mxu0 0.0
        %4689 = vmatprep.subr.mxu0 0.0
        %4690 = vmatpush1.xpose.msra.mxu0 0.0
        %4691 = vmatprep.subr.mxu0 0.0
        %4692 = vmatpush1.xpose.msra.mxu0 0.0
        %4693 = vmatprep.subr.mxu0 0.0
        %4694 = vmatpush1.xpose.msra.mxu0 0.0
        %4695 = vmatprep.subr.mxu0 0.0
        %4696 = vmatpush1.xpose.msra.mxu0 0.0
        %4697 = vmatprep.subr.mxu0 0.0
        %4698 = vmatpush1.xpose.msra.mxu0 0.0
        %4699 = vmatprep.subr.mxu0 0.0
        %4700 = vmatpush1.xpose.msra.mxu0 0.0
        %4701 = vmatprep.mubr.f32.mxu0 0.0
        %4702 = vmatmul.mubr.f32.gmra.mrb[0].mxu0 %v4605
        %v4703 = vpop.f32.mrb[0].mxu0
        %v4704 = vadd.f32 0.0, %v4703
        %v4705 = vpop.f32.mrb[0].mxu0
        %4706 = vmatprep.mubr.f32.mxu0 0.0
        %4707 = vmatmul.mubr.f32.gmra.mrb[0].mxu0 %v4607
        %v4708 = vpop.f32.mrb[0].mxu0
        %v4709 = vadd.f32 0.0, %v4708
        %v4710 = vpop.f32.mrb[0].mxu0
        %4711 = vmatprep.mubr.f32.mxu0 0.0
        %4712 = vmatmul.mubr.f32.gmra.mrb[0].mxu0 %v4609
        %v4713 = vpop.f32.mrb[0].mxu0
        %v4714 = vadd.f32 0.0, %v4713
        %v4715 = vpop.f32.mrb[0].mxu0
        %4716 = vmatprep.mubr.f32.mxu0 0.0
        %4717 = vmatmul.mubr.f32.gmra.mrb[0].mxu0 %v4611
        %v4718 = vpop.f32.mrb[0].mxu0
        %v4719 = vadd.f32 0.0, %v4718
        %v4720 = vpop.f32.mrb[0].mxu0
        %4721 = vmatprep.mubr.f32.mxu0 0.0
        %4722 = vmatmul.mubr.f32.gmra.mrb[0].mxu0 %v4613
        %v4723 = vpop.f32.mrb[0].mxu0
        %v4724 = vadd.f32 0.0, %v4723
        %v4725 = vpop.f32.mrb[0].mxu0
        %4726 = vmatprep.mubr.f32.mxu0 0.0
        %4727 = vmatmul.mubr.f32.gmra.mrb[0].mxu0 %v4615
        %v4728 = vpop.f32.mrb[0].mxu0
        %v4729 = vadd.f32 0.0, %v4728
        %v4730 = vpop.f32.mrb[0].mxu0
        %4731 = vmatprep.mubr.f32.mxu0 0.0
        %4732 = vmatmul.mubr.f32.gmra.mrb[0].mxu0 %v4617
        %v4733 = vpop.f32.mrb[0].mxu0
        %v4734 = vadd.f32 0.0, %v4733
        %v4735 = vpop.f32.mrb[0].mxu0
        %4736 = vmatprep.mubr.f32.mxu0 0.0
        %4737 = vmatmul.mubr.f32.gmra.mrb[0].mxu0 %v4619
        %v4738 = vpop.f32.mrb[0].mxu0
        %v4739 = vadd.f32 0.0, %v4738
        %v4740 = vpop.f32.mrb[0].mxu0
        %4741 = vdwg.mxu0
        %v4742 = vmul.f32 %v4704, 0.25
        %v4743 = vmul.f32 %v4709, 0.25
        %v4744 = vmul.f32 %v4714, 0.25
        %v4745 = vmul.f32 %v4719, 0.25
        %v4746 = vmul.f32 %v4724, 0.25
        %v4747 = vmul.f32 %v4729, 0.25
        %v4748 = vmul.f32 %v4734, 0.25
        %v4749 = vmul.f32 %v4739, 0.25
        %v4750 = vadd.f32 %v4742, %v575
        %v4751 = vadd.f32 %v4743, %v576
        %v4752 = vadd.f32 %v4744, %v577
        %v4753 = vadd.f32 %v4745, %v578
        %v4754 = vadd.f32 %v4746, %v579
        %v4755 = vadd.f32 %v4747, %v580
        %v4756 = vadd.f32 %v4748, %v581
        %v4757 = vadd.f32 %v4749, %v582
        %v4758 = vsel %vm585, %v4750, -inf
        %4759 = vmax.xlane.f32.xlu0 %v4758
        %v4760 = vpop.xlane.xlu0 %4759
        %v4761 = vsel %vm585, %v4751, -inf
        %4762 = vmax.xlane.f32.xlu0 %v4761
        %v4763 = vpop.xlane.xlu0 %4762
        %v4764 = vsel %vm585, %v4752, -inf
        %4765 = vmax.xlane.f32.xlu0 %v4764
        %v4766 = vpop.xlane.xlu0 %4765
        %v4767 = vsel %vm585, %v4753, -inf
        %4768 = vmax.xlane.f32.xlu0 %v4767
        %v4769 = vpop.xlane.xlu0 %4768
        %v4770 = vsel %vm585, %v4754, -inf
        %4771 = vmax.xlane.f32.xlu0 %v4770
        %v4772 = vpop.xlane.xlu0 %4771
        %v4773 = vsel %vm585, %v4755, -inf
        %4774 = vmax.xlane.f32.xlu0 %v4773
        %v4775 = vpop.xlane.xlu0 %4774
        %v4776 = vsel %vm585, %v4756, -inf
        %4777 = vmax.xlane.f32.xlu0 %v4776
        %v4778 = vpop.xlane.xlu0 %4777
        %v4779 = vsel %vm585, %v4757, -inf
        %4780 = vmax.xlane.f32.xlu0 %v4779
        %v4781 = vpop.xlane.xlu0 %4780
        %v4782 = vsub.f32 %v4750, %v4760
        %v4783 = vsub.f32 %v4751, %v4763
        %v4784 = vsub.f32 %v4752, %v4766
        %v4785 = vsub.f32 %v4753, %v4769
        %v4786 = vsub.f32 %v4754, %v4772
        %v4787 = vsub.f32 %v4755, %v4775
        %v4788 = vsub.f32 %v4756, %v4778
        %v4789 = vsub.f32 %v4757, %v4781
        %v4790 = vmul.f32 %v4782, 1.442695
        %v4791 = vpow.pop %v4790
        %v4792 = vmul.f32 %v4783, 1.442695
        %v4793 = vpow.pop %v4792
        %v4794 = vmul.f32 %v4784, 1.442695
        %v4795 = vpow.pop %v4794
        %v4796 = vmul.f32 %v4785, 1.442695
        %v4797 = vpow.pop %v4796
        %v4798 = vmul.f32 %v4786, 1.442695
        %v4799 = vpow.pop %v4798
        %v4800 = vmul.f32 %v4787, 1.442695
        %v4801 = vpow.pop %v4800
        %v4802 = vmul.f32 %v4788, 1.442695
        %v4803 = vpow.pop %v4802
        %v4804 = vmul.f32 %v4789, 1.442695
        %v4805 = vpow.pop %v4804
        %v4806 = vsel %vm585, %v4791, 0.0
        %4807 = vadd.xlane.f32.xlu0 %v4806
        %v4808 = vpop.xlane.xlu0 %4807
        %v4809 = vsel %vm585, %v4793, 0.0
        %4810 = vadd.xlane.f32.xlu0 %v4809
        %v4811 = vpop.xlane.xlu0 %4810
        %v4812 = vsel %vm585, %v4795, 0.0
        %4813 = vadd.xlane.f32.xlu0 %v4812
        %v4814 = vpop.xlane.xlu0 %4813
        %v4815 = vsel %vm585, %v4797, 0.0
        %4816 = vadd.xlane.f32.xlu0 %v4815
        %v4817 = vpop.xlane.xlu0 %4816
        %v4818 = vsel %vm585, %v4799, 0.0
        %4819 = vadd.xlane.f32.xlu0 %v4818
        %v4820 = vpop.xlane.xlu0 %4819
        %v4821 = vsel %vm585, %v4801, 0.0
        %4822 = vadd.xlane.f32.xlu0 %v4821
        %v4823 = vpop.xlane.xlu0 %4822
        %v4824 = vsel %vm585, %v4803, 0.0
        %4825 = vadd.xlane.f32.xlu0 %v4824
        %v4826 = vpop.xlane.xlu0 %4825
        %v4827 = vsel %vm585, %v4805, 0.0
        %4828 = vadd.xlane.f32.xlu0 %v4827
        %v4829 = vpop.xlane.xlu0 %4828
        %v4830 = vrcp.pop %v4808
        %v4831 = vrcp.pop %v4811
        %v4832 = vrcp.pop %v4814
        %v4833 = vrcp.pop %v4817
        %v4834 = vrcp.pop %v4820
        %v4835 = vrcp.pop %v4823
        %v4836 = vrcp.pop %v4826
        %v4837 = vrcp.pop %v4829
        %v4838 = vmul.f32 %v4791, %v4830
        %v4839 = vmul.f32 %v4793, %v4831
        %v4840 = vmul.f32 %v4795, %v4832
        %v4841 = vmul.f32 %v4797, %v4833
        %v4842 = vmul.f32 %v4799, %v4834
        %v4843 = vmul.f32 %v4801, %v4835
        %v4844 = vmul.f32 %v4803, %v4836
        %v4845 = vmul.f32 %v4805, %v4837
        %4846 = vrot.lane.b32.xlu0 %v3709, 96
        %v4847 = vpop.permute.xlu0 %4846
        %4848 = vrot.lane.b32.xlu0 %v3713, 96
        %v4849 = vpop.permute.xlu0 %4848
        %4850 = vrot.lane.b32.xlu0 %v3719, 96
        %v4851 = vpop.permute.xlu0 %4850
        %4852 = vrot.lane.b32.xlu0 %v3723, 96
        %v4853 = vpop.permute.xlu0 %4852
        %4854 = vrot.lane.b32.xlu0 %v3729, 96
        %v4855 = vpop.permute.xlu0 %4854
        %4856 = vrot.lane.b32.xlu0 %v3733, 96
        %v4857 = vpop.permute.xlu0 %4856
        %4858 = vrot.lane.b32.xlu0 %v3739, 96
        %v4859 = vpop.permute.xlu0 %4858
        %4860 = vrot.lane.b32.xlu0 %v3743, 96
        %v4861 = vpop.permute.xlu0 %4860
        %v4871 = vsel %vm585, %v4838, 0
        %v4874 = vsel %vm585, %v4839, 0
        %v4877 = vsel %vm585, %v4840, 0
        %v4880 = vsel %vm585, %v4841, 0
        %v4883 = vsel %vm585, %v4842, 0
        %v4886 = vsel %vm585, %v4843, 0
        %v4889 = vsel %vm585, %v4844, 0
        %v4892 = vsel %vm585, %v4845, 0
        %4894 = vmatprep.subr.mxu0 0.0
        %4895 = vmatpush1.msra.mxu0 %v4847
        %4896 = vmatprep.subr.mxu0 0.0
        %4897 = vmatpush1.msra.mxu0 %v4849
        %4898 = vmatprep.subr.mxu0 0.0
        %4899 = vmatpush1.msra.mxu0 %v4851
        %4900 = vmatprep.subr.mxu0 0.0
        %4901 = vmatpush1.msra.mxu0 %v4853
        %4902 = vmatprep.subr.mxu0 0.0
        %4903 = vmatpush1.msra.mxu0 %v4855
        %4904 = vmatprep.subr.mxu0 0.0
        %4905 = vmatpush1.msra.mxu0 %v4857
        %4906 = vmatprep.subr.mxu0 0.0
        %4907 = vmatpush1.msra.mxu0 %v4859
        %4908 = vmatprep.subr.mxu0 0.0
        %4909 = vmatpush1.msra.mxu0 %v4861
        %4910 = vmatprep.subr.mxu0 0.0
        %4911 = vmatpush1.msra.mxu0 0.0
        %4912 = vmatprep.subr.mxu0 0.0
        %4913 = vmatpush1.msra.mxu0 0.0
        %4914 = vmatprep.subr.mxu0 0.0
        %4915 = vmatpush1.msra.mxu0 0.0
        %4916 = vmatprep.subr.mxu0 0.0
        %4917 = vmatpush1.msra.mxu0 0.0
        %4918 = vmatprep.subr.mxu0 0.0
        %4919 = vmatpush1.msra.mxu0 0.0
        %4920 = vmatprep.subr.mxu0 0.0
        %4921 = vmatpush1.msra.mxu0 0.0
        %4922 = vmatprep.subr.mxu0 0.0
        %4923 = vmatpush1.msra.mxu0 0.0
        %4924 = vmatprep.subr.mxu0 0.0
        %4925 = vmatpush1.msra.mxu0 0.0
        %4926 = vmatprep.subr.mxu0 0.0
        %4927 = vmatpush1.msra.mxu0 0.0
        %4928 = vmatprep.subr.mxu0 0.0
        %4929 = vmatpush1.msra.mxu0 0.0
        %4930 = vmatprep.subr.mxu0 0.0
        %4931 = vmatpush1.msra.mxu0 0.0
        %4932 = vmatprep.subr.mxu0 0.0
        %4933 = vmatpush1.msra.mxu0 0.0
        %4934 = vmatprep.subr.mxu0 0.0
        %4935 = vmatpush1.msra.mxu0 0.0
        %4936 = vmatprep.subr.mxu0 0.0
        %4937 = vmatpush1.msra.mxu0 0.0
        %4938 = vmatprep.subr.mxu0 0.0
        %4939 = vmatpush1.msra.mxu0 0.0
        %4940 = vmatprep.subr.mxu0 0.0
        %4941 = vmatpush1.msra.mxu0 0.0
        %4942 = vmatprep.subr.mxu0 0.0
        %4943 = vmatpush1.msra.mxu0 0.0
        %4944 = vmatprep.subr.mxu0 0.0
        %4945 = vmatpush1.msra.mxu0 0.0
        %4946 = vmatprep.subr.mxu0 0.0
        %4947 = vmatpush1.msra.mxu0 0.0
        %4948 = vmatprep.subr.mxu0 0.0
        %4949 = vmatpush1.msra.mxu0 0.0
        %4950 = vmatprep.subr.mxu0 0.0
        %4951 = vmatpush1.msra.mxu0 0.0
        %4952 = vmatprep.subr.mxu0 0.0
        %4953 = vmatpush1.msra.mxu0 0.0
        %4954 = vmatprep.subr.mxu0 0.0
        %4955 = vmatpush1.msra.mxu0 0.0
        %4956 = vmatprep.subr.mxu0 0.0
        %4957 = vmatpush1.msra.mxu0 0.0
        %4958 = vmatprep.mubr.f32.mxu0 0.0
        %4959 = vmatmul.mubr.f32.gmra.mrb[0].mxu0 %v4871
        %v4960 = vpop.f32.mrb[0].mxu0
        %v4961 = vadd.f32 0.0, %v4960
        %v4962 = vpop.f32.mrb[0].mxu0
        %4963 = vmatprep.mubr.f32.mxu0 0.0
        %4964 = vmatmul.mubr.f32.gmra.mrb[0].mxu0 %v4874
        %v4965 = vpop.f32.mrb[0].mxu0
        %v4966 = vadd.f32 0.0, %v4965
        %v4967 = vpop.f32.mrb[0].mxu0
        %4968 = vmatprep.mubr.f32.mxu0 0.0
        %4969 = vmatmul.mubr.f32.gmra.mrb[0].mxu0 %v4877
        %v4970 = vpop.f32.mrb[0].mxu0
        %v4971 = vadd.f32 0.0, %v4970
        %v4972 = vpop.f32.mrb[0].mxu0
        %4973 = vmatprep.mubr.f32.mxu0 0.0
        %4974 = vmatmul.mubr.f32.gmra.mrb[0].mxu0 %v4880
        %v4975 = vpop.f32.mrb[0].mxu0
        %v4976 = vadd.f32 0.0, %v4975
        %v4977 = vpop.f32.mrb[0].mxu0
        %4978 = vmatprep.mubr.f32.mxu0 0.0
        %4979 = vmatmul.mubr.f32.gmra.mrb[0].mxu0 %v4883
        %v4980 = vpop.f32.mrb[0].mxu0
        %v4981 = vadd.f32 0.0, %v4980
        %v4982 = vpop.f32.mrb[0].mxu0
        %4983 = vmatprep.mubr.f32.mxu0 0.0
        %4984 = vmatmul.mubr.f32.gmra.mrb[0].mxu0 %v4886
        %v4985 = vpop.f32.mrb[0].mxu0
        %v4986 = vadd.f32 0.0, %v4985
        %v4987 = vpop.f32.mrb[0].mxu0
        %4988 = vmatprep.mubr.f32.mxu0 0.0
        %4989 = vmatmul.mubr.f32.gmra.mrb[0].mxu0 %v4889
        %v4990 = vpop.f32.mrb[0].mxu0
        %v4991 = vadd.f32 0.0, %v4990
        %v4992 = vpop.f32.mrb[0].mxu0
        %4993 = vmatprep.mubr.f32.mxu0 0.0
        %4994 = vmatmul.mubr.f32.gmra.mrb[0].mxu0 %v4892
        %v4995 = vpop.f32.mrb[0].mxu0
        %v4996 = vadd.f32 0.0, %v4995
        %v4997 = vpop.f32.mrb[0].mxu0
        %4998 = vdwg.mxu0
        %4999 = vrot.lane.b32.xlu0 %v3707, 80
        %v5000 = vpop.permute.xlu0 %4999
        %5001 = vrot.lane.b32.xlu0 %v3711, 80
        %v5002 = vpop.permute.xlu0 %5001
        %5003 = vrot.lane.b32.xlu0 %v3717, 80
        %v5004 = vpop.permute.xlu0 %5003
        %5005 = vrot.lane.b32.xlu0 %v3721, 80
        %v5006 = vpop.permute.xlu0 %5005
        %5007 = vrot.lane.b32.xlu0 %v3727, 80
        %v5008 = vpop.permute.xlu0 %5007
        %5009 = vrot.lane.b32.xlu0 %v3731, 80
        %v5010 = vpop.permute.xlu0 %5009
        %5011 = vrot.lane.b32.xlu0 %v3737, 80
        %v5012 = vpop.permute.xlu0 %5011
        %5013 = vrot.lane.b32.xlu0 %v3741, 80
        %v5014 = vpop.permute.xlu0 %5013
        %5015 = vrot.lane.b32.xlu0 %v3707, 16
        %v5016 = vpop.permute.xlu0 %5015
        %5017 = vrot.lane.b32.xlu0 %v3711, 16
        %v5018 = vpop.permute.xlu0 %5017
        %5019 = vrot.lane.b32.xlu0 %v3717, 16
        %v5020 = vpop.permute.xlu0 %5019
        %5021 = vrot.lane.b32.xlu0 %v3721, 16
        %v5022 = vpop.permute.xlu0 %5021
        %5023 = vrot.lane.b32.xlu0 %v3727, 16
        %v5024 = vpop.permute.xlu0 %5023
        %5025 = vrot.lane.b32.xlu0 %v3731, 16
        %v5026 = vpop.permute.xlu0 %5025
        %5027 = vrot.lane.b32.xlu0 %v3737, 16
        %v5028 = vpop.permute.xlu0 %5027
        %5029 = vrot.lane.b32.xlu0 %v3741, 16
        %v5030 = vpop.permute.xlu0 %5029
        %v5031 = vsel %vm892, %v5000, 0
        %v5033 = vsel %vm892, %v5002, 0
        %v5035 = vsel %vm892, %v5004, 0
        %v5037 = vsel %vm892, %v5006, 0
        %v5039 = vsel %vm892, %v5008, 0
        %v5041 = vsel %vm892, %v5010, 0
        %v5043 = vsel %vm892, %v5012, 0
        %v5045 = vsel %vm892, %v5014, 0
        %v5047 = vsel %vm892, %v5016, 0
        %v5049 = vsel %vm892, %v5018, 0
        %v5051 = vsel %vm892, %v5020, 0
        %v5053 = vsel %vm892, %v5022, 0
        %v5055 = vsel %vm892, %v5024, 0
        %v5057 = vsel %vm892, %v5026, 0
        %v5059 = vsel %vm892, %v5028, 0
        %v5061 = vsel %vm892, %v5030, 0
        %5063 = vmatprep.subr.mxu0 0.0
        %5064 = vmatpush1.xpose.msra.mxu0 %v5047
        %5065 = vmatprep.subr.mxu0 0.0
        %5066 = vmatpush1.xpose.msra.mxu0 %v5049
        %5067 = vmatprep.subr.mxu0 0.0
        %5068 = vmatpush1.xpose.msra.mxu0 %v5051
        %5069 = vmatprep.subr.mxu0 0.0
        %5070 = vmatpush1.xpose.msra.mxu0 %v5053
        %5071 = vmatprep.subr.mxu0 0.0
        %5072 = vmatpush1.xpose.msra.mxu0 %v5055
        %5073 = vmatprep.subr.mxu0 0.0
        %5074 = vmatpush1.xpose.msra.mxu0 %v5057
        %5075 = vmatprep.subr.mxu0 0.0
        %5076 = vmatpush1.xpose.msra.mxu0 %v5059
        %5077 = vmatprep.subr.mxu0 0.0
        %5078 = vmatpush1.xpose.msra.mxu0 %v5061
        %5079 = vmatprep.subr.mxu0 0.0
        %5080 = vmatpush1.xpose.msra.mxu0 0.0
        %5081 = vmatprep.subr.mxu0 0.0
        %5082 = vmatpush1.xpose.msra.mxu0 0.0
        %5083 = vmatprep.subr.mxu0 0.0
        %5084 = vmatpush1.xpose.msra.mxu0 0.0
        %5085 = vmatprep.subr.mxu0 0.0
        %5086 = vmatpush1.xpose.msra.mxu0 0.0
        %5087 = vmatprep.subr.mxu0 0.0
        %5088 = vmatpush1.xpose.msra.mxu0 0.0
        %5089 = vmatprep.subr.mxu0 0.0
        %5090 = vmatpush1.xpose.msra.mxu0 0.0
        %5091 = vmatprep.subr.mxu0 0.0
        %5092 = vmatpush1.xpose.msra.mxu0 0.0
        %5093 = vmatprep.subr.mxu0 0.0
        %5094 = vmatpush1.xpose.msra.mxu0 0.0
        %5095 = vmatprep.subr.mxu0 0.0
        %5096 = vmatpush1.xpose.msra.mxu0 0.0
        %5097 = vmatprep.subr.mxu0 0.0
        %5098 = vmatpush1.xpose.msra.mxu0 0.0
        %5099 = vmatprep.subr.mxu0 0.0
        %5100 = vmatpush1.xpose.msra.mxu0 0.0
        %5101 = vmatprep.subr.mxu0 0.0
        %5102 = vmatpush1.xpose.msra.mxu0 0.0
        %5103 = vmatprep.subr.mxu0 0.0
        %5104 = vmatpush1.xpose.msra.mxu0 0.0
        %5105 = vmatprep.subr.mxu0 0.0
        %5106 = vmatpush1.xpose.msra.mxu0 0.0
        %5107 = vmatprep.subr.mxu0 0.0
        %5108 = vmatpush1.xpose.msra.mxu0 0.0
        %5109 = vmatprep.subr.mxu0 0.0
        %5110 = vmatpush1.xpose.msra.mxu0 0.0
        %5111 = vmatprep.subr.mxu0 0.0
        %5112 = vmatpush1.xpose.msra.mxu0 0.0
        %5113 = vmatprep.subr.mxu0 0.0
        %5114 = vmatpush1.xpose.msra.mxu0 0.0
        %5115 = vmatprep.subr.mxu0 0.0
        %5116 = vmatpush1.xpose.msra.mxu0 0.0
        %5117 = vmatprep.subr.mxu0 0.0
        %5118 = vmatpush1.xpose.msra.mxu0 0.0
        %5119 = vmatprep.subr.mxu0 0.0
        %5120 = vmatpush1.xpose.msra.mxu0 0.0
        %5121 = vmatprep.subr.mxu0 0.0
        %5122 = vmatpush1.xpose.msra.mxu0 0.0
        %5123 = vmatprep.subr.mxu0 0.0
        %5124 = vmatpush1.xpose.msra.mxu0 0.0
        %5125 = vmatprep.subr.mxu0 0.0
        %5126 = vmatpush1.xpose.msra.mxu0 0.0
        %5127 = vmatprep.mubr.f32.mxu0 0.0
        %5128 = vmatmul.mubr.f32.gmra.mrb[0].mxu0 %v5031
        %v5129 = vpop.f32.mrb[0].mxu0
        %v5130 = vadd.f32 0.0, %v5129
        %v5131 = vpop.f32.mrb[0].mxu0
        %5132 = vmatprep.mubr.f32.mxu0 0.0
        %5133 = vmatmul.mubr.f32.gmra.mrb[0].mxu0 %v5033
        %v5134 = vpop.f32.mrb[0].mxu0
        %v5135 = vadd.f32 0.0, %v5134
        %v5136 = vpop.f32.mrb[0].mxu0
        %5137 = vmatprep.mubr.f32.mxu0 0.0
        %5138 = vmatmul.mubr.f32.gmra.mrb[0].mxu0 %v5035
        %v5139 = vpop.f32.mrb[0].mxu0
        %v5140 = vadd.f32 0.0, %v5139
        %v5141 = vpop.f32.mrb[0].mxu0
        %5142 = vmatprep.mubr.f32.mxu0 0.0
        %5143 = vmatmul.mubr.f32.gmra.mrb[0].mxu0 %v5037
        %v5144 = vpop.f32.mrb[0].mxu0
        %v5145 = vadd.f32 0.0, %v5144
        %v5146 = vpop.f32.mrb[0].mxu0
        %5147 = vmatprep.mubr.f32.mxu0 0.0
        %5148 = vmatmul.mubr.f32.gmra.mrb[0].mxu0 %v5039
        %v5149 = vpop.f32.mrb[0].mxu0
        %v5150 = vadd.f32 0.0, %v5149
        %v5151 = vpop.f32.mrb[0].mxu0
        %5152 = vmatprep.mubr.f32.mxu0 0.0
        %5153 = vmatmul.mubr.f32.gmra.mrb[0].mxu0 %v5041
        %v5154 = vpop.f32.mrb[0].mxu0
        %v5155 = vadd.f32 0.0, %v5154
        %v5156 = vpop.f32.mrb[0].mxu0
        %5157 = vmatprep.mubr.f32.mxu0 0.0
        %5158 = vmatmul.mubr.f32.gmra.mrb[0].mxu0 %v5043
        %v5159 = vpop.f32.mrb[0].mxu0
        %v5160 = vadd.f32 0.0, %v5159
        %v5161 = vpop.f32.mrb[0].mxu0
        %5162 = vmatprep.mubr.f32.mxu0 0.0
        %5163 = vmatmul.mubr.f32.gmra.mrb[0].mxu0 %v5045
        %v5164 = vpop.f32.mrb[0].mxu0
        %v5165 = vadd.f32 0.0, %v5164
        %v5166 = vpop.f32.mrb[0].mxu0
        %5167 = vdwg.mxu0
        %v5168 = vmul.f32 %v5130, 0.25
        %v5169 = vmul.f32 %v5135, 0.25
        %v5170 = vmul.f32 %v5140, 0.25
        %v5171 = vmul.f32 %v5145, 0.25
        %v5172 = vmul.f32 %v5150, 0.25
        %v5173 = vmul.f32 %v5155, 0.25
        %v5174 = vmul.f32 %v5160, 0.25
        %v5175 = vmul.f32 %v5165, 0.25
        %v5176 = vadd.f32 %v5168, %v575
        %v5177 = vadd.f32 %v5169, %v576
        %v5178 = vadd.f32 %v5170, %v577
        %v5179 = vadd.f32 %v5171, %v578
        %v5180 = vadd.f32 %v5172, %v579
        %v5181 = vadd.f32 %v5173, %v580
        %v5182 = vadd.f32 %v5174, %v581
        %v5183 = vadd.f32 %v5175, %v582
        %v5184 = vsel %vm585, %v5176, -inf
        %5185 = vmax.xlane.f32.xlu0 %v5184
        %v5186 = vpop.xlane.xlu0 %5185
        %v5187 = vsel %vm585, %v5177, -inf
        %5188 = vmax.xlane.f32.xlu0 %v5187
        %v5189 = vpop.xlane.xlu0 %5188
        %v5190 = vsel %vm585, %v5178, -inf
        %5191 = vmax.xlane.f32.xlu0 %v5190
        %v5192 = vpop.xlane.xlu0 %5191
        %v5193 = vsel %vm585, %v5179, -inf
        %5194 = vmax.xlane.f32.xlu0 %v5193
        %v5195 = vpop.xlane.xlu0 %5194
        %v5196 = vsel %vm585, %v5180, -inf
        %5197 = vmax.xlane.f32.xlu0 %v5196
        %v5198 = vpop.xlane.xlu0 %5197
        %v5199 = vsel %vm585, %v5181, -inf
        %5200 = vmax.xlane.f32.xlu0 %v5199
        %v5201 = vpop.xlane.xlu0 %5200
        %v5202 = vsel %vm585, %v5182, -inf
        %5203 = vmax.xlane.f32.xlu0 %v5202
        %v5204 = vpop.xlane.xlu0 %5203
        %v5205 = vsel %vm585, %v5183, -inf
        %5206 = vmax.xlane.f32.xlu0 %v5205
        %v5207 = vpop.xlane.xlu0 %5206
        %v5208 = vsub.f32 %v5176, %v5186
        %v5209 = vsub.f32 %v5177, %v5189
        %v5210 = vsub.f32 %v5178, %v5192
        %v5211 = vsub.f32 %v5179, %v5195
        %v5212 = vsub.f32 %v5180, %v5198
        %v5213 = vsub.f32 %v5181, %v5201
        %v5214 = vsub.f32 %v5182, %v5204
        %v5215 = vsub.f32 %v5183, %v5207
        %v5216 = vmul.f32 %v5208, 1.442695
        %v5217 = vpow.pop %v5216
        %v5218 = vmul.f32 %v5209, 1.442695
        %v5219 = vpow.pop %v5218
        %v5220 = vmul.f32 %v5210, 1.442695
        %v5221 = vpow.pop %v5220
        %v5222 = vmul.f32 %v5211, 1.442695
        %v5223 = vpow.pop %v5222
        %v5224 = vmul.f32 %v5212, 1.442695
        %v5225 = vpow.pop %v5224
        %v5226 = vmul.f32 %v5213, 1.442695
        %v5227 = vpow.pop %v5226
        %v5228 = vmul.f32 %v5214, 1.442695
        %v5229 = vpow.pop %v5228
        %v5230 = vmul.f32 %v5215, 1.442695
        %v5231 = vpow.pop %v5230
        %v5232 = vsel %vm585, %v5217, 0.0
        %5233 = vadd.xlane.f32.xlu0 %v5232
        %v5234 = vpop.xlane.xlu0 %5233
        %v5235 = vsel %vm585, %v5219, 0.0
        %5236 = vadd.xlane.f32.xlu0 %v5235
        %v5237 = vpop.xlane.xlu0 %5236
        %v5238 = vsel %vm585, %v5221, 0.0
        %5239 = vadd.xlane.f32.xlu0 %v5238
        %v5240 = vpop.xlane.xlu0 %5239
        %v5241 = vsel %vm585, %v5223, 0.0
        %5242 = vadd.xlane.f32.xlu0 %v5241
        %v5243 = vpop.xlane.xlu0 %5242
        %v5244 = vsel %vm585, %v5225, 0.0
        %5245 = vadd.xlane.f32.xlu0 %v5244
        %v5246 = vpop.xlane.xlu0 %5245
        %v5247 = vsel %vm585, %v5227, 0.0
        %5248 = vadd.xlane.f32.xlu0 %v5247
        %v5249 = vpop.xlane.xlu0 %5248
        %v5250 = vsel %vm585, %v5229, 0.0
        %5251 = vadd.xlane.f32.xlu0 %v5250
        %v5252 = vpop.xlane.xlu0 %5251
        %v5253 = vsel %vm585, %v5231, 0.0
        %5254 = vadd.xlane.f32.xlu0 %v5253
        %v5255 = vpop.xlane.xlu0 %5254
        %v5256 = vrcp.pop %v5234
        %v5257 = vrcp.pop %v5237
        %v5258 = vrcp.pop %v5240
        %v5259 = vrcp.pop %v5243
        %v5260 = vrcp.pop %v5246
        %v5261 = vrcp.pop %v5249
        %v5262 = vrcp.pop %v5252
        %v5263 = vrcp.pop %v5255
        %v5264 = vmul.f32 %v5217, %v5256
        %v5265 = vmul.f32 %v5219, %v5257
        %v5266 = vmul.f32 %v5221, %v5258
        %v5267 = vmul.f32 %v5223, %v5259
        %v5268 = vmul.f32 %v5225, %v5260
        %v5269 = vmul.f32 %v5227, %v5261
        %v5270 = vmul.f32 %v5229, %v5262
        %v5271 = vmul.f32 %v5231, %v5263
        %5272 = vrot.lane.b32.xlu0 %v3709, 80
        %v5273 = vpop.permute.xlu0 %5272
        %5274 = vrot.lane.b32.xlu0 %v3713, 80
        %v5275 = vpop.permute.xlu0 %5274
        %5276 = vrot.lane.b32.xlu0 %v3719, 80
        %v5277 = vpop.permute.xlu0 %5276
        %5278 = vrot.lane.b32.xlu0 %v3723, 80
        %v5279 = vpop.permute.xlu0 %5278
        %5280 = vrot.lane.b32.xlu0 %v3729, 80
        %v5281 = vpop.permute.xlu0 %5280
        %5282 = vrot.lane.b32.xlu0 %v3733, 80
        %v5283 = vpop.permute.xlu0 %5282
        %5284 = vrot.lane.b32.xlu0 %v3739, 80
        %v5285 = vpop.permute.xlu0 %5284
        %5286 = vrot.lane.b32.xlu0 %v3743, 80
        %v5287 = vpop.permute.xlu0 %5286
        %v5297 = vsel %vm585, %v5264, 0
        %v5300 = vsel %vm585, %v5265, 0
        %v5303 = vsel %vm585, %v5266, 0
        %v5306 = vsel %vm585, %v5267, 0
        %v5309 = vsel %vm585, %v5268, 0
        %v5312 = vsel %vm585, %v5269, 0
        %v5315 = vsel %vm585, %v5270, 0
        %v5318 = vsel %vm585, %v5271, 0
        %5320 = vmatprep.subr.mxu0 0.0
        %5321 = vmatpush1.msra.mxu0 %v5273
        %5322 = vmatprep.subr.mxu0 0.0
        %5323 = vmatpush1.msra.mxu0 %v5275
        %5324 = vmatprep.subr.mxu0 0.0
        %5325 = vmatpush1.msra.mxu0 %v5277
        %5326 = vmatprep.subr.mxu0 0.0
        %5327 = vmatpush1.msra.mxu0 %v5279
        %5328 = vmatprep.subr.mxu0 0.0
        %5329 = vmatpush1.msra.mxu0 %v5281
        %5330 = vmatprep.subr.mxu0 0.0
        %5331 = vmatpush1.msra.mxu0 %v5283
        %5332 = vmatprep.subr.mxu0 0.0
        %5333 = vmatpush1.msra.mxu0 %v5285
        %5334 = vmatprep.subr.mxu0 0.0
        %5335 = vmatpush1.msra.mxu0 %v5287
        %5336 = vmatprep.subr.mxu0 0.0
        %5337 = vmatpush1.msra.mxu0 0.0
        %5338 = vmatprep.subr.mxu0 0.0
        %5339 = vmatpush1.msra.mxu0 0.0
        %5340 = vmatprep.subr.mxu0 0.0
        %5341 = vmatpush1.msra.mxu0 0.0
        %5342 = vmatprep.subr.mxu0 0.0
        %5343 = vmatpush1.msra.mxu0 0.0
        %5344 = vmatprep.subr.mxu0 0.0
        %5345 = vmatpush1.msra.mxu0 0.0
        %5346 = vmatprep.subr.mxu0 0.0
        %5347 = vmatpush1.msra.mxu0 0.0
        %5348 = vmatprep.subr.mxu0 0.0
        %5349 = vmatpush1.msra.mxu0 0.0
        %5350 = vmatprep.subr.mxu0 0.0
        %5351 = vmatpush1.msra.mxu0 0.0
        %5352 = vmatprep.subr.mxu0 0.0
        %5353 = vmatpush1.msra.mxu0 0.0
        %5354 = vmatprep.subr.mxu0 0.0
        %5355 = vmatpush1.msra.mxu0 0.0
        %5356 = vmatprep.subr.mxu0 0.0
        %5357 = vmatpush1.msra.mxu0 0.0
        %5358 = vmatprep.subr.mxu0 0.0
        %5359 = vmatpush1.msra.mxu0 0.0
        %5360 = vmatprep.subr.mxu0 0.0
        %5361 = vmatpush1.msra.mxu0 0.0
        %5362 = vmatprep.subr.mxu0 0.0
        %5363 = vmatpush1.msra.mxu0 0.0
        %5364 = vmatprep.subr.mxu0 0.0
        %5365 = vmatpush1.msra.mxu0 0.0
        %5366 = vmatprep.subr.mxu0 0.0
        %5367 = vmatpush1.msra.mxu0 0.0
        %5368 = vmatprep.subr.mxu0 0.0
        %5369 = vmatpush1.msra.mxu0 0.0
        %5370 = vmatprep.subr.mxu0 0.0
        %5371 = vmatpush1.msra.mxu0 0.0
        %5372 = vmatprep.subr.mxu0 0.0
        %5373 = vmatpush1.msra.mxu0 0.0
        %5374 = vmatprep.subr.mxu0 0.0
        %5375 = vmatpush1.msra.mxu0 0.0
        %5376 = vmatprep.subr.mxu0 0.0
        %5377 = vmatpush1.msra.mxu0 0.0
        %5378 = vmatprep.subr.mxu0 0.0
        %5379 = vmatpush1.msra.mxu0 0.0
        %5380 = vmatprep.subr.mxu0 0.0
        %5381 = vmatpush1.msra.mxu0 0.0
        %5382 = vmatprep.subr.mxu0 0.0
        %5383 = vmatpush1.msra.mxu0 0.0
        %5384 = vmatprep.mubr.f32.mxu0 0.0
        %5385 = vmatmul.mubr.f32.gmra.mrb[0].mxu0 %v5297
        %v5386 = vpop.f32.mrb[0].mxu0
        %v5387 = vadd.f32 0.0, %v5386
        %v5388 = vpop.f32.mrb[0].mxu0
        %5389 = vmatprep.mubr.f32.mxu0 0.0
        %5390 = vmatmul.mubr.f32.gmra.mrb[0].mxu0 %v5300
        %v5391 = vpop.f32.mrb[0].mxu0
        %v5392 = vadd.f32 0.0, %v5391
        %v5393 = vpop.f32.mrb[0].mxu0
        %5394 = vmatprep.mubr.f32.mxu0 0.0
        %5395 = vmatmul.mubr.f32.gmra.mrb[0].mxu0 %v5303
        %v5396 = vpop.f32.mrb[0].mxu0
        %v5397 = vadd.f32 0.0, %v5396
        %v5398 = vpop.f32.mrb[0].mxu0
        %5399 = vmatprep.mubr.f32.mxu0 0.0
        %5400 = vmatmul.mubr.f32.gmra.mrb[0].mxu0 %v5306
        %v5401 = vpop.f32.mrb[0].mxu0
        %v5402 = vadd.f32 0.0, %v5401
        %v5403 = vpop.f32.mrb[0].mxu0
        %5404 = vmatprep.mubr.f32.mxu0 0.0
        %5405 = vmatmul.mubr.f32.gmra.mrb[0].mxu0 %v5309
        %v5406 = vpop.f32.mrb[0].mxu0
        %v5407 = vadd.f32 0.0, %v5406
        %v5408 = vpop.f32.mrb[0].mxu0
        %5409 = vmatprep.mubr.f32.mxu0 0.0
        %5410 = vmatmul.mubr.f32.gmra.mrb[0].mxu0 %v5312
        %v5411 = vpop.f32.mrb[0].mxu0
        %v5412 = vadd.f32 0.0, %v5411
        %v5413 = vpop.f32.mrb[0].mxu0
        %5414 = vmatprep.mubr.f32.mxu0 0.0
        %5415 = vmatmul.mubr.f32.gmra.mrb[0].mxu0 %v5315
        %v5416 = vpop.f32.mrb[0].mxu0
        %v5417 = vadd.f32 0.0, %v5416
        %v5418 = vpop.f32.mrb[0].mxu0
        %5419 = vmatprep.mubr.f32.mxu0 0.0
        %5420 = vmatmul.mubr.f32.gmra.mrb[0].mxu0 %v5318
        %v5421 = vpop.f32.mrb[0].mxu0
        %v5422 = vadd.f32 0.0, %v5421
        %v5423 = vpop.f32.mrb[0].mxu0
        %5424 = vdwg.mxu0
        %5433 = vrot.lane.b32.xlu0 %v4535, 16
        %v5434 = vpop.permute.xlu0 %5433
        %5435 = vrot.lane.b32.xlu0 %v4540, 16
        %v5436 = vpop.permute.xlu0 %5435
        %5437 = vrot.lane.b32.xlu0 %v4545, 16
        %v5438 = vpop.permute.xlu0 %5437
        %5439 = vrot.lane.b32.xlu0 %v4550, 16
        %v5440 = vpop.permute.xlu0 %5439
        %5441 = vrot.lane.b32.xlu0 %v4555, 16
        %v5442 = vpop.permute.xlu0 %5441
        %5443 = vrot.lane.b32.xlu0 %v4560, 16
        %v5444 = vpop.permute.xlu0 %5443
        %5445 = vrot.lane.b32.xlu0 %v4565, 16
        %v5446 = vpop.permute.xlu0 %5445
        %5447 = vrot.lane.b32.xlu0 %v4570, 16
        %v5448 = vpop.permute.xlu0 %5447
        %5465 = vrot.lane.b32.xlu0 %v4961, 32
        %v5466 = vpop.permute.xlu0 %5465
        %5467 = vrot.lane.b32.xlu0 %v4966, 32
        %v5468 = vpop.permute.xlu0 %5467
        %5469 = vrot.lane.b32.xlu0 %v4971, 32
        %v5470 = vpop.permute.xlu0 %5469
        %5471 = vrot.lane.b32.xlu0 %v4976, 32
        %v5472 = vpop.permute.xlu0 %5471
        %5473 = vrot.lane.b32.xlu0 %v4981, 32
        %v5474 = vpop.permute.xlu0 %5473
        %5475 = vrot.lane.b32.xlu0 %v4986, 32
        %v5476 = vpop.permute.xlu0 %5475
        %5477 = vrot.lane.b32.xlu0 %v4991, 32
        %v5478 = vpop.permute.xlu0 %5477
        %5479 = vrot.lane.b32.xlu0 %v4996, 32
        %v5480 = vpop.permute.xlu0 %5479
        %5497 = vrot.lane.b32.xlu0 %v5387, 48
        %v5498 = vpop.permute.xlu0 %5497
        %5499 = vrot.lane.b32.xlu0 %v5392, 48
        %v5500 = vpop.permute.xlu0 %5499
        %5501 = vrot.lane.b32.xlu0 %v5397, 48
        %v5502 = vpop.permute.xlu0 %5501
        %5503 = vrot.lane.b32.xlu0 %v5402, 48
        %v5504 = vpop.permute.xlu0 %5503
        %5505 = vrot.lane.b32.xlu0 %v5407, 48
        %v5506 = vpop.permute.xlu0 %5505
        %5507 = vrot.lane.b32.xlu0 %v5412, 48
        %v5508 = vpop.permute.xlu0 %5507
        %5509 = vrot.lane.b32.xlu0 %v5417, 48
        %v5510 = vpop.permute.xlu0 %5509
        %5511 = vrot.lane.b32.xlu0 %v5422, 48
        %v5512 = vpop.permute.xlu0 %5511
        %v5521 = vsel %vm892, %v4101, %v5434
        %v5522 = vsel %vm892, %v4106, %v5436
        %v5523 = vsel %vm892, %v4111, %v5438
        %v5524 = vsel %vm892, %v4116, %v5440
        %v5525 = vsel %vm892, %v4121, %v5442
        %v5526 = vsel %vm892, %v4126, %v5444
        %v5527 = vsel %vm892, %v4131, %v5446
        %v5528 = vsel %vm892, %v4136, %v5448
        %v5529 = vsel %vm2653, %v5521, %v5466
        %v5530 = vsel %vm2653, %v5522, %v5468
        %v5531 = vsel %vm2653, %v5523, %v5470
        %v5532 = vsel %vm2653, %v5524, %v5472
        %v5533 = vsel %vm2653, %v5525, %v5474
        %v5534 = vsel %vm2653, %v5526, %v5476
        %v5535 = vsel %vm2653, %v5527, %v5478
        %v5536 = vsel %vm2653, %v5528, %v5480
        %v5537 = vsel %vm2662, %v5529, %v5498
        %v5538 = vsel %vm2662, %v5530, %v5500
        %v5539 = vsel %vm2662, %v5531, %v5502
        %v5540 = vsel %vm2662, %v5532, %v5504
        %v5541 = vsel %vm2662, %v5533, %v5506
        %v5542 = vsel %vm2662, %v5534, %v5508
        %v5543 = vsel %vm2662, %v5535, %v5510
        %v5544 = vsel %vm2662, %v5536, %v5512
        %v5545 = vpack.c.bf16 %v5538, %v5537
        %v5546 = vpack.c.bf16 %v5540, %v5539
        %v5547 = vpack.c.bf16 %v5542, %v5541
        %v5548 = vpack.c.bf16 %v5544, %v5543
        %s5549 = scalar_lea.vmem %s5, 32
        %v5550 = vld [vmem:[%s5549] sm:$0xf]
        %v5551 = vld [vmem:[%s5549 + $0x4] sm:$0xf]
        %v5552 = vld [vmem:[%s5549 + $0x8] sm:$0xf]
        %v5553 = vld [vmem:[%s5549 + $0xc] sm:$0xf]
        %v5554 = vld [vmem:[%s5549 + $0x10] sm:$0xf]
        %v5555 = vld [vmem:[%s5549 + $0x14] sm:$0xf]
        %v5556 = vld [vmem:[%s5549 + $0x18] sm:$0xf]
        %v5557 = vld [vmem:[%s5549 + $0x1c] sm:$0xf]
        %v5566 = vunpack.c.l.b16 %v5550
        %v5567 = vunpack.c.l.b16 %v5551
        %v5568 = vunpack.c.l.b16 %v5552
        %v5569 = vunpack.c.l.b16 %v5553
        %v5570 = vunpack.c.l.b16 %v5554
        %v5571 = vunpack.c.l.b16 %v5555
        %v5572 = vunpack.c.l.b16 %v5556
        %v5573 = vunpack.c.l.b16 %v5557
        %v5574 = vpack.c.b16 %v5567, %v5566
        %v5575 = vpack.c.b16 %v5569, %v5568
        %v5576 = vpack.c.b16 %v5571, %v5570
        %v5577 = vpack.c.b16 %v5573, %v5572
        %v5583 = vsel %vm585, %v5545, 0
        %v5586 = vsel %vm585, %v5546, 0
        %v5589 = vsel %vm585, %v5547, 0
        %v5592 = vsel %vm585, %v5548, 0
        %5594 = vmatprep.subr.bf16.mxu0 0
        %5595 = vmatpush1.bf16.msra.mxu0 %v5574
        %5596 = vmatprep.subr.bf16.mxu0 0
        %5597 = vmatpush1.bf16.msra.mxu0 %v5575
        %5598 = vmatprep.subr.bf16.mxu0 0
        %5599 = vmatpush1.bf16.msra.mxu0 %v5576
        %5600 = vmatprep.subr.bf16.mxu0 0
        %5601 = vmatpush1.bf16.msra.mxu0 %v5577
        %5602 = vmatprep.subr.bf16.mxu0 0
        %5603 = vmatpush1.bf16.msra.mxu0 0
        %5604 = vmatprep.subr.bf16.mxu0 0
        %5605 = vmatpush1.bf16.msra.mxu0 0
        %5606 = vmatprep.subr.bf16.mxu0 0
        %5607 = vmatpush1.bf16.msra.mxu0 0
        %5608 = vmatprep.subr.bf16.mxu0 0
        %5609 = vmatpush1.bf16.msra.mxu0 0
        %5610 = vmatprep.subr.bf16.mxu0 0
        %5611 = vmatpush1.bf16.msra.mxu0 0
        %5612 = vmatprep.subr.bf16.mxu0 0
        %5613 = vmatpush1.bf16.msra.mxu0 0
        %5614 = vmatprep.subr.bf16.mxu0 0
        %5615 = vmatpush1.bf16.msra.mxu0 0
        %5616 = vmatprep.subr.bf16.mxu0 0
        %5617 = vmatpush1.bf16.msra.mxu0 0
        %5618 = vmatprep.subr.bf16.mxu0 0
        %5619 = vmatpush1.bf16.msra.mxu0 0
        %5620 = vmatprep.subr.bf16.mxu0 0
        %5621 = vmatpush1.bf16.msra.mxu0 0
        %5622 = vmatprep.subr.bf16.mxu0 0
        %5623 = vmatpush1.bf16.msra.mxu0 0
        %5624 = vmatprep.subr.bf16.mxu0 0
        %5625 = vmatpush1.bf16.msra.mxu0 0
        %5626 = vmatprep.mubr.bf16.mxu0 0
        %5627 = vmatmul.mubr.bf16.gmra.mrb[0].mxu0 %v5583
        %v5628 = vpop.f32.mrb[0].mxu0
        %v5629 = vadd.f32 0.0, %v5628
        %v5630 = vpop.f32.mrb[0].mxu0
        %v5631 = vpop.f32.mrb[0].mxu0
        %v5632 = vadd.f32 0.0, %v5631
        %v5633 = vpop.f32.mrb[0].mxu0
        %5634 = vmatprep.mubr.bf16.mxu0 0
        %5635 = vmatmul.mubr.bf16.gmra.mrb[0].mxu0 %v5586
        %v5636 = vpop.f32.mrb[0].mxu0
        %v5637 = vadd.f32 0.0, %v5636
        %v5638 = vpop.f32.mrb[0].mxu0
        %v5639 = vpop.f32.mrb[0].mxu0
        %v5640 = vadd.f32 0.0, %v5639
        %v5641 = vpop.f32.mrb[0].mxu0
        %5642 = vmatprep.mubr.bf16.mxu0 0
        %5643 = vmatmul.mubr.bf16.gmra.mrb[0].mxu0 %v5589
        %v5644 = vpop.f32.mrb[0].mxu0
        %v5645 = vadd.f32 0.0, %v5644
        %v5646 = vpop.f32.mrb[0].mxu0
        %v5647 = vpop.f32.mrb[0].mxu0
        %v5648 = vadd.f32 0.0, %v5647
        %v5649 = vpop.f32.mrb[0].mxu0
        %5650 = vmatprep.mubr.bf16.mxu0 0
        %5651 = vmatmul.mubr.bf16.gmra.mrb[0].mxu0 %v5592
        %v5652 = vpop.f32.mrb[0].mxu0
        %v5653 = vadd.f32 0.0, %v5652
        %v5654 = vpop.f32.mrb[0].mxu0
        %v5655 = vpop.f32.mrb[0].mxu0
        %v5656 = vadd.f32 0.0, %v5655
        %v5657 = vpop.f32.mrb[0].mxu0
        %5658 = vdwg.mxu0
        %v5659 = vadd.f32 %v3450, %v5629
        %v5660 = vadd.f32 %v3451, %v5632
        %v5661 = vadd.f32 %v3452, %v5637
        %v5662 = vadd.f32 %v3453, %v5640
        %v5663 = vadd.f32 %v3454, %v5645
        %v5664 = vadd.f32 %v3455, %v5648
        %v5665 = vadd.f32 %v3456, %v5653
        %v5666 = vadd.f32 %v3457, %v5656
        %s5667 = scalar_lea.vmem %s6, 1
        %v5668 = vld [vmem:[%s5667] sm:$0x1]
        %v5670 = vlaneseq
        %v5671 = vshrl.u32 %v5670, 7
        %v5672 = vsub.s32 0, %v5671
        %v5673 = vrot.slane %v5668, %v5672
        %v5675 = vadd.f32 %v5659, %v5673
        %v5676 = vadd.f32 %v5660, %v5673
        %v5677 = vadd.f32 %v5661, %v5673
        %v5678 = vadd.f32 %v5662, %v5673
        %v5679 = vadd.f32 %v5663, %v5673
        %v5680 = vadd.f32 %v5664, %v5673
        %v5681 = vadd.f32 %v5665, %v5673
        %v5682 = vadd.f32 %v5666, %v5673
        %s5683 = scalar_lea.vmem %s7, 1
        %v5684 = vld [vmem:[%s5683] sm:$0x1]
        %s5685 = scalar_lea.vmem %s8, 1
        %v5686 = vld [vmem:[%s5685] sm:$0x1]
        %v5687 = vsel %vm585, %v5675, 0.0
        %5688 = vadd.xlane.f32.xlu0 %v5687
        %v5689 = vpop.xlane.xlu0 %5688
        %v5690 = vsel %vm585, %v5676, 0.0
        %5691 = vadd.xlane.f32.xlu0 %v5690
        %v5692 = vpop.xlane.xlu0 %5691
        %v5693 = vsel %vm585, %v5677, 0.0
        %5694 = vadd.xlane.f32.xlu0 %v5693
        %v5695 = vpop.xlane.xlu0 %5694
        %v5696 = vsel %vm585, %v5678, 0.0
        %5697 = vadd.xlane.f32.xlu0 %v5696
        %v5698 = vpop.xlane.xlu0 %5697
        %v5699 = vsel %vm585, %v5679, 0.0
        %5700 = vadd.xlane.f32.xlu0 %v5699
        %v5701 = vpop.xlane.xlu0 %5700
        %v5702 = vsel %vm585, %v5680, 0.0
        %5703 = vadd.xlane.f32.xlu0 %v5702
        %v5704 = vpop.xlane.xlu0 %5703
        %v5705 = vsel %vm585, %v5681, 0.0
        %5706 = vadd.xlane.f32.xlu0 %v5705
        %v5707 = vpop.xlane.xlu0 %5706
        %v5708 = vsel %vm585, %v5682, 0.0
        %5709 = vadd.xlane.f32.xlu0 %v5708
        %v5710 = vpop.xlane.xlu0 %5709
        %v5711 = vmul.f32 %v5689, %v610
        %v5712 = vmul.f32 %v5692, %v610
        %v5713 = vmul.f32 %v5695, %v610
        %v5714 = vmul.f32 %v5698, %v610
        %v5715 = vmul.f32 %v5701, %v610
        %v5716 = vmul.f32 %v5704, %v610
        %v5717 = vmul.f32 %v5707, %v610
        %v5718 = vmul.f32 %v5710, %v610
        %v5719 = vsub.f32 %v5675, %v5711
        %v5720 = vsub.f32 %v5676, %v5712
        %v5721 = vsub.f32 %v5677, %v5713
        %v5722 = vsub.f32 %v5678, %v5714
        %v5723 = vsub.f32 %v5679, %v5715
        %v5724 = vsub.f32 %v5680, %v5716
        %v5725 = vsub.f32 %v5681, %v5717
        %v5726 = vsub.f32 %v5682, %v5718
        %v5727 = vmul.f32 %v5719, %v5719
        %v5728 = vmul.f32 %v5720, %v5720
        %v5729 = vmul.f32 %v5721, %v5721
        %v5730 = vmul.f32 %v5722, %v5722
        %v5731 = vmul.f32 %v5723, %v5723
        %v5732 = vmul.f32 %v5724, %v5724
        %v5733 = vmul.f32 %v5725, %v5725
        %v5734 = vmul.f32 %v5726, %v5726
        %v5735 = vsel %vm585, %v5727, 0.0
        %5736 = vadd.xlane.f32.xlu0 %v5735
        %v5737 = vpop.xlane.xlu0 %5736
        %v5738 = vsel %vm585, %v5728, 0.0
        %5739 = vadd.xlane.f32.xlu0 %v5738
        %v5740 = vpop.xlane.xlu0 %5739
        %v5741 = vsel %vm585, %v5729, 0.0
        %5742 = vadd.xlane.f32.xlu0 %v5741
        %v5743 = vpop.xlane.xlu0 %5742
        %v5744 = vsel %vm585, %v5730, 0.0
        %5745 = vadd.xlane.f32.xlu0 %v5744
        %v5746 = vpop.xlane.xlu0 %5745
        %v5747 = vsel %vm585, %v5731, 0.0
        %5748 = vadd.xlane.f32.xlu0 %v5747
        %v5749 = vpop.xlane.xlu0 %5748
        %v5750 = vsel %vm585, %v5732, 0.0
        %5751 = vadd.xlane.f32.xlu0 %v5750
        %v5752 = vpop.xlane.xlu0 %5751
        %v5753 = vsel %vm585, %v5733, 0.0
        %5754 = vadd.xlane.f32.xlu0 %v5753
        %v5755 = vpop.xlane.xlu0 %5754
        %v5756 = vsel %vm585, %v5734, 0.0
        %5757 = vadd.xlane.f32.xlu0 %v5756
        %v5758 = vpop.xlane.xlu0 %5757
        %v5759 = vmul.f32 %v5737, %v610
        %v5760 = vmul.f32 %v5740, %v610
        %v5761 = vmul.f32 %v5743, %v610
        %v5762 = vmul.f32 %v5746, %v610
        %v5763 = vmul.f32 %v5749, %v610
        %v5764 = vmul.f32 %v5752, %v610
        %v5765 = vmul.f32 %v5755, %v610
        %v5766 = vmul.f32 %v5758, %v610
        %v5767 = vadd.f32 %v5759, 1e-05
        %v5768 = vadd.f32 %v5760, 1e-05
        %v5769 = vadd.f32 %v5761, 1e-05
        %v5770 = vadd.f32 %v5762, 1e-05
        %v5771 = vadd.f32 %v5763, 1e-05
        %v5772 = vadd.f32 %v5764, 1e-05
        %v5773 = vadd.f32 %v5765, 1e-05
        %v5774 = vadd.f32 %v5766, 1e-05
        %v5775 = vrsqrt.pop %v5767
        %v5776 = vrsqrt.pop %v5768
        %v5777 = vrsqrt.pop %v5769
        %v5778 = vrsqrt.pop %v5770
        %v5779 = vrsqrt.pop %v5771
        %v5780 = vrsqrt.pop %v5772
        %v5781 = vrsqrt.pop %v5773
        %v5782 = vrsqrt.pop %v5774
        %v5783 = vmul.f32 %v5719, %v5775
        %v5784 = vmul.f32 %v5720, %v5776
        %v5785 = vmul.f32 %v5721, %v5777
        %v5786 = vmul.f32 %v5722, %v5778
        %v5787 = vmul.f32 %v5723, %v5779
        %v5788 = vmul.f32 %v5724, %v5780
        %v5789 = vmul.f32 %v5725, %v5781
        %v5790 = vmul.f32 %v5726, %v5782
        %v5792 = vlaneseq
        %v5793 = vshrl.u32 %v5792, 7
        %v5794 = vsub.s32 0, %v5793
        %v5795 = vrot.slane %v5684, %v5794
        %v5797 = vmul.f32 %v5783, %v5795
        %v5798 = vmul.f32 %v5784, %v5795
        %v5799 = vmul.f32 %v5785, %v5795
        %v5800 = vmul.f32 %v5786, %v5795
        %v5801 = vmul.f32 %v5787, %v5795
        %v5802 = vmul.f32 %v5788, %v5795
        %v5803 = vmul.f32 %v5789, %v5795
        %v5804 = vmul.f32 %v5790, %v5795
        %v5806 = vlaneseq
        %v5807 = vshrl.u32 %v5806, 7
        %v5808 = vsub.s32 0, %v5807
        %v5809 = vrot.slane %v5686, %v5808
        %v5811 = vadd.f32 %v5797, %v5809
        %v5812 = vadd.f32 %v5798, %v5809
        %v5813 = vadd.f32 %v5799, %v5809
        %v5814 = vadd.f32 %v5800, %v5809
        %v5815 = vadd.f32 %v5801, %v5809
        %v5816 = vadd.f32 %v5802, %v5809
        %v5817 = vadd.f32 %v5803, %v5809
        %v5818 = vadd.f32 %v5804, %v5809
        %v5819 = vpack.c.bf16 %v5812, %v5811
        %v5820 = vpack.c.bf16 %v5814, %v5813
        %v5821 = vpack.c.bf16 %v5816, %v5815
        %v5822 = vpack.c.bf16 %v5818, %v5817
        %s5823 = scalar_lea.vmem %s9, 64
        %v5824 = vld [vmem:[%s5823] sm:$0xff]
        %v5825 = vld [vmem:[%s5823 + $0x8] sm:$0xff]
        %v5826 = vld [vmem:[%s5823 + $0x10] sm:$0xff]
        %v5827 = vld [vmem:[%s5823 + $0x18] sm:$0xff]
        %v5828 = vld [vmem:[%s5823 + $0x20] sm:$0xff]
        %v5829 = vld [vmem:[%s5823 + $0x28] sm:$0xff]
        %v5830 = vld [vmem:[%s5823 + $0x30] sm:$0xff]
        %v5831 = vld [vmem:[%s5823 + $0x38] sm:$0xff]
        %s5832 = scalar_lea.vmem %s10, 2
        %v5833 = vld [vmem:[%s5832] sm:$0x3]
        %v5835 = vlaneseq
        %v5836 = vshrl.u32 %v5835, 7
        %v5837 = vsub.s32 0, %v5836
        %v5838 = vrot.slane %v5833, %v5837
        %v5839 = vlaneseq
        %v5840 = vshrl.u32 %v5839, 7
        %v5841 = vsub.s32 1, %v5840
        %v5842 = vrot.slane %v5833, %v5841
        %v5853 = vunpack.c.l.b16 %v5824
        %v5854 = vunpack.c.h.b16 %v5824
        %v5855 = vunpack.c.l.b16 %v5825
        %v5856 = vunpack.c.h.b16 %v5825
        %v5857 = vunpack.c.l.b16 %v5826
        %v5858 = vunpack.c.h.b16 %v5826
        %v5859 = vunpack.c.l.b16 %v5827
        %v5860 = vunpack.c.h.b16 %v5827
        %v5861 = vunpack.c.l.b16 %v5828
        %v5862 = vunpack.c.h.b16 %v5828
        %v5863 = vunpack.c.l.b16 %v5829
        %v5864 = vunpack.c.h.b16 %v5829
        %v5865 = vunpack.c.l.b16 %v5830
        %v5866 = vunpack.c.h.b16 %v5830
        %v5867 = vunpack.c.l.b16 %v5831
        %v5868 = vunpack.c.h.b16 %v5831
        %v5869 = vpack.c.b16 %v5855, %v5853
        %v5870 = vpack.c.b16 %v5856, %v5854
        %v5871 = vpack.c.b16 %v5859, %v5857
        %v5872 = vpack.c.b16 %v5860, %v5858
        %v5873 = vpack.c.b16 %v5863, %v5861
        %v5874 = vpack.c.b16 %v5864, %v5862
        %v5875 = vpack.c.b16 %v5867, %v5865
        %v5876 = vpack.c.b16 %v5868, %v5866
        %v5886 = vsel %vm585, %v5819, 0
        %v5889 = vsel %vm585, %v5820, 0
        %v5892 = vsel %vm585, %v5821, 0
        %v5895 = vsel %vm585, %v5822, 0
        %5897 = vmatprep.subr.bf16.mxu0 %v5870
        %5898 = vmatpush1.bf16.msra.mxu0 %v5869
        %5899 = vmatprep.subr.bf16.mxu0 %v5872
        %5900 = vmatpush1.bf16.msra.mxu0 %v5871
        %5901 = vmatprep.subr.bf16.mxu0 %v5874
        %5902 = vmatpush1.bf16.msra.mxu0 %v5873
        %5903 = vmatprep.subr.bf16.mxu0 %v5876
        %5904 = vmatpush1.bf16.msra.mxu0 %v5875
        %5905 = vmatprep.subr.bf16.mxu0 0
        %5906 = vmatpush1.bf16.msra.mxu0 0
        %5907 = vmatprep.subr.bf16.mxu0 0
        %5908 = vmatpush1.bf16.msra.mxu0 0
        %5909 = vmatprep.subr.bf16.mxu0 0
        %5910 = vmatpush1.bf16.msra.mxu0 0
        %5911 = vmatprep.subr.bf16.mxu0 0
        %5912 = vmatpush1.bf16.msra.mxu0 0
        %5913 = vmatprep.subr.bf16.mxu0 0
        %5914 = vmatpush1.bf16.msra.mxu0 0
        %5915 = vmatprep.subr.bf16.mxu0 0
        %5916 = vmatpush1.bf16.msra.mxu0 0
        %5917 = vmatprep.subr.bf16.mxu0 0
        %5918 = vmatpush1.bf16.msra.mxu0 0
        %5919 = vmatprep.subr.bf16.mxu0 0
        %5920 = vmatpush1.bf16.msra.mxu0 0
        %5921 = vmatprep.subr.bf16.mxu0 0
        %5922 = vmatpush1.bf16.msra.mxu0 0
        %5923 = vmatprep.subr.bf16.mxu0 0
        %5924 = vmatpush1.bf16.msra.mxu0 0
        %5925 = vmatprep.subr.bf16.mxu0 0
        %5926 = vmatpush1.bf16.msra.mxu0 0
        %5927 = vmatprep.subr.bf16.mxu0 0
        %5928 = vmatpush1.bf16.msra.mxu0 0
        %5929 = vmatprep.mubr.bf16.mxu0 0
        %5930 = vmatmul.mubr.bf16.gmra.mrb[0].mxu0 %v5886
        %v5931 = vpop.f32.mrb[0].mxu0
        %v5932 = vadd.f32 %v5838, %v5931
        %v5933 = vpop.f32.mrb[0].mxu0
        %v5934 = vadd.f32 %v5842, %v5933
        %v5935 = vpop.f32.mrb[0].mxu0
        %v5936 = vadd.f32 %v5838, %v5935
        %v5937 = vpop.f32.mrb[0].mxu0
        %v5938 = vadd.f32 %v5842, %v5937
        %5939 = vmatprep.mubr.bf16.mxu0 0
        %5940 = vmatmul.mubr.bf16.gmra.mrb[0].mxu0 %v5889
        %v5941 = vpop.f32.mrb[0].mxu0
        %v5942 = vadd.f32 %v5838, %v5941
        %v5943 = vpop.f32.mrb[0].mxu0
        %v5944 = vadd.f32 %v5842, %v5943
        %v5945 = vpop.f32.mrb[0].mxu0
        %v5946 = vadd.f32 %v5838, %v5945
        %v5947 = vpop.f32.mrb[0].mxu0
        %v5948 = vadd.f32 %v5842, %v5947
        %5949 = vmatprep.mubr.bf16.mxu0 0
        %5950 = vmatmul.mubr.bf16.gmra.mrb[0].mxu0 %v5892
        %v5951 = vpop.f32.mrb[0].mxu0
        %v5952 = vadd.f32 %v5838, %v5951
        %v5953 = vpop.f32.mrb[0].mxu0
        %v5954 = vadd.f32 %v5842, %v5953
        %v5955 = vpop.f32.mrb[0].mxu0
        %v5956 = vadd.f32 %v5838, %v5955
        %v5957 = vpop.f32.mrb[0].mxu0
        %v5958 = vadd.f32 %v5842, %v5957
        %5959 = vmatprep.mubr.bf16.mxu0 0
        %5960 = vmatmul.mubr.bf16.gmra.mrb[0].mxu0 %v5895
        %v5961 = vpop.f32.mrb[0].mxu0
        %v5962 = vadd.f32 %v5838, %v5961
        %v5963 = vpop.f32.mrb[0].mxu0
        %v5964 = vadd.f32 %v5842, %v5963
        %v5965 = vpop.f32.mrb[0].mxu0
        %v5966 = vadd.f32 %v5838, %v5965
        %v5967 = vpop.f32.mrb[0].mxu0
        %v5968 = vadd.f32 %v5842, %v5967
        %5969 = vdwg.mxu0
        %v5970 = vmul.f32 %v5932, %v5932
        %v5971 = vmul.f32 %v5934, %v5934
        %v5972 = vmul.f32 %v5936, %v5936
        %v5973 = vmul.f32 %v5938, %v5938
        %v5974 = vmul.f32 %v5942, %v5942
        %v5975 = vmul.f32 %v5944, %v5944
        %v5976 = vmul.f32 %v5946, %v5946
        %v5977 = vmul.f32 %v5948, %v5948
        %v5978 = vmul.f32 %v5952, %v5952
        %v5979 = vmul.f32 %v5954, %v5954
        %v5980 = vmul.f32 %v5956, %v5956
        %v5981 = vmul.f32 %v5958, %v5958
        %v5982 = vmul.f32 %v5962, %v5962
        %v5983 = vmul.f32 %v5964, %v5964
        %v5984 = vmul.f32 %v5966, %v5966
        %v5985 = vmul.f32 %v5968, %v5968
        %v5986 = vmul.f32 %v5932, %v5970
        %v5987 = vmul.f32 %v5934, %v5971
        %v5988 = vmul.f32 %v5936, %v5972
        %v5989 = vmul.f32 %v5938, %v5973
        %v5990 = vmul.f32 %v5942, %v5974
        %v5991 = vmul.f32 %v5944, %v5975
        %v5992 = vmul.f32 %v5946, %v5976
        %v5993 = vmul.f32 %v5948, %v5977
        %v5994 = vmul.f32 %v5952, %v5978
        %v5995 = vmul.f32 %v5954, %v5979
        %v5996 = vmul.f32 %v5956, %v5980
        %v5997 = vmul.f32 %v5958, %v5981
        %v5998 = vmul.f32 %v5962, %v5982
        %v5999 = vmul.f32 %v5964, %v5983
        %v6000 = vmul.f32 %v5966, %v5984
        %v6001 = vmul.f32 %v5968, %v5985
        %v6002 = vmul.f32 %v5986, 0.044715
        %v6003 = vmul.f32 %v5987, 0.044715
        %v6004 = vmul.f32 %v5988, 0.044715
        %v6005 = vmul.f32 %v5989, 0.044715
        %v6006 = vmul.f32 %v5990, 0.044715
        %v6007 = vmul.f32 %v5991, 0.044715
        %v6008 = vmul.f32 %v5992, 0.044715
        %v6009 = vmul.f32 %v5993, 0.044715
        %v6010 = vmul.f32 %v5994, 0.044715
        %v6011 = vmul.f32 %v5995, 0.044715
        %v6012 = vmul.f32 %v5996, 0.044715
        %v6013 = vmul.f32 %v5997, 0.044715
        %v6014 = vmul.f32 %v5998, 0.044715
        %v6015 = vmul.f32 %v5999, 0.044715
        %v6016 = vmul.f32 %v6000, 0.044715
        %v6017 = vmul.f32 %v6001, 0.044715
        %v6018 = vadd.f32 %v5932, %v6002
        %v6019 = vadd.f32 %v5934, %v6003
        %v6020 = vadd.f32 %v5936, %v6004
        %v6021 = vadd.f32 %v5938, %v6005
        %v6022 = vadd.f32 %v5942, %v6006
        %v6023 = vadd.f32 %v5944, %v6007
        %v6024 = vadd.f32 %v5946, %v6008
        %v6025 = vadd.f32 %v5948, %v6009
        %v6026 = vadd.f32 %v5952, %v6010
        %v6027 = vadd.f32 %v5954, %v6011
        %v6028 = vadd.f32 %v5956, %v6012
        %v6029 = vadd.f32 %v5958, %v6013
        %v6030 = vadd.f32 %v5962, %v6014
        %v6031 = vadd.f32 %v5964, %v6015
        %v6032 = vadd.f32 %v5966, %v6016
        %v6033 = vadd.f32 %v5968, %v6017
        %v6034 = vmul.f32 %v6018, 0.7978846
        %v6035 = vmul.f32 %v6019, 0.7978846
        %v6036 = vmul.f32 %v6020, 0.7978846
        %v6037 = vmul.f32 %v6021, 0.7978846
        %v6038 = vmul.f32 %v6022, 0.7978846
        %v6039 = vmul.f32 %v6023, 0.7978846
        %v6040 = vmul.f32 %v6024, 0.7978846
        %v6041 = vmul.f32 %v6025, 0.7978846
        %v6042 = vmul.f32 %v6026, 0.7978846
        %v6043 = vmul.f32 %v6027, 0.7978846
        %v6044 = vmul.f32 %v6028, 0.7978846
        %v6045 = vmul.f32 %v6029, 0.7978846
        %v6046 = vmul.f32 %v6030, 0.7978846
        %v6047 = vmul.f32 %v6031, 0.7978846
        %v6048 = vmul.f32 %v6032, 0.7978846
        %v6049 = vmul.f32 %v6033, 0.7978846
        %v6050 = vtanh.pop %v6034
        %v6051 = vtanh.pop %v6035
        %v6052 = vtanh.pop %v6036
        %v6053 = vtanh.pop %v6037
        %v6054 = vtanh.pop %v6038
        %v6055 = vtanh.pop %v6039
        %v6056 = vtanh.pop %v6040
        %v6057 = vtanh.pop %v6041
        %v6058 = vtanh.pop %v6042
        %v6059 = vtanh.pop %v6043
        %v6060 = vtanh.pop %v6044
        %v6061 = vtanh.pop %v6045
        %v6062 = vtanh.pop %v6046
        %v6063 = vtanh.pop %v6047
        %v6064 = vtanh.pop %v6048
        %v6065 = vtanh.pop %v6049
        %v6066 = vadd.f32 %v6050, 1.0
        %v6067 = vadd.f32 %v6051, 1.0
        %v6068 = vadd.f32 %v6052, 1.0
        %v6069 = vadd.f32 %v6053, 1.0
        %v6070 = vadd.f32 %v6054, 1.0
        %v6071 = vadd.f32 %v6055, 1.0
        %v6072 = vadd.f32 %v6056, 1.0
        %v6073 = vadd.f32 %v6057, 1.0
        %v6074 = vadd.f32 %v6058, 1.0
        %v6075 = vadd.f32 %v6059, 1.0
        %v6076 = vadd.f32 %v6060, 1.0
        %v6077 = vadd.f32 %v6061, 1.0
        %v6078 = vadd.f32 %v6062, 1.0
        %v6079 = vadd.f32 %v6063, 1.0
        %v6080 = vadd.f32 %v6064, 1.0
        %v6081 = vadd.f32 %v6065, 1.0
        %v6082 = vmul.f32 %v6066, 0.5
        %v6083 = vmul.f32 %v6067, 0.5
        %v6084 = vmul.f32 %v6068, 0.5
        %v6085 = vmul.f32 %v6069, 0.5
        %v6086 = vmul.f32 %v6070, 0.5
        %v6087 = vmul.f32 %v6071, 0.5
        %v6088 = vmul.f32 %v6072, 0.5
        %v6089 = vmul.f32 %v6073, 0.5
        %v6090 = vmul.f32 %v6074, 0.5
        %v6091 = vmul.f32 %v6075, 0.5
        %v6092 = vmul.f32 %v6076, 0.5
        %v6093 = vmul.f32 %v6077, 0.5
        %v6094 = vmul.f32 %v6078, 0.5
        %v6095 = vmul.f32 %v6079, 0.5
        %v6096 = vmul.f32 %v6080, 0.5
        %v6097 = vmul.f32 %v6081, 0.5
        %v6098 = vmul.f32 %v5932, %v6082
        %v6099 = vmul.f32 %v5934, %v6083
        %v6100 = vmul.f32 %v5936, %v6084
        %v6101 = vmul.f32 %v5938, %v6085
        %v6102 = vmul.f32 %v5942, %v6086
        %v6103 = vmul.f32 %v5944, %v6087
        %v6104 = vmul.f32 %v5946, %v6088
        %v6105 = vmul.f32 %v5948, %v6089
        %v6106 = vmul.f32 %v5952, %v6090
        %v6107 = vmul.f32 %v5954, %v6091
        %v6108 = vmul.f32 %v5956, %v6092
        %v6109 = vmul.f32 %v5958, %v6093
        %v6110 = vmul.f32 %v5962, %v6094
        %v6111 = vmul.f32 %v5964, %v6095
        %v6112 = vmul.f32 %v5966, %v6096
        %v6113 = vmul.f32 %v5968, %v6097
        %v6114 = vpack.c.bf16 %v6100, %v6098
        %v6115 = vpack.c.bf16 %v6101, %v6099
        %v6116 = vpack.c.bf16 %v6104, %v6102
        %v6117 = vpack.c.bf16 %v6105, %v6103
        %v6118 = vpack.c.bf16 %v6108, %v6106
        %v6119 = vpack.c.bf16 %v6109, %v6107
        %v6120 = vpack.c.bf16 %v6112, %v6110
        %v6121 = vpack.c.bf16 %v6113, %v6111
        %s6122 = scalar_lea.vmem %s11, 128
        %v6123 = vld [vmem:[%s6122] sm:$0xf]
        %v6124 = vld [vmem:[%s6122 + $0x4] sm:$0xf]
        %v6125 = vld [vmem:[%s6122 + $0x8] sm:$0xf]
        %v6126 = vld [vmem:[%s6122 + $0xc] sm:$0xf]
        %v6127 = vld [vmem:[%s6122 + $0x10] sm:$0xf]
        %v6128 = vld [vmem:[%s6122 + $0x14] sm:$0xf]
        %v6129 = vld [vmem:[%s6122 + $0x18] sm:$0xf]
        %v6130 = vld [vmem:[%s6122 + $0x1c] sm:$0xf]
        %v6131 = vld [vmem:[%s6122 + $0x20] sm:$0xf]
        %v6132 = vld [vmem:[%s6122 + $0x24] sm:$0xf]
        %v6133 = vld [vmem:[%s6122 + $0x28] sm:$0xf]
        %v6134 = vld [vmem:[%s6122 + $0x2c] sm:$0xf]
        %v6135 = vld [vmem:[%s6122 + $0x30] sm:$0xf]
        %v6136 = vld [vmem:[%s6122 + $0x34] sm:$0xf]
        %v6137 = vld [vmem:[%s6122 + $0x38] sm:$0xf]
        %v6138 = vld [vmem:[%s6122 + $0x3c] sm:$0xf]
        %v6139 = vld [vmem:[%s6122 + $0x40] sm:$0xf]
        %v6140 = vld [vmem:[%s6122 + $0x44] sm:$0xf]
        %v6141 = vld [vmem:[%s6122 + $0x48] sm:$0xf]
        %v6142 = vld [vmem:[%s6122 + $0x4c] sm:$0xf]
        %v6143 = vld [vmem:[%s6122 + $0x50] sm:$0xf]
        %v6144 = vld [vmem:[%s6122 + $0x54] sm:$0xf]
        %v6145 = vld [vmem:[%s6122 + $0x58] sm:$0xf]
        %v6146 = vld [vmem:[%s6122 + $0x5c] sm:$0xf]
        %v6147 = vld [vmem:[%s6122 + $0x60] sm:$0xf]
        %v6148 = vld [vmem:[%s6122 + $0x64] sm:$0xf]
        %v6149 = vld [vmem:[%s6122 + $0x68] sm:$0xf]
        %v6150 = vld [vmem:[%s6122 + $0x6c] sm:$0xf]
        %v6151 = vld [vmem:[%s6122 + $0x70] sm:$0xf]
        %v6152 = vld [vmem:[%s6122 + $0x74] sm:$0xf]
        %v6153 = vld [vmem:[%s6122 + $0x78] sm:$0xf]
        %v6154 = vld [vmem:[%s6122 + $0x7c] sm:$0xf]
        %v6187 = vunpack.c.l.b16 %v6123
        %v6188 = vunpack.c.l.b16 %v6124
        %v6189 = vunpack.c.l.b16 %v6125
        %v6190 = vunpack.c.l.b16 %v6126
        %v6191 = vunpack.c.l.b16 %v6127
        %v6192 = vunpack.c.l.b16 %v6128
        %v6193 = vunpack.c.l.b16 %v6129
        %v6194 = vunpack.c.l.b16 %v6130
        %v6195 = vunpack.c.l.b16 %v6131
        %v6196 = vunpack.c.l.b16 %v6132
        %v6197 = vunpack.c.l.b16 %v6133
        %v6198 = vunpack.c.l.b16 %v6134
        %v6199 = vunpack.c.l.b16 %v6135
        %v6200 = vunpack.c.l.b16 %v6136
        %v6201 = vunpack.c.l.b16 %v6137
        %v6202 = vunpack.c.l.b16 %v6138
        %v6203 = vunpack.c.l.b16 %v6139
        %v6204 = vunpack.c.l.b16 %v6140
        %v6205 = vunpack.c.l.b16 %v6141
        %v6206 = vunpack.c.l.b16 %v6142
        %v6207 = vunpack.c.l.b16 %v6143
        %v6208 = vunpack.c.l.b16 %v6144
        %v6209 = vunpack.c.l.b16 %v6145
        %v6210 = vunpack.c.l.b16 %v6146
        %v6211 = vunpack.c.l.b16 %v6147
        %v6212 = vunpack.c.l.b16 %v6148
        %v6213 = vunpack.c.l.b16 %v6149
        %v6214 = vunpack.c.l.b16 %v6150
        %v6215 = vunpack.c.l.b16 %v6151
        %v6216 = vunpack.c.l.b16 %v6152
        %v6217 = vunpack.c.l.b16 %v6153
        %v6218 = vunpack.c.l.b16 %v6154
        %v6219 = vpack.c.b16 %v6188, %v6187
        %v6220 = vpack.c.b16 %v6190, %v6189
        %v6221 = vpack.c.b16 %v6192, %v6191
        %v6222 = vpack.c.b16 %v6194, %v6193
        %v6223 = vpack.c.b16 %v6196, %v6195
        %v6224 = vpack.c.b16 %v6198, %v6197
        %v6225 = vpack.c.b16 %v6200, %v6199
        %v6226 = vpack.c.b16 %v6202, %v6201
        %v6227 = vpack.c.b16 %v6204, %v6203
        %v6228 = vpack.c.b16 %v6206, %v6205
        %v6229 = vpack.c.b16 %v6208, %v6207
        %v6230 = vpack.c.b16 %v6210, %v6209
        %v6231 = vpack.c.b16 %v6212, %v6211
        %v6232 = vpack.c.b16 %v6214, %v6213
        %v6233 = vpack.c.b16 %v6216, %v6215
        %v6234 = vpack.c.b16 %v6218, %v6217
        %6251 = vmatprep.subr.bf16.mxu0 0
        %6252 = vmatpush1.bf16.msra.mxu0 %v6219
        %6253 = vmatprep.subr.bf16.mxu0 0
        %6254 = vmatpush1.bf16.msra.mxu0 %v6220
        %6255 = vmatprep.subr.bf16.mxu0 0
        %6256 = vmatpush1.bf16.msra.mxu0 %v6221
        %6257 = vmatprep.subr.bf16.mxu0 0
        %6258 = vmatpush1.bf16.msra.mxu0 %v6222
        %6259 = vmatprep.subr.bf16.mxu0 0
        %6260 = vmatpush1.bf16.msra.mxu0 %v6223
        %6261 = vmatprep.subr.bf16.mxu0 0
        %6262 = vmatpush1.bf16.msra.mxu0 %v6224
        %6263 = vmatprep.subr.bf16.mxu0 0
        %6264 = vmatpush1.bf16.msra.mxu0 %v6225
        %6265 = vmatprep.subr.bf16.mxu0 0
        %6266 = vmatpush1.bf16.msra.mxu0 %v6226
        %6267 = vmatprep.subr.bf16.mxu0 0
        %6268 = vmatpush1.bf16.msra.mxu0 %v6227
        %6269 = vmatprep.subr.bf16.mxu0 0
        %6270 = vmatpush1.bf16.msra.mxu0 %v6228
        %6271 = vmatprep.subr.bf16.mxu0 0
        %6272 = vmatpush1.bf16.msra.mxu0 %v6229
        %6273 = vmatprep.subr.bf16.mxu0 0
        %6274 = vmatpush1.bf16.msra.mxu0 %v6230
        %6275 = vmatprep.subr.bf16.mxu0 0
        %6276 = vmatpush1.bf16.msra.mxu0 %v6231
        %6277 = vmatprep.subr.bf16.mxu0 0
        %6278 = vmatpush1.bf16.msra.mxu0 %v6232
        %6279 = vmatprep.subr.bf16.mxu0 0
        %6280 = vmatpush1.bf16.msra.mxu0 %v6233
        %6281 = vmatprep.subr.bf16.mxu0 0
        %6282 = vmatpush1.bf16.msra.mxu0 %v6234
        %6283 = vmatprep.mubr.bf16.mxu0 %v6115
        %6284 = vmatmul.mubr.bf16.gmra.mrb[0].mxu0 %v6114
        %v6285 = vpop.f32.mrb[0].mxu0
        %v6286 = vadd.f32 0.0, %v6285
        %v6287 = vpop.f32.mrb[0].mxu0
        %v6288 = vpop.f32.mrb[0].mxu0
        %v6289 = vadd.f32 0.0, %v6288
        %v6290 = vpop.f32.mrb[0].mxu0
        %6291 = vmatprep.mubr.bf16.mxu0 %v6117
        %6292 = vmatmul.mubr.bf16.gmra.mrb[0].mxu0 %v6116
        %v6293 = vpop.f32.mrb[0].mxu0
        %v6294 = vadd.f32 0.0, %v6293
        %v6295 = vpop.f32.mrb[0].mxu0
        %v6296 = vpop.f32.mrb[0].mxu0
        %v6297 = vadd.f32 0.0, %v6296
        %v6298 = vpop.f32.mrb[0].mxu0
        %6299 = vmatprep.mubr.bf16.mxu0 %v6119
        %6300 = vmatmul.mubr.bf16.gmra.mrb[0].mxu0 %v6118
        %v6301 = vpop.f32.mrb[0].mxu0
        %v6302 = vadd.f32 0.0, %v6301
        %v6303 = vpop.f32.mrb[0].mxu0
        %v6304 = vpop.f32.mrb[0].mxu0
        %v6305 = vadd.f32 0.0, %v6304
        %v6306 = vpop.f32.mrb[0].mxu0
        %6307 = vmatprep.mubr.bf16.mxu0 %v6121
        %6308 = vmatmul.mubr.bf16.gmra.mrb[0].mxu0 %v6120
        %v6309 = vpop.f32.mrb[0].mxu0
        %v6310 = vadd.f32 0.0, %v6309
        %v6311 = vpop.f32.mrb[0].mxu0
        %v6312 = vpop.f32.mrb[0].mxu0
        %v6313 = vadd.f32 0.0, %v6312
        %v6314 = vpop.f32.mrb[0].mxu0
        %6315 = vdwg.mxu0
        %v6316 = vadd.f32 %v5675, %v6286
        %v6317 = vadd.f32 %v5676, %v6289
        %v6318 = vadd.f32 %v5677, %v6294
        %v6319 = vadd.f32 %v5678, %v6297
        %v6320 = vadd.f32 %v5679, %v6302
        %v6321 = vadd.f32 %v5680, %v6305
        %v6322 = vadd.f32 %v5681, %v6310
        %v6323 = vadd.f32 %v5682, %v6313
        %s6324 = scalar_lea.vmem %s12, 1
        %v6325 = vld [vmem:[%s6324] sm:$0x1]
        %v6327 = vlaneseq
        %v6328 = vshrl.u32 %v6327, 7
        %v6329 = vsub.s32 0, %v6328
        %v6330 = vrot.slane %v6325, %v6329
        %v6332 = vadd.f32 %v6316, %v6330
        %v6333 = vadd.f32 %v6317, %v6330
        %v6334 = vadd.f32 %v6318, %v6330
        %v6335 = vadd.f32 %v6319, %v6330
        %v6336 = vadd.f32 %v6320, %v6330
        %v6337 = vadd.f32 %v6321, %v6330
        %v6338 = vadd.f32 %v6322, %v6330
        %v6339 = vadd.f32 %v6323, %v6330
        %v6340 = vld [vmem:[%s13] sm:$0x1]
        %v6341 = vld [vmem:[%s14] sm:$0x1]
        %v6342 = vsel %vm585, %v6332, 0.0
        %6343 = vadd.xlane.f32.xlu0 %v6342
        %v6344 = vpop.xlane.xlu0 %6343
        %v6345 = vsel %vm585, %v6333, 0.0
        %6346 = vadd.xlane.f32.xlu0 %v6345
        %v6347 = vpop.xlane.xlu0 %6346
        %v6348 = vsel %vm585, %v6334, 0.0
        %6349 = vadd.xlane.f32.xlu0 %v6348
        %v6350 = vpop.xlane.xlu0 %6349
        %v6351 = vsel %vm585, %v6335, 0.0
        %6352 = vadd.xlane.f32.xlu0 %v6351
        %v6353 = vpop.xlane.xlu0 %6352
        %v6354 = vsel %vm585, %v6336, 0.0
        %6355 = vadd.xlane.f32.xlu0 %v6354
        %v6356 = vpop.xlane.xlu0 %6355
        %v6357 = vsel %vm585, %v6337, 0.0
        %6358 = vadd.xlane.f32.xlu0 %v6357
        %v6359 = vpop.xlane.xlu0 %6358
        %v6360 = vsel %vm585, %v6338, 0.0
        %6361 = vadd.xlane.f32.xlu0 %v6360
        %v6362 = vpop.xlane.xlu0 %6361
        %v6363 = vsel %vm585, %v6339, 0.0
        %6364 = vadd.xlane.f32.xlu0 %v6363
        %v6365 = vpop.xlane.xlu0 %6364
        %v6366 = vmul.f32 %v6344, %v610
        %v6367 = vmul.f32 %v6347, %v610
        %v6368 = vmul.f32 %v6350, %v610
        %v6369 = vmul.f32 %v6353, %v610
        %v6370 = vmul.f32 %v6356, %v610
        %v6371 = vmul.f32 %v6359, %v610
        %v6372 = vmul.f32 %v6362, %v610
        %v6373 = vmul.f32 %v6365, %v610
        %v6374 = vsub.f32 %v6332, %v6366
        %v6375 = vsub.f32 %v6333, %v6367
        %v6376 = vsub.f32 %v6334, %v6368
        %v6377 = vsub.f32 %v6335, %v6369
        %v6378 = vsub.f32 %v6336, %v6370
        %v6379 = vsub.f32 %v6337, %v6371
        %v6380 = vsub.f32 %v6338, %v6372
        %v6381 = vsub.f32 %v6339, %v6373
        %v6382 = vmul.f32 %v6374, %v6374
        %v6383 = vmul.f32 %v6375, %v6375
        %v6384 = vmul.f32 %v6376, %v6376
        %v6385 = vmul.f32 %v6377, %v6377
        %v6386 = vmul.f32 %v6378, %v6378
        %v6387 = vmul.f32 %v6379, %v6379
        %v6388 = vmul.f32 %v6380, %v6380
        %v6389 = vmul.f32 %v6381, %v6381
        %v6390 = vsel %vm585, %v6382, 0.0
        %6391 = vadd.xlane.f32.xlu0 %v6390
        %v6392 = vpop.xlane.xlu0 %6391
        %v6393 = vsel %vm585, %v6383, 0.0
        %6394 = vadd.xlane.f32.xlu0 %v6393
        %v6395 = vpop.xlane.xlu0 %6394
        %v6396 = vsel %vm585, %v6384, 0.0
        %6397 = vadd.xlane.f32.xlu0 %v6396
        %v6398 = vpop.xlane.xlu0 %6397
        %v6399 = vsel %vm585, %v6385, 0.0
        %6400 = vadd.xlane.f32.xlu0 %v6399
        %v6401 = vpop.xlane.xlu0 %6400
        %v6402 = vsel %vm585, %v6386, 0.0
        %6403 = vadd.xlane.f32.xlu0 %v6402
        %v6404 = vpop.xlane.xlu0 %6403
        %v6405 = vsel %vm585, %v6387, 0.0
        %6406 = vadd.xlane.f32.xlu0 %v6405
        %v6407 = vpop.xlane.xlu0 %6406
        %v6408 = vsel %vm585, %v6388, 0.0
        %6409 = vadd.xlane.f32.xlu0 %v6408
        %v6410 = vpop.xlane.xlu0 %6409
        %v6411 = vsel %vm585, %v6389, 0.0
        %6412 = vadd.xlane.f32.xlu0 %v6411
        %v6413 = vpop.xlane.xlu0 %6412
        %v6414 = vmul.f32 %v6392, %v610
        %v6415 = vmul.f32 %v6395, %v610
        %v6416 = vmul.f32 %v6398, %v610
        %v6417 = vmul.f32 %v6401, %v610
        %v6418 = vmul.f32 %v6404, %v610
        %v6419 = vmul.f32 %v6407, %v610
        %v6420 = vmul.f32 %v6410, %v610
        %v6421 = vmul.f32 %v6413, %v610
        %v6422 = vadd.f32 %v6414, 1e-05
        %v6423 = vadd.f32 %v6415, 1e-05
        %v6424 = vadd.f32 %v6416, 1e-05
        %v6425 = vadd.f32 %v6417, 1e-05
        %v6426 = vadd.f32 %v6418, 1e-05
        %v6427 = vadd.f32 %v6419, 1e-05
        %v6428 = vadd.f32 %v6420, 1e-05
        %v6429 = vadd.f32 %v6421, 1e-05
        %v6430 = vrsqrt.pop %v6422
        %v6431 = vrsqrt.pop %v6423
        %v6432 = vrsqrt.pop %v6424
        %v6433 = vrsqrt.pop %v6425
        %v6434 = vrsqrt.pop %v6426
        %v6435 = vrsqrt.pop %v6427
        %v6436 = vrsqrt.pop %v6428
        %v6437 = vrsqrt.pop %v6429
        %v6438 = vmul.f32 %v6374, %v6430
        %v6439 = vmul.f32 %v6375, %v6431
        %v6440 = vmul.f32 %v6376, %v6432
        %v6441 = vmul.f32 %v6377, %v6433
        %v6442 = vmul.f32 %v6378, %v6434
        %v6443 = vmul.f32 %v6379, %v6435
        %v6444 = vmul.f32 %v6380, %v6436
        %v6445 = vmul.f32 %v6381, %v6437
        %v6447 = vlaneseq
        %v6448 = vshrl.u32 %v6447, 7
        %v6449 = vsub.s32 0, %v6448
        %v6450 = vrot.slane %v6340, %v6449
        %v6452 = vmul.f32 %v6438, %v6450
        %v6453 = vmul.f32 %v6439, %v6450
        %v6454 = vmul.f32 %v6440, %v6450
        %v6455 = vmul.f32 %v6441, %v6450
        %v6456 = vmul.f32 %v6442, %v6450
        %v6457 = vmul.f32 %v6443, %v6450
        %v6458 = vmul.f32 %v6444, %v6450
        %v6459 = vmul.f32 %v6445, %v6450
        %v6461 = vlaneseq
        %v6462 = vshrl.u32 %v6461, 7
        %v6463 = vsub.s32 0, %v6462
        %v6464 = vrot.slane %v6341, %v6463
        %v6466 = vadd.f32 %v6452, %v6464
        %v6467 = vadd.f32 %v6453, %v6464
        %v6468 = vadd.f32 %v6454, %v6464
        %v6469 = vadd.f32 %v6455, %v6464
        %v6470 = vadd.f32 %v6456, %v6464
        %v6471 = vadd.f32 %v6457, %v6464
        %v6472 = vadd.f32 %v6458, %v6464
        %v6473 = vadd.f32 %v6459, %v6464
        %v6474 = vpack.c.bf16 %v6467, %v6466
        %v6475 = vpack.c.bf16 %v6469, %v6468
        %v6476 = vpack.c.bf16 %v6471, %v6470
        %v6477 = vpack.c.bf16 %v6473, %v6472
        %v6478 = vld [vmem:[%s15] sm:$0xff]
        %v6479 = vld [vmem:[%s15 + $0x8] sm:$0xff]
        %v6480 = vld [vmem:[%s15 + $0x10] sm:$0xff]
        %v6481 = vld [vmem:[%s15 + $0x18] sm:$0xff]
        %v6482 = vld [vmem:[%s15 + $0x20] sm:$0xff]
        %v6483 = vld [vmem:[%s15 + $0x28] sm:$0xff]
        %v6484 = vld [vmem:[%s15 + $0x30] sm:$0xff]
        %v6485 = vld [vmem:[%s15 + $0x38] sm:$0xff]
        %v6486 = vld [vmem:[%s16] sm:$0x3]
        %v6488 = vlaneseq
        %v6489 = vshrl.u32 %v6488, 7
        %v6490 = vsub.s32 0, %v6489
        %v6491 = vrot.slane %v6486, %v6490
        %v6492 = vlaneseq
        %v6493 = vshrl.u32 %v6492, 7
        %v6494 = vsub.s32 1, %v6493
        %v6495 = vrot.slane %v6486, %v6494
        %v6506 = vunpack.c.l.b16 %v6478
        %v6507 = vunpack.c.h.b16 %v6478
        %v6508 = vunpack.c.l.b16 %v6479
        %v6509 = vunpack.c.h.b16 %v6479
        %v6510 = vunpack.c.l.b16 %v6480
        %v6511 = vunpack.c.h.b16 %v6480
        %v6512 = vunpack.c.l.b16 %v6481
        %v6513 = vunpack.c.h.b16 %v6481
        %v6514 = vunpack.c.l.b16 %v6482
        %v6515 = vunpack.c.h.b16 %v6482
        %v6516 = vunpack.c.l.b16 %v6483
        %v6517 = vunpack.c.h.b16 %v6483
        %v6518 = vunpack.c.l.b16 %v6484
        %v6519 = vunpack.c.h.b16 %v6484
        %v6520 = vunpack.c.l.b16 %v6485
        %v6521 = vunpack.c.h.b16 %v6485
        %v6522 = vpack.c.b16 %v6508, %v6506
        %v6523 = vpack.c.b16 %v6509, %v6507
        %v6524 = vpack.c.b16 %v6512, %v6510
        %v6525 = vpack.c.b16 %v6513, %v6511
        %v6526 = vpack.c.b16 %v6516, %v6514
        %v6527 = vpack.c.b16 %v6517, %v6515
        %v6528 = vpack.c.b16 %v6520, %v6518
        %v6529 = vpack.c.b16 %v6521, %v6519
        %v6539 = vsel %vm585, %v6474, 0
        %v6542 = vsel %vm585, %v6475, 0
        %v6545 = vsel %vm585, %v6476, 0
        %v6548 = vsel %vm585, %v6477, 0
        %6550 = vmatprep.subr.bf16.mxu0 %v6523
        %6551 = vmatpush1.bf16.msra.mxu0 %v6522
        %6552 = vmatprep.subr.bf16.mxu0 %v6525
        %6553 = vmatpush1.bf16.msra.mxu0 %v6524
        %6554 = vmatprep.subr.bf16.mxu0 %v6527
        %6555 = vmatpush1.bf16.msra.mxu0 %v6526
        %6556 = vmatprep.subr.bf16.mxu0 %v6529
        %6557 = vmatpush1.bf16.msra.mxu0 %v6528
        %6558 = vmatprep.subr.bf16.mxu0 0
        %6559 = vmatpush1.bf16.msra.mxu0 0
        %6560 = vmatprep.subr.bf16.mxu0 0
        %6561 = vmatpush1.bf16.msra.mxu0 0
        %6562 = vmatprep.subr.bf16.mxu0 0
        %6563 = vmatpush1.bf16.msra.mxu0 0
        %6564 = vmatprep.subr.bf16.mxu0 0
        %6565 = vmatpush1.bf16.msra.mxu0 0
        %6566 = vmatprep.subr.bf16.mxu0 0
        %6567 = vmatpush1.bf16.msra.mxu0 0
        %6568 = vmatprep.subr.bf16.mxu0 0
        %6569 = vmatpush1.bf16.msra.mxu0 0
        %6570 = vmatprep.subr.bf16.mxu0 0
        %6571 = vmatpush1.bf16.msra.mxu0 0
        %6572 = vmatprep.subr.bf16.mxu0 0
        %6573 = vmatpush1.bf16.msra.mxu0 0
        %6574 = vmatprep.subr.bf16.mxu0 0
        %6575 = vmatpush1.bf16.msra.mxu0 0
        %6576 = vmatprep.subr.bf16.mxu0 0
        %6577 = vmatpush1.bf16.msra.mxu0 0
        %6578 = vmatprep.subr.bf16.mxu0 0
        %6579 = vmatpush1.bf16.msra.mxu0 0
        %6580 = vmatprep.subr.bf16.mxu0 0
        %6581 = vmatpush1.bf16.msra.mxu0 0
        %6582 = vmatprep.mubr.bf16.mxu0 0
        %6583 = vmatmul.mubr.bf16.gmra.mrb[0].mxu0 %v6539
        %v6584 = vpop.f32.mrb[0].mxu0
        %v6585 = vadd.f32 %v6491, %v6584
        %v6586 = vpop.f32.mrb[0].mxu0
        %v6587 = vadd.f32 %v6495, %v6586
        %v6588 = vpop.f32.mrb[0].mxu0
        %v6589 = vadd.f32 %v6491, %v6588
        %v6590 = vpop.f32.mrb[0].mxu0
        %v6591 = vadd.f32 %v6495, %v6590
        %6592 = vmatprep.mubr.bf16.mxu0 0
        %6593 = vmatmul.mubr.bf16.gmra.mrb[0].mxu0 %v6542
        %v6594 = vpop.f32.mrb[0].mxu0
        %v6595 = vadd.f32 %v6491, %v6594
        %v6596 = vpop.f32.mrb[0].mxu0
        %v6597 = vadd.f32 %v6495, %v6596
        %v6598 = vpop.f32.mrb[0].mxu0
        %v6599 = vadd.f32 %v6491, %v6598
        %v6600 = vpop.f32.mrb[0].mxu0
        %v6601 = vadd.f32 %v6495, %v6600
        %6602 = vmatprep.mubr.bf16.mxu0 0
        %6603 = vmatmul.mubr.bf16.gmra.mrb[0].mxu0 %v6545
        %v6604 = vpop.f32.mrb[0].mxu0
        %v6605 = vadd.f32 %v6491, %v6604
        %v6606 = vpop.f32.mrb[0].mxu0
        %v6607 = vadd.f32 %v6495, %v6606
        %v6608 = vpop.f32.mrb[0].mxu0
        %v6609 = vadd.f32 %v6491, %v6608
        %v6610 = vpop.f32.mrb[0].mxu0
        %v6611 = vadd.f32 %v6495, %v6610
        %6612 = vmatprep.mubr.bf16.mxu0 0
        %6613 = vmatmul.mubr.bf16.gmra.mrb[0].mxu0 %v6548
        %v6614 = vpop.f32.mrb[0].mxu0
        %v6615 = vadd.f32 %v6491, %v6614
        %v6616 = vpop.f32.mrb[0].mxu0
        %v6617 = vadd.f32 %v6495, %v6616
        %v6618 = vpop.f32.mrb[0].mxu0
        %v6619 = vadd.f32 %v6491, %v6618
        %v6620 = vpop.f32.mrb[0].mxu0
        %v6621 = vadd.f32 %v6495, %v6620
        %6622 = vdwg.mxu0
        %6623 = vst [vmem:[%s541] sm:$0xff] %v6585
        %6624 = vst [vmem:[%s541 + $0x8] sm:$0xff] %v6587
        %6625 = vst [vmem:[%s541 + $0x10] sm:$0xff] %v6589
        %6626 = vst [vmem:[%s541 + $0x18] sm:$0xff] %v6591
        %6627 = vst [vmem:[%s541 + $0x20] sm:$0xff] %v6595
        %6628 = vst [vmem:[%s541 + $0x28] sm:$0xff] %v6597
        %6629 = vst [vmem:[%s541 + $0x30] sm:$0xff] %v6599
        %6630 = vst [vmem:[%s541 + $0x38] sm:$0xff] %v6601
        %6631 = vst [vmem:[%s541 + $0x40] sm:$0xff] %v6605
        %6632 = vst [vmem:[%s541 + $0x48] sm:$0xff] %v6607
        %6633 = vst [vmem:[%s541 + $0x50] sm:$0xff] %v6609
        %6634 = vst [vmem:[%s541 + $0x58] sm:$0xff] %v6611
        %6635 = vst [vmem:[%s541 + $0x60] sm:$0xff] %v6615
        %6636 = vst [vmem:[%s541 + $0x68] sm:$0xff] %v6617
        %6637 = vst [vmem:[%s541 + $0x70] sm:$0xff] %v6619
        %6638 = vst [vmem:[%s541 + $0x78] sm:$0xff] %v6621
        %s6639 = sand.u32 %s401, 1
        %s6640 = scalar_lea.sflag [#allocation3], %s6639
        %s6641 = sand.u32 %s401, 1
        %s6642 = smul.addr %s6641, 128
        %s6643 = scalar_lea.vmem [#allocation2], %s6642
        // Predicated region
        $region89: #{forward.3} parent=87 // pred_check
          %p6644 = pneg %p411
        $region90: #{forward.3} parent=87 // pred_check_branch
          %6646 = sbr.rel (%p6644) target = $region92
        $region91: #{forward.3} parent=87 // pred_region
          %s6648 = ssub.s32 2048, 2048
          %6649 = vsyncadd %s6640, %s6648
          %s6650 = smul.addr %s31, 16
          %s6651 = smul.addr %s6650, 128
          %s6652 = scalar_lea.hbm %s17, %s6651
          %s6653 = sshll.u32 %s6643, 4
          %s6654 = int_to_ptr.vmem [resolvable:$true] %s6653
          %6659 = dma.vmem_to_hbm [thread:$0]  %s6654, 2048, %s6652, %s6640, 256, 256, 16
        $region92: #{forward.3} parent=87 // pred_fallthru
          _
      $region88: #{forward.3} parent=5 // pred_fallthru
        _
      %p6660 = scmp.le.s32.totalorder 2, %s26
      // Predicated region
      $region93: #{forward.3} parent=5 // pred_check
        %p6661 = pneg %p6660
      $region94: #{forward.3} parent=5 // pred_check_branch
        %6663 = sbr.rel (%p6661) target = $region96
      $region95: #{forward.3} parent=5 // pred_region
        %s6664 = ssub.s32 %s26, 2
        // Predicated region
        $region97: #{forward.3} parent=95 // pred_check
          %p6665 = pneg %p417
        $region98: #{forward.3} parent=95 // pred_check_branch
          %6667 = sbr.rel (%p6665) target = $region100
        $region99: #{forward.3} parent=95 // pred_region
          %s6668 = sand.u32 %s402, 1
          %s6669 = scalar_lea.sflag [#allocation3], %s6668
          %s6670 = sand.u32 %s402, 1
          %s6671 = smul.addr %s6670, 128
          %s6672 = scalar_lea.vmem [#allocation2], %s6671
          %6673 = dma.done %s6669, 2048
        $region100: #{forward.3} parent=95 // pred_fallthru
          _
      $region96: #{forward.3} parent=5 // pred_fallthru
        _
    $region6: #{forward.3} parent=1 // loop_footer
      %s30 = sadd.s32 1, %s26
    $region7: #{forward.3} parent=1 // loop_footer_branch
      %25 = sbr.rel target = $region3
    $region8: #{forward.3} parent=1 // loop_exit
      _
    %6674 = vsyncpa [#allocation3], 1
    %s6675 = scalar_lea.sflag [#allocation3], 1
    %6676 = vsyncpa %s6675, 1

</llo_original>
